<compile_context>
chip_gen: v6e
topology: v6e:2x2x1
jax: 0.10.0
libtpu: 0.0.40
codegen_flags: <defaults>
</compile_context>

<pallas_src>
import jax
import jax.numpy as jnp
from jax.experimental import pallas as pl
from jax.experimental.pallas import tpu as pltpu

WIDTH = 16        # module default is 64; small square spatial size for the test
LANE_BLOCK = 128  # images per grid step (one full lane width)

# tap t corresponds to kernel position (ky, kx) in row-major flatten order of
# the (3, 3) conv weights; output[i, j] += w[ky, kx] * padded[i + ky, j + kx].
_TAPS = tuple((ky, kx) for ky in range(3) for kx in range(3))


def _pad_spatial(a):
    """Zero-pad the two leading (spatial) dims of (H, W, LN) by 1 on each side."""
    H, W, LN = a.shape
    zrow = jnp.zeros((1, W, LN), a.dtype)
    a = jnp.concatenate([zrow, a, zrow], axis=0)          # (H+2, W, LN)
    zcol = jnp.zeros((H + 2, 1, LN), a.dtype)
    return jnp.concatenate([zcol, a, zcol], axis=1)       # (H+2, W+2, LN)


def onehot_kernel(x_ref, w1_ref, b1_ref, w2_ref, b2_ref, o_ref):
    x = x_ref[...]                       # (H, W, LN) f32; lanes = independent images
    H, W, LN = x.shape

    # Pad once; all 9 taps become static slices (no lane movement at all).
    xp = _pad_spatial(x)
    # Hoisted: the 9 shifted views of x, shared by all 4 conv1 output channels.
    taps_x = [x if t == 4 else xp[ky:ky + H, kx:kx + W, :]
              for t, (ky, kx) in enumerate(_TAPS)]

    acc2 = None  # conv2 accumulator (bias folded in on the first contribution)

    # Channels are tiny (1 -> 4 -> 1): fully unrolled.  Only one hidden channel
    # is live at a time to keep VMEM / vreg pressure low.
    for c in range(4):
        # conv1 channel c; bias folded into the center tap (which is x itself).
        acc = w1_ref[c, 4] * x + b1_ref[c]
        for t in (0, 1, 2, 3, 5, 6, 7, 8):
            acc = acc + w1_ref[c, t] * taps_x[t]
        h = jnp.maximum(acc, 0.0)        # ReLU -> hidden channel c

        # conv2 contribution of hidden channel c.
        center = w2_ref[c, 4] * h
        acc2 = (center + b2_ref[0]) if acc2 is None else (acc2 + center)
        hp = _pad_spatial(h)
        for t in (0, 1, 2, 3, 5, 6, 7, 8):
            ky, kx = _TAPS[t]
            acc2 = acc2 + w2_ref[c, t] * hp[ky:ky + H, kx:kx + W, :]

    o_ref[...] = jnp.maximum(acc2, 0.0)  # final ReLU


def onehot_net_forward(x_nchw, params):
    """Forward pass of OnehotNet.  x_nchw: (N, 1, WIDTH, WIDTH) float32."""
    N, C, H, W = x_nchw.shape
    assert C == 1 and H == WIDTH and W == WIDTH

    # Lane-dense relayout: batch goes on the last (lane) axis, padded to a
    # multiple of 128.  Each grid step handles 128 images; larger batches give
    # several "parallel" steps (keeps both v7x TensorCores busy).
    Np = pl.cdiv(N, LANE_BLOCK) * LANE_BLOCK
    x_t = jnp.transpose(x_nchw[:, 0, :, :], (1, 2, 0))        # (H, W, N)
    x_t = jnp.pad(x_t, ((0, 0), (0, 0), (0, Np - N)))         # (H, W, Np)

    w1 = params["w1"].reshape(4, 9).astype(jnp.float32)       # (4,1,3,3) -> (4,9)
    b1 = params["b1"].astype(jnp.float32)                     # (4,)
    w2 = params["w2"].reshape(4, 9).astype(jnp.float32)       # (1,4,3,3) -> (4,9)
    b2 = params["b2"].astype(jnp.float32)                     # (1,)
    # NOTE: conv4 (1x1) exists in __init__ but is never used in forward().

    smem = pl.BlockSpec(memory_space=pltpu.MemorySpace.SMEM)
    y_t = pl.pallas_call(
        onehot_kernel,
        out_shape=jax.ShapeDtypeStruct((H, W, Np), jnp.float32),
        grid=(Np // LANE_BLOCK,),
        in_specs=[
            pl.BlockSpec((H, W, LANE_BLOCK), lambda n: (0, 0, n)),  # image slab
            smem, smem, smem, smem,                                  # tiny weights/biases
        ],
        out_specs=pl.BlockSpec((H, W, LANE_BLOCK), lambda n: (0, 0, n)),
        compiler_params=pltpu.CompilerParams(dimension_semantics=("parallel",)),
    )(x_t, w1, b1, w2, b2)

    # Undo the relayout; equivalent of x.view(-1, width ** 2).
    y = jnp.transpose(y_t[:, :, :N], (2, 0, 1))                # (N, H, W)
    return y.reshape(N, WIDTH * WIDTH)


def reference_forward(x_nchw, params):
    """Pure-JAX reference matching the PyTorch forward exactly."""
    dn = ("NCHW", "OIHW", "NCHW")
    h = jax.lax.conv_general_dilated(
        x_nchw, params["w1"], (1, 1), [(1, 1), (1, 1)], dimension_numbers=dn)
    h = jax.nn.relu(h + params["b1"].reshape(1, 4, 1, 1))
    y = jax.lax.conv_general_dilated(
        h, params["w2"], (1, 1), [(1, 1), (1, 1)], dimension_numbers=dn)
    y = jax.nn.relu(y + params["b2"].reshape(1, 1, 1, 1))
    return y.reshape(x_nchw.shape[0], -1)


if __name__ == "__main__":
    key = jax.random.PRNGKey(0)
    ks = jax.random.split(key, 8)
    params = {
        "w1": jax.random.normal(ks[0], (4, 1, 3, 3), jnp.float32) * 0.3,
        "b1": jax.random.normal(ks[1], (4,), jnp.float32) * 0.1,
        "w2": jax.random.normal(ks[2], (1, 4, 3, 3), jnp.float32) * 0.3,
        "b2": jax.random.normal(ks[3], (1,), jnp.float32) * 0.1,
        # conv4 parameters exist in the module but are unused in forward():
        "w4": jax.random.normal(ks[4], (1, 1, 1, 1), jnp.float32),
        "b4": jax.random.normal(ks[5], (1,), jnp.float32),
    }
    x = jax.random.normal(ks[6], (2, 1, WIDTH, WIDTH), jnp.float32)

    out = jax.block_until_ready(onehot_net_forward(x, params))
    ref = reference_forward(x, params)

    assert out.shape == (2, WIDTH * WIDTH), out.shape
    if not jnp.allclose(out, ref, atol=1e-4, rtol=1e-4):
        raise AssertionError("Pallas kernel output mismatch vs JAX reference")
    print("KERNEL_OK")
</pallas_src>

<mosaic_0001>
module attributes {stable_mosaic.version = 11 : i64} {
  func.func @onehot_kernel(%arg0: i32, %arg1: memref<16x16x128xf32, #tpu.memory_space<vmem>>, %arg2: memref<4x9xf32, #tpu.memory_space<smem>>, %arg3: memref<4xf32, #tpu.memory_space<smem>>, %arg4: memref<4x9xf32, #tpu.memory_space<smem>>, %arg5: memref<1xf32, #tpu.memory_space<smem>>, %arg6: memref<16x16x128xf32, #tpu.memory_space<vmem>>) attributes {dimension_semantics = [#tpu.dimension_semantics<parallel>], iteration_bounds = array<i64: 1>, scalar_prefetch = 0 : i64, scratch_operands = 0 : i64, tpu.core_type = #tpu.core_type<tc>, window_params = [{transform_indices = @transform_0, window_bounds = array<i64: 16, 16, 128>}, {transform_indices = @transform_1, window_bounds = array<i64: 4, 9>}, {transform_indices = @transform_2, window_bounds = array<i64: 4>}, {transform_indices = @transform_3, window_bounds = array<i64: 4, 9>}, {transform_indices = @transform_4, window_bounds = array<i64: 1>}, {transform_indices = @transform_5, window_bounds = array<i64: 16, 16, 128>}]} {
    %c0 = arith.constant 0 : index
    %c0_0 = arith.constant 0 : index
    %c0_1 = arith.constant 0 : index
    %0 = vector.load %arg1[%c0, %c0_0, %c0_1] : memref<16x16x128xf32, #tpu.memory_space<vmem>>, vector<16x16x128xf32>
    %cst = arith.constant 0.000000e+00 : f32
    %1 = vector.broadcast %cst : f32 to vector<1x16x128xf32>
    %2 = tpu.concatenate %1, %0, %1 in 0 : vector<1x16x128xf32>, vector<16x16x128xf32>, vector<1x16x128xf32> -> vector<18x16x128xf32>
    %cst_2 = arith.constant 0.000000e+00 : f32
    %3 = vector.broadcast %cst_2 : f32 to vector<18x1x128xf32>
    %4 = tpu.concatenate %3, %2, %3 in 1 : vector<18x1x128xf32>, vector<18x16x128xf32>, vector<18x1x128xf32> -> vector<18x18x128xf32>
    %5 = vector.extract_strided_slice %4 {offsets = [0, 0, 0], sizes = [16, 16, 128], strides = [1, 1, 1]} : vector<18x18x128xf32> to vector<16x16x128xf32>
    %6 = vector.extract_strided_slice %4 {offsets = [0, 1, 0], sizes = [16, 16, 128], strides = [1, 1, 1]} : vector<18x18x128xf32> to vector<16x16x128xf32>
    %7 = vector.extract_strided_slice %4 {offsets = [0, 2, 0], sizes = [16, 16, 128], strides = [1, 1, 1]} : vector<18x18x128xf32> to vector<16x16x128xf32>
    %8 = vector.extract_strided_slice %4 {offsets = [1, 0, 0], sizes = [16, 16, 128], strides = [1, 1, 1]} : vector<18x18x128xf32> to vector<16x16x128xf32>
    %9 = vector.extract_strided_slice %4 {offsets = [1, 2, 0], sizes = [16, 16, 128], strides = [1, 1, 1]} : vector<18x18x128xf32> to vector<16x16x128xf32>
    %10 = vector.extract_strided_slice %4 {offsets = [2, 0, 0], sizes = [16, 16, 128], strides = [1, 1, 1]} : vector<18x18x128xf32> to vector<16x16x128xf32>
    %11 = vector.extract_strided_slice %4 {offsets = [2, 1, 0], sizes = [16, 16, 128], strides = [1, 1, 1]} : vector<18x18x128xf32> to vector<16x16x128xf32>
    %12 = vector.extract_strided_slice %4 {offsets = [2, 2, 0], sizes = [16, 16, 128], strides = [1, 1, 1]} : vector<18x18x128xf32> to vector<16x16x128xf32>
    %c0_3 = arith.constant 0 : index
    %c4 = arith.constant 4 : index
    %13 = memref.load %arg2[%c0_3, %c4] : memref<4x9xf32, #tpu.memory_space<smem>>
    %14 = vector.broadcast %13 : f32 to vector<16x16x128xf32>
    %15 = arith.mulf %14, %0 : vector<16x16x128xf32>
    %c0_4 = arith.constant 0 : index
    %16 = memref.load %arg3[%c0_4] : memref<4xf32, #tpu.memory_space<smem>>
    %17 = vector.broadcast %16 : f32 to vector<16x16x128xf32>
    %18 = arith.addf %15, %17 : vector<16x16x128xf32>
    %c0_5 = arith.constant 0 : index
    %c0_6 = arith.constant 0 : index
    %19 = memref.load %arg2[%c0_5, %c0_6] : memref<4x9xf32, #tpu.memory_space<smem>>
    %20 = vector.broadcast %19 : f32 to vector<16x16x128xf32>
    %21 = arith.mulf %20, %5 : vector<16x16x128xf32>
    %22 = arith.addf %18, %21 : vector<16x16x128xf32>
    %c0_7 = arith.constant 0 : index
    %c1 = arith.constant 1 : index
    %23 = memref.load %arg2[%c0_7, %c1] : memref<4x9xf32, #tpu.memory_space<smem>>
    %24 = vector.broadcast %23 : f32 to vector<16x16x128xf32>
    %25 = arith.mulf %24, %6 : vector<16x16x128xf32>
    %26 = arith.addf %22, %25 : vector<16x16x128xf32>
    %c0_8 = arith.constant 0 : index
    %c2 = arith.constant 2 : index
    %27 = memref.load %arg2[%c0_8, %c2] : memref<4x9xf32, #tpu.memory_space<smem>>
    %28 = vector.broadcast %27 : f32 to vector<16x16x128xf32>
    %29 = arith.mulf %28, %7 : vector<16x16x128xf32>
    %30 = arith.addf %26, %29 : vector<16x16x128xf32>
    %c0_9 = arith.constant 0 : index
    %c3 = arith.constant 3 : index
    %31 = memref.load %arg2[%c0_9, %c3] : memref<4x9xf32, #tpu.memory_space<smem>>
    %32 = vector.broadcast %31 : f32 to vector<16x16x128xf32>
    %33 = arith.mulf %32, %8 : vector<16x16x128xf32>
    %34 = arith.addf %30, %33 : vector<16x16x128xf32>
    %c0_10 = arith.constant 0 : index
    %c5 = arith.constant 5 : index
    %35 = memref.load %arg2[%c0_10, %c5] : memref<4x9xf32, #tpu.memory_space<smem>>
    %36 = vector.broadcast %35 : f32 to vector<16x16x128xf32>
    %37 = arith.mulf %36, %9 : vector<16x16x128xf32>
    %38 = arith.addf %34, %37 : vector<16x16x128xf32>
    %c0_11 = arith.constant 0 : index
    %c6 = arith.constant 6 : index
    %39 = memref.load %arg2[%c0_11, %c6] : memref<4x9xf32, #tpu.memory_space<smem>>
    %40 = vector.broadcast %39 : f32 to vector<16x16x128xf32>
    %41 = arith.mulf %40, %10 : vector<16x16x128xf32>
    %42 = arith.addf %38, %41 : vector<16x16x128xf32>
    %c0_12 = arith.constant 0 : index
    %c7 = arith.constant 7 : index
    %43 = memref.load %arg2[%c0_12, %c7] : memref<4x9xf32, #tpu.memory_space<smem>>
    %44 = vector.broadcast %43 : f32 to vector<16x16x128xf32>
    %45 = arith.mulf %44, %11 : vector<16x16x128xf32>
    %46 = arith.addf %42, %45 : vector<16x16x128xf32>
    %c0_13 = arith.constant 0 : index
    %c8 = arith.constant 8 : index
    %47 = memref.load %arg2[%c0_13, %c8] : memref<4x9xf32, #tpu.memory_space<smem>>
    %48 = vector.broadcast %47 : f32 to vector<16x16x128xf32>
    %49 = arith.mulf %48, %12 : vector<16x16x128xf32>
    %50 = arith.addf %46, %49 : vector<16x16x128xf32>
    %cst_14 = arith.constant 0.000000e+00 : f32
    %51 = vector.broadcast %cst_14 : f32 to vector<16x16x128xf32>
    %52 = arith.maximumf %50, %51 : vector<16x16x128xf32>
    %c0_15 = arith.constant 0 : index
    %c4_16 = arith.constant 4 : index
    %53 = memref.load %arg4[%c0_15, %c4_16] : memref<4x9xf32, #tpu.memory_space<smem>>
    %54 = vector.broadcast %53 : f32 to vector<16x16x128xf32>
    %55 = arith.mulf %54, %52 : vector<16x16x128xf32>
    %c0_17 = arith.constant 0 : index
    %56 = memref.load %arg5[%c0_17] : memref<1xf32, #tpu.memory_space<smem>>
    %57 = vector.broadcast %56 : f32 to vector<16x16x128xf32>
    %58 = arith.addf %55, %57 : vector<16x16x128xf32>
    %cst_18 = arith.constant 0.000000e+00 : f32
    %59 = vector.broadcast %cst_18 : f32 to vector<1x16x128xf32>
    %60 = tpu.concatenate %59, %52, %59 in 0 : vector<1x16x128xf32>, vector<16x16x128xf32>, vector<1x16x128xf32> -> vector<18x16x128xf32>
    %cst_19 = arith.constant 0.000000e+00 : f32
    %61 = vector.broadcast %cst_19 : f32 to vector<18x1x128xf32>
    %62 = tpu.concatenate %61, %60, %61 in 1 : vector<18x1x128xf32>, vector<18x16x128xf32>, vector<18x1x128xf32> -> vector<18x18x128xf32>
    %c0_20 = arith.constant 0 : index
    %c0_21 = arith.constant 0 : index
    %63 = memref.load %arg4[%c0_20, %c0_21] : memref<4x9xf32, #tpu.memory_space<smem>>
    %64 = vector.extract_strided_slice %62 {offsets = [0, 0, 0], sizes = [16, 16, 128], strides = [1, 1, 1]} : vector<18x18x128xf32> to vector<16x16x128xf32>
    %65 = vector.broadcast %63 : f32 to vector<16x16x128xf32>
    %66 = arith.mulf %65, %64 : vector<16x16x128xf32>
    %67 = arith.addf %58, %66 : vector<16x16x128xf32>
    %c0_22 = arith.constant 0 : index
    %c1_23 = arith.constant 1 : index
    %68 = memref.load %arg4[%c0_22, %c1_23] : memref<4x9xf32, #tpu.memory_space<smem>>
    %69 = vector.extract_strided_slice %62 {offsets = [0, 1, 0], sizes = [16, 16, 128], strides = [1, 1, 1]} : vector<18x18x128xf32> to vector<16x16x128xf32>
    %70 = vector.broadcast %68 : f32 to vector<16x16x128xf32>
    %71 = arith.mulf %70, %69 : vector<16x16x128xf32>
    %72 = arith.addf %67, %71 : vector<16x16x128xf32>
    %c0_24 = arith.constant 0 : index
    %c2_25 = arith.constant 2 : index
    %73 = memref.load %arg4[%c0_24, %c2_25] : memref<4x9xf32, #tpu.memory_space<smem>>
    %74 = vector.extract_strided_slice %62 {offsets = [0, 2, 0], sizes = [16, 16, 128], strides = [1, 1, 1]} : vector<18x18x128xf32> to vector<16x16x128xf32>
    %75 = vector.broadcast %73 : f32 to vector<16x16x128xf32>
    %76 = arith.mulf %75, %74 : vector<16x16x128xf32>
    %77 = arith.addf %72, %76 : vector<16x16x128xf32>
    %c0_26 = arith.constant 0 : index
    %c3_27 = arith.constant 3 : index
    %78 = memref.load %arg4[%c0_26, %c3_27] : memref<4x9xf32, #tpu.memory_space<smem>>
    %79 = vector.extract_strided_slice %62 {offsets = [1, 0, 0], sizes = [16, 16, 128], strides = [1, 1, 1]} : vector<18x18x128xf32> to vector<16x16x128xf32>
    %80 = vector.broadcast %78 : f32 to vector<16x16x128xf32>
    %81 = arith.mulf %80, %79 : vector<16x16x128xf32>
    %82 = arith.addf %77, %81 : vector<16x16x128xf32>
    %c0_28 = arith.constant 0 : index
    %c5_29 = arith.constant 5 : index
    %83 = memref.load %arg4[%c0_28, %c5_29] : memref<4x9xf32, #tpu.memory_space<smem>>
    %84 = vector.extract_strided_slice %62 {offsets = [1, 2, 0], sizes = [16, 16, 128], strides = [1, 1, 1]} : vector<18x18x128xf32> to vector<16x16x128xf32>
    %85 = vector.broadcast %83 : f32 to vector<16x16x128xf32>
    %86 = arith.mulf %85, %84 : vector<16x16x128xf32>
    %87 = arith.addf %82, %86 : vector<16x16x128xf32>
    %c0_30 = arith.constant 0 : index
    %c6_31 = arith.constant 6 : index
    %88 = memref.load %arg4[%c0_30, %c6_31] : memref<4x9xf32, #tpu.memory_space<smem>>
    %89 = vector.extract_strided_slice %62 {offsets = [2, 0, 0], sizes = [16, 16, 128], strides = [1, 1, 1]} : vector<18x18x128xf32> to vector<16x16x128xf32>
    %90 = vector.broadcast %88 : f32 to vector<16x16x128xf32>
    %91 = arith.mulf %90, %89 : vector<16x16x128xf32>
    %92 = arith.addf %87, %91 : vector<16x16x128xf32>
    %c0_32 = arith.constant 0 : index
    %c7_33 = arith.constant 7 : index
    %93 = memref.load %arg4[%c0_32, %c7_33] : memref<4x9xf32, #tpu.memory_space<smem>>
    %94 = vector.extract_strided_slice %62 {offsets = [2, 1, 0], sizes = [16, 16, 128], strides = [1, 1, 1]} : vector<18x18x128xf32> to vector<16x16x128xf32>
    %95 = vector.broadcast %93 : f32 to vector<16x16x128xf32>
    %96 = arith.mulf %95, %94 : vector<16x16x128xf32>
    %97 = arith.addf %92, %96 : vector<16x16x128xf32>
    %c0_34 = arith.constant 0 : index
    %c8_35 = arith.constant 8 : index
    %98 = memref.load %arg4[%c0_34, %c8_35] : memref<4x9xf32, #tpu.memory_space<smem>>
    %99 = vector.extract_strided_slice %62 {offsets = [2, 2, 0], sizes = [16, 16, 128], strides = [1, 1, 1]} : vector<18x18x128xf32> to vector<16x16x128xf32>
    %100 = vector.broadcast %98 : f32 to vector<16x16x128xf32>
    %101 = arith.mulf %100, %99 : vector<16x16x128xf32>
    %102 = arith.addf %97, %101 : vector<16x16x128xf32>
    %c1_36 = arith.constant 1 : index
    %c4_37 = arith.constant 4 : index
    %103 = memref.load %arg2[%c1_36, %c4_37] : memref<4x9xf32, #tpu.memory_space<smem>>
    %104 = vector.broadcast %103 : f32 to vector<16x16x128xf32>
    %105 = arith.mulf %104, %0 : vector<16x16x128xf32>
    %c1_38 = arith.constant 1 : index
    %106 = memref.load %arg3[%c1_38] : memref<4xf32, #tpu.memory_space<smem>>
    %107 = vector.broadcast %106 : f32 to vector<16x16x128xf32>
    %108 = arith.addf %105, %107 : vector<16x16x128xf32>
    %c1_39 = arith.constant 1 : index
    %c0_40 = arith.constant 0 : index
    %109 = memref.load %arg2[%c1_39, %c0_40] : memref<4x9xf32, #tpu.memory_space<smem>>
    %110 = vector.broadcast %109 : f32 to vector<16x16x128xf32>
    %111 = arith.mulf %110, %5 : vector<16x16x128xf32>
    %112 = arith.addf %108, %111 : vector<16x16x128xf32>
    %c1_41 = arith.constant 1 : index
    %c1_42 = arith.constant 1 : index
    %113 = memref.load %arg2[%c1_41, %c1_42] : memref<4x9xf32, #tpu.memory_space<smem>>
    %114 = vector.broadcast %113 : f32 to vector<16x16x128xf32>
    %115 = arith.mulf %114, %6 : vector<16x16x128xf32>
    %116 = arith.addf %112, %115 : vector<16x16x128xf32>
    %c1_43 = arith.constant 1 : index
    %c2_44 = arith.constant 2 : index
    %117 = memref.load %arg2[%c1_43, %c2_44] : memref<4x9xf32, #tpu.memory_space<smem>>
    %118 = vector.broadcast %117 : f32 to vector<16x16x128xf32>
    %119 = arith.mulf %118, %7 : vector<16x16x128xf32>
    %120 = arith.addf %116, %119 : vector<16x16x128xf32>
    %c1_45 = arith.constant 1 : index
    %c3_46 = arith.constant 3 : index
    %121 = memref.load %arg2[%c1_45, %c3_46] : memref<4x9xf32, #tpu.memory_space<smem>>
    %122 = vector.broadcast %121 : f32 to vector<16x16x128xf32>
    %123 = arith.mulf %122, %8 : vector<16x16x128xf32>
    %124 = arith.addf %120, %123 : vector<16x16x128xf32>
    %c1_47 = arith.constant 1 : index
    %c5_48 = arith.constant 5 : index
    %125 = memref.load %arg2[%c1_47, %c5_48] : memref<4x9xf32, #tpu.memory_space<smem>>
    %126 = vector.broadcast %125 : f32 to vector<16x16x128xf32>
    %127 = arith.mulf %126, %9 : vector<16x16x128xf32>
    %128 = arith.addf %124, %127 : vector<16x16x128xf32>
    %c1_49 = arith.constant 1 : index
    %c6_50 = arith.constant 6 : index
    %129 = memref.load %arg2[%c1_49, %c6_50] : memref<4x9xf32, #tpu.memory_space<smem>>
    %130 = vector.broadcast %129 : f32 to vector<16x16x128xf32>
    %131 = arith.mulf %130, %10 : vector<16x16x128xf32>
    %132 = arith.addf %128, %131 : vector<16x16x128xf32>
    %c1_51 = arith.constant 1 : index
    %c7_52 = arith.constant 7 : index
    %133 = memref.load %arg2[%c1_51, %c7_52] : memref<4x9xf32, #tpu.memory_space<smem>>
    %134 = vector.broadcast %133 : f32 to vector<16x16x128xf32>
    %135 = arith.mulf %134, %11 : vector<16x16x128xf32>
    %136 = arith.addf %132, %135 : vector<16x16x128xf32>
    %c1_53 = arith.constant 1 : index
    %c8_54 = arith.constant 8 : index
    %137 = memref.load %arg2[%c1_53, %c8_54] : memref<4x9xf32, #tpu.memory_space<smem>>
    %138 = vector.broadcast %137 : f32 to vector<16x16x128xf32>
    %139 = arith.mulf %138, %12 : vector<16x16x128xf32>
    %140 = arith.addf %136, %139 : vector<16x16x128xf32>
    %cst_55 = arith.constant 0.000000e+00 : f32
    %141 = vector.broadcast %cst_55 : f32 to vector<16x16x128xf32>
    %142 = arith.maximumf %140, %141 : vector<16x16x128xf32>
    %c1_56 = arith.constant 1 : index
    %c4_57 = arith.constant 4 : index
    %143 = memref.load %arg4[%c1_56, %c4_57] : memref<4x9xf32, #tpu.memory_space<smem>>
    %144 = vector.broadcast %143 : f32 to vector<16x16x128xf32>
    %145 = arith.mulf %144, %142 : vector<16x16x128xf32>
    %146 = arith.addf %102, %145 : vector<16x16x128xf32>
    %cst_58 = arith.constant 0.000000e+00 : f32
    %147 = vector.broadcast %cst_58 : f32 to vector<1x16x128xf32>
    %148 = tpu.concatenate %147, %142, %147 in 0 : vector<1x16x128xf32>, vector<16x16x128xf32>, vector<1x16x128xf32> -> vector<18x16x128xf32>
    %cst_59 = arith.constant 0.000000e+00 : f32
    %149 = vector.broadcast %cst_59 : f32 to vector<18x1x128xf32>
    %150 = tpu.concatenate %149, %148, %149 in 1 : vector<18x1x128xf32>, vector<18x16x128xf32>, vector<18x1x128xf32> -> vector<18x18x128xf32>
    %c1_60 = arith.constant 1 : index
    %c0_61 = arith.constant 0 : index
    %151 = memref.load %arg4[%c1_60, %c0_61] : memref<4x9xf32, #tpu.memory_space<smem>>
    %152 = vector.extract_strided_slice %150 {offsets = [0, 0, 0], sizes = [16, 16, 128], strides = [1, 1, 1]} : vector<18x18x128xf32> to vector<16x16x128xf32>
    %153 = vector.broadcast %151 : f32 to vector<16x16x128xf32>
    %154 = arith.mulf %153, %152 : vector<16x16x128xf32>
    %155 = arith.addf %146, %154 : vector<16x16x128xf32>
    %c1_62 = arith.constant 1 : index
    %c1_63 = arith.constant 1 : index
    %156 = memref.load %arg4[%c1_62, %c1_63] : memref<4x9xf32, #tpu.memory_space<smem>>
    %157 = vector.extract_strided_slice %150 {offsets = [0, 1, 0], sizes = [16, 16, 128], strides = [1, 1, 1]} : vector<18x18x128xf32> to vector<16x16x128xf32>
    %158 = vector.broadcast %156 : f32 to vector<16x16x128xf32>
    %159 = arith.mulf %158, %157 : vector<16x16x128xf32>
    %160 = arith.addf %155, %159 : vector<16x16x128xf32>
    %c1_64 = arith.constant 1 : index
    %c2_65 = arith.constant 2 : index
    %161 = memref.load %arg4[%c1_64, %c2_65] : memref<4x9xf32, #tpu.memory_space<smem>>
    %162 = vector.extract_strided_slice %150 {offsets = [0, 2, 0], sizes = [16, 16, 128], strides = [1, 1, 1]} : vector<18x18x128xf32> to vector<16x16x128xf32>
    %163 = vector.broadcast %161 : f32 to vector<16x16x128xf32>
    %164 = arith.mulf %163, %162 : vector<16x16x128xf32>
    %165 = arith.addf %160, %164 : vector<16x16x128xf32>
    %c1_66 = arith.constant 1 : index
    %c3_67 = arith.constant 3 : index
    %166 = memref.load %arg4[%c1_66, %c3_67] : memref<4x9xf32, #tpu.memory_space<smem>>
    %167 = vector.extract_strided_slice %150 {offsets = [1, 0, 0], sizes = [16, 16, 128], strides = [1, 1, 1]} : vector<18x18x128xf32> to vector<16x16x128xf32>
    %168 = vector.broadcast %166 : f32 to vector<16x16x128xf32>
    %169 = arith.mulf %168, %167 : vector<16x16x128xf32>
    %170 = arith.addf %165, %169 : vector<16x16x128xf32>
    %c1_68 = arith.constant 1 : index
    %c5_69 = arith.constant 5 : index
    %171 = memref.load %arg4[%c1_68, %c5_69] : memref<4x9xf32, #tpu.memory_space<smem>>
    %172 = vector.extract_strided_slice %150 {offsets = [1, 2, 0], sizes = [16, 16, 128], strides = [1, 1, 1]} : vector<18x18x128xf32> to vector<16x16x128xf32>
    %173 = vector.broadcast %171 : f32 to vector<16x16x128xf32>
    %174 = arith.mulf %173, %172 : vector<16x16x128xf32>
    %175 = arith.addf %170, %174 : vector<16x16x128xf32>
    %c1_70 = arith.constant 1 : index
    %c6_71 = arith.constant 6 : index
    %176 = memref.load %arg4[%c1_70, %c6_71] : memref<4x9xf32, #tpu.memory_space<smem>>
    %177 = vector.extract_strided_slice %150 {offsets = [2, 0, 0], sizes = [16, 16, 128], strides = [1, 1, 1]} : vector<18x18x128xf32> to vector<16x16x128xf32>
    %178 = vector.broadcast %176 : f32 to vector<16x16x128xf32>
    %179 = arith.mulf %178, %177 : vector<16x16x128xf32>
    %180 = arith.addf %175, %179 : vector<16x16x128xf32>
    %c1_72 = arith.constant 1 : index
    %c7_73 = arith.constant 7 : index
    %181 = memref.load %arg4[%c1_72, %c7_73] : memref<4x9xf32, #tpu.memory_space<smem>>
    %182 = vector.extract_strided_slice %150 {offsets = [2, 1, 0], sizes = [16, 16, 128], strides = [1, 1, 1]} : vector<18x18x128xf32> to vector<16x16x128xf32>
    %183 = vector.broadcast %181 : f32 to vector<16x16x128xf32>
    %184 = arith.mulf %183, %182 : vector<16x16x128xf32>
    %185 = arith.addf %180, %184 : vector<16x16x128xf32>
    %c1_74 = arith.constant 1 : index
    %c8_75 = arith.constant 8 : index
    %186 = memref.load %arg4[%c1_74, %c8_75] : memref<4x9xf32, #tpu.memory_space<smem>>
    %187 = vector.extract_strided_slice %150 {offsets = [2, 2, 0], sizes = [16, 16, 128], strides = [1, 1, 1]} : vector<18x18x128xf32> to vector<16x16x128xf32>
    %188 = vector.broadcast %186 : f32 to vector<16x16x128xf32>
    %189 = arith.mulf %188, %187 : vector<16x16x128xf32>
    %190 = arith.addf %185, %189 : vector<16x16x128xf32>
    %c2_76 = arith.constant 2 : index
    %c4_77 = arith.constant 4 : index
    %191 = memref.load %arg2[%c2_76, %c4_77] : memref<4x9xf32, #tpu.memory_space<smem>>
    %192 = vector.broadcast %191 : f32 to vector<16x16x128xf32>
    %193 = arith.mulf %192, %0 : vector<16x16x128xf32>
    %c2_78 = arith.constant 2 : index
    %194 = memref.load %arg3[%c2_78] : memref<4xf32, #tpu.memory_space<smem>>
    %195 = vector.broadcast %194 : f32 to vector<16x16x128xf32>
    %196 = arith.addf %193, %195 : vector<16x16x128xf32>
    %c2_79 = arith.constant 2 : index
    %c0_80 = arith.constant 0 : index
    %197 = memref.load %arg2[%c2_79, %c0_80] : memref<4x9xf32, #tpu.memory_space<smem>>
    %198 = vector.broadcast %197 : f32 to vector<16x16x128xf32>
    %199 = arith.mulf %198, %5 : vector<16x16x128xf32>
    %200 = arith.addf %196, %199 : vector<16x16x128xf32>
    %c2_81 = arith.constant 2 : index
    %c1_82 = arith.constant 1 : index
    %201 = memref.load %arg2[%c2_81, %c1_82] : memref<4x9xf32, #tpu.memory_space<smem>>
    %202 = vector.broadcast %201 : f32 to vector<16x16x128xf32>
    %203 = arith.mulf %202, %6 : vector<16x16x128xf32>
    %204 = arith.addf %200, %203 : vector<16x16x128xf32>
    %c2_83 = arith.constant 2 : index
    %c2_84 = arith.constant 2 : index
    %205 = memref.load %arg2[%c2_83, %c2_84] : memref<4x9xf32, #tpu.memory_space<smem>>
    %206 = vector.broadcast %205 : f32 to vector<16x16x128xf32>
    %207 = arith.mulf %206, %7 : vector<16x16x128xf32>
    %208 = arith.addf %204, %207 : vector<16x16x128xf32>
    %c2_85 = arith.constant 2 : index
    %c3_86 = arith.constant 3 : index
    %209 = memref.load %arg2[%c2_85, %c3_86] : memref<4x9xf32, #tpu.memory_space<smem>>
    %210 = vector.broadcast %209 : f32 to vector<16x16x128xf32>
    %211 = arith.mulf %210, %8 : vector<16x16x128xf32>
    %212 = arith.addf %208, %211 : vector<16x16x128xf32>
    %c2_87 = arith.constant 2 : index
    %c5_88 = arith.constant 5 : index
    %213 = memref.load %arg2[%c2_87, %c5_88] : memref<4x9xf32, #tpu.memory_space<smem>>
    %214 = vector.broadcast %213 : f32 to vector<16x16x128xf32>
    %215 = arith.mulf %214, %9 : vector<16x16x128xf32>
    %216 = arith.addf %212, %215 : vector<16x16x128xf32>
    %c2_89 = arith.constant 2 : index
    %c6_90 = arith.constant 6 : index
    %217 = memref.load %arg2[%c2_89, %c6_90] : memref<4x9xf32, #tpu.memory_space<smem>>
    %218 = vector.broadcast %217 : f32 to vector<16x16x128xf32>
    %219 = arith.mulf %218, %10 : vector<16x16x128xf32>
    %220 = arith.addf %216, %219 : vector<16x16x128xf32>
    %c2_91 = arith.constant 2 : index
    %c7_92 = arith.constant 7 : index
    %221 = memref.load %arg2[%c2_91, %c7_92] : memref<4x9xf32, #tpu.memory_space<smem>>
    %222 = vector.broadcast %221 : f32 to vector<16x16x128xf32>
    %223 = arith.mulf %222, %11 : vector<16x16x128xf32>
    %224 = arith.addf %220, %223 : vector<16x16x128xf32>
    %c2_93 = arith.constant 2 : index
    %c8_94 = arith.constant 8 : index
    %225 = memref.load %arg2[%c2_93, %c8_94] : memref<4x9xf32, #tpu.memory_space<smem>>
    %226 = vector.broadcast %225 : f32 to vector<16x16x128xf32>
    %227 = arith.mulf %226, %12 : vector<16x16x128xf32>
    %228 = arith.addf %224, %227 : vector<16x16x128xf32>
    %cst_95 = arith.constant 0.000000e+00 : f32
    %229 = vector.broadcast %cst_95 : f32 to vector<16x16x128xf32>
    %230 = arith.maximumf %228, %229 : vector<16x16x128xf32>
    %c2_96 = arith.constant 2 : index
    %c4_97 = arith.constant 4 : index
    %231 = memref.load %arg4[%c2_96, %c4_97] : memref<4x9xf32, #tpu.memory_space<smem>>
    %232 = vector.broadcast %231 : f32 to vector<16x16x128xf32>
    %233 = arith.mulf %232, %230 : vector<16x16x128xf32>
    %234 = arith.addf %190, %233 : vector<16x16x128xf32>
    %cst_98 = arith.constant 0.000000e+00 : f32
    %235 = vector.broadcast %cst_98 : f32 to vector<1x16x128xf32>
    %236 = tpu.concatenate %235, %230, %235 in 0 : vector<1x16x128xf32>, vector<16x16x128xf32>, vector<1x16x128xf32> -> vector<18x16x128xf32>
    %cst_99 = arith.constant 0.000000e+00 : f32
    %237 = vector.broadcast %cst_99 : f32 to vector<18x1x128xf32>
    %238 = tpu.concatenate %237, %236, %237 in 1 : vector<18x1x128xf32>, vector<18x16x128xf32>, vector<18x1x128xf32> -> vector<18x18x128xf32>
    %c2_100 = arith.constant 2 : index
    %c0_101 = arith.constant 0 : index
    %239 = memref.load %arg4[%c2_100, %c0_101] : memref<4x9xf32, #tpu.memory_space<smem>>
    %240 = vector.extract_strided_slice %238 {offsets = [0, 0, 0], sizes = [16, 16, 128], strides = [1, 1, 1]} : vector<18x18x128xf32> to vector<16x16x128xf32>
    %241 = vector.broadcast %239 : f32 to vector<16x16x128xf32>
    %242 = arith.mulf %241, %240 : vector<16x16x128xf32>
    %243 = arith.addf %234, %242 : vector<16x16x128xf32>
    %c2_102 = arith.constant 2 : index
    %c1_103 = arith.constant 1 : index
    %244 = memref.load %arg4[%c2_102, %c1_103] : memref<4x9xf32, #tpu.memory_space<smem>>
    %245 = vector.extract_strided_slice %238 {offsets = [0, 1, 0], sizes = [16, 16, 128], strides = [1, 1, 1]} : vector<18x18x128xf32> to vector<16x16x128xf32>
    %246 = vector.broadcast %244 : f32 to vector<16x16x128xf32>
    %247 = arith.mulf %246, %245 : vector<16x16x128xf32>
    %248 = arith.addf %243, %247 : vector<16x16x128xf32>
    %c2_104 = arith.constant 2 : index
    %c2_105 = arith.constant 2 : index
    %249 = memref.load %arg4[%c2_104, %c2_105] : memref<4x9xf32, #tpu.memory_space<smem>>
    %250 = vector.extract_strided_slice %238 {offsets = [0, 2, 0], sizes = [16, 16, 128], strides = [1, 1, 1]} : vector<18x18x128xf32> to vector<16x16x128xf32>
    %251 = vector.broadcast %249 : f32 to vector<16x16x128xf32>
    %252 = arith.mulf %251, %250 : vector<16x16x128xf32>
    %253 = arith.addf %248, %252 : vector<16x16x128xf32>
    %c2_106 = arith.constant 2 : index
    %c3_107 = arith.constant 3 : index
    %254 = memref.load %arg4[%c2_106, %c3_107] : memref<4x9xf32, #tpu.memory_space<smem>>
    %255 = vector.extract_strided_slice %238 {offsets = [1, 0, 0], sizes = [16, 16, 128], strides = [1, 1, 1]} : vector<18x18x128xf32> to vector<16x16x128xf32>
    %256 = vector.broadcast %254 : f32 to vector<16x16x128xf32>
    %257 = arith.mulf %256, %255 : vector<16x16x128xf32>
    %258 = arith.addf %253, %257 : vector<16x16x128xf32>
    %c2_108 = arith.constant 2 : index
    %c5_109 = arith.constant 5 : index
    %259 = memref.load %arg4[%c2_108, %c5_109] : memref<4x9xf32, #tpu.memory_space<smem>>
    %260 = vector.extract_strided_slice %238 {offsets = [1, 2, 0], sizes = [16, 16, 128], strides = [1, 1, 1]} : vector<18x18x128xf32> to vector<16x16x128xf32>
    %261 = vector.broadcast %259 : f32 to vector<16x16x128xf32>
    %262 = arith.mulf %261, %260 : vector<16x16x128xf32>
    %263 = arith.addf %258, %262 : vector<16x16x128xf32>
    %c2_110 = arith.constant 2 : index
    %c6_111 = arith.constant 6 : index
    %264 = memref.load %arg4[%c2_110, %c6_111] : memref<4x9xf32, #tpu.memory_space<smem>>
    %265 = vector.extract_strided_slice %238 {offsets = [2, 0, 0], sizes = [16, 16, 128], strides = [1, 1, 1]} : vector<18x18x128xf32> to vector<16x16x128xf32>
    %266 = vector.broadcast %264 : f32 to vector<16x16x128xf32>
    %267 = arith.mulf %266, %265 : vector<16x16x128xf32>
    %268 = arith.addf %263, %267 : vector<16x16x128xf32>
    %c2_112 = arith.constant 2 : index
    %c7_113 = arith.constant 7 : index
    %269 = memref.load %arg4[%c2_112, %c7_113] : memref<4x9xf32, #tpu.memory_space<smem>>
    %270 = vector.extract_strided_slice %238 {offsets = [2, 1, 0], sizes = [16, 16, 128], strides = [1, 1, 1]} : vector<18x18x128xf32> to vector<16x16x128xf32>
    %271 = vector.broadcast %269 : f32 to vector<16x16x128xf32>
    %272 = arith.mulf %271, %270 : vector<16x16x128xf32>
    %273 = arith.addf %268, %272 : vector<16x16x128xf32>
    %c2_114 = arith.constant 2 : index
    %c8_115 = arith.constant 8 : index
    %274 = memref.load %arg4[%c2_114, %c8_115] : memref<4x9xf32, #tpu.memory_space<smem>>
    %275 = vector.extract_strided_slice %238 {offsets = [2, 2, 0], sizes = [16, 16, 128], strides = [1, 1, 1]} : vector<18x18x128xf32> to vector<16x16x128xf32>
    %276 = vector.broadcast %274 : f32 to vector<16x16x128xf32>
    %277 = arith.mulf %276, %275 : vector<16x16x128xf32>
    %278 = arith.addf %273, %277 : vector<16x16x128xf32>
    %c3_116 = arith.constant 3 : index
    %c4_117 = arith.constant 4 : index
    %279 = memref.load %arg2[%c3_116, %c4_117] : memref<4x9xf32, #tpu.memory_space<smem>>
    %280 = vector.broadcast %279 : f32 to vector<16x16x128xf32>
    %281 = arith.mulf %280, %0 : vector<16x16x128xf32>
    %c3_118 = arith.constant 3 : index
    %282 = memref.load %arg3[%c3_118] : memref<4xf32, #tpu.memory_space<smem>>
    %283 = vector.broadcast %282 : f32 to vector<16x16x128xf32>
    %284 = arith.addf %281, %283 : vector<16x16x128xf32>
    %c3_119 = arith.constant 3 : index
    %c0_120 = arith.constant 0 : index
    %285 = memref.load %arg2[%c3_119, %c0_120] : memref<4x9xf32, #tpu.memory_space<smem>>
    %286 = vector.broadcast %285 : f32 to vector<16x16x128xf32>
    %287 = arith.mulf %286, %5 : vector<16x16x128xf32>
    %288 = arith.addf %284, %287 : vector<16x16x128xf32>
    %c3_121 = arith.constant 3 : index
    %c1_122 = arith.constant 1 : index
    %289 = memref.load %arg2[%c3_121, %c1_122] : memref<4x9xf32, #tpu.memory_space<smem>>
    %290 = vector.broadcast %289 : f32 to vector<16x16x128xf32>
    %291 = arith.mulf %290, %6 : vector<16x16x128xf32>
    %292 = arith.addf %288, %291 : vector<16x16x128xf32>
    %c3_123 = arith.constant 3 : index
    %c2_124 = arith.constant 2 : index
    %293 = memref.load %arg2[%c3_123, %c2_124] : memref<4x9xf32, #tpu.memory_space<smem>>
    %294 = vector.broadcast %293 : f32 to vector<16x16x128xf32>
    %295 = arith.mulf %294, %7 : vector<16x16x128xf32>
    %296 = arith.addf %292, %295 : vector<16x16x128xf32>
    %c3_125 = arith.constant 3 : index
    %c3_126 = arith.constant 3 : index
    %297 = memref.load %arg2[%c3_125, %c3_126] : memref<4x9xf32, #tpu.memory_space<smem>>
    %298 = vector.broadcast %297 : f32 to vector<16x16x128xf32>
    %299 = arith.mulf %298, %8 : vector<16x16x128xf32>
    %300 = arith.addf %296, %299 : vector<16x16x128xf32>
    %c3_127 = arith.constant 3 : index
    %c5_128 = arith.constant 5 : index
    %301 = memref.load %arg2[%c3_127, %c5_128] : memref<4x9xf32, #tpu.memory_space<smem>>
    %302 = vector.broadcast %301 : f32 to vector<16x16x128xf32>
    %303 = arith.mulf %302, %9 : vector<16x16x128xf32>
    %304 = arith.addf %300, %303 : vector<16x16x128xf32>
    %c3_129 = arith.constant 3 : index
    %c6_130 = arith.constant 6 : index
    %305 = memref.load %arg2[%c3_129, %c6_130] : memref<4x9xf32, #tpu.memory_space<smem>>
    %306 = vector.broadcast %305 : f32 to vector<16x16x128xf32>
    %307 = arith.mulf %306, %10 : vector<16x16x128xf32>
    %308 = arith.addf %304, %307 : vector<16x16x128xf32>
    %c3_131 = arith.constant 3 : index
    %c7_132 = arith.constant 7 : index
    %309 = memref.load %arg2[%c3_131, %c7_132] : memref<4x9xf32, #tpu.memory_space<smem>>
    %310 = vector.broadcast %309 : f32 to vector<16x16x128xf32>
    %311 = arith.mulf %310, %11 : vector<16x16x128xf32>
    %312 = arith.addf %308, %311 : vector<16x16x128xf32>
    %c3_133 = arith.constant 3 : index
    %c8_134 = arith.constant 8 : index
    %313 = memref.load %arg2[%c3_133, %c8_134] : memref<4x9xf32, #tpu.memory_space<smem>>
    %314 = vector.broadcast %313 : f32 to vector<16x16x128xf32>
    %315 = arith.mulf %314, %12 : vector<16x16x128xf32>
    %316 = arith.addf %312, %315 : vector<16x16x128xf32>
    %cst_135 = arith.constant 0.000000e+00 : f32
    %317 = vector.broadcast %cst_135 : f32 to vector<16x16x128xf32>
    %318 = arith.maximumf %316, %317 : vector<16x16x128xf32>
    %c3_136 = arith.constant 3 : index
    %c4_137 = arith.constant 4 : index
    %319 = memref.load %arg4[%c3_136, %c4_137] : memref<4x9xf32, #tpu.memory_space<smem>>
    %320 = vector.broadcast %319 : f32 to vector<16x16x128xf32>
    %321 = arith.mulf %320, %318 : vector<16x16x128xf32>
    %322 = arith.addf %278, %321 : vector<16x16x128xf32>
    %cst_138 = arith.constant 0.000000e+00 : f32
    %323 = vector.broadcast %cst_138 : f32 to vector<1x16x128xf32>
    %324 = tpu.concatenate %323, %318, %323 in 0 : vector<1x16x128xf32>, vector<16x16x128xf32>, vector<1x16x128xf32> -> vector<18x16x128xf32>
    %cst_139 = arith.constant 0.000000e+00 : f32
    %325 = vector.broadcast %cst_139 : f32 to vector<18x1x128xf32>
    %326 = tpu.concatenate %325, %324, %325 in 1 : vector<18x1x128xf32>, vector<18x16x128xf32>, vector<18x1x128xf32> -> vector<18x18x128xf32>
    %c3_140 = arith.constant 3 : index
    %c0_141 = arith.constant 0 : index
    %327 = memref.load %arg4[%c3_140, %c0_141] : memref<4x9xf32, #tpu.memory_space<smem>>
    %328 = vector.extract_strided_slice %326 {offsets = [0, 0, 0], sizes = [16, 16, 128], strides = [1, 1, 1]} : vector<18x18x128xf32> to vector<16x16x128xf32>
    %329 = vector.broadcast %327 : f32 to vector<16x16x128xf32>
    %330 = arith.mulf %329, %328 : vector<16x16x128xf32>
    %331 = arith.addf %322, %330 : vector<16x16x128xf32>
    %c3_142 = arith.constant 3 : index
    %c1_143 = arith.constant 1 : index
    %332 = memref.load %arg4[%c3_142, %c1_143] : memref<4x9xf32, #tpu.memory_space<smem>>
    %333 = vector.extract_strided_slice %326 {offsets = [0, 1, 0], sizes = [16, 16, 128], strides = [1, 1, 1]} : vector<18x18x128xf32> to vector<16x16x128xf32>
    %334 = vector.broadcast %332 : f32 to vector<16x16x128xf32>
    %335 = arith.mulf %334, %333 : vector<16x16x128xf32>
    %336 = arith.addf %331, %335 : vector<16x16x128xf32>
    %c3_144 = arith.constant 3 : index
    %c2_145 = arith.constant 2 : index
    %337 = memref.load %arg4[%c3_144, %c2_145] : memref<4x9xf32, #tpu.memory_space<smem>>
    %338 = vector.extract_strided_slice %326 {offsets = [0, 2, 0], sizes = [16, 16, 128], strides = [1, 1, 1]} : vector<18x18x128xf32> to vector<16x16x128xf32>
    %339 = vector.broadcast %337 : f32 to vector<16x16x128xf32>
    %340 = arith.mulf %339, %338 : vector<16x16x128xf32>
    %341 = arith.addf %336, %340 : vector<16x16x128xf32>
    %c3_146 = arith.constant 3 : index
    %c3_147 = arith.constant 3 : index
    %342 = memref.load %arg4[%c3_146, %c3_147] : memref<4x9xf32, #tpu.memory_space<smem>>
    %343 = vector.extract_strided_slice %326 {offsets = [1, 0, 0], sizes = [16, 16, 128], strides = [1, 1, 1]} : vector<18x18x128xf32> to vector<16x16x128xf32>
    %344 = vector.broadcast %342 : f32 to vector<16x16x128xf32>
    %345 = arith.mulf %344, %343 : vector<16x16x128xf32>
    %346 = arith.addf %341, %345 : vector<16x16x128xf32>
    %c3_148 = arith.constant 3 : index
    %c5_149 = arith.constant 5 : index
    %347 = memref.load %arg4[%c3_148, %c5_149] : memref<4x9xf32, #tpu.memory_space<smem>>
    %348 = vector.extract_strided_slice %326 {offsets = [1, 2, 0], sizes = [16, 16, 128], strides = [1, 1, 1]} : vector<18x18x128xf32> to vector<16x16x128xf32>
    %349 = vector.broadcast %347 : f32 to vector<16x16x128xf32>
    %350 = arith.mulf %349, %348 : vector<16x16x128xf32>
    %351 = arith.addf %346, %350 : vector<16x16x128xf32>
    %c3_150 = arith.constant 3 : index
    %c6_151 = arith.constant 6 : index
    %352 = memref.load %arg4[%c3_150, %c6_151] : memref<4x9xf32, #tpu.memory_space<smem>>
    %353 = vector.extract_strided_slice %326 {offsets = [2, 0, 0], sizes = [16, 16, 128], strides = [1, 1, 1]} : vector<18x18x128xf32> to vector<16x16x128xf32>
    %354 = vector.broadcast %352 : f32 to vector<16x16x128xf32>
    %355 = arith.mulf %354, %353 : vector<16x16x128xf32>
    %356 = arith.addf %351, %355 : vector<16x16x128xf32>
    %c3_152 = arith.constant 3 : index
    %c7_153 = arith.constant 7 : index
    %357 = memref.load %arg4[%c3_152, %c7_153] : memref<4x9xf32, #tpu.memory_space<smem>>
    %358 = vector.extract_strided_slice %326 {offsets = [2, 1, 0], sizes = [16, 16, 128], strides = [1, 1, 1]} : vector<18x18x128xf32> to vector<16x16x128xf32>
    %359 = vector.broadcast %357 : f32 to vector<16x16x128xf32>
    %360 = arith.mulf %359, %358 : vector<16x16x128xf32>
    %361 = arith.addf %356, %360 : vector<16x16x128xf32>
    %c3_154 = arith.constant 3 : index
    %c8_155 = arith.constant 8 : index
    %362 = memref.load %arg4[%c3_154, %c8_155] : memref<4x9xf32, #tpu.memory_space<smem>>
    %363 = vector.extract_strided_slice %326 {offsets = [2, 2, 0], sizes = [16, 16, 128], strides = [1, 1, 1]} : vector<18x18x128xf32> to vector<16x16x128xf32>
    %364 = vector.broadcast %362 : f32 to vector<16x16x128xf32>
    %365 = arith.mulf %364, %363 : vector<16x16x128xf32>
    %366 = arith.addf %361, %365 : vector<16x16x128xf32>
    %cst_156 = arith.constant 0.000000e+00 : f32
    %367 = vector.broadcast %cst_156 : f32 to vector<16x16x128xf32>
    %368 = arith.maximumf %366, %367 : vector<16x16x128xf32>
    %c0_157 = arith.constant 0 : index
    %c0_158 = arith.constant 0 : index
    %c0_159 = arith.constant 0 : index
    %369 = vector.load %arg6[%c0_157, %c0_158, %c0_159] : memref<16x16x128xf32, #tpu.memory_space<vmem>>, vector<16x16x128xf32>
    tpu.vector_store %arg6[%c0_157, %c0_158, %c0_159], %368 {strides = array<i32>} : memref<16x16x128xf32, #tpu.memory_space<vmem>>, vector<16x16x128xf32>,
    return
  }
  func.func @transform_0(%arg0: i32) -> (i32, i32, i32) {
    %c0_i32 = arith.constant 0 : i32
    %c0_i32_0 = arith.constant 0 : i32
    %c0_i32_1 = arith.constant 0 : i32
    return %c0_i32, %c0_i32_0, %arg0 : i32, i32, i32
  }
  func.func @transform_1(%arg0: i32) -> (i32, i32) {
    %c0_i32 = arith.constant 0 : i32
    %c0_i32_0 = arith.constant 0 : i32
    %c0_i32_1 = arith.constant 0 : i32
    return %c0_i32, %c0_i32_0 : i32, i32
  }
  func.func @transform_2(%arg0: i32) -> i32 {
    %c0_i32 = arith.constant 0 : i32
    %c0_i32_0 = arith.constant 0 : i32
    return %c0_i32 : i32
  }
  func.func @transform_3(%arg0: i32) -> (i32, i32) {
    %c0_i32 = arith.constant 0 : i32
    %c0_i32_0 = arith.constant 0 : i32
    %c0_i32_1 = arith.constant 0 : i32
    return %c0_i32, %c0_i32_0 : i32, i32
  }
  func.func @transform_4(%arg0: i32) -> i32 {
    %c0_i32 = arith.constant 0 : i32
    %c0_i32_0 = arith.constant 0 : i32
    return %c0_i32 : i32
  }
  func.func @transform_5(%arg0: i32) -> (i32, i32, i32) {
    %c0_i32 = arith.constant 0 : i32
    %c0_i32_0 = arith.constant 0 : i32
    %c0_i32_1 = arith.constant 0 : i32
    return %c0_i32, %c0_i32_0, %arg0 : i32, i32, i32
  }
}

</mosaic_0001>

<llo_original>
// kernel: tpu_custom_call.1
$region0: #{tpu_custom_call.1}
  #allocation0 [shape = 'u32[]', space=smem, size = 0x4, offset = 0x4, fixed_abs, tag = 'smem constant byte address 0x4 - core index']
  #allocation1 [shape = 'u32[144,128]{1,0:T(1,128)}', space=vmem, size = 0x12000, scoped, tag = 'internal scratch']
  #allocation2 [shape = 'f32[1]{0:T(128)S(6)}', space=smem, size = 0x200, scoped, tag = 'scoped memory for tpu_custom_call.1']
  %s0 = inlined_call_operand.hbm [shape: f32[16,16,128], index: 0, kind: input, shape index: {}]
  %s1 = inlined_call_operand.hbm [shape: f32[4,9], index: 1, kind: input, shape index: {}]
  %s2 = inlined_call_operand.vmem [shape: f32[4], index: 2, kind: input, shape index: {}]
  %s3 = inlined_call_operand.vmem [shape: f32[4,9], index: 3, kind: input, shape index: {}]
  %s4 = inlined_call_operand.<no memory space> [shape: f32[1], index: 4, kind: input, shape index: {}]
  %s5 = inlined_call_operand.hbm [shape: f32[16,16,128], index: 5, kind: output, shape index: {}]
  %s6 = sld [smem:[#allocation0]]
  $region46: #{tpu_custom_call.1} parent=0
    _
  %s8 = ssub.s32 1, %s6
  %s9 = scalar_select 0, %s8, %s6
  %10 = sst [smem:[#allocation2]] %s4
  $region1: #{tpu_custom_call.1} parent=0
    #allocation3 [shape = 'u8[131072]{0}', space=vmem, size = 0x20000, scoped, tag = 'input window, operand 0, single buffered']
    #allocation4 [shape = 's32[1]{0}', space=sflag, size = 0x4, scoped, tag = 'scoped memory for tpu_custom_call.1']
    #allocation5 [shape = 's32[1]{0}', space=sflag, size = 0x4, scoped, tag = 'scoped memory for tpu_custom_call.1']
    #allocation6 [shape = 's32[1]{0}', space=sflag, size = 0x4, scoped, tag = 'scoped memory for tpu_custom_call.1']
    #allocation7 [shape = 's32[1]{0}', space=sflag, size = 0x4, scoped, tag = 'scoped memory for tpu_custom_call.1']
    #allocation8 [shape = 'u8[2048]{0}', space=smem, size = 0x800, scoped, tag = 'input window, operand 1, single buffered']
    #allocation9 [shape = 'u8[512]{0}', space=smem, size = 0x200, scoped, tag = 'input window, operand 2, single buffered']
    #allocation10 [shape = 'u8[2048]{0}', space=smem, size = 0x800, scoped, tag = 'input window, operand 3, single buffered']
    #allocation11 [shape = 's32[1]{0}', space=sflag, size = 0x4, scoped, tag = 'scoped memory for tpu_custom_call.1']
    #allocation12 [shape = 'u8[131072]{0}', space=vmem, size = 0x20000, scoped, tag = 'output window, operand 0, single buffered']
    %11 = vsyncpa [#allocation4], 0
    %12 = vsyncpa [#allocation6], 0
    %13 = vsyncpa [#allocation7], 0
    %14 = vsyncpa [#allocation11], 0
    %15 = vsyncpa [#allocation5], 0
    // Predicated region
    $region2: #{tpu_custom_call.1} parent=1 // pred_check
      _
    $region3: #{tpu_custom_call.1} parent=1 // pred_check_branch
      %17 = sbr.rel (0) target = $region5
    $region4: #{tpu_custom_call.1} parent=1 // pred_region
      %s19 = ssub.s32 4096, 4096
      %20 = vsyncadd [#allocation4], %s19
      %s21 = sshll.u32 [#allocation3], 4
      %s22 = int_to_ptr.vmem [resolvable:$true] %s21
      %27 = dma.hbm_to_vmem [thread:$0]  %s0, 4096, %s22, [#allocation4], 128, 128, 8
    $region5: #{tpu_custom_call.1} parent=1 // pred_fallthru
      _
    // Predicated region
    $region6: #{tpu_custom_call.1} parent=1 // pred_check
      _
    $region7: #{tpu_custom_call.1} parent=1 // pred_check_branch
      %29 = sbr.rel (0) target = $region9
    $region8: #{tpu_custom_call.1} parent=1 // pred_region
      %s31 = ssub.s32 64, 64
      %32 = vsyncadd [#allocation6], %s31
      %35 = dma.hbm_to_smem %s1, 64, [#allocation8], [#allocation6]
    $region9: #{tpu_custom_call.1} parent=1 // pred_fallthru
      _
    // Predicated region
    $region10: #{tpu_custom_call.1} parent=1 // pred_check
      _
    $region11: #{tpu_custom_call.1} parent=1 // pred_check_branch
      %37 = sbr.rel (0) target = $region13
    $region12: #{tpu_custom_call.1} parent=1 // pred_region
      %s39 = ssub.s32 16, 16
      %40 = vsyncadd [#allocation7], %s39
      %s42 = sshll.u32 %s2, 4
      %s43 = int_to_ptr.vmem [resolvable:$true] %s42
      %45 = dma.vmem_to_smem %s43, 16, [#allocation9], [#allocation7]
    $region13: #{tpu_custom_call.1} parent=1 // pred_fallthru
      _
    // Predicated region
    $region14: #{tpu_custom_call.1} parent=1 // pred_check
      _
    $region15: #{tpu_custom_call.1} parent=1 // pred_check_branch
      %47 = sbr.rel (0) target = $region17
    $region16: #{tpu_custom_call.1} parent=1 // pred_region
      %s49 = ssub.s32 64, 64
      %50 = vsyncadd [#allocation11], %s49
      %s52 = sshll.u32 %s3, 4
      %s53 = int_to_ptr.vmem [resolvable:$true] %s52
      %55 = dma.vmem_to_smem %s53, 64, [#allocation10], [#allocation11]
    $region17: #{tpu_custom_call.1} parent=1 // pred_fallthru
      _
    // Predicated region
    $region18: #{tpu_custom_call.1} parent=1 // pred_check
      _
    $region19: #{tpu_custom_call.1} parent=1 // pred_check_branch
      %57 = sbr.rel (0) target = $region21
    $region20: #{tpu_custom_call.1} parent=1 // pred_region
      _
    $region21: #{tpu_custom_call.1} parent=1 // pred_fallthru
      _
    // Predicated region
    $region22: #{tpu_custom_call.1} parent=1 // pred_check
      _
    $region23: #{tpu_custom_call.1} parent=1 // pred_check_branch
      %59 = sbr.rel (0) target = $region25
    $region24: #{tpu_custom_call.1} parent=1 // pred_region
      %60 = dma.done [#allocation4], 4096
    $region25: #{tpu_custom_call.1} parent=1 // pred_fallthru
      _
    // Predicated region
    $region26: #{tpu_custom_call.1} parent=1 // pred_check
      _
    $region27: #{tpu_custom_call.1} parent=1 // pred_check_branch
      %62 = sbr.rel (0) target = $region29
    $region28: #{tpu_custom_call.1} parent=1 // pred_region
      %63 = dma.done [#allocation6], 64
    $region29: #{tpu_custom_call.1} parent=1 // pred_fallthru
      _
    // Predicated region
    $region30: #{tpu_custom_call.1} parent=1 // pred_check
      _
    $region31: #{tpu_custom_call.1} parent=1 // pred_check_branch
      %65 = sbr.rel (0) target = $region33
    $region32: #{tpu_custom_call.1} parent=1 // pred_region
      %66 = dma.done [#allocation7], 16
    $region33: #{tpu_custom_call.1} parent=1 // pred_fallthru
      _
    // Predicated region
    $region34: #{tpu_custom_call.1} parent=1 // pred_check
      _
    $region35: #{tpu_custom_call.1} parent=1 // pred_check_branch
      %68 = sbr.rel (0) target = $region37
    $region36: #{tpu_custom_call.1} parent=1 // pred_region
      %69 = dma.done [#allocation11], 64
    $region37: #{tpu_custom_call.1} parent=1 // pred_fallthru
      _
    %70 = sfence
    %v71 = vld [vmem:[#allocation3] sm:$0xff]
    %v72 = vld [vmem:[#allocation3 + $0x8] sm:$0xff]
    %v73 = vld [vmem:[#allocation3 + $0x10] sm:$0xff]
    %v74 = vld [vmem:[#allocation3 + $0x18] sm:$0xff]
    %v75 = vld [vmem:[#allocation3 + $0x20] sm:$0xff]
    %v76 = vld [vmem:[#allocation3 + $0x28] sm:$0xff]
    %v77 = vld [vmem:[#allocation3 + $0x30] sm:$0xff]
    %v78 = vld [vmem:[#allocation3 + $0x38] sm:$0xff]
    %v79 = vld [vmem:[#allocation3 + $0x40] sm:$0xff]
    %v80 = vld [vmem:[#allocation3 + $0x48] sm:$0xff]
    %v81 = vld [vmem:[#allocation3 + $0x50] sm:$0xff]
    %v82 = vld [vmem:[#allocation3 + $0x58] sm:$0xff]
    %v83 = vld [vmem:[#allocation3 + $0x60] sm:$0xff]
    %v84 = vld [vmem:[#allocation3 + $0x68] sm:$0xff]
    %v85 = vld [vmem:[#allocation3 + $0x70] sm:$0xff]
    %v86 = vld [vmem:[#allocation3 + $0x78] sm:$0xff]
    %v87 = vld [vmem:[#allocation3 + $0x80] sm:$0xff]
    %v88 = vld [vmem:[#allocation3 + $0x88] sm:$0xff]
    %v89 = vld [vmem:[#allocation3 + $0x90] sm:$0xff]
    %v90 = vld [vmem:[#allocation3 + $0x98] sm:$0xff]
    %v91 = vld [vmem:[#allocation3 + $0xa0] sm:$0xff]
    %v92 = vld [vmem:[#allocation3 + $0xa8] sm:$0xff]
    %v93 = vld [vmem:[#allocation3 + $0xb0] sm:$0xff]
    %v94 = vld [vmem:[#allocation3 + $0xb8] sm:$0xff]
    %v95 = vld [vmem:[#allocation3 + $0xc0] sm:$0xff]
    %v96 = vld [vmem:[#allocation3 + $0xc8] sm:$0xff]
    %v97 = vld [vmem:[#allocation3 + $0xd0] sm:$0xff]
    %v98 = vld [vmem:[#allocation3 + $0xd8] sm:$0xff]
    %v99 = vld [vmem:[#allocation3 + $0xe0] sm:$0xff]
    %v100 = vld [vmem:[#allocation3 + $0xe8] sm:$0xff]
    %v101 = vld [vmem:[#allocation3 + $0xf0] sm:$0xff]
    %v102 = vld [vmem:[#allocation3 + $0xf8] sm:$0xff]
    %vm136 = vcmask 1040384
    %v137 = vrot.slane 0.0, 7
    %v138 = vsel %vm136, %v137, %v137
    %v139 = vrot.slane %v71, 7
    %v140 = vrot.slane %v72, 7
    %v141 = vsel %vm136, %v139, %v140
    %v142 = vrot.slane %v73, 7
    %v143 = vrot.slane %v74, 7
    %v144 = vsel %vm136, %v142, %v143
    %v145 = vrot.slane %v75, 7
    %v146 = vrot.slane %v76, 7
    %v147 = vsel %vm136, %v145, %v146
    %v148 = vrot.slane %v77, 7
    %v149 = vrot.slane %v78, 7
    %v150 = vsel %vm136, %v148, %v149
    %v151 = vrot.slane %v79, 7
    %v152 = vrot.slane %v80, 7
    %v153 = vsel %vm136, %v151, %v152
    %v154 = vrot.slane %v81, 7
    %v155 = vrot.slane %v82, 7
    %v156 = vsel %vm136, %v154, %v155
    %v157 = vrot.slane %v83, 7
    %v158 = vrot.slane %v84, 7
    %v159 = vsel %vm136, %v157, %v158
    %v160 = vrot.slane %v85, 7
    %v161 = vrot.slane %v86, 7
    %v162 = vsel %vm136, %v160, %v161
    %v163 = vrot.slane %v87, 7
    %v164 = vrot.slane %v88, 7
    %v165 = vsel %vm136, %v163, %v164
    %v166 = vrot.slane %v89, 7
    %v167 = vrot.slane %v90, 7
    %v168 = vsel %vm136, %v166, %v167
    %v169 = vrot.slane %v91, 7
    %v170 = vrot.slane %v92, 7
    %v171 = vsel %vm136, %v169, %v170
    %v172 = vrot.slane %v93, 7
    %v173 = vrot.slane %v94, 7
    %v174 = vsel %vm136, %v172, %v173
    %v175 = vrot.slane %v95, 7
    %v176 = vrot.slane %v96, 7
    %v177 = vsel %vm136, %v175, %v176
    %v178 = vrot.slane %v97, 7
    %v179 = vrot.slane %v98, 7
    %v180 = vsel %vm136, %v178, %v179
    %v181 = vrot.slane %v99, 7
    %v182 = vrot.slane %v100, 7
    %v183 = vsel %vm136, %v181, %v182
    %v184 = vrot.slane %v101, 7
    %v185 = vrot.slane %v102, 7
    %v186 = vsel %vm136, %v184, %v185
    %v237 = vsel %vm136, 0.0, %v137
    %v238 = vsel %vm136, 0.0, %v139
    %v239 = vsel %vm136, 0.0, %v142
    %v240 = vsel %vm136, 0.0, %v145
    %v241 = vsel %vm136, 0.0, %v148
    %v242 = vsel %vm136, 0.0, %v151
    %v243 = vsel %vm136, 0.0, %v154
    %v244 = vsel %vm136, 0.0, %v157
    %v245 = vsel %vm136, 0.0, %v160
    %v246 = vsel %vm136, 0.0, %v163
    %v247 = vsel %vm136, 0.0, %v166
    %v248 = vsel %vm136, 0.0, %v169
    %v249 = vsel %vm136, 0.0, %v172
    %v250 = vsel %vm136, 0.0, %v175
    %v251 = vsel %vm136, 0.0, %v178
    %v252 = vsel %vm136, 0.0, %v181
    %v253 = vsel %vm136, 0.0, %v184
    %v254 = vsel %vm136, %v137, 0.0
    %v255 = vsel %vm136, %v140, 0.0
    %v256 = vsel %vm136, %v143, 0.0
    %v257 = vsel %vm136, %v146, 0.0
    %v258 = vsel %vm136, %v149, 0.0
    %v259 = vsel %vm136, %v152, 0.0
    %v260 = vsel %vm136, %v155, 0.0
    %v261 = vsel %vm136, %v158, 0.0
    %v262 = vsel %vm136, %v161, 0.0
    %v263 = vsel %vm136, %v164, 0.0
    %v264 = vsel %vm136, %v167, 0.0
    %v265 = vsel %vm136, %v170, 0.0
    %v266 = vsel %vm136, %v173, 0.0
    %v267 = vsel %vm136, %v176, 0.0
    %v268 = vsel %vm136, %v179, 0.0
    %v269 = vsel %vm136, %v182, 0.0
    %v270 = vsel %vm136, %v185, 0.0
    %s271 = sld [smem:[#allocation8 + $0x4]]
    %v272 = vstv %s271
    %v273 = vmul.f32 %v272, %v71
    %v274 = vmul.f32 %v272, %v72
    %v275 = vmul.f32 %v272, %v73
    %v276 = vmul.f32 %v272, %v74
    %v277 = vmul.f32 %v272, %v75
    %v278 = vmul.f32 %v272, %v76
    %v279 = vmul.f32 %v272, %v77
    %v280 = vmul.f32 %v272, %v78
    %v281 = vmul.f32 %v272, %v79
    %v282 = vmul.f32 %v272, %v80
    %v283 = vmul.f32 %v272, %v81
    %v284 = vmul.f32 %v272, %v82
    %v285 = vmul.f32 %v272, %v83
    %v286 = vmul.f32 %v272, %v84
    %v287 = vmul.f32 %v272, %v85
    %v288 = vmul.f32 %v272, %v86
    %v289 = vmul.f32 %v272, %v87
    %v290 = vmul.f32 %v272, %v88
    %v291 = vmul.f32 %v272, %v89
    %v292 = vmul.f32 %v272, %v90
    %v293 = vmul.f32 %v272, %v91
    %v294 = vmul.f32 %v272, %v92
    %v295 = vmul.f32 %v272, %v93
    %v296 = vmul.f32 %v272, %v94
    %v297 = vmul.f32 %v272, %v95
    %v298 = vmul.f32 %v272, %v96
    %v299 = vmul.f32 %v272, %v97
    %v300 = vmul.f32 %v272, %v98
    %v301 = vmul.f32 %v272, %v99
    %v302 = vmul.f32 %v272, %v100
    %v303 = vmul.f32 %v272, %v101
    %v304 = vmul.f32 %v272, %v102
    %s305 = sld [smem:[#allocation9]]
    %v306 = vstv %s305
    %v307 = vadd.f32 %v273, %v306
    %v308 = vadd.f32 %v274, %v306
    %v309 = vadd.f32 %v275, %v306
    %v310 = vadd.f32 %v276, %v306
    %v311 = vadd.f32 %v277, %v306
    %v312 = vadd.f32 %v278, %v306
    %v313 = vadd.f32 %v279, %v306
    %v314 = vadd.f32 %v280, %v306
    %v315 = vadd.f32 %v281, %v306
    %v316 = vadd.f32 %v282, %v306
    %v317 = vadd.f32 %v283, %v306
    %v318 = vadd.f32 %v284, %v306
    %v319 = vadd.f32 %v285, %v306
    %v320 = vadd.f32 %v286, %v306
    %v321 = vadd.f32 %v287, %v306
    %v322 = vadd.f32 %v288, %v306
    %v323 = vadd.f32 %v289, %v306
    %v324 = vadd.f32 %v290, %v306
    %v325 = vadd.f32 %v291, %v306
    %v326 = vadd.f32 %v292, %v306
    %v327 = vadd.f32 %v293, %v306
    %v328 = vadd.f32 %v294, %v306
    %v329 = vadd.f32 %v295, %v306
    %v330 = vadd.f32 %v296, %v306
    %v331 = vadd.f32 %v297, %v306
    %v332 = vadd.f32 %v298, %v306
    %v333 = vadd.f32 %v299, %v306
    %v334 = vadd.f32 %v300, %v306
    %v335 = vadd.f32 %v301, %v306
    %v336 = vadd.f32 %v302, %v306
    %v337 = vadd.f32 %v303, %v306
    %v338 = vadd.f32 %v304, %v306
    %s339 = sld [smem:[#allocation8]]
    %v340 = vstv %s339
    %v341 = vmul.f32 %v340, %v237
    %v342 = vmul.f32 %v340, %v138
    %v343 = vmul.f32 %v340, %v238
    %v344 = vmul.f32 %v340, %v141
    %v345 = vmul.f32 %v340, %v239
    %v346 = vmul.f32 %v340, %v144
    %v347 = vmul.f32 %v340, %v240
    %v348 = vmul.f32 %v340, %v147
    %v349 = vmul.f32 %v340, %v241
    %v350 = vmul.f32 %v340, %v150
    %v351 = vmul.f32 %v340, %v242
    %v352 = vmul.f32 %v340, %v153
    %v353 = vmul.f32 %v340, %v243
    %v354 = vmul.f32 %v340, %v156
    %v355 = vmul.f32 %v340, %v244
    %v356 = vmul.f32 %v340, %v159
    %v357 = vmul.f32 %v340, %v245
    %v358 = vmul.f32 %v340, %v162
    %v359 = vmul.f32 %v340, %v246
    %v360 = vmul.f32 %v340, %v165
    %v361 = vmul.f32 %v340, %v247
    %v362 = vmul.f32 %v340, %v168
    %v363 = vmul.f32 %v340, %v248
    %v364 = vmul.f32 %v340, %v171
    %v365 = vmul.f32 %v340, %v249
    %v366 = vmul.f32 %v340, %v174
    %v367 = vmul.f32 %v340, %v250
    %v368 = vmul.f32 %v340, %v177
    %v369 = vmul.f32 %v340, %v251
    %v370 = vmul.f32 %v340, %v180
    %v371 = vmul.f32 %v340, %v252
    %v372 = vmul.f32 %v340, %v183
    %v373 = vadd.f32 %v307, %v341
    %v374 = vadd.f32 %v308, %v342
    %v375 = vadd.f32 %v309, %v343
    %v376 = vadd.f32 %v310, %v344
    %v377 = vadd.f32 %v311, %v345
    %v378 = vadd.f32 %v312, %v346
    %v379 = vadd.f32 %v313, %v347
    %v380 = vadd.f32 %v314, %v348
    %v381 = vadd.f32 %v315, %v349
    %v382 = vadd.f32 %v316, %v350
    %v383 = vadd.f32 %v317, %v351
    %v384 = vadd.f32 %v318, %v352
    %v385 = vadd.f32 %v319, %v353
    %v386 = vadd.f32 %v320, %v354
    %v387 = vadd.f32 %v321, %v355
    %v388 = vadd.f32 %v322, %v356
    %v389 = vadd.f32 %v323, %v357
    %v390 = vadd.f32 %v324, %v358
    %v391 = vadd.f32 %v325, %v359
    %v392 = vadd.f32 %v326, %v360
    %v393 = vadd.f32 %v327, %v361
    %v394 = vadd.f32 %v328, %v362
    %v395 = vadd.f32 %v329, %v363
    %v396 = vadd.f32 %v330, %v364
    %v397 = vadd.f32 %v331, %v365
    %v398 = vadd.f32 %v332, %v366
    %v399 = vadd.f32 %v333, %v367
    %v400 = vadd.f32 %v334, %v368
    %v401 = vadd.f32 %v335, %v369
    %v402 = vadd.f32 %v336, %v370
    %v403 = vadd.f32 %v337, %v371
    %v404 = vadd.f32 %v338, %v372
    %s405 = sld [smem:[#allocation8 + $0x1]]
    %v406 = vstv %s405
    %v407 = vmul.f32 %v406, %v237
    %v408 = vmul.f32 %v406, %v138
    %v409 = vmul.f32 %v406, %v254
    %v410 = vmul.f32 %v406, %v238
    %v411 = vmul.f32 %v406, %v141
    %v412 = vmul.f32 %v406, %v255
    %v413 = vmul.f32 %v406, %v239
    %v414 = vmul.f32 %v406, %v144
    %v415 = vmul.f32 %v406, %v256
    %v416 = vmul.f32 %v406, %v240
    %v417 = vmul.f32 %v406, %v147
    %v418 = vmul.f32 %v406, %v257
    %v419 = vmul.f32 %v406, %v241
    %v420 = vmul.f32 %v406, %v150
    %v421 = vmul.f32 %v406, %v258
    %v422 = vmul.f32 %v406, %v242
    %v423 = vmul.f32 %v406, %v153
    %v424 = vmul.f32 %v406, %v259
    %v425 = vmul.f32 %v406, %v243
    %v426 = vmul.f32 %v406, %v156
    %v427 = vmul.f32 %v406, %v260
    %v428 = vmul.f32 %v406, %v244
    %v429 = vmul.f32 %v406, %v159
    %v430 = vmul.f32 %v406, %v261
    %v431 = vmul.f32 %v406, %v245
    %v432 = vmul.f32 %v406, %v162
    %v433 = vmul.f32 %v406, %v262
    %v434 = vmul.f32 %v406, %v246
    %v435 = vmul.f32 %v406, %v165
    %v436 = vmul.f32 %v406, %v263
    %v437 = vmul.f32 %v406, %v247
    %v438 = vmul.f32 %v406, %v168
    %v439 = vmul.f32 %v406, %v264
    %v440 = vmul.f32 %v406, %v248
    %v441 = vmul.f32 %v406, %v171
    %v442 = vmul.f32 %v406, %v265
    %v443 = vmul.f32 %v406, %v249
    %v444 = vmul.f32 %v406, %v174
    %v445 = vmul.f32 %v406, %v266
    %v446 = vmul.f32 %v406, %v250
    %v447 = vmul.f32 %v406, %v177
    %v448 = vmul.f32 %v406, %v267
    %v449 = vmul.f32 %v406, %v251
    %v450 = vmul.f32 %v406, %v180
    %v451 = vmul.f32 %v406, %v268
    %v452 = vmul.f32 %v406, %v252
    %v453 = vmul.f32 %v406, %v183
    %v454 = vmul.f32 %v406, %v269
    %vm503 = vcmask 1046528
    %v504 = vrot.slane %v407, 1
    %v505 = vrot.slane %v408, 1
    %v506 = vsel %vm503, %v504, %v505
    %v507 = vrot.slane %v409, 1
    %v508 = vsel %vm503, %v505, %v507
    %v509 = vrot.slane %v410, 1
    %v510 = vrot.slane %v411, 1
    %v511 = vsel %vm503, %v509, %v510
    %v512 = vrot.slane %v412, 1
    %v513 = vsel %vm503, %v510, %v512
    %v514 = vrot.slane %v413, 1
    %v515 = vrot.slane %v414, 1
    %v516 = vsel %vm503, %v514, %v515
    %v517 = vrot.slane %v415, 1
    %v518 = vsel %vm503, %v515, %v517
    %v519 = vrot.slane %v416, 1
    %v520 = vrot.slane %v417, 1
    %v521 = vsel %vm503, %v519, %v520
    %v522 = vrot.slane %v418, 1
    %v523 = vsel %vm503, %v520, %v522
    %v524 = vrot.slane %v419, 1
    %v525 = vrot.slane %v420, 1
    %v526 = vsel %vm503, %v524, %v525
    %v527 = vrot.slane %v421, 1
    %v528 = vsel %vm503, %v525, %v527
    %v529 = vrot.slane %v422, 1
    %v530 = vrot.slane %v423, 1
    %v531 = vsel %vm503, %v529, %v530
    %v532 = vrot.slane %v424, 1
    %v533 = vsel %vm503, %v530, %v532
    %v534 = vrot.slane %v425, 1
    %v535 = vrot.slane %v426, 1
    %v536 = vsel %vm503, %v534, %v535
    %v537 = vrot.slane %v427, 1
    %v538 = vsel %vm503, %v535, %v537
    %v539 = vrot.slane %v428, 1
    %v540 = vrot.slane %v429, 1
    %v541 = vsel %vm503, %v539, %v540
    %v542 = vrot.slane %v430, 1
    %v543 = vsel %vm503, %v540, %v542
    %v544 = vrot.slane %v431, 1
    %v545 = vrot.slane %v432, 1
    %v546 = vsel %vm503, %v544, %v545
    %v547 = vrot.slane %v433, 1
    %v548 = vsel %vm503, %v545, %v547
    %v549 = vrot.slane %v434, 1
    %v550 = vrot.slane %v435, 1
    %v551 = vsel %vm503, %v549, %v550
    %v552 = vrot.slane %v436, 1
    %v553 = vsel %vm503, %v550, %v552
    %v554 = vrot.slane %v437, 1
    %v555 = vrot.slane %v438, 1
    %v556 = vsel %vm503, %v554, %v555
    %v557 = vrot.slane %v439, 1
    %v558 = vsel %vm503, %v555, %v557
    %v559 = vrot.slane %v440, 1
    %v560 = vrot.slane %v441, 1
    %v561 = vsel %vm503, %v559, %v560
    %v562 = vrot.slane %v442, 1
    %v563 = vsel %vm503, %v560, %v562
    %v564 = vrot.slane %v443, 1
    %v565 = vrot.slane %v444, 1
    %v566 = vsel %vm503, %v564, %v565
    %v567 = vrot.slane %v445, 1
    %v568 = vsel %vm503, %v565, %v567
    %v569 = vrot.slane %v446, 1
    %v570 = vrot.slane %v447, 1
    %v571 = vsel %vm503, %v569, %v570
    %v572 = vrot.slane %v448, 1
    %v573 = vsel %vm503, %v570, %v572
    %v574 = vrot.slane %v449, 1
    %v575 = vrot.slane %v450, 1
    %v576 = vsel %vm503, %v574, %v575
    %v577 = vrot.slane %v451, 1
    %v578 = vsel %vm503, %v575, %v577
    %v579 = vrot.slane %v452, 1
    %v580 = vrot.slane %v453, 1
    %v581 = vsel %vm503, %v579, %v580
    %v582 = vrot.slane %v454, 1
    %v583 = vsel %vm503, %v580, %v582
    %v616 = vadd.f32 %v373, %v506
    %v617 = vadd.f32 %v374, %v508
    %v618 = vadd.f32 %v375, %v511
    %v619 = vadd.f32 %v376, %v513
    %v620 = vadd.f32 %v377, %v516
    %v621 = vadd.f32 %v378, %v518
    %v622 = vadd.f32 %v379, %v521
    %v623 = vadd.f32 %v380, %v523
    %v624 = vadd.f32 %v381, %v526
    %v625 = vadd.f32 %v382, %v528
    %v626 = vadd.f32 %v383, %v531
    %v627 = vadd.f32 %v384, %v533
    %v628 = vadd.f32 %v385, %v536
    %v629 = vadd.f32 %v386, %v538
    %v630 = vadd.f32 %v387, %v541
    %v631 = vadd.f32 %v388, %v543
    %v632 = vadd.f32 %v389, %v546
    %v633 = vadd.f32 %v390, %v548
    %v634 = vadd.f32 %v391, %v551
    %v635 = vadd.f32 %v392, %v553
    %v636 = vadd.f32 %v393, %v556
    %v637 = vadd.f32 %v394, %v558
    %v638 = vadd.f32 %v395, %v561
    %v639 = vadd.f32 %v396, %v563
    %v640 = vadd.f32 %v397, %v566
    %v641 = vadd.f32 %v398, %v568
    %v642 = vadd.f32 %v399, %v571
    %v643 = vadd.f32 %v400, %v573
    %v644 = vadd.f32 %v401, %v576
    %v645 = vadd.f32 %v402, %v578
    %v646 = vadd.f32 %v403, %v581
    %v647 = vadd.f32 %v404, %v583
    %s648 = sld [smem:[#allocation8 + $0x2]]
    %v649 = vstv %s648
    %v650 = vmul.f32 %v649, %v237
    %v651 = vmul.f32 %v649, %v138
    %v652 = vmul.f32 %v649, %v254
    %v653 = vmul.f32 %v649, %v238
    %v654 = vmul.f32 %v649, %v141
    %v655 = vmul.f32 %v649, %v255
    %v656 = vmul.f32 %v649, %v239
    %v657 = vmul.f32 %v649, %v144
    %v658 = vmul.f32 %v649, %v256
    %v659 = vmul.f32 %v649, %v240
    %v660 = vmul.f32 %v649, %v147
    %v661 = vmul.f32 %v649, %v257
    %v662 = vmul.f32 %v649, %v241
    %v663 = vmul.f32 %v649, %v150
    %v664 = vmul.f32 %v649, %v258
    %v665 = vmul.f32 %v649, %v242
    %v666 = vmul.f32 %v649, %v153
    %v667 = vmul.f32 %v649, %v259
    %v668 = vmul.f32 %v649, %v243
    %v669 = vmul.f32 %v649, %v156
    %v670 = vmul.f32 %v649, %v260
    %v671 = vmul.f32 %v649, %v244
    %v672 = vmul.f32 %v649, %v159
    %v673 = vmul.f32 %v649, %v261
    %v674 = vmul.f32 %v649, %v245
    %v675 = vmul.f32 %v649, %v162
    %v676 = vmul.f32 %v649, %v262
    %v677 = vmul.f32 %v649, %v246
    %v678 = vmul.f32 %v649, %v165
    %v679 = vmul.f32 %v649, %v263
    %v680 = vmul.f32 %v649, %v247
    %v681 = vmul.f32 %v649, %v168
    %v682 = vmul.f32 %v649, %v264
    %v683 = vmul.f32 %v649, %v248
    %v684 = vmul.f32 %v649, %v171
    %v685 = vmul.f32 %v649, %v265
    %v686 = vmul.f32 %v649, %v249
    %v687 = vmul.f32 %v649, %v174
    %v688 = vmul.f32 %v649, %v266
    %v689 = vmul.f32 %v649, %v250
    %v690 = vmul.f32 %v649, %v177
    %v691 = vmul.f32 %v649, %v267
    %v692 = vmul.f32 %v649, %v251
    %v693 = vmul.f32 %v649, %v180
    %v694 = vmul.f32 %v649, %v268
    %v695 = vmul.f32 %v649, %v252
    %v696 = vmul.f32 %v649, %v183
    %v697 = vmul.f32 %v649, %v269
    %vm746 = vcmask 1045504
    %v747 = vrot.slane %v650, 2
    %v748 = vrot.slane %v651, 2
    %v749 = vsel %vm746, %v747, %v748
    %v750 = vrot.slane %v652, 2
    %v751 = vsel %vm746, %v748, %v750
    %v752 = vrot.slane %v653, 2
    %v753 = vrot.slane %v654, 2
    %v754 = vsel %vm746, %v752, %v753
    %v755 = vrot.slane %v655, 2
    %v756 = vsel %vm746, %v753, %v755
    %v757 = vrot.slane %v656, 2
    %v758 = vrot.slane %v657, 2
    %v759 = vsel %vm746, %v757, %v758
    %v760 = vrot.slane %v658, 2
    %v761 = vsel %vm746, %v758, %v760
    %v762 = vrot.slane %v659, 2
    %v763 = vrot.slane %v660, 2
    %v764 = vsel %vm746, %v762, %v763
    %v765 = vrot.slane %v661, 2
    %v766 = vsel %vm746, %v763, %v765
    %v767 = vrot.slane %v662, 2
    %v768 = vrot.slane %v663, 2
    %v769 = vsel %vm746, %v767, %v768
    %v770 = vrot.slane %v664, 2
    %v771 = vsel %vm746, %v768, %v770
    %v772 = vrot.slane %v665, 2
    %v773 = vrot.slane %v666, 2
    %v774 = vsel %vm746, %v772, %v773
    %v775 = vrot.slane %v667, 2
    %v776 = vsel %vm746, %v773, %v775
    %v777 = vrot.slane %v668, 2
    %v778 = vrot.slane %v669, 2
    %v779 = vsel %vm746, %v777, %v778
    %v780 = vrot.slane %v670, 2
    %v781 = vsel %vm746, %v778, %v780
    %v782 = vrot.slane %v671, 2
    %v783 = vrot.slane %v672, 2
    %v784 = vsel %vm746, %v782, %v783
    %v785 = vrot.slane %v673, 2
    %v786 = vsel %vm746, %v783, %v785
    %v787 = vrot.slane %v674, 2
    %v788 = vrot.slane %v675, 2
    %v789 = vsel %vm746, %v787, %v788
    %v790 = vrot.slane %v676, 2
    %v791 = vsel %vm746, %v788, %v790
    %v792 = vrot.slane %v677, 2
    %v793 = vrot.slane %v678, 2
    %v794 = vsel %vm746, %v792, %v793
    %v795 = vrot.slane %v679, 2
    %v796 = vsel %vm746, %v793, %v795
    %v797 = vrot.slane %v680, 2
    %v798 = vrot.slane %v681, 2
    %v799 = vsel %vm746, %v797, %v798
    %v800 = vrot.slane %v682, 2
    %v801 = vsel %vm746, %v798, %v800
    %v802 = vrot.slane %v683, 2
    %v803 = vrot.slane %v684, 2
    %v804 = vsel %vm746, %v802, %v803
    %v805 = vrot.slane %v685, 2
    %v806 = vsel %vm746, %v803, %v805
    %v807 = vrot.slane %v686, 2
    %v808 = vrot.slane %v687, 2
    %v809 = vsel %vm746, %v807, %v808
    %v810 = vrot.slane %v688, 2
    %v811 = vsel %vm746, %v808, %v810
    %v812 = vrot.slane %v689, 2
    %v813 = vrot.slane %v690, 2
    %v814 = vsel %vm746, %v812, %v813
    %v815 = vrot.slane %v691, 2
    %v816 = vsel %vm746, %v813, %v815
    %v817 = vrot.slane %v692, 2
    %v818 = vrot.slane %v693, 2
    %v819 = vsel %vm746, %v817, %v818
    %v820 = vrot.slane %v694, 2
    %v821 = vsel %vm746, %v818, %v820
    %v822 = vrot.slane %v695, 2
    %v823 = vrot.slane %v696, 2
    %v824 = vsel %vm746, %v822, %v823
    %v825 = vrot.slane %v697, 2
    %v826 = vsel %vm746, %v823, %v825
    %v859 = vadd.f32 %v616, %v749
    %v860 = vadd.f32 %v617, %v751
    %v861 = vadd.f32 %v618, %v754
    %v862 = vadd.f32 %v619, %v756
    %v863 = vadd.f32 %v620, %v759
    %v864 = vadd.f32 %v621, %v761
    %v865 = vadd.f32 %v622, %v764
    %v866 = vadd.f32 %v623, %v766
    %v867 = vadd.f32 %v624, %v769
    %v868 = vadd.f32 %v625, %v771
    %v869 = vadd.f32 %v626, %v774
    %v870 = vadd.f32 %v627, %v776
    %v871 = vadd.f32 %v628, %v779
    %v872 = vadd.f32 %v629, %v781
    %v873 = vadd.f32 %v630, %v784
    %v874 = vadd.f32 %v631, %v786
    %v875 = vadd.f32 %v632, %v789
    %v876 = vadd.f32 %v633, %v791
    %v877 = vadd.f32 %v634, %v794
    %v878 = vadd.f32 %v635, %v796
    %v879 = vadd.f32 %v636, %v799
    %v880 = vadd.f32 %v637, %v801
    %v881 = vadd.f32 %v638, %v804
    %v882 = vadd.f32 %v639, %v806
    %v883 = vadd.f32 %v640, %v809
    %v884 = vadd.f32 %v641, %v811
    %v885 = vadd.f32 %v642, %v814
    %v886 = vadd.f32 %v643, %v816
    %v887 = vadd.f32 %v644, %v819
    %v888 = vadd.f32 %v645, %v821
    %v889 = vadd.f32 %v646, %v824
    %v890 = vadd.f32 %v647, %v826
    %s891 = sld [smem:[#allocation8 + $0x3]]
    %v892 = vstv %s891
    %v893 = vmul.f32 %v892, %v238
    %v894 = vmul.f32 %v892, %v141
    %v895 = vmul.f32 %v892, %v239
    %v896 = vmul.f32 %v892, %v144
    %v897 = vmul.f32 %v892, %v240
    %v898 = vmul.f32 %v892, %v147
    %v899 = vmul.f32 %v892, %v241
    %v900 = vmul.f32 %v892, %v150
    %v901 = vmul.f32 %v892, %v242
    %v902 = vmul.f32 %v892, %v153
    %v903 = vmul.f32 %v892, %v243
    %v904 = vmul.f32 %v892, %v156
    %v905 = vmul.f32 %v892, %v244
    %v906 = vmul.f32 %v892, %v159
    %v907 = vmul.f32 %v892, %v245
    %v908 = vmul.f32 %v892, %v162
    %v909 = vmul.f32 %v892, %v246
    %v910 = vmul.f32 %v892, %v165
    %v911 = vmul.f32 %v892, %v247
    %v912 = vmul.f32 %v892, %v168
    %v913 = vmul.f32 %v892, %v248
    %v914 = vmul.f32 %v892, %v171
    %v915 = vmul.f32 %v892, %v249
    %v916 = vmul.f32 %v892, %v174
    %v917 = vmul.f32 %v892, %v250
    %v918 = vmul.f32 %v892, %v177
    %v919 = vmul.f32 %v892, %v251
    %v920 = vmul.f32 %v892, %v180
    %v921 = vmul.f32 %v892, %v252
    %v922 = vmul.f32 %v892, %v183
    %v923 = vmul.f32 %v892, %v253
    %v924 = vmul.f32 %v892, %v186
    %v925 = vadd.f32 %v859, %v893
    %v926 = vadd.f32 %v860, %v894
    %v927 = vadd.f32 %v861, %v895
    %v928 = vadd.f32 %v862, %v896
    %v929 = vadd.f32 %v863, %v897
    %v930 = vadd.f32 %v864, %v898
    %v931 = vadd.f32 %v865, %v899
    %v932 = vadd.f32 %v866, %v900
    %v933 = vadd.f32 %v867, %v901
    %v934 = vadd.f32 %v868, %v902
    %v935 = vadd.f32 %v869, %v903
    %v936 = vadd.f32 %v870, %v904
    %v937 = vadd.f32 %v871, %v905
    %v938 = vadd.f32 %v872, %v906
    %v939 = vadd.f32 %v873, %v907
    %v940 = vadd.f32 %v874, %v908
    %v941 = vadd.f32 %v875, %v909
    %v942 = vadd.f32 %v876, %v910
    %v943 = vadd.f32 %v877, %v911
    %v944 = vadd.f32 %v878, %v912
    %v945 = vadd.f32 %v879, %v913
    %v946 = vadd.f32 %v880, %v914
    %v947 = vadd.f32 %v881, %v915
    %v948 = vadd.f32 %v882, %v916
    %v949 = vadd.f32 %v883, %v917
    %v950 = vadd.f32 %v884, %v918
    %v951 = vadd.f32 %v885, %v919
    %v952 = vadd.f32 %v886, %v920
    %v953 = vadd.f32 %v887, %v921
    %v954 = vadd.f32 %v888, %v922
    %v955 = vadd.f32 %v889, %v923
    %v956 = vadd.f32 %v890, %v924
    %s957 = sld [smem:[#allocation8 + $0x5]]
    %v958 = vstv %s957
    %v959 = vmul.f32 %v958, %v238
    %v960 = vmul.f32 %v958, %v141
    %v961 = vmul.f32 %v958, %v255
    %v962 = vmul.f32 %v958, %v239
    %v963 = vmul.f32 %v958, %v144
    %v964 = vmul.f32 %v958, %v256
    %v965 = vmul.f32 %v958, %v240
    %v966 = vmul.f32 %v958, %v147
    %v967 = vmul.f32 %v958, %v257
    %v968 = vmul.f32 %v958, %v241
    %v969 = vmul.f32 %v958, %v150
    %v970 = vmul.f32 %v958, %v258
    %v971 = vmul.f32 %v958, %v242
    %v972 = vmul.f32 %v958, %v153
    %v973 = vmul.f32 %v958, %v259
    %v974 = vmul.f32 %v958, %v243
    %v975 = vmul.f32 %v958, %v156
    %v976 = vmul.f32 %v958, %v260
    %v977 = vmul.f32 %v958, %v244
    %v978 = vmul.f32 %v958, %v159
    %v979 = vmul.f32 %v958, %v261
    %v980 = vmul.f32 %v958, %v245
    %v981 = vmul.f32 %v958, %v162
    %v982 = vmul.f32 %v958, %v262
    %v983 = vmul.f32 %v958, %v246
    %v984 = vmul.f32 %v958, %v165
    %v985 = vmul.f32 %v958, %v263
    %v986 = vmul.f32 %v958, %v247
    %v987 = vmul.f32 %v958, %v168
    %v988 = vmul.f32 %v958, %v264
    %v989 = vmul.f32 %v958, %v248
    %v990 = vmul.f32 %v958, %v171
    %v991 = vmul.f32 %v958, %v265
    %v992 = vmul.f32 %v958, %v249
    %v993 = vmul.f32 %v958, %v174
    %v994 = vmul.f32 %v958, %v266
    %v995 = vmul.f32 %v958, %v250
    %v996 = vmul.f32 %v958, %v177
    %v997 = vmul.f32 %v958, %v267
    %v998 = vmul.f32 %v958, %v251
    %v999 = vmul.f32 %v958, %v180
    %v1000 = vmul.f32 %v958, %v268
    %v1001 = vmul.f32 %v958, %v252
    %v1002 = vmul.f32 %v958, %v183
    %v1003 = vmul.f32 %v958, %v269
    %v1004 = vmul.f32 %v958, %v253
    %v1005 = vmul.f32 %v958, %v186
    %v1006 = vmul.f32 %v958, %v270
    %v1055 = vrot.slane %v959, 2
    %v1056 = vrot.slane %v960, 2
    %v1057 = vsel %vm746, %v1055, %v1056
    %v1058 = vrot.slane %v961, 2
    %v1059 = vsel %vm746, %v1056, %v1058
    %v1060 = vrot.slane %v962, 2
    %v1061 = vrot.slane %v963, 2
    %v1062 = vsel %vm746, %v1060, %v1061
    %v1063 = vrot.slane %v964, 2
    %v1064 = vsel %vm746, %v1061, %v1063
    %v1065 = vrot.slane %v965, 2
    %v1066 = vrot.slane %v966, 2
    %v1067 = vsel %vm746, %v1065, %v1066
    %v1068 = vrot.slane %v967, 2
    %v1069 = vsel %vm746, %v1066, %v1068
    %v1070 = vrot.slane %v968, 2
    %v1071 = vrot.slane %v969, 2
    %v1072 = vsel %vm746, %v1070, %v1071
    %v1073 = vrot.slane %v970, 2
    %v1074 = vsel %vm746, %v1071, %v1073
    %v1075 = vrot.slane %v971, 2
    %v1076 = vrot.slane %v972, 2
    %v1077 = vsel %vm746, %v1075, %v1076
    %v1078 = vrot.slane %v973, 2
    %v1079 = vsel %vm746, %v1076, %v1078
    %v1080 = vrot.slane %v974, 2
    %v1081 = vrot.slane %v975, 2
    %v1082 = vsel %vm746, %v1080, %v1081
    %v1083 = vrot.slane %v976, 2
    %v1084 = vsel %vm746, %v1081, %v1083
    %v1085 = vrot.slane %v977, 2
    %v1086 = vrot.slane %v978, 2
    %v1087 = vsel %vm746, %v1085, %v1086
    %v1088 = vrot.slane %v979, 2
    %v1089 = vsel %vm746, %v1086, %v1088
    %v1090 = vrot.slane %v980, 2
    %v1091 = vrot.slane %v981, 2
    %v1092 = vsel %vm746, %v1090, %v1091
    %v1093 = vrot.slane %v982, 2
    %v1094 = vsel %vm746, %v1091, %v1093
    %v1095 = vrot.slane %v983, 2
    %v1096 = vrot.slane %v984, 2
    %v1097 = vsel %vm746, %v1095, %v1096
    %v1098 = vrot.slane %v985, 2
    %v1099 = vsel %vm746, %v1096, %v1098
    %v1100 = vrot.slane %v986, 2
    %v1101 = vrot.slane %v987, 2
    %v1102 = vsel %vm746, %v1100, %v1101
    %v1103 = vrot.slane %v988, 2
    %v1104 = vsel %vm746, %v1101, %v1103
    %v1105 = vrot.slane %v989, 2
    %v1106 = vrot.slane %v990, 2
    %v1107 = vsel %vm746, %v1105, %v1106
    %v1108 = vrot.slane %v991, 2
    %v1109 = vsel %vm746, %v1106, %v1108
    %v1110 = vrot.slane %v992, 2
    %v1111 = vrot.slane %v993, 2
    %v1112 = vsel %vm746, %v1110, %v1111
    %v1113 = vrot.slane %v994, 2
    %v1114 = vsel %vm746, %v1111, %v1113
    %v1115 = vrot.slane %v995, 2
    %v1116 = vrot.slane %v996, 2
    %v1117 = vsel %vm746, %v1115, %v1116
    %v1118 = vrot.slane %v997, 2
    %v1119 = vsel %vm746, %v1116, %v1118
    %v1120 = vrot.slane %v998, 2
    %v1121 = vrot.slane %v999, 2
    %v1122 = vsel %vm746, %v1120, %v1121
    %v1123 = vrot.slane %v1000, 2
    %v1124 = vsel %vm746, %v1121, %v1123
    %v1125 = vrot.slane %v1001, 2
    %v1126 = vrot.slane %v1002, 2
    %v1127 = vsel %vm746, %v1125, %v1126
    %v1128 = vrot.slane %v1003, 2
    %v1129 = vsel %vm746, %v1126, %v1128
    %v1130 = vrot.slane %v1004, 2
    %v1131 = vrot.slane %v1005, 2
    %v1132 = vsel %vm746, %v1130, %v1131
    %v1133 = vrot.slane %v1006, 2
    %v1134 = vsel %vm746, %v1131, %v1133
    %v1167 = vadd.f32 %v925, %v1057
    %v1168 = vadd.f32 %v926, %v1059
    %v1169 = vadd.f32 %v927, %v1062
    %v1170 = vadd.f32 %v928, %v1064
    %v1171 = vadd.f32 %v929, %v1067
    %v1172 = vadd.f32 %v930, %v1069
    %v1173 = vadd.f32 %v931, %v1072
    %v1174 = vadd.f32 %v932, %v1074
    %v1175 = vadd.f32 %v933, %v1077
    %v1176 = vadd.f32 %v934, %v1079
    %v1177 = vadd.f32 %v935, %v1082
    %v1178 = vadd.f32 %v936, %v1084
    %v1179 = vadd.f32 %v937, %v1087
    %v1180 = vadd.f32 %v938, %v1089
    %v1181 = vadd.f32 %v939, %v1092
    %v1182 = vadd.f32 %v940, %v1094
    %v1183 = vadd.f32 %v941, %v1097
    %v1184 = vadd.f32 %v942, %v1099
    %v1185 = vadd.f32 %v943, %v1102
    %v1186 = vadd.f32 %v944, %v1104
    %v1187 = vadd.f32 %v945, %v1107
    %v1188 = vadd.f32 %v946, %v1109
    %v1189 = vadd.f32 %v947, %v1112
    %v1190 = vadd.f32 %v948, %v1114
    %v1191 = vadd.f32 %v949, %v1117
    %v1192 = vadd.f32 %v950, %v1119
    %v1193 = vadd.f32 %v951, %v1122
    %v1194 = vadd.f32 %v952, %v1124
    %v1195 = vadd.f32 %v953, %v1127
    %v1196 = vadd.f32 %v954, %v1129
    %v1197 = vadd.f32 %v955, %v1132
    %v1198 = vadd.f32 %v956, %v1134
    %s1199 = sld [smem:[#allocation8 + $0x6]]
    %v1200 = vstv %s1199
    %v1201 = vmul.f32 %v1200, %v239
    %v1202 = vmul.f32 %v1200, %v144
    %v1203 = vmul.f32 %v1200, %v240
    %v1204 = vmul.f32 %v1200, %v147
    %v1205 = vmul.f32 %v1200, %v241
    %v1206 = vmul.f32 %v1200, %v150
    %v1207 = vmul.f32 %v1200, %v242
    %v1208 = vmul.f32 %v1200, %v153
    %v1209 = vmul.f32 %v1200, %v243
    %v1210 = vmul.f32 %v1200, %v156
    %v1211 = vmul.f32 %v1200, %v244
    %v1212 = vmul.f32 %v1200, %v159
    %v1213 = vmul.f32 %v1200, %v245
    %v1214 = vmul.f32 %v1200, %v162
    %v1215 = vmul.f32 %v1200, %v246
    %v1216 = vmul.f32 %v1200, %v165
    %v1217 = vmul.f32 %v1200, %v247
    %v1218 = vmul.f32 %v1200, %v168
    %v1219 = vmul.f32 %v1200, %v248
    %v1220 = vmul.f32 %v1200, %v171
    %v1221 = vmul.f32 %v1200, %v249
    %v1222 = vmul.f32 %v1200, %v174
    %v1223 = vmul.f32 %v1200, %v250
    %v1224 = vmul.f32 %v1200, %v177
    %v1225 = vmul.f32 %v1200, %v251
    %v1226 = vmul.f32 %v1200, %v180
    %v1227 = vmul.f32 %v1200, %v252
    %v1228 = vmul.f32 %v1200, %v183
    %v1229 = vmul.f32 %v1200, %v253
    %v1230 = vmul.f32 %v1200, %v186
    %v1231 = vmul.f32 %v1200, %v237
    %v1232 = vmul.f32 %v1200, %v138
    %v1233 = vadd.f32 %v1167, %v1201
    %v1234 = vadd.f32 %v1168, %v1202
    %v1235 = vadd.f32 %v1169, %v1203
    %v1236 = vadd.f32 %v1170, %v1204
    %v1237 = vadd.f32 %v1171, %v1205
    %v1238 = vadd.f32 %v1172, %v1206
    %v1239 = vadd.f32 %v1173, %v1207
    %v1240 = vadd.f32 %v1174, %v1208
    %v1241 = vadd.f32 %v1175, %v1209
    %v1242 = vadd.f32 %v1176, %v1210
    %v1243 = vadd.f32 %v1177, %v1211
    %v1244 = vadd.f32 %v1178, %v1212
    %v1245 = vadd.f32 %v1179, %v1213
    %v1246 = vadd.f32 %v1180, %v1214
    %v1247 = vadd.f32 %v1181, %v1215
    %v1248 = vadd.f32 %v1182, %v1216
    %v1249 = vadd.f32 %v1183, %v1217
    %v1250 = vadd.f32 %v1184, %v1218
    %v1251 = vadd.f32 %v1185, %v1219
    %v1252 = vadd.f32 %v1186, %v1220
    %v1253 = vadd.f32 %v1187, %v1221
    %v1254 = vadd.f32 %v1188, %v1222
    %v1255 = vadd.f32 %v1189, %v1223
    %v1256 = vadd.f32 %v1190, %v1224
    %v1257 = vadd.f32 %v1191, %v1225
    %v1258 = vadd.f32 %v1192, %v1226
    %v1259 = vadd.f32 %v1193, %v1227
    %v1260 = vadd.f32 %v1194, %v1228
    %v1261 = vadd.f32 %v1195, %v1229
    %v1262 = vadd.f32 %v1196, %v1230
    %v1263 = vadd.f32 %v1197, %v1231
    %v1264 = vadd.f32 %v1198, %v1232
    %s1265 = sld [smem:[#allocation8 + $0x7]]
    %v1266 = vstv %s1265
    %v1267 = vmul.f32 %v1266, %v239
    %v1268 = vmul.f32 %v1266, %v144
    %v1269 = vmul.f32 %v1266, %v256
    %v1270 = vmul.f32 %v1266, %v240
    %v1271 = vmul.f32 %v1266, %v147
    %v1272 = vmul.f32 %v1266, %v257
    %v1273 = vmul.f32 %v1266, %v241
    %v1274 = vmul.f32 %v1266, %v150
    %v1275 = vmul.f32 %v1266, %v258
    %v1276 = vmul.f32 %v1266, %v242
    %v1277 = vmul.f32 %v1266, %v153
    %v1278 = vmul.f32 %v1266, %v259
    %v1279 = vmul.f32 %v1266, %v243
    %v1280 = vmul.f32 %v1266, %v156
    %v1281 = vmul.f32 %v1266, %v260
    %v1282 = vmul.f32 %v1266, %v244
    %v1283 = vmul.f32 %v1266, %v159
    %v1284 = vmul.f32 %v1266, %v261
    %v1285 = vmul.f32 %v1266, %v245
    %v1286 = vmul.f32 %v1266, %v162
    %v1287 = vmul.f32 %v1266, %v262
    %v1288 = vmul.f32 %v1266, %v246
    %v1289 = vmul.f32 %v1266, %v165
    %v1290 = vmul.f32 %v1266, %v263
    %v1291 = vmul.f32 %v1266, %v247
    %v1292 = vmul.f32 %v1266, %v168
    %v1293 = vmul.f32 %v1266, %v264
    %v1294 = vmul.f32 %v1266, %v248
    %v1295 = vmul.f32 %v1266, %v171
    %v1296 = vmul.f32 %v1266, %v265
    %v1297 = vmul.f32 %v1266, %v249
    %v1298 = vmul.f32 %v1266, %v174
    %v1299 = vmul.f32 %v1266, %v266
    %v1300 = vmul.f32 %v1266, %v250
    %v1301 = vmul.f32 %v1266, %v177
    %v1302 = vmul.f32 %v1266, %v267
    %v1303 = vmul.f32 %v1266, %v251
    %v1304 = vmul.f32 %v1266, %v180
    %v1305 = vmul.f32 %v1266, %v268
    %v1306 = vmul.f32 %v1266, %v252
    %v1307 = vmul.f32 %v1266, %v183
    %v1308 = vmul.f32 %v1266, %v269
    %v1309 = vmul.f32 %v1266, %v253
    %v1310 = vmul.f32 %v1266, %v186
    %v1311 = vmul.f32 %v1266, %v270
    %v1312 = vmul.f32 %v1266, %v237
    %v1313 = vmul.f32 %v1266, %v138
    %v1314 = vmul.f32 %v1266, %v254
    %v1363 = vrot.slane %v1267, 1
    %v1364 = vrot.slane %v1268, 1
    %v1365 = vsel %vm503, %v1363, %v1364
    %v1366 = vrot.slane %v1269, 1
    %v1367 = vsel %vm503, %v1364, %v1366
    %v1368 = vrot.slane %v1270, 1
    %v1369 = vrot.slane %v1271, 1
    %v1370 = vsel %vm503, %v1368, %v1369
    %v1371 = vrot.slane %v1272, 1
    %v1372 = vsel %vm503, %v1369, %v1371
    %v1373 = vrot.slane %v1273, 1
    %v1374 = vrot.slane %v1274, 1
    %v1375 = vsel %vm503, %v1373, %v1374
    %v1376 = vrot.slane %v1275, 1
    %v1377 = vsel %vm503, %v1374, %v1376
    %v1378 = vrot.slane %v1276, 1
    %v1379 = vrot.slane %v1277, 1
    %v1380 = vsel %vm503, %v1378, %v1379
    %v1381 = vrot.slane %v1278, 1
    %v1382 = vsel %vm503, %v1379, %v1381
    %v1383 = vrot.slane %v1279, 1
    %v1384 = vrot.slane %v1280, 1
    %v1385 = vsel %vm503, %v1383, %v1384
    %v1386 = vrot.slane %v1281, 1
    %v1387 = vsel %vm503, %v1384, %v1386
    %v1388 = vrot.slane %v1282, 1
    %v1389 = vrot.slane %v1283, 1
    %v1390 = vsel %vm503, %v1388, %v1389
    %v1391 = vrot.slane %v1284, 1
    %v1392 = vsel %vm503, %v1389, %v1391
    %v1393 = vrot.slane %v1285, 1
    %v1394 = vrot.slane %v1286, 1
    %v1395 = vsel %vm503, %v1393, %v1394
    %v1396 = vrot.slane %v1287, 1
    %v1397 = vsel %vm503, %v1394, %v1396
    %v1398 = vrot.slane %v1288, 1
    %v1399 = vrot.slane %v1289, 1
    %v1400 = vsel %vm503, %v1398, %v1399
    %v1401 = vrot.slane %v1290, 1
    %v1402 = vsel %vm503, %v1399, %v1401
    %v1403 = vrot.slane %v1291, 1
    %v1404 = vrot.slane %v1292, 1
    %v1405 = vsel %vm503, %v1403, %v1404
    %v1406 = vrot.slane %v1293, 1
    %v1407 = vsel %vm503, %v1404, %v1406
    %v1408 = vrot.slane %v1294, 1
    %v1409 = vrot.slane %v1295, 1
    %v1410 = vsel %vm503, %v1408, %v1409
    %v1411 = vrot.slane %v1296, 1
    %v1412 = vsel %vm503, %v1409, %v1411
    %v1413 = vrot.slane %v1297, 1
    %v1414 = vrot.slane %v1298, 1
    %v1415 = vsel %vm503, %v1413, %v1414
    %v1416 = vrot.slane %v1299, 1
    %v1417 = vsel %vm503, %v1414, %v1416
    %v1418 = vrot.slane %v1300, 1
    %v1419 = vrot.slane %v1301, 1
    %v1420 = vsel %vm503, %v1418, %v1419
    %v1421 = vrot.slane %v1302, 1
    %v1422 = vsel %vm503, %v1419, %v1421
    %v1423 = vrot.slane %v1303, 1
    %v1424 = vrot.slane %v1304, 1
    %v1425 = vsel %vm503, %v1423, %v1424
    %v1426 = vrot.slane %v1305, 1
    %v1427 = vsel %vm503, %v1424, %v1426
    %v1428 = vrot.slane %v1306, 1
    %v1429 = vrot.slane %v1307, 1
    %v1430 = vsel %vm503, %v1428, %v1429
    %v1431 = vrot.slane %v1308, 1
    %v1432 = vsel %vm503, %v1429, %v1431
    %v1433 = vrot.slane %v1309, 1
    %v1434 = vrot.slane %v1310, 1
    %v1435 = vsel %vm503, %v1433, %v1434
    %v1436 = vrot.slane %v1311, 1
    %v1437 = vsel %vm503, %v1434, %v1436
    %v1438 = vrot.slane %v1312, 1
    %v1439 = vrot.slane %v1313, 1
    %v1440 = vsel %vm503, %v1438, %v1439
    %v1441 = vrot.slane %v1314, 1
    %v1442 = vsel %vm503, %v1439, %v1441
    %v1475 = vadd.f32 %v1233, %v1365
    %v1476 = vadd.f32 %v1234, %v1367
    %v1477 = vadd.f32 %v1235, %v1370
    %v1478 = vadd.f32 %v1236, %v1372
    %v1479 = vadd.f32 %v1237, %v1375
    %v1480 = vadd.f32 %v1238, %v1377
    %v1481 = vadd.f32 %v1239, %v1380
    %v1482 = vadd.f32 %v1240, %v1382
    %v1483 = vadd.f32 %v1241, %v1385
    %v1484 = vadd.f32 %v1242, %v1387
    %v1485 = vadd.f32 %v1243, %v1390
    %v1486 = vadd.f32 %v1244, %v1392
    %v1487 = vadd.f32 %v1245, %v1395
    %v1488 = vadd.f32 %v1246, %v1397
    %v1489 = vadd.f32 %v1247, %v1400
    %v1490 = vadd.f32 %v1248, %v1402
    %v1491 = vadd.f32 %v1249, %v1405
    %v1492 = vadd.f32 %v1250, %v1407
    %v1493 = vadd.f32 %v1251, %v1410
    %v1494 = vadd.f32 %v1252, %v1412
    %v1495 = vadd.f32 %v1253, %v1415
    %v1496 = vadd.f32 %v1254, %v1417
    %v1497 = vadd.f32 %v1255, %v1420
    %v1498 = vadd.f32 %v1256, %v1422
    %v1499 = vadd.f32 %v1257, %v1425
    %v1500 = vadd.f32 %v1258, %v1427
    %v1501 = vadd.f32 %v1259, %v1430
    %v1502 = vadd.f32 %v1260, %v1432
    %v1503 = vadd.f32 %v1261, %v1435
    %v1504 = vadd.f32 %v1262, %v1437
    %v1505 = vadd.f32 %v1263, %v1440
    %v1506 = vadd.f32 %v1264, %v1442
    %s1507 = sld [smem:[#allocation8 + $0x8]]
    %v1508 = vstv %s1507
    %v1509 = vmul.f32 %v1508, %v239
    %v1510 = vmul.f32 %v1508, %v144
    %v1511 = vmul.f32 %v1508, %v256
    %v1512 = vmul.f32 %v1508, %v240
    %v1513 = vmul.f32 %v1508, %v147
    %v1514 = vmul.f32 %v1508, %v257
    %v1515 = vmul.f32 %v1508, %v241
    %v1516 = vmul.f32 %v1508, %v150
    %v1517 = vmul.f32 %v1508, %v258
    %v1518 = vmul.f32 %v1508, %v242
    %v1519 = vmul.f32 %v1508, %v153
    %v1520 = vmul.f32 %v1508, %v259
    %v1521 = vmul.f32 %v1508, %v243
    %v1522 = vmul.f32 %v1508, %v156
    %v1523 = vmul.f32 %v1508, %v260
    %v1524 = vmul.f32 %v1508, %v244
    %v1525 = vmul.f32 %v1508, %v159
    %v1526 = vmul.f32 %v1508, %v261
    %v1527 = vmul.f32 %v1508, %v245
    %v1528 = vmul.f32 %v1508, %v162
    %v1529 = vmul.f32 %v1508, %v262
    %v1530 = vmul.f32 %v1508, %v246
    %v1531 = vmul.f32 %v1508, %v165
    %v1532 = vmul.f32 %v1508, %v263
    %v1533 = vmul.f32 %v1508, %v247
    %v1534 = vmul.f32 %v1508, %v168
    %v1535 = vmul.f32 %v1508, %v264
    %v1536 = vmul.f32 %v1508, %v248
    %v1537 = vmul.f32 %v1508, %v171
    %v1538 = vmul.f32 %v1508, %v265
    %v1539 = vmul.f32 %v1508, %v249
    %v1540 = vmul.f32 %v1508, %v174
    %v1541 = vmul.f32 %v1508, %v266
    %v1542 = vmul.f32 %v1508, %v250
    %v1543 = vmul.f32 %v1508, %v177
    %v1544 = vmul.f32 %v1508, %v267
    %v1545 = vmul.f32 %v1508, %v251
    %v1546 = vmul.f32 %v1508, %v180
    %v1547 = vmul.f32 %v1508, %v268
    %v1548 = vmul.f32 %v1508, %v252
    %v1549 = vmul.f32 %v1508, %v183
    %v1550 = vmul.f32 %v1508, %v269
    %v1551 = vmul.f32 %v1508, %v253
    %v1552 = vmul.f32 %v1508, %v186
    %v1553 = vmul.f32 %v1508, %v270
    %v1554 = vmul.f32 %v1508, %v237
    %v1555 = vmul.f32 %v1508, %v138
    %v1556 = vmul.f32 %v1508, %v254
    %v1605 = vrot.slane %v1509, 2
    %v1606 = vrot.slane %v1510, 2
    %v1607 = vsel %vm746, %v1605, %v1606
    %v1608 = vrot.slane %v1511, 2
    %v1609 = vsel %vm746, %v1606, %v1608
    %v1610 = vrot.slane %v1512, 2
    %v1611 = vrot.slane %v1513, 2
    %v1612 = vsel %vm746, %v1610, %v1611
    %v1613 = vrot.slane %v1514, 2
    %v1614 = vsel %vm746, %v1611, %v1613
    %v1615 = vrot.slane %v1515, 2
    %v1616 = vrot.slane %v1516, 2
    %v1617 = vsel %vm746, %v1615, %v1616
    %v1618 = vrot.slane %v1517, 2
    %v1619 = vsel %vm746, %v1616, %v1618
    %v1620 = vrot.slane %v1518, 2
    %v1621 = vrot.slane %v1519, 2
    %v1622 = vsel %vm746, %v1620, %v1621
    %v1623 = vrot.slane %v1520, 2
    %v1624 = vsel %vm746, %v1621, %v1623
    %v1625 = vrot.slane %v1521, 2
    %v1626 = vrot.slane %v1522, 2
    %v1627 = vsel %vm746, %v1625, %v1626
    %v1628 = vrot.slane %v1523, 2
    %v1629 = vsel %vm746, %v1626, %v1628
    %v1630 = vrot.slane %v1524, 2
    %v1631 = vrot.slane %v1525, 2
    %v1632 = vsel %vm746, %v1630, %v1631
    %v1633 = vrot.slane %v1526, 2
    %v1634 = vsel %vm746, %v1631, %v1633
    %v1635 = vrot.slane %v1527, 2
    %v1636 = vrot.slane %v1528, 2
    %v1637 = vsel %vm746, %v1635, %v1636
    %v1638 = vrot.slane %v1529, 2
    %v1639 = vsel %vm746, %v1636, %v1638
    %v1640 = vrot.slane %v1530, 2
    %v1641 = vrot.slane %v1531, 2
    %v1642 = vsel %vm746, %v1640, %v1641
    %v1643 = vrot.slane %v1532, 2
    %v1644 = vsel %vm746, %v1641, %v1643
    %v1645 = vrot.slane %v1533, 2
    %v1646 = vrot.slane %v1534, 2
    %v1647 = vsel %vm746, %v1645, %v1646
    %v1648 = vrot.slane %v1535, 2
    %v1649 = vsel %vm746, %v1646, %v1648
    %v1650 = vrot.slane %v1536, 2
    %v1651 = vrot.slane %v1537, 2
    %v1652 = vsel %vm746, %v1650, %v1651
    %v1653 = vrot.slane %v1538, 2
    %v1654 = vsel %vm746, %v1651, %v1653
    %v1655 = vrot.slane %v1539, 2
    %v1656 = vrot.slane %v1540, 2
    %v1657 = vsel %vm746, %v1655, %v1656
    %v1658 = vrot.slane %v1541, 2
    %v1659 = vsel %vm746, %v1656, %v1658
    %v1660 = vrot.slane %v1542, 2
    %v1661 = vrot.slane %v1543, 2
    %v1662 = vsel %vm746, %v1660, %v1661
    %v1663 = vrot.slane %v1544, 2
    %v1664 = vsel %vm746, %v1661, %v1663
    %v1665 = vrot.slane %v1545, 2
    %v1666 = vrot.slane %v1546, 2
    %v1667 = vsel %vm746, %v1665, %v1666
    %v1668 = vrot.slane %v1547, 2
    %v1669 = vsel %vm746, %v1666, %v1668
    %v1670 = vrot.slane %v1548, 2
    %v1671 = vrot.slane %v1549, 2
    %v1672 = vsel %vm746, %v1670, %v1671
    %v1673 = vrot.slane %v1550, 2
    %v1674 = vsel %vm746, %v1671, %v1673
    %v1675 = vrot.slane %v1551, 2
    %v1676 = vrot.slane %v1552, 2
    %v1677 = vsel %vm746, %v1675, %v1676
    %v1678 = vrot.slane %v1553, 2
    %v1679 = vsel %vm746, %v1676, %v1678
    %v1680 = vrot.slane %v1554, 2
    %v1681 = vrot.slane %v1555, 2
    %v1682 = vsel %vm746, %v1680, %v1681
    %v1683 = vrot.slane %v1556, 2
    %v1684 = vsel %vm746, %v1681, %v1683
    %v1717 = vadd.f32 %v1475, %v1607
    %v1718 = vadd.f32 %v1476, %v1609
    %v1719 = vadd.f32 %v1477, %v1612
    %v1720 = vadd.f32 %v1478, %v1614
    %v1721 = vadd.f32 %v1479, %v1617
    %v1722 = vadd.f32 %v1480, %v1619
    %v1723 = vadd.f32 %v1481, %v1622
    %v1724 = vadd.f32 %v1482, %v1624
    %v1725 = vadd.f32 %v1483, %v1627
    %v1726 = vadd.f32 %v1484, %v1629
    %v1727 = vadd.f32 %v1485, %v1632
    %v1728 = vadd.f32 %v1486, %v1634
    %v1729 = vadd.f32 %v1487, %v1637
    %v1730 = vadd.f32 %v1488, %v1639
    %v1731 = vadd.f32 %v1489, %v1642
    %v1732 = vadd.f32 %v1490, %v1644
    %v1733 = vadd.f32 %v1491, %v1647
    %v1734 = vadd.f32 %v1492, %v1649
    %v1735 = vadd.f32 %v1493, %v1652
    %v1736 = vadd.f32 %v1494, %v1654
    %v1737 = vadd.f32 %v1495, %v1657
    %v1738 = vadd.f32 %v1496, %v1659
    %v1739 = vadd.f32 %v1497, %v1662
    %v1740 = vadd.f32 %v1498, %v1664
    %v1741 = vadd.f32 %v1499, %v1667
    %v1742 = vadd.f32 %v1500, %v1669
    %v1743 = vadd.f32 %v1501, %v1672
    %v1744 = vadd.f32 %v1502, %v1674
    %v1745 = vadd.f32 %v1503, %v1677
    %v1746 = vadd.f32 %v1504, %v1679
    %v1747 = vadd.f32 %v1505, %v1682
    %v1748 = vadd.f32 %v1506, %v1684
    %v1749 = vmax.f32 %v1717, 0.0
    %v1750 = vmax.f32 %v1718, 0.0
    %v1751 = vmax.f32 %v1719, 0.0
    %v1752 = vmax.f32 %v1720, 0.0
    %v1753 = vmax.f32 %v1721, 0.0
    %v1754 = vmax.f32 %v1722, 0.0
    %v1755 = vmax.f32 %v1723, 0.0
    %v1756 = vmax.f32 %v1724, 0.0
    %v1757 = vmax.f32 %v1725, 0.0
    %v1758 = vmax.f32 %v1726, 0.0
    %v1759 = vmax.f32 %v1727, 0.0
    %v1760 = vmax.f32 %v1728, 0.0
    %v1761 = vmax.f32 %v1729, 0.0
    %v1762 = vmax.f32 %v1730, 0.0
    %v1763 = vmax.f32 %v1731, 0.0
    %v1764 = vmax.f32 %v1732, 0.0
    %v1765 = vmax.f32 %v1733, 0.0
    %v1766 = vmax.f32 %v1734, 0.0
    %v1767 = vmax.f32 %v1735, 0.0
    %v1768 = vmax.f32 %v1736, 0.0
    %v1769 = vmax.f32 %v1737, 0.0
    %v1770 = vmax.f32 %v1738, 0.0
    %v1771 = vmax.f32 %v1739, 0.0
    %v1772 = vmax.f32 %v1740, 0.0
    %v1773 = vmax.f32 %v1741, 0.0
    %v1774 = vmax.f32 %v1742, 0.0
    %v1775 = vmax.f32 %v1743, 0.0
    %v1776 = vmax.f32 %v1744, 0.0
    %v1777 = vmax.f32 %v1745, 0.0
    %v1778 = vmax.f32 %v1746, 0.0
    %v1779 = vmax.f32 %v1747, 0.0
    %v1780 = vmax.f32 %v1748, 0.0
    %s1781 = sld [smem:[#allocation10 + $0x4]]
    %v1782 = vstv %s1781
    %v1783 = vmul.f32 %v1782, %v1749
    %v1784 = vmul.f32 %v1782, %v1750
    %v1785 = vmul.f32 %v1782, %v1751
    %v1786 = vmul.f32 %v1782, %v1752
    %v1787 = vmul.f32 %v1782, %v1753
    %v1788 = vmul.f32 %v1782, %v1754
    %v1789 = vmul.f32 %v1782, %v1755
    %v1790 = vmul.f32 %v1782, %v1756
    %v1791 = vmul.f32 %v1782, %v1757
    %v1792 = vmul.f32 %v1782, %v1758
    %v1793 = vmul.f32 %v1782, %v1759
    %v1794 = vmul.f32 %v1782, %v1760
    %v1795 = vmul.f32 %v1782, %v1761
    %v1796 = vmul.f32 %v1782, %v1762
    %v1797 = vmul.f32 %v1782, %v1763
    %v1798 = vmul.f32 %v1782, %v1764
    %v1799 = vmul.f32 %v1782, %v1765
    %v1800 = vmul.f32 %v1782, %v1766
    %v1801 = vmul.f32 %v1782, %v1767
    %v1802 = vmul.f32 %v1782, %v1768
    %v1803 = vmul.f32 %v1782, %v1769
    %v1804 = vmul.f32 %v1782, %v1770
    %v1805 = vmul.f32 %v1782, %v1771
    %v1806 = vmul.f32 %v1782, %v1772
    %v1807 = vmul.f32 %v1782, %v1773
    %v1808 = vmul.f32 %v1782, %v1774
    %v1809 = vmul.f32 %v1782, %v1775
    %v1810 = vmul.f32 %v1782, %v1776
    %v1811 = vmul.f32 %v1782, %v1777
    %v1812 = vmul.f32 %v1782, %v1778
    %v1813 = vmul.f32 %v1782, %v1779
    %v1814 = vmul.f32 %v1782, %v1780
    %s1815 = sld [smem:[#allocation2]]
    %v1816 = vstv %s1815
    %v1817 = vadd.f32 %v1783, %v1816
    %v1818 = vadd.f32 %v1784, %v1816
    %v1819 = vadd.f32 %v1785, %v1816
    %v1820 = vadd.f32 %v1786, %v1816
    %v1821 = vadd.f32 %v1787, %v1816
    %v1822 = vadd.f32 %v1788, %v1816
    %v1823 = vadd.f32 %v1789, %v1816
    %v1824 = vadd.f32 %v1790, %v1816
    %v1825 = vadd.f32 %v1791, %v1816
    %v1826 = vadd.f32 %v1792, %v1816
    %v1827 = vadd.f32 %v1793, %v1816
    %v1828 = vadd.f32 %v1794, %v1816
    %v1829 = vadd.f32 %v1795, %v1816
    %v1830 = vadd.f32 %v1796, %v1816
    %v1831 = vadd.f32 %v1797, %v1816
    %v1832 = vadd.f32 %v1798, %v1816
    %v1833 = vadd.f32 %v1799, %v1816
    %v1834 = vadd.f32 %v1800, %v1816
    %v1835 = vadd.f32 %v1801, %v1816
    %v1836 = vadd.f32 %v1802, %v1816
    %v1837 = vadd.f32 %v1803, %v1816
    %v1838 = vadd.f32 %v1804, %v1816
    %v1839 = vadd.f32 %v1805, %v1816
    %v1840 = vadd.f32 %v1806, %v1816
    %v1841 = vadd.f32 %v1807, %v1816
    %v1842 = vadd.f32 %v1808, %v1816
    %v1843 = vadd.f32 %v1809, %v1816
    %v1844 = vadd.f32 %v1810, %v1816
    %v1845 = vadd.f32 %v1811, %v1816
    %v1846 = vadd.f32 %v1812, %v1816
    %v1847 = vadd.f32 %v1813, %v1816
    %v1848 = vadd.f32 %v1814, %v1816
    %v1881 = vrot.slane %v1749, 7
    %v1882 = vrot.slane %v1750, 7
    %v1883 = vsel %vm136, %v1881, %v1882
    %v1884 = vrot.slane %v1751, 7
    %v1885 = vrot.slane %v1752, 7
    %v1886 = vsel %vm136, %v1884, %v1885
    %v1887 = vrot.slane %v1753, 7
    %v1888 = vrot.slane %v1754, 7
    %v1889 = vsel %vm136, %v1887, %v1888
    %v1890 = vrot.slane %v1755, 7
    %v1891 = vrot.slane %v1756, 7
    %v1892 = vsel %vm136, %v1890, %v1891
    %v1893 = vrot.slane %v1757, 7
    %v1894 = vrot.slane %v1758, 7
    %v1895 = vsel %vm136, %v1893, %v1894
    %v1896 = vrot.slane %v1759, 7
    %v1897 = vrot.slane %v1760, 7
    %v1898 = vsel %vm136, %v1896, %v1897
    %v1899 = vrot.slane %v1761, 7
    %v1900 = vrot.slane %v1762, 7
    %v1901 = vsel %vm136, %v1899, %v1900
    %v1902 = vrot.slane %v1763, 7
    %v1903 = vrot.slane %v1764, 7
    %v1904 = vsel %vm136, %v1902, %v1903
    %v1905 = vrot.slane %v1765, 7
    %v1906 = vrot.slane %v1766, 7
    %v1907 = vsel %vm136, %v1905, %v1906
    %v1908 = vrot.slane %v1767, 7
    %v1909 = vrot.slane %v1768, 7
    %v1910 = vsel %vm136, %v1908, %v1909
    %v1911 = vrot.slane %v1769, 7
    %v1912 = vrot.slane %v1770, 7
    %v1913 = vsel %vm136, %v1911, %v1912
    %v1914 = vrot.slane %v1771, 7
    %v1915 = vrot.slane %v1772, 7
    %v1916 = vsel %vm136, %v1914, %v1915
    %v1917 = vrot.slane %v1773, 7
    %v1918 = vrot.slane %v1774, 7
    %v1919 = vsel %vm136, %v1917, %v1918
    %v1920 = vrot.slane %v1775, 7
    %v1921 = vrot.slane %v1776, 7
    %v1922 = vsel %vm136, %v1920, %v1921
    %v1923 = vrot.slane %v1777, 7
    %v1924 = vrot.slane %v1778, 7
    %v1925 = vsel %vm136, %v1923, %v1924
    %v1926 = vrot.slane %v1779, 7
    %v1927 = vrot.slane %v1780, 7
    %v1928 = vsel %vm136, %v1926, %v1927
    %v1977 = vsel %vm136, 0.0, %v1881
    %v1978 = vsel %vm136, 0.0, %v1884
    %v1979 = vsel %vm136, 0.0, %v1887
    %v1980 = vsel %vm136, 0.0, %v1890
    %v1981 = vsel %vm136, 0.0, %v1893
    %v1982 = vsel %vm136, 0.0, %v1896
    %v1983 = vsel %vm136, 0.0, %v1899
    %v1984 = vsel %vm136, 0.0, %v1902
    %v1985 = vsel %vm136, 0.0, %v1905
    %v1986 = vsel %vm136, 0.0, %v1908
    %v1987 = vsel %vm136, 0.0, %v1911
    %v1988 = vsel %vm136, 0.0, %v1914
    %v1989 = vsel %vm136, 0.0, %v1917
    %v1990 = vsel %vm136, 0.0, %v1920
    %v1991 = vsel %vm136, 0.0, %v1923
    %v1992 = vsel %vm136, 0.0, %v1926
    %v1993 = vsel %vm136, %v1882, 0.0
    %v1994 = vsel %vm136, %v1885, 0.0
    %v1995 = vsel %vm136, %v1888, 0.0
    %v1996 = vsel %vm136, %v1891, 0.0
    %v1997 = vsel %vm136, %v1894, 0.0
    %v1998 = vsel %vm136, %v1897, 0.0
    %v1999 = vsel %vm136, %v1900, 0.0
    %v2000 = vsel %vm136, %v1903, 0.0
    %v2001 = vsel %vm136, %v1906, 0.0
    %v2002 = vsel %vm136, %v1909, 0.0
    %v2003 = vsel %vm136, %v1912, 0.0
    %v2004 = vsel %vm136, %v1915, 0.0
    %v2005 = vsel %vm136, %v1918, 0.0
    %v2006 = vsel %vm136, %v1921, 0.0
    %v2007 = vsel %vm136, %v1924, 0.0
    %v2008 = vsel %vm136, %v1927, 0.0
    %s2009 = sld [smem:[#allocation10]]
    %v2010 = vstv %s2009
    %v2011 = vmul.f32 %v2010, %v237
    %v2012 = vmul.f32 %v2010, %v138
    %v2013 = vmul.f32 %v2010, %v1977
    %v2014 = vmul.f32 %v2010, %v1883
    %v2015 = vmul.f32 %v2010, %v1978
    %v2016 = vmul.f32 %v2010, %v1886
    %v2017 = vmul.f32 %v2010, %v1979
    %v2018 = vmul.f32 %v2010, %v1889
    %v2019 = vmul.f32 %v2010, %v1980
    %v2020 = vmul.f32 %v2010, %v1892
    %v2021 = vmul.f32 %v2010, %v1981
    %v2022 = vmul.f32 %v2010, %v1895
    %v2023 = vmul.f32 %v2010, %v1982
    %v2024 = vmul.f32 %v2010, %v1898
    %v2025 = vmul.f32 %v2010, %v1983
    %v2026 = vmul.f32 %v2010, %v1901
    %v2027 = vmul.f32 %v2010, %v1984
    %v2028 = vmul.f32 %v2010, %v1904
    %v2029 = vmul.f32 %v2010, %v1985
    %v2030 = vmul.f32 %v2010, %v1907
    %v2031 = vmul.f32 %v2010, %v1986
    %v2032 = vmul.f32 %v2010, %v1910
    %v2033 = vmul.f32 %v2010, %v1987
    %v2034 = vmul.f32 %v2010, %v1913
    %v2035 = vmul.f32 %v2010, %v1988
    %v2036 = vmul.f32 %v2010, %v1916
    %v2037 = vmul.f32 %v2010, %v1989
    %v2038 = vmul.f32 %v2010, %v1919
    %v2039 = vmul.f32 %v2010, %v1990
    %v2040 = vmul.f32 %v2010, %v1922
    %v2041 = vmul.f32 %v2010, %v1991
    %v2042 = vmul.f32 %v2010, %v1925
    %v2043 = vadd.f32 %v1817, %v2011
    %v2044 = vadd.f32 %v1818, %v2012
    %v2045 = vadd.f32 %v1819, %v2013
    %v2046 = vadd.f32 %v1820, %v2014
    %v2047 = vadd.f32 %v1821, %v2015
    %v2048 = vadd.f32 %v1822, %v2016
    %v2049 = vadd.f32 %v1823, %v2017
    %v2050 = vadd.f32 %v1824, %v2018
    %v2051 = vadd.f32 %v1825, %v2019
    %v2052 = vadd.f32 %v1826, %v2020
    %v2053 = vadd.f32 %v1827, %v2021
    %v2054 = vadd.f32 %v1828, %v2022
    %v2055 = vadd.f32 %v1829, %v2023
    %v2056 = vadd.f32 %v1830, %v2024
    %v2057 = vadd.f32 %v1831, %v2025
    %v2058 = vadd.f32 %v1832, %v2026
    %v2059 = vadd.f32 %v1833, %v2027
    %v2060 = vadd.f32 %v1834, %v2028
    %v2061 = vadd.f32 %v1835, %v2029
    %v2062 = vadd.f32 %v1836, %v2030
    %v2063 = vadd.f32 %v1837, %v2031
    %v2064 = vadd.f32 %v1838, %v2032
    %v2065 = vadd.f32 %v1839, %v2033
    %v2066 = vadd.f32 %v1840, %v2034
    %v2067 = vadd.f32 %v1841, %v2035
    %v2068 = vadd.f32 %v1842, %v2036
    %v2069 = vadd.f32 %v1843, %v2037
    %v2070 = vadd.f32 %v1844, %v2038
    %v2071 = vadd.f32 %v1845, %v2039
    %v2072 = vadd.f32 %v1846, %v2040
    %v2073 = vadd.f32 %v1847, %v2041
    %v2074 = vadd.f32 %v1848, %v2042
    %s2075 = sld [smem:[#allocation10 + $0x1]]
    %v2076 = vstv %s2075
    %v2077 = vmul.f32 %v2076, %v237
    %v2078 = vmul.f32 %v2076, %v138
    %v2079 = vmul.f32 %v2076, %v254
    %v2080 = vmul.f32 %v2076, %v1977
    %v2081 = vmul.f32 %v2076, %v1883
    %v2082 = vmul.f32 %v2076, %v1993
    %v2083 = vmul.f32 %v2076, %v1978
    %v2084 = vmul.f32 %v2076, %v1886
    %v2085 = vmul.f32 %v2076, %v1994
    %v2086 = vmul.f32 %v2076, %v1979
    %v2087 = vmul.f32 %v2076, %v1889
    %v2088 = vmul.f32 %v2076, %v1995
    %v2089 = vmul.f32 %v2076, %v1980
    %v2090 = vmul.f32 %v2076, %v1892
    %v2091 = vmul.f32 %v2076, %v1996
    %v2092 = vmul.f32 %v2076, %v1981
    %v2093 = vmul.f32 %v2076, %v1895
    %v2094 = vmul.f32 %v2076, %v1997
    %v2095 = vmul.f32 %v2076, %v1982
    %v2096 = vmul.f32 %v2076, %v1898
    %v2097 = vmul.f32 %v2076, %v1998
    %v2098 = vmul.f32 %v2076, %v1983
    %v2099 = vmul.f32 %v2076, %v1901
    %v2100 = vmul.f32 %v2076, %v1999
    %v2101 = vmul.f32 %v2076, %v1984
    %v2102 = vmul.f32 %v2076, %v1904
    %v2103 = vmul.f32 %v2076, %v2000
    %v2104 = vmul.f32 %v2076, %v1985
    %v2105 = vmul.f32 %v2076, %v1907
    %v2106 = vmul.f32 %v2076, %v2001
    %v2107 = vmul.f32 %v2076, %v1986
    %v2108 = vmul.f32 %v2076, %v1910
    %v2109 = vmul.f32 %v2076, %v2002
    %v2110 = vmul.f32 %v2076, %v1987
    %v2111 = vmul.f32 %v2076, %v1913
    %v2112 = vmul.f32 %v2076, %v2003
    %v2113 = vmul.f32 %v2076, %v1988
    %v2114 = vmul.f32 %v2076, %v1916
    %v2115 = vmul.f32 %v2076, %v2004
    %v2116 = vmul.f32 %v2076, %v1989
    %v2117 = vmul.f32 %v2076, %v1919
    %v2118 = vmul.f32 %v2076, %v2005
    %v2119 = vmul.f32 %v2076, %v1990
    %v2120 = vmul.f32 %v2076, %v1922
    %v2121 = vmul.f32 %v2076, %v2006
    %v2122 = vmul.f32 %v2076, %v1991
    %v2123 = vmul.f32 %v2076, %v1925
    %v2124 = vmul.f32 %v2076, %v2007
    %v2173 = vrot.slane %v2077, 1
    %v2174 = vrot.slane %v2078, 1
    %v2175 = vsel %vm503, %v2173, %v2174
    %v2176 = vrot.slane %v2079, 1
    %v2177 = vsel %vm503, %v2174, %v2176
    %v2178 = vrot.slane %v2080, 1
    %v2179 = vrot.slane %v2081, 1
    %v2180 = vsel %vm503, %v2178, %v2179
    %v2181 = vrot.slane %v2082, 1
    %v2182 = vsel %vm503, %v2179, %v2181
    %v2183 = vrot.slane %v2083, 1
    %v2184 = vrot.slane %v2084, 1
    %v2185 = vsel %vm503, %v2183, %v2184
    %v2186 = vrot.slane %v2085, 1
    %v2187 = vsel %vm503, %v2184, %v2186
    %v2188 = vrot.slane %v2086, 1
    %v2189 = vrot.slane %v2087, 1
    %v2190 = vsel %vm503, %v2188, %v2189
    %v2191 = vrot.slane %v2088, 1
    %v2192 = vsel %vm503, %v2189, %v2191
    %v2193 = vrot.slane %v2089, 1
    %v2194 = vrot.slane %v2090, 1
    %v2195 = vsel %vm503, %v2193, %v2194
    %v2196 = vrot.slane %v2091, 1
    %v2197 = vsel %vm503, %v2194, %v2196
    %v2198 = vrot.slane %v2092, 1
    %v2199 = vrot.slane %v2093, 1
    %v2200 = vsel %vm503, %v2198, %v2199
    %v2201 = vrot.slane %v2094, 1
    %v2202 = vsel %vm503, %v2199, %v2201
    %v2203 = vrot.slane %v2095, 1
    %v2204 = vrot.slane %v2096, 1
    %v2205 = vsel %vm503, %v2203, %v2204
    %v2206 = vrot.slane %v2097, 1
    %v2207 = vsel %vm503, %v2204, %v2206
    %v2208 = vrot.slane %v2098, 1
    %v2209 = vrot.slane %v2099, 1
    %v2210 = vsel %vm503, %v2208, %v2209
    %v2211 = vrot.slane %v2100, 1
    %v2212 = vsel %vm503, %v2209, %v2211
    %v2213 = vrot.slane %v2101, 1
    %v2214 = vrot.slane %v2102, 1
    %v2215 = vsel %vm503, %v2213, %v2214
    %v2216 = vrot.slane %v2103, 1
    %v2217 = vsel %vm503, %v2214, %v2216
    %v2218 = vrot.slane %v2104, 1
    %v2219 = vrot.slane %v2105, 1
    %v2220 = vsel %vm503, %v2218, %v2219
    %v2221 = vrot.slane %v2106, 1
    %v2222 = vsel %vm503, %v2219, %v2221
    %v2223 = vrot.slane %v2107, 1
    %v2224 = vrot.slane %v2108, 1
    %v2225 = vsel %vm503, %v2223, %v2224
    %v2226 = vrot.slane %v2109, 1
    %v2227 = vsel %vm503, %v2224, %v2226
    %v2228 = vrot.slane %v2110, 1
    %v2229 = vrot.slane %v2111, 1
    %v2230 = vsel %vm503, %v2228, %v2229
    %v2231 = vrot.slane %v2112, 1
    %v2232 = vsel %vm503, %v2229, %v2231
    %v2233 = vrot.slane %v2113, 1
    %v2234 = vrot.slane %v2114, 1
    %v2235 = vsel %vm503, %v2233, %v2234
    %v2236 = vrot.slane %v2115, 1
    %v2237 = vsel %vm503, %v2234, %v2236
    %v2238 = vrot.slane %v2116, 1
    %v2239 = vrot.slane %v2117, 1
    %v2240 = vsel %vm503, %v2238, %v2239
    %v2241 = vrot.slane %v2118, 1
    %v2242 = vsel %vm503, %v2239, %v2241
    %v2243 = vrot.slane %v2119, 1
    %v2244 = vrot.slane %v2120, 1
    %v2245 = vsel %vm503, %v2243, %v2244
    %v2246 = vrot.slane %v2121, 1
    %v2247 = vsel %vm503, %v2244, %v2246
    %v2248 = vrot.slane %v2122, 1
    %v2249 = vrot.slane %v2123, 1
    %v2250 = vsel %vm503, %v2248, %v2249
    %v2251 = vrot.slane %v2124, 1
    %v2252 = vsel %vm503, %v2249, %v2251
    %v2285 = vadd.f32 %v2043, %v2175
    %v2286 = vadd.f32 %v2044, %v2177
    %v2287 = vadd.f32 %v2045, %v2180
    %v2288 = vadd.f32 %v2046, %v2182
    %v2289 = vadd.f32 %v2047, %v2185
    %v2290 = vadd.f32 %v2048, %v2187
    %v2291 = vadd.f32 %v2049, %v2190
    %v2292 = vadd.f32 %v2050, %v2192
    %v2293 = vadd.f32 %v2051, %v2195
    %v2294 = vadd.f32 %v2052, %v2197
    %v2295 = vadd.f32 %v2053, %v2200
    %v2296 = vadd.f32 %v2054, %v2202
    %v2297 = vadd.f32 %v2055, %v2205
    %v2298 = vadd.f32 %v2056, %v2207
    %v2299 = vadd.f32 %v2057, %v2210
    %v2300 = vadd.f32 %v2058, %v2212
    %v2301 = vadd.f32 %v2059, %v2215
    %v2302 = vadd.f32 %v2060, %v2217
    %v2303 = vadd.f32 %v2061, %v2220
    %v2304 = vadd.f32 %v2062, %v2222
    %v2305 = vadd.f32 %v2063, %v2225
    %v2306 = vadd.f32 %v2064, %v2227
    %v2307 = vadd.f32 %v2065, %v2230
    %v2308 = vadd.f32 %v2066, %v2232
    %v2309 = vadd.f32 %v2067, %v2235
    %v2310 = vadd.f32 %v2068, %v2237
    %v2311 = vadd.f32 %v2069, %v2240
    %v2312 = vadd.f32 %v2070, %v2242
    %v2313 = vadd.f32 %v2071, %v2245
    %v2314 = vadd.f32 %v2072, %v2247
    %v2315 = vadd.f32 %v2073, %v2250
    %v2316 = vadd.f32 %v2074, %v2252
    %s2317 = sld [smem:[#allocation10 + $0x2]]
    %v2318 = vstv %s2317
    %v2319 = vmul.f32 %v2318, %v237
    %v2320 = vmul.f32 %v2318, %v138
    %v2321 = vmul.f32 %v2318, %v254
    %v2322 = vmul.f32 %v2318, %v1977
    %v2323 = vmul.f32 %v2318, %v1883
    %v2324 = vmul.f32 %v2318, %v1993
    %v2325 = vmul.f32 %v2318, %v1978
    %v2326 = vmul.f32 %v2318, %v1886
    %v2327 = vmul.f32 %v2318, %v1994
    %v2328 = vmul.f32 %v2318, %v1979
    %v2329 = vmul.f32 %v2318, %v1889
    %v2330 = vmul.f32 %v2318, %v1995
    %v2331 = vmul.f32 %v2318, %v1980
    %v2332 = vmul.f32 %v2318, %v1892
    %v2333 = vmul.f32 %v2318, %v1996
    %v2334 = vmul.f32 %v2318, %v1981
    %v2335 = vmul.f32 %v2318, %v1895
    %v2336 = vmul.f32 %v2318, %v1997
    %v2337 = vmul.f32 %v2318, %v1982
    %v2338 = vmul.f32 %v2318, %v1898
    %v2339 = vmul.f32 %v2318, %v1998
    %v2340 = vmul.f32 %v2318, %v1983
    %v2341 = vmul.f32 %v2318, %v1901
    %v2342 = vmul.f32 %v2318, %v1999
    %v2343 = vmul.f32 %v2318, %v1984
    %v2344 = vmul.f32 %v2318, %v1904
    %v2345 = vmul.f32 %v2318, %v2000
    %v2346 = vmul.f32 %v2318, %v1985
    %v2347 = vmul.f32 %v2318, %v1907
    %v2348 = vmul.f32 %v2318, %v2001
    %v2349 = vmul.f32 %v2318, %v1986
    %v2350 = vmul.f32 %v2318, %v1910
    %v2351 = vmul.f32 %v2318, %v2002
    %v2352 = vmul.f32 %v2318, %v1987
    %v2353 = vmul.f32 %v2318, %v1913
    %v2354 = vmul.f32 %v2318, %v2003
    %v2355 = vmul.f32 %v2318, %v1988
    %v2356 = vmul.f32 %v2318, %v1916
    %v2357 = vmul.f32 %v2318, %v2004
    %v2358 = vmul.f32 %v2318, %v1989
    %v2359 = vmul.f32 %v2318, %v1919
    %v2360 = vmul.f32 %v2318, %v2005
    %v2361 = vmul.f32 %v2318, %v1990
    %v2362 = vmul.f32 %v2318, %v1922
    %v2363 = vmul.f32 %v2318, %v2006
    %v2364 = vmul.f32 %v2318, %v1991
    %v2365 = vmul.f32 %v2318, %v1925
    %v2366 = vmul.f32 %v2318, %v2007
    %v2415 = vrot.slane %v2319, 2
    %v2416 = vrot.slane %v2320, 2
    %v2417 = vsel %vm746, %v2415, %v2416
    %v2418 = vrot.slane %v2321, 2
    %v2419 = vsel %vm746, %v2416, %v2418
    %v2420 = vrot.slane %v2322, 2
    %v2421 = vrot.slane %v2323, 2
    %v2422 = vsel %vm746, %v2420, %v2421
    %v2423 = vrot.slane %v2324, 2
    %v2424 = vsel %vm746, %v2421, %v2423
    %v2425 = vrot.slane %v2325, 2
    %v2426 = vrot.slane %v2326, 2
    %v2427 = vsel %vm746, %v2425, %v2426
    %v2428 = vrot.slane %v2327, 2
    %v2429 = vsel %vm746, %v2426, %v2428
    %v2430 = vrot.slane %v2328, 2
    %v2431 = vrot.slane %v2329, 2
    %v2432 = vsel %vm746, %v2430, %v2431
    %v2433 = vrot.slane %v2330, 2
    %v2434 = vsel %vm746, %v2431, %v2433
    %v2435 = vrot.slane %v2331, 2
    %v2436 = vrot.slane %v2332, 2
    %v2437 = vsel %vm746, %v2435, %v2436
    %v2438 = vrot.slane %v2333, 2
    %v2439 = vsel %vm746, %v2436, %v2438
    %v2440 = vrot.slane %v2334, 2
    %v2441 = vrot.slane %v2335, 2
    %v2442 = vsel %vm746, %v2440, %v2441
    %v2443 = vrot.slane %v2336, 2
    %v2444 = vsel %vm746, %v2441, %v2443
    %v2445 = vrot.slane %v2337, 2
    %v2446 = vrot.slane %v2338, 2
    %v2447 = vsel %vm746, %v2445, %v2446
    %v2448 = vrot.slane %v2339, 2
    %v2449 = vsel %vm746, %v2446, %v2448
    %v2450 = vrot.slane %v2340, 2
    %v2451 = vrot.slane %v2341, 2
    %v2452 = vsel %vm746, %v2450, %v2451
    %v2453 = vrot.slane %v2342, 2
    %v2454 = vsel %vm746, %v2451, %v2453
    %v2455 = vrot.slane %v2343, 2
    %v2456 = vrot.slane %v2344, 2
    %v2457 = vsel %vm746, %v2455, %v2456
    %v2458 = vrot.slane %v2345, 2
    %v2459 = vsel %vm746, %v2456, %v2458
    %v2460 = vrot.slane %v2346, 2
    %v2461 = vrot.slane %v2347, 2
    %v2462 = vsel %vm746, %v2460, %v2461
    %v2463 = vrot.slane %v2348, 2
    %v2464 = vsel %vm746, %v2461, %v2463
    %v2465 = vrot.slane %v2349, 2
    %v2466 = vrot.slane %v2350, 2
    %v2467 = vsel %vm746, %v2465, %v2466
    %v2468 = vrot.slane %v2351, 2
    %v2469 = vsel %vm746, %v2466, %v2468
    %v2470 = vrot.slane %v2352, 2
    %v2471 = vrot.slane %v2353, 2
    %v2472 = vsel %vm746, %v2470, %v2471
    %v2473 = vrot.slane %v2354, 2
    %v2474 = vsel %vm746, %v2471, %v2473
    %v2475 = vrot.slane %v2355, 2
    %v2476 = vrot.slane %v2356, 2
    %v2477 = vsel %vm746, %v2475, %v2476
    %v2478 = vrot.slane %v2357, 2
    %v2479 = vsel %vm746, %v2476, %v2478
    %v2480 = vrot.slane %v2358, 2
    %v2481 = vrot.slane %v2359, 2
    %v2482 = vsel %vm746, %v2480, %v2481
    %v2483 = vrot.slane %v2360, 2
    %v2484 = vsel %vm746, %v2481, %v2483
    %v2485 = vrot.slane %v2361, 2
    %v2486 = vrot.slane %v2362, 2
    %v2487 = vsel %vm746, %v2485, %v2486
    %v2488 = vrot.slane %v2363, 2
    %v2489 = vsel %vm746, %v2486, %v2488
    %v2490 = vrot.slane %v2364, 2
    %v2491 = vrot.slane %v2365, 2
    %v2492 = vsel %vm746, %v2490, %v2491
    %v2493 = vrot.slane %v2366, 2
    %v2494 = vsel %vm746, %v2491, %v2493
    %v2527 = vadd.f32 %v2285, %v2417
    %v2528 = vadd.f32 %v2286, %v2419
    %v2529 = vadd.f32 %v2287, %v2422
    %v2530 = vadd.f32 %v2288, %v2424
    %v2531 = vadd.f32 %v2289, %v2427
    %v2532 = vadd.f32 %v2290, %v2429
    %v2533 = vadd.f32 %v2291, %v2432
    %v2534 = vadd.f32 %v2292, %v2434
    %v2535 = vadd.f32 %v2293, %v2437
    %v2536 = vadd.f32 %v2294, %v2439
    %v2537 = vadd.f32 %v2295, %v2442
    %v2538 = vadd.f32 %v2296, %v2444
    %v2539 = vadd.f32 %v2297, %v2447
    %v2540 = vadd.f32 %v2298, %v2449
    %v2541 = vadd.f32 %v2299, %v2452
    %v2542 = vadd.f32 %v2300, %v2454
    %v2543 = vadd.f32 %v2301, %v2457
    %v2544 = vadd.f32 %v2302, %v2459
    %v2545 = vadd.f32 %v2303, %v2462
    %v2546 = vadd.f32 %v2304, %v2464
    %v2547 = vadd.f32 %v2305, %v2467
    %v2548 = vadd.f32 %v2306, %v2469
    %v2549 = vadd.f32 %v2307, %v2472
    %v2550 = vadd.f32 %v2308, %v2474
    %v2551 = vadd.f32 %v2309, %v2477
    %v2552 = vadd.f32 %v2310, %v2479
    %v2553 = vadd.f32 %v2311, %v2482
    %v2554 = vadd.f32 %v2312, %v2484
    %v2555 = vadd.f32 %v2313, %v2487
    %v2556 = vadd.f32 %v2314, %v2489
    %v2557 = vadd.f32 %v2315, %v2492
    %v2558 = vadd.f32 %v2316, %v2494
    %s2559 = sld [smem:[#allocation10 + $0x3]]
    %v2560 = vstv %s2559
    %v2561 = vmul.f32 %v2560, %v1977
    %v2562 = vmul.f32 %v2560, %v1883
    %v2563 = vmul.f32 %v2560, %v1978
    %v2564 = vmul.f32 %v2560, %v1886
    %v2565 = vmul.f32 %v2560, %v1979
    %v2566 = vmul.f32 %v2560, %v1889
    %v2567 = vmul.f32 %v2560, %v1980
    %v2568 = vmul.f32 %v2560, %v1892
    %v2569 = vmul.f32 %v2560, %v1981
    %v2570 = vmul.f32 %v2560, %v1895
    %v2571 = vmul.f32 %v2560, %v1982
    %v2572 = vmul.f32 %v2560, %v1898
    %v2573 = vmul.f32 %v2560, %v1983
    %v2574 = vmul.f32 %v2560, %v1901
    %v2575 = vmul.f32 %v2560, %v1984
    %v2576 = vmul.f32 %v2560, %v1904
    %v2577 = vmul.f32 %v2560, %v1985
    %v2578 = vmul.f32 %v2560, %v1907
    %v2579 = vmul.f32 %v2560, %v1986
    %v2580 = vmul.f32 %v2560, %v1910
    %v2581 = vmul.f32 %v2560, %v1987
    %v2582 = vmul.f32 %v2560, %v1913
    %v2583 = vmul.f32 %v2560, %v1988
    %v2584 = vmul.f32 %v2560, %v1916
    %v2585 = vmul.f32 %v2560, %v1989
    %v2586 = vmul.f32 %v2560, %v1919
    %v2587 = vmul.f32 %v2560, %v1990
    %v2588 = vmul.f32 %v2560, %v1922
    %v2589 = vmul.f32 %v2560, %v1991
    %v2590 = vmul.f32 %v2560, %v1925
    %v2591 = vmul.f32 %v2560, %v1992
    %v2592 = vmul.f32 %v2560, %v1928
    %v2593 = vadd.f32 %v2527, %v2561
    %v2594 = vadd.f32 %v2528, %v2562
    %v2595 = vadd.f32 %v2529, %v2563
    %v2596 = vadd.f32 %v2530, %v2564
    %v2597 = vadd.f32 %v2531, %v2565
    %v2598 = vadd.f32 %v2532, %v2566
    %v2599 = vadd.f32 %v2533, %v2567
    %v2600 = vadd.f32 %v2534, %v2568
    %v2601 = vadd.f32 %v2535, %v2569
    %v2602 = vadd.f32 %v2536, %v2570
    %v2603 = vadd.f32 %v2537, %v2571
    %v2604 = vadd.f32 %v2538, %v2572
    %v2605 = vadd.f32 %v2539, %v2573
    %v2606 = vadd.f32 %v2540, %v2574
    %v2607 = vadd.f32 %v2541, %v2575
    %v2608 = vadd.f32 %v2542, %v2576
    %v2609 = vadd.f32 %v2543, %v2577
    %v2610 = vadd.f32 %v2544, %v2578
    %v2611 = vadd.f32 %v2545, %v2579
    %v2612 = vadd.f32 %v2546, %v2580
    %v2613 = vadd.f32 %v2547, %v2581
    %v2614 = vadd.f32 %v2548, %v2582
    %v2615 = vadd.f32 %v2549, %v2583
    %v2616 = vadd.f32 %v2550, %v2584
    %v2617 = vadd.f32 %v2551, %v2585
    %v2618 = vadd.f32 %v2552, %v2586
    %v2619 = vadd.f32 %v2553, %v2587
    %v2620 = vadd.f32 %v2554, %v2588
    %v2621 = vadd.f32 %v2555, %v2589
    %v2622 = vadd.f32 %v2556, %v2590
    %v2623 = vadd.f32 %v2557, %v2591
    %v2624 = vadd.f32 %v2558, %v2592
    %s2625 = sld [smem:[#allocation10 + $0x5]]
    %v2626 = vstv %s2625
    %v2627 = vmul.f32 %v2626, %v1977
    %v2628 = vmul.f32 %v2626, %v1883
    %v2629 = vmul.f32 %v2626, %v1993
    %v2630 = vmul.f32 %v2626, %v1978
    %v2631 = vmul.f32 %v2626, %v1886
    %v2632 = vmul.f32 %v2626, %v1994
    %v2633 = vmul.f32 %v2626, %v1979
    %v2634 = vmul.f32 %v2626, %v1889
    %v2635 = vmul.f32 %v2626, %v1995
    %v2636 = vmul.f32 %v2626, %v1980
    %v2637 = vmul.f32 %v2626, %v1892
    %v2638 = vmul.f32 %v2626, %v1996
    %v2639 = vmul.f32 %v2626, %v1981
    %v2640 = vmul.f32 %v2626, %v1895
    %v2641 = vmul.f32 %v2626, %v1997
    %v2642 = vmul.f32 %v2626, %v1982
    %v2643 = vmul.f32 %v2626, %v1898
    %v2644 = vmul.f32 %v2626, %v1998
    %v2645 = vmul.f32 %v2626, %v1983
    %v2646 = vmul.f32 %v2626, %v1901
    %v2647 = vmul.f32 %v2626, %v1999
    %v2648 = vmul.f32 %v2626, %v1984
    %v2649 = vmul.f32 %v2626, %v1904
    %v2650 = vmul.f32 %v2626, %v2000
    %v2651 = vmul.f32 %v2626, %v1985
    %v2652 = vmul.f32 %v2626, %v1907
    %v2653 = vmul.f32 %v2626, %v2001
    %v2654 = vmul.f32 %v2626, %v1986
    %v2655 = vmul.f32 %v2626, %v1910
    %v2656 = vmul.f32 %v2626, %v2002
    %v2657 = vmul.f32 %v2626, %v1987
    %v2658 = vmul.f32 %v2626, %v1913
    %v2659 = vmul.f32 %v2626, %v2003
    %v2660 = vmul.f32 %v2626, %v1988
    %v2661 = vmul.f32 %v2626, %v1916
    %v2662 = vmul.f32 %v2626, %v2004
    %v2663 = vmul.f32 %v2626, %v1989
    %v2664 = vmul.f32 %v2626, %v1919
    %v2665 = vmul.f32 %v2626, %v2005
    %v2666 = vmul.f32 %v2626, %v1990
    %v2667 = vmul.f32 %v2626, %v1922
    %v2668 = vmul.f32 %v2626, %v2006
    %v2669 = vmul.f32 %v2626, %v1991
    %v2670 = vmul.f32 %v2626, %v1925
    %v2671 = vmul.f32 %v2626, %v2007
    %v2672 = vmul.f32 %v2626, %v1992
    %v2673 = vmul.f32 %v2626, %v1928
    %v2674 = vmul.f32 %v2626, %v2008
    %v2723 = vrot.slane %v2627, 2
    %v2724 = vrot.slane %v2628, 2
    %v2725 = vsel %vm746, %v2723, %v2724
    %v2726 = vrot.slane %v2629, 2
    %v2727 = vsel %vm746, %v2724, %v2726
    %v2728 = vrot.slane %v2630, 2
    %v2729 = vrot.slane %v2631, 2
    %v2730 = vsel %vm746, %v2728, %v2729
    %v2731 = vrot.slane %v2632, 2
    %v2732 = vsel %vm746, %v2729, %v2731
    %v2733 = vrot.slane %v2633, 2
    %v2734 = vrot.slane %v2634, 2
    %v2735 = vsel %vm746, %v2733, %v2734
    %v2736 = vrot.slane %v2635, 2
    %v2737 = vsel %vm746, %v2734, %v2736
    %v2738 = vrot.slane %v2636, 2
    %v2739 = vrot.slane %v2637, 2
    %v2740 = vsel %vm746, %v2738, %v2739
    %v2741 = vrot.slane %v2638, 2
    %v2742 = vsel %vm746, %v2739, %v2741
    %v2743 = vrot.slane %v2639, 2
    %v2744 = vrot.slane %v2640, 2
    %v2745 = vsel %vm746, %v2743, %v2744
    %v2746 = vrot.slane %v2641, 2
    %v2747 = vsel %vm746, %v2744, %v2746
    %v2748 = vrot.slane %v2642, 2
    %v2749 = vrot.slane %v2643, 2
    %v2750 = vsel %vm746, %v2748, %v2749
    %v2751 = vrot.slane %v2644, 2
    %v2752 = vsel %vm746, %v2749, %v2751
    %v2753 = vrot.slane %v2645, 2
    %v2754 = vrot.slane %v2646, 2
    %v2755 = vsel %vm746, %v2753, %v2754
    %v2756 = vrot.slane %v2647, 2
    %v2757 = vsel %vm746, %v2754, %v2756
    %v2758 = vrot.slane %v2648, 2
    %v2759 = vrot.slane %v2649, 2
    %v2760 = vsel %vm746, %v2758, %v2759
    %v2761 = vrot.slane %v2650, 2
    %v2762 = vsel %vm746, %v2759, %v2761
    %v2763 = vrot.slane %v2651, 2
    %v2764 = vrot.slane %v2652, 2
    %v2765 = vsel %vm746, %v2763, %v2764
    %v2766 = vrot.slane %v2653, 2
    %v2767 = vsel %vm746, %v2764, %v2766
    %v2768 = vrot.slane %v2654, 2
    %v2769 = vrot.slane %v2655, 2
    %v2770 = vsel %vm746, %v2768, %v2769
    %v2771 = vrot.slane %v2656, 2
    %v2772 = vsel %vm746, %v2769, %v2771
    %v2773 = vrot.slane %v2657, 2
    %v2774 = vrot.slane %v2658, 2
    %v2775 = vsel %vm746, %v2773, %v2774
    %v2776 = vrot.slane %v2659, 2
    %v2777 = vsel %vm746, %v2774, %v2776
    %v2778 = vrot.slane %v2660, 2
    %v2779 = vrot.slane %v2661, 2
    %v2780 = vsel %vm746, %v2778, %v2779
    %v2781 = vrot.slane %v2662, 2
    %v2782 = vsel %vm746, %v2779, %v2781
    %v2783 = vrot.slane %v2663, 2
    %v2784 = vrot.slane %v2664, 2
    %v2785 = vsel %vm746, %v2783, %v2784
    %v2786 = vrot.slane %v2665, 2
    %v2787 = vsel %vm746, %v2784, %v2786
    %v2788 = vrot.slane %v2666, 2
    %v2789 = vrot.slane %v2667, 2
    %v2790 = vsel %vm746, %v2788, %v2789
    %v2791 = vrot.slane %v2668, 2
    %v2792 = vsel %vm746, %v2789, %v2791
    %v2793 = vrot.slane %v2669, 2
    %v2794 = vrot.slane %v2670, 2
    %v2795 = vsel %vm746, %v2793, %v2794
    %v2796 = vrot.slane %v2671, 2
    %v2797 = vsel %vm746, %v2794, %v2796
    %v2798 = vrot.slane %v2672, 2
    %v2799 = vrot.slane %v2673, 2
    %v2800 = vsel %vm746, %v2798, %v2799
    %v2801 = vrot.slane %v2674, 2
    %v2802 = vsel %vm746, %v2799, %v2801
    %v2835 = vadd.f32 %v2593, %v2725
    %v2836 = vadd.f32 %v2594, %v2727
    %v2837 = vadd.f32 %v2595, %v2730
    %v2838 = vadd.f32 %v2596, %v2732
    %v2839 = vadd.f32 %v2597, %v2735
    %v2840 = vadd.f32 %v2598, %v2737
    %v2841 = vadd.f32 %v2599, %v2740
    %v2842 = vadd.f32 %v2600, %v2742
    %v2843 = vadd.f32 %v2601, %v2745
    %v2844 = vadd.f32 %v2602, %v2747
    %v2845 = vadd.f32 %v2603, %v2750
    %v2846 = vadd.f32 %v2604, %v2752
    %v2847 = vadd.f32 %v2605, %v2755
    %v2848 = vadd.f32 %v2606, %v2757
    %v2849 = vadd.f32 %v2607, %v2760
    %v2850 = vadd.f32 %v2608, %v2762
    %v2851 = vadd.f32 %v2609, %v2765
    %v2852 = vadd.f32 %v2610, %v2767
    %v2853 = vadd.f32 %v2611, %v2770
    %v2854 = vadd.f32 %v2612, %v2772
    %v2855 = vadd.f32 %v2613, %v2775
    %v2856 = vadd.f32 %v2614, %v2777
    %v2857 = vadd.f32 %v2615, %v2780
    %v2858 = vadd.f32 %v2616, %v2782
    %v2859 = vadd.f32 %v2617, %v2785
    %v2860 = vadd.f32 %v2618, %v2787
    %v2861 = vadd.f32 %v2619, %v2790
    %v2862 = vadd.f32 %v2620, %v2792
    %v2863 = vadd.f32 %v2621, %v2795
    %v2864 = vadd.f32 %v2622, %v2797
    %v2865 = vadd.f32 %v2623, %v2800
    %v2866 = vadd.f32 %v2624, %v2802
    %s2867 = sld [smem:[#allocation10 + $0x6]]
    %v2868 = vstv %s2867
    %v2869 = vmul.f32 %v2868, %v1978
    %v2870 = vmul.f32 %v2868, %v1886
    %v2871 = vmul.f32 %v2868, %v1979
    %v2872 = vmul.f32 %v2868, %v1889
    %v2873 = vmul.f32 %v2868, %v1980
    %v2874 = vmul.f32 %v2868, %v1892
    %v2875 = vmul.f32 %v2868, %v1981
    %v2876 = vmul.f32 %v2868, %v1895
    %v2877 = vmul.f32 %v2868, %v1982
    %v2878 = vmul.f32 %v2868, %v1898
    %v2879 = vmul.f32 %v2868, %v1983
    %v2880 = vmul.f32 %v2868, %v1901
    %v2881 = vmul.f32 %v2868, %v1984
    %v2882 = vmul.f32 %v2868, %v1904
    %v2883 = vmul.f32 %v2868, %v1985
    %v2884 = vmul.f32 %v2868, %v1907
    %v2885 = vmul.f32 %v2868, %v1986
    %v2886 = vmul.f32 %v2868, %v1910
    %v2887 = vmul.f32 %v2868, %v1987
    %v2888 = vmul.f32 %v2868, %v1913
    %v2889 = vmul.f32 %v2868, %v1988
    %v2890 = vmul.f32 %v2868, %v1916
    %v2891 = vmul.f32 %v2868, %v1989
    %v2892 = vmul.f32 %v2868, %v1919
    %v2893 = vmul.f32 %v2868, %v1990
    %v2894 = vmul.f32 %v2868, %v1922
    %v2895 = vmul.f32 %v2868, %v1991
    %v2896 = vmul.f32 %v2868, %v1925
    %v2897 = vmul.f32 %v2868, %v1992
    %v2898 = vmul.f32 %v2868, %v1928
    %v2899 = vmul.f32 %v2868, %v237
    %v2900 = vmul.f32 %v2868, %v138
    %v2901 = vadd.f32 %v2835, %v2869
    %v2902 = vadd.f32 %v2836, %v2870
    %v2903 = vadd.f32 %v2837, %v2871
    %v2904 = vadd.f32 %v2838, %v2872
    %v2905 = vadd.f32 %v2839, %v2873
    %v2906 = vadd.f32 %v2840, %v2874
    %v2907 = vadd.f32 %v2841, %v2875
    %v2908 = vadd.f32 %v2842, %v2876
    %v2909 = vadd.f32 %v2843, %v2877
    %v2910 = vadd.f32 %v2844, %v2878
    %v2911 = vadd.f32 %v2845, %v2879
    %v2912 = vadd.f32 %v2846, %v2880
    %v2913 = vadd.f32 %v2847, %v2881
    %v2914 = vadd.f32 %v2848, %v2882
    %v2915 = vadd.f32 %v2849, %v2883
    %v2916 = vadd.f32 %v2850, %v2884
    %v2917 = vadd.f32 %v2851, %v2885
    %v2918 = vadd.f32 %v2852, %v2886
    %v2919 = vadd.f32 %v2853, %v2887
    %v2920 = vadd.f32 %v2854, %v2888
    %v2921 = vadd.f32 %v2855, %v2889
    %v2922 = vadd.f32 %v2856, %v2890
    %v2923 = vadd.f32 %v2857, %v2891
    %v2924 = vadd.f32 %v2858, %v2892
    %v2925 = vadd.f32 %v2859, %v2893
    %v2926 = vadd.f32 %v2860, %v2894
    %v2927 = vadd.f32 %v2861, %v2895
    %v2928 = vadd.f32 %v2862, %v2896
    %v2929 = vadd.f32 %v2863, %v2897
    %v2930 = vadd.f32 %v2864, %v2898
    %v2931 = vadd.f32 %v2865, %v2899
    %v2932 = vadd.f32 %v2866, %v2900
    %s2933 = sld [smem:[#allocation10 + $0x7]]
    %v2934 = vstv %s2933
    %v2935 = vmul.f32 %v2934, %v1978
    %v2936 = vmul.f32 %v2934, %v1886
    %v2937 = vmul.f32 %v2934, %v1994
    %v2938 = vmul.f32 %v2934, %v1979
    %v2939 = vmul.f32 %v2934, %v1889
    %v2940 = vmul.f32 %v2934, %v1995
    %v2941 = vmul.f32 %v2934, %v1980
    %v2942 = vmul.f32 %v2934, %v1892
    %v2943 = vmul.f32 %v2934, %v1996
    %v2944 = vmul.f32 %v2934, %v1981
    %v2945 = vmul.f32 %v2934, %v1895
    %v2946 = vmul.f32 %v2934, %v1997
    %v2947 = vmul.f32 %v2934, %v1982
    %v2948 = vmul.f32 %v2934, %v1898
    %v2949 = vmul.f32 %v2934, %v1998
    %v2950 = vmul.f32 %v2934, %v1983
    %v2951 = vmul.f32 %v2934, %v1901
    %v2952 = vmul.f32 %v2934, %v1999
    %v2953 = vmul.f32 %v2934, %v1984
    %v2954 = vmul.f32 %v2934, %v1904
    %v2955 = vmul.f32 %v2934, %v2000
    %v2956 = vmul.f32 %v2934, %v1985
    %v2957 = vmul.f32 %v2934, %v1907
    %v2958 = vmul.f32 %v2934, %v2001
    %v2959 = vmul.f32 %v2934, %v1986
    %v2960 = vmul.f32 %v2934, %v1910
    %v2961 = vmul.f32 %v2934, %v2002
    %v2962 = vmul.f32 %v2934, %v1987
    %v2963 = vmul.f32 %v2934, %v1913
    %v2964 = vmul.f32 %v2934, %v2003
    %v2965 = vmul.f32 %v2934, %v1988
    %v2966 = vmul.f32 %v2934, %v1916
    %v2967 = vmul.f32 %v2934, %v2004
    %v2968 = vmul.f32 %v2934, %v1989
    %v2969 = vmul.f32 %v2934, %v1919
    %v2970 = vmul.f32 %v2934, %v2005
    %v2971 = vmul.f32 %v2934, %v1990
    %v2972 = vmul.f32 %v2934, %v1922
    %v2973 = vmul.f32 %v2934, %v2006
    %v2974 = vmul.f32 %v2934, %v1991
    %v2975 = vmul.f32 %v2934, %v1925
    %v2976 = vmul.f32 %v2934, %v2007
    %v2977 = vmul.f32 %v2934, %v1992
    %v2978 = vmul.f32 %v2934, %v1928
    %v2979 = vmul.f32 %v2934, %v2008
    %v2980 = vmul.f32 %v2934, %v237
    %v2981 = vmul.f32 %v2934, %v138
    %v2982 = vmul.f32 %v2934, %v254
    %v3031 = vrot.slane %v2935, 1
    %v3032 = vrot.slane %v2936, 1
    %v3033 = vsel %vm503, %v3031, %v3032
    %v3034 = vrot.slane %v2937, 1
    %v3035 = vsel %vm503, %v3032, %v3034
    %v3036 = vrot.slane %v2938, 1
    %v3037 = vrot.slane %v2939, 1
    %v3038 = vsel %vm503, %v3036, %v3037
    %v3039 = vrot.slane %v2940, 1
    %v3040 = vsel %vm503, %v3037, %v3039
    %v3041 = vrot.slane %v2941, 1
    %v3042 = vrot.slane %v2942, 1
    %v3043 = vsel %vm503, %v3041, %v3042
    %v3044 = vrot.slane %v2943, 1
    %v3045 = vsel %vm503, %v3042, %v3044
    %v3046 = vrot.slane %v2944, 1
    %v3047 = vrot.slane %v2945, 1
    %v3048 = vsel %vm503, %v3046, %v3047
    %v3049 = vrot.slane %v2946, 1
    %v3050 = vsel %vm503, %v3047, %v3049
    %v3051 = vrot.slane %v2947, 1
    %v3052 = vrot.slane %v2948, 1
    %v3053 = vsel %vm503, %v3051, %v3052
    %v3054 = vrot.slane %v2949, 1
    %v3055 = vsel %vm503, %v3052, %v3054
    %v3056 = vrot.slane %v2950, 1
    %v3057 = vrot.slane %v2951, 1
    %v3058 = vsel %vm503, %v3056, %v3057
    %v3059 = vrot.slane %v2952, 1
    %v3060 = vsel %vm503, %v3057, %v3059
    %v3061 = vrot.slane %v2953, 1
    %v3062 = vrot.slane %v2954, 1
    %v3063 = vsel %vm503, %v3061, %v3062
    %v3064 = vrot.slane %v2955, 1
    %v3065 = vsel %vm503, %v3062, %v3064
    %v3066 = vrot.slane %v2956, 1
    %v3067 = vrot.slane %v2957, 1
    %v3068 = vsel %vm503, %v3066, %v3067
    %v3069 = vrot.slane %v2958, 1
    %v3070 = vsel %vm503, %v3067, %v3069
    %v3071 = vrot.slane %v2959, 1
    %v3072 = vrot.slane %v2960, 1
    %v3073 = vsel %vm503, %v3071, %v3072
    %v3074 = vrot.slane %v2961, 1
    %v3075 = vsel %vm503, %v3072, %v3074
    %v3076 = vrot.slane %v2962, 1
    %v3077 = vrot.slane %v2963, 1
    %v3078 = vsel %vm503, %v3076, %v3077
    %v3079 = vrot.slane %v2964, 1
    %v3080 = vsel %vm503, %v3077, %v3079
    %v3081 = vrot.slane %v2965, 1
    %v3082 = vrot.slane %v2966, 1
    %v3083 = vsel %vm503, %v3081, %v3082
    %v3084 = vrot.slane %v2967, 1
    %v3085 = vsel %vm503, %v3082, %v3084
    %v3086 = vrot.slane %v2968, 1
    %v3087 = vrot.slane %v2969, 1
    %v3088 = vsel %vm503, %v3086, %v3087
    %v3089 = vrot.slane %v2970, 1
    %v3090 = vsel %vm503, %v3087, %v3089
    %v3091 = vrot.slane %v2971, 1
    %v3092 = vrot.slane %v2972, 1
    %v3093 = vsel %vm503, %v3091, %v3092
    %v3094 = vrot.slane %v2973, 1
    %v3095 = vsel %vm503, %v3092, %v3094
    %v3096 = vrot.slane %v2974, 1
    %v3097 = vrot.slane %v2975, 1
    %v3098 = vsel %vm503, %v3096, %v3097
    %v3099 = vrot.slane %v2976, 1
    %v3100 = vsel %vm503, %v3097, %v3099
    %v3101 = vrot.slane %v2977, 1
    %v3102 = vrot.slane %v2978, 1
    %v3103 = vsel %vm503, %v3101, %v3102
    %v3104 = vrot.slane %v2979, 1
    %v3105 = vsel %vm503, %v3102, %v3104
    %v3106 = vrot.slane %v2980, 1
    %v3107 = vrot.slane %v2981, 1
    %v3108 = vsel %vm503, %v3106, %v3107
    %v3109 = vrot.slane %v2982, 1
    %v3110 = vsel %vm503, %v3107, %v3109
    %v3143 = vadd.f32 %v2901, %v3033
    %v3144 = vadd.f32 %v2902, %v3035
    %v3145 = vadd.f32 %v2903, %v3038
    %v3146 = vadd.f32 %v2904, %v3040
    %v3147 = vadd.f32 %v2905, %v3043
    %v3148 = vadd.f32 %v2906, %v3045
    %v3149 = vadd.f32 %v2907, %v3048
    %v3150 = vadd.f32 %v2908, %v3050
    %v3151 = vadd.f32 %v2909, %v3053
    %v3152 = vadd.f32 %v2910, %v3055
    %v3153 = vadd.f32 %v2911, %v3058
    %v3154 = vadd.f32 %v2912, %v3060
    %v3155 = vadd.f32 %v2913, %v3063
    %v3156 = vadd.f32 %v2914, %v3065
    %v3157 = vadd.f32 %v2915, %v3068
    %v3158 = vadd.f32 %v2916, %v3070
    %v3159 = vadd.f32 %v2917, %v3073
    %v3160 = vadd.f32 %v2918, %v3075
    %v3161 = vadd.f32 %v2919, %v3078
    %v3162 = vadd.f32 %v2920, %v3080
    %v3163 = vadd.f32 %v2921, %v3083
    %v3164 = vadd.f32 %v2922, %v3085
    %v3165 = vadd.f32 %v2923, %v3088
    %v3166 = vadd.f32 %v2924, %v3090
    %v3167 = vadd.f32 %v2925, %v3093
    %v3168 = vadd.f32 %v2926, %v3095
    %v3169 = vadd.f32 %v2927, %v3098
    %v3170 = vadd.f32 %v2928, %v3100
    %v3171 = vadd.f32 %v2929, %v3103
    %v3172 = vadd.f32 %v2930, %v3105
    %v3173 = vadd.f32 %v2931, %v3108
    %v3174 = vadd.f32 %v2932, %v3110
    %s3175 = sld [smem:[#allocation10 + $0x8]]
    %v3176 = vstv %s3175
    %v3177 = vmul.f32 %v3176, %v1978
    %v3178 = vmul.f32 %v3176, %v1886
    %v3179 = vmul.f32 %v3176, %v1994
    %v3180 = vmul.f32 %v3176, %v1979
    %v3181 = vmul.f32 %v3176, %v1889
    %v3182 = vmul.f32 %v3176, %v1995
    %v3183 = vmul.f32 %v3176, %v1980
    %v3184 = vmul.f32 %v3176, %v1892
    %v3185 = vmul.f32 %v3176, %v1996
    %v3186 = vmul.f32 %v3176, %v1981
    %v3187 = vmul.f32 %v3176, %v1895
    %v3188 = vmul.f32 %v3176, %v1997
    %v3189 = vmul.f32 %v3176, %v1982
    %v3190 = vmul.f32 %v3176, %v1898
    %v3191 = vmul.f32 %v3176, %v1998
    %v3192 = vmul.f32 %v3176, %v1983
    %v3193 = vmul.f32 %v3176, %v1901
    %v3194 = vmul.f32 %v3176, %v1999
    %v3195 = vmul.f32 %v3176, %v1984
    %v3196 = vmul.f32 %v3176, %v1904
    %v3197 = vmul.f32 %v3176, %v2000
    %v3198 = vmul.f32 %v3176, %v1985
    %v3199 = vmul.f32 %v3176, %v1907
    %v3200 = vmul.f32 %v3176, %v2001
    %v3201 = vmul.f32 %v3176, %v1986
    %v3202 = vmul.f32 %v3176, %v1910
    %v3203 = vmul.f32 %v3176, %v2002
    %v3204 = vmul.f32 %v3176, %v1987
    %v3205 = vmul.f32 %v3176, %v1913
    %v3206 = vmul.f32 %v3176, %v2003
    %v3207 = vmul.f32 %v3176, %v1988
    %v3208 = vmul.f32 %v3176, %v1916
    %v3209 = vmul.f32 %v3176, %v2004
    %v3210 = vmul.f32 %v3176, %v1989
    %v3211 = vmul.f32 %v3176, %v1919
    %v3212 = vmul.f32 %v3176, %v2005
    %v3213 = vmul.f32 %v3176, %v1990
    %v3214 = vmul.f32 %v3176, %v1922
    %v3215 = vmul.f32 %v3176, %v2006
    %v3216 = vmul.f32 %v3176, %v1991
    %v3217 = vmul.f32 %v3176, %v1925
    %v3218 = vmul.f32 %v3176, %v2007
    %v3219 = vmul.f32 %v3176, %v1992
    %v3220 = vmul.f32 %v3176, %v1928
    %v3221 = vmul.f32 %v3176, %v2008
    %v3222 = vmul.f32 %v3176, %v237
    %v3223 = vmul.f32 %v3176, %v138
    %v3224 = vmul.f32 %v3176, %v254
    %v3273 = vrot.slane %v3177, 2
    %v3274 = vrot.slane %v3178, 2
    %v3275 = vsel %vm746, %v3273, %v3274
    %v3276 = vrot.slane %v3179, 2
    %v3277 = vsel %vm746, %v3274, %v3276
    %v3278 = vrot.slane %v3180, 2
    %v3279 = vrot.slane %v3181, 2
    %v3280 = vsel %vm746, %v3278, %v3279
    %v3281 = vrot.slane %v3182, 2
    %v3282 = vsel %vm746, %v3279, %v3281
    %v3283 = vrot.slane %v3183, 2
    %v3284 = vrot.slane %v3184, 2
    %v3285 = vsel %vm746, %v3283, %v3284
    %v3286 = vrot.slane %v3185, 2
    %v3287 = vsel %vm746, %v3284, %v3286
    %v3288 = vrot.slane %v3186, 2
    %v3289 = vrot.slane %v3187, 2
    %v3290 = vsel %vm746, %v3288, %v3289
    %v3291 = vrot.slane %v3188, 2
    %v3292 = vsel %vm746, %v3289, %v3291
    %v3293 = vrot.slane %v3189, 2
    %v3294 = vrot.slane %v3190, 2
    %v3295 = vsel %vm746, %v3293, %v3294
    %v3296 = vrot.slane %v3191, 2
    %v3297 = vsel %vm746, %v3294, %v3296
    %v3298 = vrot.slane %v3192, 2
    %v3299 = vrot.slane %v3193, 2
    %v3300 = vsel %vm746, %v3298, %v3299
    %v3301 = vrot.slane %v3194, 2
    %v3302 = vsel %vm746, %v3299, %v3301
    %v3303 = vrot.slane %v3195, 2
    %v3304 = vrot.slane %v3196, 2
    %v3305 = vsel %vm746, %v3303, %v3304
    %v3306 = vrot.slane %v3197, 2
    %v3307 = vsel %vm746, %v3304, %v3306
    %v3308 = vrot.slane %v3198, 2
    %v3309 = vrot.slane %v3199, 2
    %v3310 = vsel %vm746, %v3308, %v3309
    %v3311 = vrot.slane %v3200, 2
    %v3312 = vsel %vm746, %v3309, %v3311
    %v3313 = vrot.slane %v3201, 2
    %v3314 = vrot.slane %v3202, 2
    %v3315 = vsel %vm746, %v3313, %v3314
    %v3316 = vrot.slane %v3203, 2
    %v3317 = vsel %vm746, %v3314, %v3316
    %v3318 = vrot.slane %v3204, 2
    %v3319 = vrot.slane %v3205, 2
    %v3320 = vsel %vm746, %v3318, %v3319
    %v3321 = vrot.slane %v3206, 2
    %v3322 = vsel %vm746, %v3319, %v3321
    %v3323 = vrot.slane %v3207, 2
    %v3324 = vrot.slane %v3208, 2
    %v3325 = vsel %vm746, %v3323, %v3324
    %v3326 = vrot.slane %v3209, 2
    %v3327 = vsel %vm746, %v3324, %v3326
    %v3328 = vrot.slane %v3210, 2
    %v3329 = vrot.slane %v3211, 2
    %v3330 = vsel %vm746, %v3328, %v3329
    %v3331 = vrot.slane %v3212, 2
    %v3332 = vsel %vm746, %v3329, %v3331
    %v3333 = vrot.slane %v3213, 2
    %v3334 = vrot.slane %v3214, 2
    %v3335 = vsel %vm746, %v3333, %v3334
    %v3336 = vrot.slane %v3215, 2
    %v3337 = vsel %vm746, %v3334, %v3336
    %v3338 = vrot.slane %v3216, 2
    %v3339 = vrot.slane %v3217, 2
    %v3340 = vsel %vm746, %v3338, %v3339
    %v3341 = vrot.slane %v3218, 2
    %v3342 = vsel %vm746, %v3339, %v3341
    %v3343 = vrot.slane %v3219, 2
    %v3344 = vrot.slane %v3220, 2
    %v3345 = vsel %vm746, %v3343, %v3344
    %v3346 = vrot.slane %v3221, 2
    %v3347 = vsel %vm746, %v3344, %v3346
    %v3348 = vrot.slane %v3222, 2
    %v3349 = vrot.slane %v3223, 2
    %v3350 = vsel %vm746, %v3348, %v3349
    %v3351 = vrot.slane %v3224, 2
    %v3352 = vsel %vm746, %v3349, %v3351
    %v3385 = vadd.f32 %v3143, %v3275
    %v3386 = vadd.f32 %v3144, %v3277
    %v3387 = vadd.f32 %v3145, %v3280
    %v3388 = vadd.f32 %v3146, %v3282
    %v3389 = vadd.f32 %v3147, %v3285
    %v3390 = vadd.f32 %v3148, %v3287
    %v3391 = vadd.f32 %v3149, %v3290
    %v3392 = vadd.f32 %v3150, %v3292
    %v3393 = vadd.f32 %v3151, %v3295
    %v3394 = vadd.f32 %v3152, %v3297
    %v3395 = vadd.f32 %v3153, %v3300
    %v3396 = vadd.f32 %v3154, %v3302
    %v3397 = vadd.f32 %v3155, %v3305
    %v3398 = vadd.f32 %v3156, %v3307
    %v3399 = vadd.f32 %v3157, %v3310
    %v3400 = vadd.f32 %v3158, %v3312
    %v3401 = vadd.f32 %v3159, %v3315
    %v3402 = vadd.f32 %v3160, %v3317
    %v3403 = vadd.f32 %v3161, %v3320
    %v3404 = vadd.f32 %v3162, %v3322
    %v3405 = vadd.f32 %v3163, %v3325
    %v3406 = vadd.f32 %v3164, %v3327
    %v3407 = vadd.f32 %v3165, %v3330
    %v3408 = vadd.f32 %v3166, %v3332
    %v3409 = vadd.f32 %v3167, %v3335
    %v3410 = vadd.f32 %v3168, %v3337
    %v3411 = vadd.f32 %v3169, %v3340
    %v3412 = vadd.f32 %v3170, %v3342
    %v3413 = vadd.f32 %v3171, %v3345
    %v3414 = vadd.f32 %v3172, %v3347
    %v3415 = vadd.f32 %v3173, %v3350
    %v3416 = vadd.f32 %v3174, %v3352
    %s3417 = sld [smem:[#allocation8 + $0x84]]
    %v3418 = vstv %s3417
    %v3419 = vmul.f32 %v3418, %v71
    %v3420 = vmul.f32 %v3418, %v72
    %v3421 = vmul.f32 %v3418, %v73
    %v3422 = vmul.f32 %v3418, %v74
    %v3423 = vmul.f32 %v3418, %v75
    %v3424 = vmul.f32 %v3418, %v76
    %v3425 = vmul.f32 %v3418, %v77
    %v3426 = vmul.f32 %v3418, %v78
    %v3427 = vmul.f32 %v3418, %v79
    %v3428 = vmul.f32 %v3418, %v80
    %v3429 = vmul.f32 %v3418, %v81
    %v3430 = vmul.f32 %v3418, %v82
    %v3431 = vmul.f32 %v3418, %v83
    %v3432 = vmul.f32 %v3418, %v84
    %v3433 = vmul.f32 %v3418, %v85
    %v3434 = vmul.f32 %v3418, %v86
    %v3435 = vmul.f32 %v3418, %v87
    %v3436 = vmul.f32 %v3418, %v88
    %v3437 = vmul.f32 %v3418, %v89
    %v3438 = vmul.f32 %v3418, %v90
    %v3439 = vmul.f32 %v3418, %v91
    %v3440 = vmul.f32 %v3418, %v92
    %v3441 = vmul.f32 %v3418, %v93
    %v3442 = vmul.f32 %v3418, %v94
    %v3443 = vmul.f32 %v3418, %v95
    %v3444 = vmul.f32 %v3418, %v96
    %v3445 = vmul.f32 %v3418, %v97
    %v3446 = vmul.f32 %v3418, %v98
    %v3447 = vmul.f32 %v3418, %v99
    %v3448 = vmul.f32 %v3418, %v100
    %v3449 = vmul.f32 %v3418, %v101
    %v3450 = vmul.f32 %v3418, %v102
    %s3451 = sld [smem:[#allocation9 + $0x1]]
    %v3452 = vstv %s3451
    %v3453 = vadd.f32 %v3419, %v3452
    %v3454 = vadd.f32 %v3420, %v3452
    %v3455 = vadd.f32 %v3421, %v3452
    %v3456 = vadd.f32 %v3422, %v3452
    %v3457 = vadd.f32 %v3423, %v3452
    %v3458 = vadd.f32 %v3424, %v3452
    %v3459 = vadd.f32 %v3425, %v3452
    %v3460 = vadd.f32 %v3426, %v3452
    %v3461 = vadd.f32 %v3427, %v3452
    %v3462 = vadd.f32 %v3428, %v3452
    %v3463 = vadd.f32 %v3429, %v3452
    %v3464 = vadd.f32 %v3430, %v3452
    %v3465 = vadd.f32 %v3431, %v3452
    %v3466 = vadd.f32 %v3432, %v3452
    %v3467 = vadd.f32 %v3433, %v3452
    %v3468 = vadd.f32 %v3434, %v3452
    %v3469 = vadd.f32 %v3435, %v3452
    %v3470 = vadd.f32 %v3436, %v3452
    %v3471 = vadd.f32 %v3437, %v3452
    %v3472 = vadd.f32 %v3438, %v3452
    %v3473 = vadd.f32 %v3439, %v3452
    %v3474 = vadd.f32 %v3440, %v3452
    %v3475 = vadd.f32 %v3441, %v3452
    %v3476 = vadd.f32 %v3442, %v3452
    %v3477 = vadd.f32 %v3443, %v3452
    %v3478 = vadd.f32 %v3444, %v3452
    %v3479 = vadd.f32 %v3445, %v3452
    %v3480 = vadd.f32 %v3446, %v3452
    %v3481 = vadd.f32 %v3447, %v3452
    %v3482 = vadd.f32 %v3448, %v3452
    %v3483 = vadd.f32 %v3449, %v3452
    %v3484 = vadd.f32 %v3450, %v3452
    %s3485 = sld [smem:[#allocation8 + $0x80]]
    %v3486 = vstv %s3485
    %v3487 = vmul.f32 %v3486, %v237
    %v3488 = vmul.f32 %v3486, %v138
    %v3489 = vmul.f32 %v3486, %v238
    %v3490 = vmul.f32 %v3486, %v141
    %v3491 = vmul.f32 %v3486, %v239
    %v3492 = vmul.f32 %v3486, %v144
    %v3493 = vmul.f32 %v3486, %v240
    %v3494 = vmul.f32 %v3486, %v147
    %v3495 = vmul.f32 %v3486, %v241
    %v3496 = vmul.f32 %v3486, %v150
    %v3497 = vmul.f32 %v3486, %v242
    %v3498 = vmul.f32 %v3486, %v153
    %v3499 = vmul.f32 %v3486, %v243
    %v3500 = vmul.f32 %v3486, %v156
    %v3501 = vmul.f32 %v3486, %v244
    %v3502 = vmul.f32 %v3486, %v159
    %v3503 = vmul.f32 %v3486, %v245
    %v3504 = vmul.f32 %v3486, %v162
    %v3505 = vmul.f32 %v3486, %v246
    %v3506 = vmul.f32 %v3486, %v165
    %v3507 = vmul.f32 %v3486, %v247
    %v3508 = vmul.f32 %v3486, %v168
    %v3509 = vmul.f32 %v3486, %v248
    %v3510 = vmul.f32 %v3486, %v171
    %v3511 = vmul.f32 %v3486, %v249
    %v3512 = vmul.f32 %v3486, %v174
    %v3513 = vmul.f32 %v3486, %v250
    %v3514 = vmul.f32 %v3486, %v177
    %v3515 = vmul.f32 %v3486, %v251
    %v3516 = vmul.f32 %v3486, %v180
    %v3517 = vmul.f32 %v3486, %v252
    %v3518 = vmul.f32 %v3486, %v183
    %v3519 = vadd.f32 %v3453, %v3487
    %v3520 = vadd.f32 %v3454, %v3488
    %v3521 = vadd.f32 %v3455, %v3489
    %v3522 = vadd.f32 %v3456, %v3490
    %v3523 = vadd.f32 %v3457, %v3491
    %v3524 = vadd.f32 %v3458, %v3492
    %v3525 = vadd.f32 %v3459, %v3493
    %v3526 = vadd.f32 %v3460, %v3494
    %v3527 = vadd.f32 %v3461, %v3495
    %v3528 = vadd.f32 %v3462, %v3496
    %v3529 = vadd.f32 %v3463, %v3497
    %v3530 = vadd.f32 %v3464, %v3498
    %v3531 = vadd.f32 %v3465, %v3499
    %v3532 = vadd.f32 %v3466, %v3500
    %v3533 = vadd.f32 %v3467, %v3501
    %v3534 = vadd.f32 %v3468, %v3502
    %v3535 = vadd.f32 %v3469, %v3503
    %v3536 = vadd.f32 %v3470, %v3504
    %v3537 = vadd.f32 %v3471, %v3505
    %v3538 = vadd.f32 %v3472, %v3506
    %v3539 = vadd.f32 %v3473, %v3507
    %v3540 = vadd.f32 %v3474, %v3508
    %v3541 = vadd.f32 %v3475, %v3509
    %v3542 = vadd.f32 %v3476, %v3510
    %v3543 = vadd.f32 %v3477, %v3511
    %v3544 = vadd.f32 %v3478, %v3512
    %v3545 = vadd.f32 %v3479, %v3513
    %v3546 = vadd.f32 %v3480, %v3514
    %v3547 = vadd.f32 %v3481, %v3515
    %v3548 = vadd.f32 %v3482, %v3516
    %v3549 = vadd.f32 %v3483, %v3517
    %v3550 = vadd.f32 %v3484, %v3518
    %s3551 = sld [smem:[#allocation8 + $0x81]]
    %v3552 = vstv %s3551
    %v3553 = vmul.f32 %v3552, %v237
    %v3554 = vmul.f32 %v3552, %v138
    %v3555 = vmul.f32 %v3552, %v254
    %v3556 = vmul.f32 %v3552, %v238
    %v3557 = vmul.f32 %v3552, %v141
    %v3558 = vmul.f32 %v3552, %v255
    %v3559 = vmul.f32 %v3552, %v239
    %v3560 = vmul.f32 %v3552, %v144
    %v3561 = vmul.f32 %v3552, %v256
    %v3562 = vmul.f32 %v3552, %v240
    %v3563 = vmul.f32 %v3552, %v147
    %v3564 = vmul.f32 %v3552, %v257
    %v3565 = vmul.f32 %v3552, %v241
    %v3566 = vmul.f32 %v3552, %v150
    %v3567 = vmul.f32 %v3552, %v258
    %v3568 = vmul.f32 %v3552, %v242
    %v3569 = vmul.f32 %v3552, %v153
    %v3570 = vmul.f32 %v3552, %v259
    %v3571 = vmul.f32 %v3552, %v243
    %v3572 = vmul.f32 %v3552, %v156
    %v3573 = vmul.f32 %v3552, %v260
    %v3574 = vmul.f32 %v3552, %v244
    %v3575 = vmul.f32 %v3552, %v159
    %v3576 = vmul.f32 %v3552, %v261
    %v3577 = vmul.f32 %v3552, %v245
    %v3578 = vmul.f32 %v3552, %v162
    %v3579 = vmul.f32 %v3552, %v262
    %v3580 = vmul.f32 %v3552, %v246
    %v3581 = vmul.f32 %v3552, %v165
    %v3582 = vmul.f32 %v3552, %v263
    %v3583 = vmul.f32 %v3552, %v247
    %v3584 = vmul.f32 %v3552, %v168
    %v3585 = vmul.f32 %v3552, %v264
    %v3586 = vmul.f32 %v3552, %v248
    %v3587 = vmul.f32 %v3552, %v171
    %v3588 = vmul.f32 %v3552, %v265
    %v3589 = vmul.f32 %v3552, %v249
    %v3590 = vmul.f32 %v3552, %v174
    %v3591 = vmul.f32 %v3552, %v266
    %v3592 = vmul.f32 %v3552, %v250
    %v3593 = vmul.f32 %v3552, %v177
    %v3594 = vmul.f32 %v3552, %v267
    %v3595 = vmul.f32 %v3552, %v251
    %v3596 = vmul.f32 %v3552, %v180
    %v3597 = vmul.f32 %v3552, %v268
    %v3598 = vmul.f32 %v3552, %v252
    %v3599 = vmul.f32 %v3552, %v183
    %v3600 = vmul.f32 %v3552, %v269
    %v3649 = vrot.slane %v3553, 1
    %v3650 = vrot.slane %v3554, 1
    %v3651 = vsel %vm503, %v3649, %v3650
    %v3652 = vrot.slane %v3555, 1
    %v3653 = vsel %vm503, %v3650, %v3652
    %v3654 = vrot.slane %v3556, 1
    %v3655 = vrot.slane %v3557, 1
    %v3656 = vsel %vm503, %v3654, %v3655
    %v3657 = vrot.slane %v3558, 1
    %v3658 = vsel %vm503, %v3655, %v3657
    %v3659 = vrot.slane %v3559, 1
    %v3660 = vrot.slane %v3560, 1
    %v3661 = vsel %vm503, %v3659, %v3660
    %v3662 = vrot.slane %v3561, 1
    %v3663 = vsel %vm503, %v3660, %v3662
    %v3664 = vrot.slane %v3562, 1
    %v3665 = vrot.slane %v3563, 1
    %v3666 = vsel %vm503, %v3664, %v3665
    %v3667 = vrot.slane %v3564, 1
    %v3668 = vsel %vm503, %v3665, %v3667
    %v3669 = vrot.slane %v3565, 1
    %v3670 = vrot.slane %v3566, 1
    %v3671 = vsel %vm503, %v3669, %v3670
    %v3672 = vrot.slane %v3567, 1
    %v3673 = vsel %vm503, %v3670, %v3672
    %v3674 = vrot.slane %v3568, 1
    %v3675 = vrot.slane %v3569, 1
    %v3676 = vsel %vm503, %v3674, %v3675
    %v3677 = vrot.slane %v3570, 1
    %v3678 = vsel %vm503, %v3675, %v3677
    %v3679 = vrot.slane %v3571, 1
    %v3680 = vrot.slane %v3572, 1
    %v3681 = vsel %vm503, %v3679, %v3680
    %v3682 = vrot.slane %v3573, 1
    %v3683 = vsel %vm503, %v3680, %v3682
    %v3684 = vrot.slane %v3574, 1
    %v3685 = vrot.slane %v3575, 1
    %v3686 = vsel %vm503, %v3684, %v3685
    %v3687 = vrot.slane %v3576, 1
    %v3688 = vsel %vm503, %v3685, %v3687
    %v3689 = vrot.slane %v3577, 1
    %v3690 = vrot.slane %v3578, 1
    %v3691 = vsel %vm503, %v3689, %v3690
    %v3692 = vrot.slane %v3579, 1
    %v3693 = vsel %vm503, %v3690, %v3692
    %v3694 = vrot.slane %v3580, 1
    %v3695 = vrot.slane %v3581, 1
    %v3696 = vsel %vm503, %v3694, %v3695
    %v3697 = vrot.slane %v3582, 1
    %v3698 = vsel %vm503, %v3695, %v3697
    %v3699 = vrot.slane %v3583, 1
    %v3700 = vrot.slane %v3584, 1
    %v3701 = vsel %vm503, %v3699, %v3700
    %v3702 = vrot.slane %v3585, 1
    %v3703 = vsel %vm503, %v3700, %v3702
    %v3704 = vrot.slane %v3586, 1
    %v3705 = vrot.slane %v3587, 1
    %v3706 = vsel %vm503, %v3704, %v3705
    %v3707 = vrot.slane %v3588, 1
    %v3708 = vsel %vm503, %v3705, %v3707
    %v3709 = vrot.slane %v3589, 1
    %v3710 = vrot.slane %v3590, 1
    %v3711 = vsel %vm503, %v3709, %v3710
    %v3712 = vrot.slane %v3591, 1
    %v3713 = vsel %vm503, %v3710, %v3712
    %v3714 = vrot.slane %v3592, 1
    %v3715 = vrot.slane %v3593, 1
    %v3716 = vsel %vm503, %v3714, %v3715
    %v3717 = vrot.slane %v3594, 1
    %v3718 = vsel %vm503, %v3715, %v3717
    %v3719 = vrot.slane %v3595, 1
    %v3720 = vrot.slane %v3596, 1
    %v3721 = vsel %vm503, %v3719, %v3720
    %v3722 = vrot.slane %v3597, 1
    %v3723 = vsel %vm503, %v3720, %v3722
    %v3724 = vrot.slane %v3598, 1
    %v3725 = vrot.slane %v3599, 1
    %v3726 = vsel %vm503, %v3724, %v3725
    %v3727 = vrot.slane %v3600, 1
    %v3728 = vsel %vm503, %v3725, %v3727
    %v3761 = vadd.f32 %v3519, %v3651
    %v3762 = vadd.f32 %v3520, %v3653
    %v3763 = vadd.f32 %v3521, %v3656
    %v3764 = vadd.f32 %v3522, %v3658
    %v3765 = vadd.f32 %v3523, %v3661
    %v3766 = vadd.f32 %v3524, %v3663
    %v3767 = vadd.f32 %v3525, %v3666
    %v3768 = vadd.f32 %v3526, %v3668
    %v3769 = vadd.f32 %v3527, %v3671
    %v3770 = vadd.f32 %v3528, %v3673
    %v3771 = vadd.f32 %v3529, %v3676
    %v3772 = vadd.f32 %v3530, %v3678
    %v3773 = vadd.f32 %v3531, %v3681
    %v3774 = vadd.f32 %v3532, %v3683
    %v3775 = vadd.f32 %v3533, %v3686
    %v3776 = vadd.f32 %v3534, %v3688
    %v3777 = vadd.f32 %v3535, %v3691
    %v3778 = vadd.f32 %v3536, %v3693
    %v3779 = vadd.f32 %v3537, %v3696
    %v3780 = vadd.f32 %v3538, %v3698
    %v3781 = vadd.f32 %v3539, %v3701
    %v3782 = vadd.f32 %v3540, %v3703
    %v3783 = vadd.f32 %v3541, %v3706
    %v3784 = vadd.f32 %v3542, %v3708
    %v3785 = vadd.f32 %v3543, %v3711
    %v3786 = vadd.f32 %v3544, %v3713
    %v3787 = vadd.f32 %v3545, %v3716
    %v3788 = vadd.f32 %v3546, %v3718
    %v3789 = vadd.f32 %v3547, %v3721
    %v3790 = vadd.f32 %v3548, %v3723
    %v3791 = vadd.f32 %v3549, %v3726
    %v3792 = vadd.f32 %v3550, %v3728
    %s3793 = sld [smem:[#allocation8 + $0x82]]
    %v3794 = vstv %s3793
    %v3795 = vmul.f32 %v3794, %v237
    %v3796 = vmul.f32 %v3794, %v138
    %v3797 = vmul.f32 %v3794, %v254
    %v3798 = vmul.f32 %v3794, %v238
    %v3799 = vmul.f32 %v3794, %v141
    %v3800 = vmul.f32 %v3794, %v255
    %v3801 = vmul.f32 %v3794, %v239
    %v3802 = vmul.f32 %v3794, %v144
    %v3803 = vmul.f32 %v3794, %v256
    %v3804 = vmul.f32 %v3794, %v240
    %v3805 = vmul.f32 %v3794, %v147
    %v3806 = vmul.f32 %v3794, %v257
    %v3807 = vmul.f32 %v3794, %v241
    %v3808 = vmul.f32 %v3794, %v150
    %v3809 = vmul.f32 %v3794, %v258
    %v3810 = vmul.f32 %v3794, %v242
    %v3811 = vmul.f32 %v3794, %v153
    %v3812 = vmul.f32 %v3794, %v259
    %v3813 = vmul.f32 %v3794, %v243
    %v3814 = vmul.f32 %v3794, %v156
    %v3815 = vmul.f32 %v3794, %v260
    %v3816 = vmul.f32 %v3794, %v244
    %v3817 = vmul.f32 %v3794, %v159
    %v3818 = vmul.f32 %v3794, %v261
    %v3819 = vmul.f32 %v3794, %v245
    %v3820 = vmul.f32 %v3794, %v162
    %v3821 = vmul.f32 %v3794, %v262
    %v3822 = vmul.f32 %v3794, %v246
    %v3823 = vmul.f32 %v3794, %v165
    %v3824 = vmul.f32 %v3794, %v263
    %v3825 = vmul.f32 %v3794, %v247
    %v3826 = vmul.f32 %v3794, %v168
    %v3827 = vmul.f32 %v3794, %v264
    %v3828 = vmul.f32 %v3794, %v248
    %v3829 = vmul.f32 %v3794, %v171
    %v3830 = vmul.f32 %v3794, %v265
    %v3831 = vmul.f32 %v3794, %v249
    %v3832 = vmul.f32 %v3794, %v174
    %v3833 = vmul.f32 %v3794, %v266
    %v3834 = vmul.f32 %v3794, %v250
    %v3835 = vmul.f32 %v3794, %v177
    %v3836 = vmul.f32 %v3794, %v267
    %v3837 = vmul.f32 %v3794, %v251
    %v3838 = vmul.f32 %v3794, %v180
    %v3839 = vmul.f32 %v3794, %v268
    %v3840 = vmul.f32 %v3794, %v252
    %v3841 = vmul.f32 %v3794, %v183
    %v3842 = vmul.f32 %v3794, %v269
    %v3891 = vrot.slane %v3795, 2
    %v3892 = vrot.slane %v3796, 2
    %v3893 = vsel %vm746, %v3891, %v3892
    %v3894 = vrot.slane %v3797, 2
    %v3895 = vsel %vm746, %v3892, %v3894
    %v3896 = vrot.slane %v3798, 2
    %v3897 = vrot.slane %v3799, 2
    %v3898 = vsel %vm746, %v3896, %v3897
    %v3899 = vrot.slane %v3800, 2
    %v3900 = vsel %vm746, %v3897, %v3899
    %v3901 = vrot.slane %v3801, 2
    %v3902 = vrot.slane %v3802, 2
    %v3903 = vsel %vm746, %v3901, %v3902
    %v3904 = vrot.slane %v3803, 2
    %v3905 = vsel %vm746, %v3902, %v3904
    %v3906 = vrot.slane %v3804, 2
    %v3907 = vrot.slane %v3805, 2
    %v3908 = vsel %vm746, %v3906, %v3907
    %v3909 = vrot.slane %v3806, 2
    %v3910 = vsel %vm746, %v3907, %v3909
    %v3911 = vrot.slane %v3807, 2
    %v3912 = vrot.slane %v3808, 2
    %v3913 = vsel %vm746, %v3911, %v3912
    %v3914 = vrot.slane %v3809, 2
    %v3915 = vsel %vm746, %v3912, %v3914
    %v3916 = vrot.slane %v3810, 2
    %v3917 = vrot.slane %v3811, 2
    %v3918 = vsel %vm746, %v3916, %v3917
    %v3919 = vrot.slane %v3812, 2
    %v3920 = vsel %vm746, %v3917, %v3919
    %v3921 = vrot.slane %v3813, 2
    %v3922 = vrot.slane %v3814, 2
    %v3923 = vsel %vm746, %v3921, %v3922
    %v3924 = vrot.slane %v3815, 2
    %v3925 = vsel %vm746, %v3922, %v3924
    %v3926 = vrot.slane %v3816, 2
    %v3927 = vrot.slane %v3817, 2
    %v3928 = vsel %vm746, %v3926, %v3927
    %v3929 = vrot.slane %v3818, 2
    %v3930 = vsel %vm746, %v3927, %v3929
    %v3931 = vrot.slane %v3819, 2
    %v3932 = vrot.slane %v3820, 2
    %v3933 = vsel %vm746, %v3931, %v3932
    %v3934 = vrot.slane %v3821, 2
    %v3935 = vsel %vm746, %v3932, %v3934
    %v3936 = vrot.slane %v3822, 2
    %v3937 = vrot.slane %v3823, 2
    %v3938 = vsel %vm746, %v3936, %v3937
    %v3939 = vrot.slane %v3824, 2
    %v3940 = vsel %vm746, %v3937, %v3939
    %v3941 = vrot.slane %v3825, 2
    %v3942 = vrot.slane %v3826, 2
    %v3943 = vsel %vm746, %v3941, %v3942
    %v3944 = vrot.slane %v3827, 2
    %v3945 = vsel %vm746, %v3942, %v3944
    %v3946 = vrot.slane %v3828, 2
    %v3947 = vrot.slane %v3829, 2
    %v3948 = vsel %vm746, %v3946, %v3947
    %v3949 = vrot.slane %v3830, 2
    %v3950 = vsel %vm746, %v3947, %v3949
    %v3951 = vrot.slane %v3831, 2
    %v3952 = vrot.slane %v3832, 2
    %v3953 = vsel %vm746, %v3951, %v3952
    %v3954 = vrot.slane %v3833, 2
    %v3955 = vsel %vm746, %v3952, %v3954
    %v3956 = vrot.slane %v3834, 2
    %v3957 = vrot.slane %v3835, 2
    %v3958 = vsel %vm746, %v3956, %v3957
    %v3959 = vrot.slane %v3836, 2
    %v3960 = vsel %vm746, %v3957, %v3959
    %v3961 = vrot.slane %v3837, 2
    %v3962 = vrot.slane %v3838, 2
    %v3963 = vsel %vm746, %v3961, %v3962
    %v3964 = vrot.slane %v3839, 2
    %v3965 = vsel %vm746, %v3962, %v3964
    %v3966 = vrot.slane %v3840, 2
    %v3967 = vrot.slane %v3841, 2
    %v3968 = vsel %vm746, %v3966, %v3967
    %v3969 = vrot.slane %v3842, 2
    %v3970 = vsel %vm746, %v3967, %v3969
    %v4003 = vadd.f32 %v3761, %v3893
    %v4004 = vadd.f32 %v3762, %v3895
    %v4005 = vadd.f32 %v3763, %v3898
    %v4006 = vadd.f32 %v3764, %v3900
    %v4007 = vadd.f32 %v3765, %v3903
    %v4008 = vadd.f32 %v3766, %v3905
    %v4009 = vadd.f32 %v3767, %v3908
    %v4010 = vadd.f32 %v3768, %v3910
    %v4011 = vadd.f32 %v3769, %v3913
    %v4012 = vadd.f32 %v3770, %v3915
    %v4013 = vadd.f32 %v3771, %v3918
    %v4014 = vadd.f32 %v3772, %v3920
    %v4015 = vadd.f32 %v3773, %v3923
    %v4016 = vadd.f32 %v3774, %v3925
    %v4017 = vadd.f32 %v3775, %v3928
    %v4018 = vadd.f32 %v3776, %v3930
    %v4019 = vadd.f32 %v3777, %v3933
    %v4020 = vadd.f32 %v3778, %v3935
    %v4021 = vadd.f32 %v3779, %v3938
    %v4022 = vadd.f32 %v3780, %v3940
    %v4023 = vadd.f32 %v3781, %v3943
    %v4024 = vadd.f32 %v3782, %v3945
    %v4025 = vadd.f32 %v3783, %v3948
    %v4026 = vadd.f32 %v3784, %v3950
    %v4027 = vadd.f32 %v3785, %v3953
    %v4028 = vadd.f32 %v3786, %v3955
    %v4029 = vadd.f32 %v3787, %v3958
    %v4030 = vadd.f32 %v3788, %v3960
    %v4031 = vadd.f32 %v3789, %v3963
    %v4032 = vadd.f32 %v3790, %v3965
    %v4033 = vadd.f32 %v3791, %v3968
    %v4034 = vadd.f32 %v3792, %v3970
    %s4035 = sld [smem:[#allocation8 + $0x83]]
    %v4036 = vstv %s4035
    %v4037 = vmul.f32 %v4036, %v238
    %v4038 = vmul.f32 %v4036, %v141
    %v4039 = vmul.f32 %v4036, %v239
    %v4040 = vmul.f32 %v4036, %v144
    %v4041 = vmul.f32 %v4036, %v240
    %v4042 = vmul.f32 %v4036, %v147
    %v4043 = vmul.f32 %v4036, %v241
    %v4044 = vmul.f32 %v4036, %v150
    %v4045 = vmul.f32 %v4036, %v242
    %v4046 = vmul.f32 %v4036, %v153
    %v4047 = vmul.f32 %v4036, %v243
    %v4048 = vmul.f32 %v4036, %v156
    %v4049 = vmul.f32 %v4036, %v244
    %v4050 = vmul.f32 %v4036, %v159
    %v4051 = vmul.f32 %v4036, %v245
    %v4052 = vmul.f32 %v4036, %v162
    %v4053 = vmul.f32 %v4036, %v246
    %v4054 = vmul.f32 %v4036, %v165
    %v4055 = vmul.f32 %v4036, %v247
    %v4056 = vmul.f32 %v4036, %v168
    %v4057 = vmul.f32 %v4036, %v248
    %v4058 = vmul.f32 %v4036, %v171
    %v4059 = vmul.f32 %v4036, %v249
    %v4060 = vmul.f32 %v4036, %v174
    %v4061 = vmul.f32 %v4036, %v250
    %v4062 = vmul.f32 %v4036, %v177
    %v4063 = vmul.f32 %v4036, %v251
    %v4064 = vmul.f32 %v4036, %v180
    %v4065 = vmul.f32 %v4036, %v252
    %v4066 = vmul.f32 %v4036, %v183
    %v4067 = vmul.f32 %v4036, %v253
    %v4068 = vmul.f32 %v4036, %v186
    %v4069 = vadd.f32 %v4003, %v4037
    %v4070 = vadd.f32 %v4004, %v4038
    %v4071 = vadd.f32 %v4005, %v4039
    %v4072 = vadd.f32 %v4006, %v4040
    %v4073 = vadd.f32 %v4007, %v4041
    %v4074 = vadd.f32 %v4008, %v4042
    %v4075 = vadd.f32 %v4009, %v4043
    %v4076 = vadd.f32 %v4010, %v4044
    %v4077 = vadd.f32 %v4011, %v4045
    %v4078 = vadd.f32 %v4012, %v4046
    %v4079 = vadd.f32 %v4013, %v4047
    %v4080 = vadd.f32 %v4014, %v4048
    %v4081 = vadd.f32 %v4015, %v4049
    %v4082 = vadd.f32 %v4016, %v4050
    %v4083 = vadd.f32 %v4017, %v4051
    %v4084 = vadd.f32 %v4018, %v4052
    %v4085 = vadd.f32 %v4019, %v4053
    %v4086 = vadd.f32 %v4020, %v4054
    %v4087 = vadd.f32 %v4021, %v4055
    %v4088 = vadd.f32 %v4022, %v4056
    %v4089 = vadd.f32 %v4023, %v4057
    %v4090 = vadd.f32 %v4024, %v4058
    %v4091 = vadd.f32 %v4025, %v4059
    %v4092 = vadd.f32 %v4026, %v4060
    %v4093 = vadd.f32 %v4027, %v4061
    %v4094 = vadd.f32 %v4028, %v4062
    %v4095 = vadd.f32 %v4029, %v4063
    %v4096 = vadd.f32 %v4030, %v4064
    %v4097 = vadd.f32 %v4031, %v4065
    %v4098 = vadd.f32 %v4032, %v4066
    %v4099 = vadd.f32 %v4033, %v4067
    %v4100 = vadd.f32 %v4034, %v4068
    %s4101 = sld [smem:[#allocation8 + $0x85]]
    %v4102 = vstv %s4101
    %v4103 = vmul.f32 %v4102, %v238
    %v4104 = vmul.f32 %v4102, %v141
    %v4105 = vmul.f32 %v4102, %v255
    %v4106 = vmul.f32 %v4102, %v239
    %v4107 = vmul.f32 %v4102, %v144
    %v4108 = vmul.f32 %v4102, %v256
    %v4109 = vmul.f32 %v4102, %v240
    %v4110 = vmul.f32 %v4102, %v147
    %v4111 = vmul.f32 %v4102, %v257
    %v4112 = vmul.f32 %v4102, %v241
    %v4113 = vmul.f32 %v4102, %v150
    %v4114 = vmul.f32 %v4102, %v258
    %v4115 = vmul.f32 %v4102, %v242
    %v4116 = vmul.f32 %v4102, %v153
    %v4117 = vmul.f32 %v4102, %v259
    %v4118 = vmul.f32 %v4102, %v243
    %v4119 = vmul.f32 %v4102, %v156
    %v4120 = vmul.f32 %v4102, %v260
    %v4121 = vmul.f32 %v4102, %v244
    %v4122 = vmul.f32 %v4102, %v159
    %v4123 = vmul.f32 %v4102, %v261
    %v4124 = vmul.f32 %v4102, %v245
    %v4125 = vmul.f32 %v4102, %v162
    %v4126 = vmul.f32 %v4102, %v262
    %v4127 = vmul.f32 %v4102, %v246
    %v4128 = vmul.f32 %v4102, %v165
    %v4129 = vmul.f32 %v4102, %v263
    %v4130 = vmul.f32 %v4102, %v247
    %v4131 = vmul.f32 %v4102, %v168
    %v4132 = vmul.f32 %v4102, %v264
    %v4133 = vmul.f32 %v4102, %v248
    %v4134 = vmul.f32 %v4102, %v171
    %v4135 = vmul.f32 %v4102, %v265
    %v4136 = vmul.f32 %v4102, %v249
    %v4137 = vmul.f32 %v4102, %v174
    %v4138 = vmul.f32 %v4102, %v266
    %v4139 = vmul.f32 %v4102, %v250
    %v4140 = vmul.f32 %v4102, %v177
    %v4141 = vmul.f32 %v4102, %v267
    %v4142 = vmul.f32 %v4102, %v251
    %v4143 = vmul.f32 %v4102, %v180
    %v4144 = vmul.f32 %v4102, %v268
    %v4145 = vmul.f32 %v4102, %v252
    %v4146 = vmul.f32 %v4102, %v183
    %v4147 = vmul.f32 %v4102, %v269
    %v4148 = vmul.f32 %v4102, %v253
    %v4149 = vmul.f32 %v4102, %v186
    %v4150 = vmul.f32 %v4102, %v270
    %v4199 = vrot.slane %v4103, 2
    %v4200 = vrot.slane %v4104, 2
    %v4201 = vsel %vm746, %v4199, %v4200
    %v4202 = vrot.slane %v4105, 2
    %v4203 = vsel %vm746, %v4200, %v4202
    %v4204 = vrot.slane %v4106, 2
    %v4205 = vrot.slane %v4107, 2
    %v4206 = vsel %vm746, %v4204, %v4205
    %v4207 = vrot.slane %v4108, 2
    %v4208 = vsel %vm746, %v4205, %v4207
    %v4209 = vrot.slane %v4109, 2
    %v4210 = vrot.slane %v4110, 2
    %v4211 = vsel %vm746, %v4209, %v4210
    %v4212 = vrot.slane %v4111, 2
    %v4213 = vsel %vm746, %v4210, %v4212
    %v4214 = vrot.slane %v4112, 2
    %v4215 = vrot.slane %v4113, 2
    %v4216 = vsel %vm746, %v4214, %v4215
    %v4217 = vrot.slane %v4114, 2
    %v4218 = vsel %vm746, %v4215, %v4217
    %v4219 = vrot.slane %v4115, 2
    %v4220 = vrot.slane %v4116, 2
    %v4221 = vsel %vm746, %v4219, %v4220
    %v4222 = vrot.slane %v4117, 2
    %v4223 = vsel %vm746, %v4220, %v4222
    %v4224 = vrot.slane %v4118, 2
    %v4225 = vrot.slane %v4119, 2
    %v4226 = vsel %vm746, %v4224, %v4225
    %v4227 = vrot.slane %v4120, 2
    %v4228 = vsel %vm746, %v4225, %v4227
    %v4229 = vrot.slane %v4121, 2
    %v4230 = vrot.slane %v4122, 2
    %v4231 = vsel %vm746, %v4229, %v4230
    %v4232 = vrot.slane %v4123, 2
    %v4233 = vsel %vm746, %v4230, %v4232
    %v4234 = vrot.slane %v4124, 2
    %v4235 = vrot.slane %v4125, 2
    %v4236 = vsel %vm746, %v4234, %v4235
    %v4237 = vrot.slane %v4126, 2
    %v4238 = vsel %vm746, %v4235, %v4237
    %v4239 = vrot.slane %v4127, 2
    %v4240 = vrot.slane %v4128, 2
    %v4241 = vsel %vm746, %v4239, %v4240
    %v4242 = vrot.slane %v4129, 2
    %v4243 = vsel %vm746, %v4240, %v4242
    %v4244 = vrot.slane %v4130, 2
    %v4245 = vrot.slane %v4131, 2
    %v4246 = vsel %vm746, %v4244, %v4245
    %v4247 = vrot.slane %v4132, 2
    %v4248 = vsel %vm746, %v4245, %v4247
    %v4249 = vrot.slane %v4133, 2
    %v4250 = vrot.slane %v4134, 2
    %v4251 = vsel %vm746, %v4249, %v4250
    %v4252 = vrot.slane %v4135, 2
    %v4253 = vsel %vm746, %v4250, %v4252
    %v4254 = vrot.slane %v4136, 2
    %v4255 = vrot.slane %v4137, 2
    %v4256 = vsel %vm746, %v4254, %v4255
    %v4257 = vrot.slane %v4138, 2
    %v4258 = vsel %vm746, %v4255, %v4257
    %v4259 = vrot.slane %v4139, 2
    %v4260 = vrot.slane %v4140, 2
    %v4261 = vsel %vm746, %v4259, %v4260
    %v4262 = vrot.slane %v4141, 2
    %v4263 = vsel %vm746, %v4260, %v4262
    %v4264 = vrot.slane %v4142, 2
    %v4265 = vrot.slane %v4143, 2
    %v4266 = vsel %vm746, %v4264, %v4265
    %v4267 = vrot.slane %v4144, 2
    %v4268 = vsel %vm746, %v4265, %v4267
    %v4269 = vrot.slane %v4145, 2
    %v4270 = vrot.slane %v4146, 2
    %v4271 = vsel %vm746, %v4269, %v4270
    %v4272 = vrot.slane %v4147, 2
    %v4273 = vsel %vm746, %v4270, %v4272
    %v4274 = vrot.slane %v4148, 2
    %v4275 = vrot.slane %v4149, 2
    %v4276 = vsel %vm746, %v4274, %v4275
    %v4277 = vrot.slane %v4150, 2
    %v4278 = vsel %vm746, %v4275, %v4277
    %v4311 = vadd.f32 %v4069, %v4201
    %v4312 = vadd.f32 %v4070, %v4203
    %v4313 = vadd.f32 %v4071, %v4206
    %v4314 = vadd.f32 %v4072, %v4208
    %v4315 = vadd.f32 %v4073, %v4211
    %v4316 = vadd.f32 %v4074, %v4213
    %v4317 = vadd.f32 %v4075, %v4216
    %v4318 = vadd.f32 %v4076, %v4218
    %v4319 = vadd.f32 %v4077, %v4221
    %v4320 = vadd.f32 %v4078, %v4223
    %v4321 = vadd.f32 %v4079, %v4226
    %v4322 = vadd.f32 %v4080, %v4228
    %v4323 = vadd.f32 %v4081, %v4231
    %v4324 = vadd.f32 %v4082, %v4233
    %v4325 = vadd.f32 %v4083, %v4236
    %v4326 = vadd.f32 %v4084, %v4238
    %v4327 = vadd.f32 %v4085, %v4241
    %v4328 = vadd.f32 %v4086, %v4243
    %v4329 = vadd.f32 %v4087, %v4246
    %v4330 = vadd.f32 %v4088, %v4248
    %v4331 = vadd.f32 %v4089, %v4251
    %v4332 = vadd.f32 %v4090, %v4253
    %v4333 = vadd.f32 %v4091, %v4256
    %v4334 = vadd.f32 %v4092, %v4258
    %v4335 = vadd.f32 %v4093, %v4261
    %v4336 = vadd.f32 %v4094, %v4263
    %v4337 = vadd.f32 %v4095, %v4266
    %v4338 = vadd.f32 %v4096, %v4268
    %v4339 = vadd.f32 %v4097, %v4271
    %v4340 = vadd.f32 %v4098, %v4273
    %v4341 = vadd.f32 %v4099, %v4276
    %v4342 = vadd.f32 %v4100, %v4278
    %s4343 = sld [smem:[#allocation8 + $0x86]]
    %v4344 = vstv %s4343
    %v4345 = vmul.f32 %v4344, %v239
    %v4346 = vmul.f32 %v4344, %v144
    %v4347 = vmul.f32 %v4344, %v240
    %v4348 = vmul.f32 %v4344, %v147
    %v4349 = vmul.f32 %v4344, %v241
    %v4350 = vmul.f32 %v4344, %v150
    %v4351 = vmul.f32 %v4344, %v242
    %v4352 = vmul.f32 %v4344, %v153
    %v4353 = vmul.f32 %v4344, %v243
    %v4354 = vmul.f32 %v4344, %v156
    %v4355 = vmul.f32 %v4344, %v244
    %v4356 = vmul.f32 %v4344, %v159
    %v4357 = vmul.f32 %v4344, %v245
    %v4358 = vmul.f32 %v4344, %v162
    %v4359 = vmul.f32 %v4344, %v246
    %v4360 = vmul.f32 %v4344, %v165
    %v4361 = vmul.f32 %v4344, %v247
    %v4362 = vmul.f32 %v4344, %v168
    %v4363 = vmul.f32 %v4344, %v248
    %v4364 = vmul.f32 %v4344, %v171
    %v4365 = vmul.f32 %v4344, %v249
    %v4366 = vmul.f32 %v4344, %v174
    %v4367 = vmul.f32 %v4344, %v250
    %v4368 = vmul.f32 %v4344, %v177
    %v4369 = vmul.f32 %v4344, %v251
    %v4370 = vmul.f32 %v4344, %v180
    %v4371 = vmul.f32 %v4344, %v252
    %v4372 = vmul.f32 %v4344, %v183
    %v4373 = vmul.f32 %v4344, %v253
    %v4374 = vmul.f32 %v4344, %v186
    %v4375 = vmul.f32 %v4344, %v237
    %v4376 = vmul.f32 %v4344, %v138
    %v4377 = vadd.f32 %v4311, %v4345
    %v4378 = vadd.f32 %v4312, %v4346
    %v4379 = vadd.f32 %v4313, %v4347
    %v4380 = vadd.f32 %v4314, %v4348
    %v4381 = vadd.f32 %v4315, %v4349
    %v4382 = vadd.f32 %v4316, %v4350
    %v4383 = vadd.f32 %v4317, %v4351
    %v4384 = vadd.f32 %v4318, %v4352
    %v4385 = vadd.f32 %v4319, %v4353
    %v4386 = vadd.f32 %v4320, %v4354
    %v4387 = vadd.f32 %v4321, %v4355
    %v4388 = vadd.f32 %v4322, %v4356
    %v4389 = vadd.f32 %v4323, %v4357
    %v4390 = vadd.f32 %v4324, %v4358
    %v4391 = vadd.f32 %v4325, %v4359
    %v4392 = vadd.f32 %v4326, %v4360
    %v4393 = vadd.f32 %v4327, %v4361
    %v4394 = vadd.f32 %v4328, %v4362
    %v4395 = vadd.f32 %v4329, %v4363
    %v4396 = vadd.f32 %v4330, %v4364
    %v4397 = vadd.f32 %v4331, %v4365
    %v4398 = vadd.f32 %v4332, %v4366
    %v4399 = vadd.f32 %v4333, %v4367
    %v4400 = vadd.f32 %v4334, %v4368
    %v4401 = vadd.f32 %v4335, %v4369
    %v4402 = vadd.f32 %v4336, %v4370
    %v4403 = vadd.f32 %v4337, %v4371
    %v4404 = vadd.f32 %v4338, %v4372
    %v4405 = vadd.f32 %v4339, %v4373
    %v4406 = vadd.f32 %v4340, %v4374
    %v4407 = vadd.f32 %v4341, %v4375
    %v4408 = vadd.f32 %v4342, %v4376
    %s4409 = sld [smem:[#allocation8 + $0x87]]
    %v4410 = vstv %s4409
    %v4411 = vmul.f32 %v4410, %v239
    %v4412 = vmul.f32 %v4410, %v144
    %v4413 = vmul.f32 %v4410, %v256
    %v4414 = vmul.f32 %v4410, %v240
    %v4415 = vmul.f32 %v4410, %v147
    %v4416 = vmul.f32 %v4410, %v257
    %v4417 = vmul.f32 %v4410, %v241
    %v4418 = vmul.f32 %v4410, %v150
    %v4419 = vmul.f32 %v4410, %v258
    %v4420 = vmul.f32 %v4410, %v242
    %v4421 = vmul.f32 %v4410, %v153
    %v4422 = vmul.f32 %v4410, %v259
    %v4423 = vmul.f32 %v4410, %v243
    %v4424 = vmul.f32 %v4410, %v156
    %v4425 = vmul.f32 %v4410, %v260
    %v4426 = vmul.f32 %v4410, %v244
    %v4427 = vmul.f32 %v4410, %v159
    %v4428 = vmul.f32 %v4410, %v261
    %v4429 = vmul.f32 %v4410, %v245
    %v4430 = vmul.f32 %v4410, %v162
    %v4431 = vmul.f32 %v4410, %v262
    %v4432 = vmul.f32 %v4410, %v246
    %v4433 = vmul.f32 %v4410, %v165
    %v4434 = vmul.f32 %v4410, %v263
    %v4435 = vmul.f32 %v4410, %v247
    %v4436 = vmul.f32 %v4410, %v168
    %v4437 = vmul.f32 %v4410, %v264
    %v4438 = vmul.f32 %v4410, %v248
    %v4439 = vmul.f32 %v4410, %v171
    %v4440 = vmul.f32 %v4410, %v265
    %v4441 = vmul.f32 %v4410, %v249
    %v4442 = vmul.f32 %v4410, %v174
    %v4443 = vmul.f32 %v4410, %v266
    %v4444 = vmul.f32 %v4410, %v250
    %v4445 = vmul.f32 %v4410, %v177
    %v4446 = vmul.f32 %v4410, %v267
    %v4447 = vmul.f32 %v4410, %v251
    %v4448 = vmul.f32 %v4410, %v180
    %v4449 = vmul.f32 %v4410, %v268
    %v4450 = vmul.f32 %v4410, %v252
    %v4451 = vmul.f32 %v4410, %v183
    %v4452 = vmul.f32 %v4410, %v269
    %v4453 = vmul.f32 %v4410, %v253
    %v4454 = vmul.f32 %v4410, %v186
    %v4455 = vmul.f32 %v4410, %v270
    %v4456 = vmul.f32 %v4410, %v237
    %v4457 = vmul.f32 %v4410, %v138
    %v4458 = vmul.f32 %v4410, %v254
    %v4507 = vrot.slane %v4411, 1
    %v4508 = vrot.slane %v4412, 1
    %v4509 = vsel %vm503, %v4507, %v4508
    %v4510 = vrot.slane %v4413, 1
    %v4511 = vsel %vm503, %v4508, %v4510
    %v4512 = vrot.slane %v4414, 1
    %v4513 = vrot.slane %v4415, 1
    %v4514 = vsel %vm503, %v4512, %v4513
    %v4515 = vrot.slane %v4416, 1
    %v4516 = vsel %vm503, %v4513, %v4515
    %v4517 = vrot.slane %v4417, 1
    %v4518 = vrot.slane %v4418, 1
    %v4519 = vsel %vm503, %v4517, %v4518
    %v4520 = vrot.slane %v4419, 1
    %v4521 = vsel %vm503, %v4518, %v4520
    %v4522 = vrot.slane %v4420, 1
    %v4523 = vrot.slane %v4421, 1
    %v4524 = vsel %vm503, %v4522, %v4523
    %v4525 = vrot.slane %v4422, 1
    %v4526 = vsel %vm503, %v4523, %v4525
    %v4527 = vrot.slane %v4423, 1
    %v4528 = vrot.slane %v4424, 1
    %v4529 = vsel %vm503, %v4527, %v4528
    %v4530 = vrot.slane %v4425, 1
    %v4531 = vsel %vm503, %v4528, %v4530
    %v4532 = vrot.slane %v4426, 1
    %v4533 = vrot.slane %v4427, 1
    %v4534 = vsel %vm503, %v4532, %v4533
    %v4535 = vrot.slane %v4428, 1
    %v4536 = vsel %vm503, %v4533, %v4535
    %v4537 = vrot.slane %v4429, 1
    %v4538 = vrot.slane %v4430, 1
    %v4539 = vsel %vm503, %v4537, %v4538
    %v4540 = vrot.slane %v4431, 1
    %v4541 = vsel %vm503, %v4538, %v4540
    %v4542 = vrot.slane %v4432, 1
    %v4543 = vrot.slane %v4433, 1
    %v4544 = vsel %vm503, %v4542, %v4543
    %v4545 = vrot.slane %v4434, 1
    %v4546 = vsel %vm503, %v4543, %v4545
    %v4547 = vrot.slane %v4435, 1
    %v4548 = vrot.slane %v4436, 1
    %v4549 = vsel %vm503, %v4547, %v4548
    %v4550 = vrot.slane %v4437, 1
    %v4551 = vsel %vm503, %v4548, %v4550
    %v4552 = vrot.slane %v4438, 1
    %v4553 = vrot.slane %v4439, 1
    %v4554 = vsel %vm503, %v4552, %v4553
    %v4555 = vrot.slane %v4440, 1
    %v4556 = vsel %vm503, %v4553, %v4555
    %v4557 = vrot.slane %v4441, 1
    %v4558 = vrot.slane %v4442, 1
    %v4559 = vsel %vm503, %v4557, %v4558
    %v4560 = vrot.slane %v4443, 1
    %v4561 = vsel %vm503, %v4558, %v4560
    %v4562 = vrot.slane %v4444, 1
    %v4563 = vrot.slane %v4445, 1
    %v4564 = vsel %vm503, %v4562, %v4563
    %v4565 = vrot.slane %v4446, 1
    %v4566 = vsel %vm503, %v4563, %v4565
    %v4567 = vrot.slane %v4447, 1
    %v4568 = vrot.slane %v4448, 1
    %v4569 = vsel %vm503, %v4567, %v4568
    %v4570 = vrot.slane %v4449, 1
    %v4571 = vsel %vm503, %v4568, %v4570
    %v4572 = vrot.slane %v4450, 1
    %v4573 = vrot.slane %v4451, 1
    %v4574 = vsel %vm503, %v4572, %v4573
    %v4575 = vrot.slane %v4452, 1
    %v4576 = vsel %vm503, %v4573, %v4575
    %v4577 = vrot.slane %v4453, 1
    %v4578 = vrot.slane %v4454, 1
    %v4579 = vsel %vm503, %v4577, %v4578
    %v4580 = vrot.slane %v4455, 1
    %v4581 = vsel %vm503, %v4578, %v4580
    %v4582 = vrot.slane %v4456, 1
    %v4583 = vrot.slane %v4457, 1
    %v4584 = vsel %vm503, %v4582, %v4583
    %v4585 = vrot.slane %v4458, 1
    %v4586 = vsel %vm503, %v4583, %v4585
    %v4619 = vadd.f32 %v4377, %v4509
    %v4620 = vadd.f32 %v4378, %v4511
    %v4621 = vadd.f32 %v4379, %v4514
    %v4622 = vadd.f32 %v4380, %v4516
    %v4623 = vadd.f32 %v4381, %v4519
    %v4624 = vadd.f32 %v4382, %v4521
    %v4625 = vadd.f32 %v4383, %v4524
    %v4626 = vadd.f32 %v4384, %v4526
    %v4627 = vadd.f32 %v4385, %v4529
    %v4628 = vadd.f32 %v4386, %v4531
    %v4629 = vadd.f32 %v4387, %v4534
    %v4630 = vadd.f32 %v4388, %v4536
    %v4631 = vadd.f32 %v4389, %v4539
    %v4632 = vadd.f32 %v4390, %v4541
    %v4633 = vadd.f32 %v4391, %v4544
    %v4634 = vadd.f32 %v4392, %v4546
    %v4635 = vadd.f32 %v4393, %v4549
    %v4636 = vadd.f32 %v4394, %v4551
    %v4637 = vadd.f32 %v4395, %v4554
    %v4638 = vadd.f32 %v4396, %v4556
    %v4639 = vadd.f32 %v4397, %v4559
    %v4640 = vadd.f32 %v4398, %v4561
    %v4641 = vadd.f32 %v4399, %v4564
    %v4642 = vadd.f32 %v4400, %v4566
    %v4643 = vadd.f32 %v4401, %v4569
    %v4644 = vadd.f32 %v4402, %v4571
    %v4645 = vadd.f32 %v4403, %v4574
    %v4646 = vadd.f32 %v4404, %v4576
    %v4647 = vadd.f32 %v4405, %v4579
    %v4648 = vadd.f32 %v4406, %v4581
    %v4649 = vadd.f32 %v4407, %v4584
    %v4650 = vadd.f32 %v4408, %v4586
    %s4651 = sld [smem:[#allocation8 + $0x88]]
    %v4652 = vstv %s4651
    %v4653 = vmul.f32 %v4652, %v239
    %v4654 = vmul.f32 %v4652, %v144
    %v4655 = vmul.f32 %v4652, %v256
    %v4656 = vmul.f32 %v4652, %v240
    %v4657 = vmul.f32 %v4652, %v147
    %v4658 = vmul.f32 %v4652, %v257
    %v4659 = vmul.f32 %v4652, %v241
    %v4660 = vmul.f32 %v4652, %v150
    %v4661 = vmul.f32 %v4652, %v258
    %v4662 = vmul.f32 %v4652, %v242
    %v4663 = vmul.f32 %v4652, %v153
    %v4664 = vmul.f32 %v4652, %v259
    %v4665 = vmul.f32 %v4652, %v243
    %v4666 = vmul.f32 %v4652, %v156
    %v4667 = vmul.f32 %v4652, %v260
    %v4668 = vmul.f32 %v4652, %v244
    %v4669 = vmul.f32 %v4652, %v159
    %v4670 = vmul.f32 %v4652, %v261
    %v4671 = vmul.f32 %v4652, %v245
    %v4672 = vmul.f32 %v4652, %v162
    %v4673 = vmul.f32 %v4652, %v262
    %v4674 = vmul.f32 %v4652, %v246
    %v4675 = vmul.f32 %v4652, %v165
    %v4676 = vmul.f32 %v4652, %v263
    %v4677 = vmul.f32 %v4652, %v247
    %v4678 = vmul.f32 %v4652, %v168
    %v4679 = vmul.f32 %v4652, %v264
    %v4680 = vmul.f32 %v4652, %v248
    %v4681 = vmul.f32 %v4652, %v171
    %v4682 = vmul.f32 %v4652, %v265
    %v4683 = vmul.f32 %v4652, %v249
    %v4684 = vmul.f32 %v4652, %v174
    %v4685 = vmul.f32 %v4652, %v266
    %v4686 = vmul.f32 %v4652, %v250
    %v4687 = vmul.f32 %v4652, %v177
    %v4688 = vmul.f32 %v4652, %v267
    %v4689 = vmul.f32 %v4652, %v251
    %v4690 = vmul.f32 %v4652, %v180
    %v4691 = vmul.f32 %v4652, %v268
    %v4692 = vmul.f32 %v4652, %v252
    %v4693 = vmul.f32 %v4652, %v183
    %v4694 = vmul.f32 %v4652, %v269
    %v4695 = vmul.f32 %v4652, %v253
    %v4696 = vmul.f32 %v4652, %v186
    %v4697 = vmul.f32 %v4652, %v270
    %v4698 = vmul.f32 %v4652, %v237
    %v4699 = vmul.f32 %v4652, %v138
    %v4700 = vmul.f32 %v4652, %v254
    %v4749 = vrot.slane %v4653, 2
    %v4750 = vrot.slane %v4654, 2
    %v4751 = vsel %vm746, %v4749, %v4750
    %v4752 = vrot.slane %v4655, 2
    %v4753 = vsel %vm746, %v4750, %v4752
    %v4754 = vrot.slane %v4656, 2
    %v4755 = vrot.slane %v4657, 2
    %v4756 = vsel %vm746, %v4754, %v4755
    %v4757 = vrot.slane %v4658, 2
    %v4758 = vsel %vm746, %v4755, %v4757
    %v4759 = vrot.slane %v4659, 2
    %v4760 = vrot.slane %v4660, 2
    %v4761 = vsel %vm746, %v4759, %v4760
    %v4762 = vrot.slane %v4661, 2
    %v4763 = vsel %vm746, %v4760, %v4762
    %v4764 = vrot.slane %v4662, 2
    %v4765 = vrot.slane %v4663, 2
    %v4766 = vsel %vm746, %v4764, %v4765
    %v4767 = vrot.slane %v4664, 2
    %v4768 = vsel %vm746, %v4765, %v4767
    %v4769 = vrot.slane %v4665, 2
    %v4770 = vrot.slane %v4666, 2
    %v4771 = vsel %vm746, %v4769, %v4770
    %v4772 = vrot.slane %v4667, 2
    %v4773 = vsel %vm746, %v4770, %v4772
    %v4774 = vrot.slane %v4668, 2
    %v4775 = vrot.slane %v4669, 2
    %v4776 = vsel %vm746, %v4774, %v4775
    %v4777 = vrot.slane %v4670, 2
    %v4778 = vsel %vm746, %v4775, %v4777
    %v4779 = vrot.slane %v4671, 2
    %v4780 = vrot.slane %v4672, 2
    %v4781 = vsel %vm746, %v4779, %v4780
    %v4782 = vrot.slane %v4673, 2
    %v4783 = vsel %vm746, %v4780, %v4782
    %v4784 = vrot.slane %v4674, 2
    %v4785 = vrot.slane %v4675, 2
    %v4786 = vsel %vm746, %v4784, %v4785
    %v4787 = vrot.slane %v4676, 2
    %v4788 = vsel %vm746, %v4785, %v4787
    %v4789 = vrot.slane %v4677, 2
    %v4790 = vrot.slane %v4678, 2
    %v4791 = vsel %vm746, %v4789, %v4790
    %v4792 = vrot.slane %v4679, 2
    %v4793 = vsel %vm746, %v4790, %v4792
    %v4794 = vrot.slane %v4680, 2
    %v4795 = vrot.slane %v4681, 2
    %v4796 = vsel %vm746, %v4794, %v4795
    %v4797 = vrot.slane %v4682, 2
    %v4798 = vsel %vm746, %v4795, %v4797
    %v4799 = vrot.slane %v4683, 2
    %v4800 = vrot.slane %v4684, 2
    %v4801 = vsel %vm746, %v4799, %v4800
    %v4802 = vrot.slane %v4685, 2
    %v4803 = vsel %vm746, %v4800, %v4802
    %v4804 = vrot.slane %v4686, 2
    %v4805 = vrot.slane %v4687, 2
    %v4806 = vsel %vm746, %v4804, %v4805
    %v4807 = vrot.slane %v4688, 2
    %v4808 = vsel %vm746, %v4805, %v4807
    %v4809 = vrot.slane %v4689, 2
    %v4810 = vrot.slane %v4690, 2
    %v4811 = vsel %vm746, %v4809, %v4810
    %v4812 = vrot.slane %v4691, 2
    %v4813 = vsel %vm746, %v4810, %v4812
    %v4814 = vrot.slane %v4692, 2
    %v4815 = vrot.slane %v4693, 2
    %v4816 = vsel %vm746, %v4814, %v4815
    %v4817 = vrot.slane %v4694, 2
    %v4818 = vsel %vm746, %v4815, %v4817
    %v4819 = vrot.slane %v4695, 2
    %v4820 = vrot.slane %v4696, 2
    %v4821 = vsel %vm746, %v4819, %v4820
    %v4822 = vrot.slane %v4697, 2
    %v4823 = vsel %vm746, %v4820, %v4822
    %v4824 = vrot.slane %v4698, 2
    %v4825 = vrot.slane %v4699, 2
    %v4826 = vsel %vm746, %v4824, %v4825
    %v4827 = vrot.slane %v4700, 2
    %v4828 = vsel %vm746, %v4825, %v4827
    %v4861 = vadd.f32 %v4619, %v4751
    %v4862 = vadd.f32 %v4620, %v4753
    %v4863 = vadd.f32 %v4621, %v4756
    %v4864 = vadd.f32 %v4622, %v4758
    %v4865 = vadd.f32 %v4623, %v4761
    %v4866 = vadd.f32 %v4624, %v4763
    %v4867 = vadd.f32 %v4625, %v4766
    %v4868 = vadd.f32 %v4626, %v4768
    %v4869 = vadd.f32 %v4627, %v4771
    %v4870 = vadd.f32 %v4628, %v4773
    %v4871 = vadd.f32 %v4629, %v4776
    %v4872 = vadd.f32 %v4630, %v4778
    %v4873 = vadd.f32 %v4631, %v4781
    %v4874 = vadd.f32 %v4632, %v4783
    %v4875 = vadd.f32 %v4633, %v4786
    %v4876 = vadd.f32 %v4634, %v4788
    %v4877 = vadd.f32 %v4635, %v4791
    %v4878 = vadd.f32 %v4636, %v4793
    %v4879 = vadd.f32 %v4637, %v4796
    %v4880 = vadd.f32 %v4638, %v4798
    %v4881 = vadd.f32 %v4639, %v4801
    %v4882 = vadd.f32 %v4640, %v4803
    %v4883 = vadd.f32 %v4641, %v4806
    %v4884 = vadd.f32 %v4642, %v4808
    %v4885 = vadd.f32 %v4643, %v4811
    %v4886 = vadd.f32 %v4644, %v4813
    %v4887 = vadd.f32 %v4645, %v4816
    %v4888 = vadd.f32 %v4646, %v4818
    %v4889 = vadd.f32 %v4647, %v4821
    %v4890 = vadd.f32 %v4648, %v4823
    %v4891 = vadd.f32 %v4649, %v4826
    %v4892 = vadd.f32 %v4650, %v4828
    %v4893 = vmax.f32 %v4861, 0.0
    %v4894 = vmax.f32 %v4862, 0.0
    %v4895 = vmax.f32 %v4863, 0.0
    %v4896 = vmax.f32 %v4864, 0.0
    %v4897 = vmax.f32 %v4865, 0.0
    %v4898 = vmax.f32 %v4866, 0.0
    %v4899 = vmax.f32 %v4867, 0.0
    %v4900 = vmax.f32 %v4868, 0.0
    %v4901 = vmax.f32 %v4869, 0.0
    %v4902 = vmax.f32 %v4870, 0.0
    %v4903 = vmax.f32 %v4871, 0.0
    %v4904 = vmax.f32 %v4872, 0.0
    %v4905 = vmax.f32 %v4873, 0.0
    %v4906 = vmax.f32 %v4874, 0.0
    %v4907 = vmax.f32 %v4875, 0.0
    %v4908 = vmax.f32 %v4876, 0.0
    %v4909 = vmax.f32 %v4877, 0.0
    %v4910 = vmax.f32 %v4878, 0.0
    %v4911 = vmax.f32 %v4879, 0.0
    %v4912 = vmax.f32 %v4880, 0.0
    %v4913 = vmax.f32 %v4881, 0.0
    %v4914 = vmax.f32 %v4882, 0.0
    %v4915 = vmax.f32 %v4883, 0.0
    %v4916 = vmax.f32 %v4884, 0.0
    %v4917 = vmax.f32 %v4885, 0.0
    %v4918 = vmax.f32 %v4886, 0.0
    %v4919 = vmax.f32 %v4887, 0.0
    %v4920 = vmax.f32 %v4888, 0.0
    %v4921 = vmax.f32 %v4889, 0.0
    %v4922 = vmax.f32 %v4890, 0.0
    %v4923 = vmax.f32 %v4891, 0.0
    %v4924 = vmax.f32 %v4892, 0.0
    %s4925 = sld [smem:[#allocation10 + $0x84]]
    %v4926 = vstv %s4925
    %v4927 = vmul.f32 %v4926, %v4893
    %v4928 = vmul.f32 %v4926, %v4894
    %v4929 = vmul.f32 %v4926, %v4895
    %v4930 = vmul.f32 %v4926, %v4896
    %v4931 = vmul.f32 %v4926, %v4897
    %v4932 = vmul.f32 %v4926, %v4898
    %v4933 = vmul.f32 %v4926, %v4899
    %v4934 = vmul.f32 %v4926, %v4900
    %v4935 = vmul.f32 %v4926, %v4901
    %v4936 = vmul.f32 %v4926, %v4902
    %v4937 = vmul.f32 %v4926, %v4903
    %v4938 = vmul.f32 %v4926, %v4904
    %v4939 = vmul.f32 %v4926, %v4905
    %v4940 = vmul.f32 %v4926, %v4906
    %v4941 = vmul.f32 %v4926, %v4907
    %v4942 = vmul.f32 %v4926, %v4908
    %v4943 = vmul.f32 %v4926, %v4909
    %v4944 = vmul.f32 %v4926, %v4910
    %v4945 = vmul.f32 %v4926, %v4911
    %v4946 = vmul.f32 %v4926, %v4912
    %v4947 = vmul.f32 %v4926, %v4913
    %v4948 = vmul.f32 %v4926, %v4914
    %v4949 = vmul.f32 %v4926, %v4915
    %v4950 = vmul.f32 %v4926, %v4916
    %v4951 = vmul.f32 %v4926, %v4917
    %v4952 = vmul.f32 %v4926, %v4918
    %v4953 = vmul.f32 %v4926, %v4919
    %v4954 = vmul.f32 %v4926, %v4920
    %v4955 = vmul.f32 %v4926, %v4921
    %v4956 = vmul.f32 %v4926, %v4922
    %v4957 = vmul.f32 %v4926, %v4923
    %v4958 = vmul.f32 %v4926, %v4924
    %v4959 = vadd.f32 %v3385, %v4927
    %v4960 = vadd.f32 %v3386, %v4928
    %v4961 = vadd.f32 %v3387, %v4929
    %v4962 = vadd.f32 %v3388, %v4930
    %v4963 = vadd.f32 %v3389, %v4931
    %v4964 = vadd.f32 %v3390, %v4932
    %v4965 = vadd.f32 %v3391, %v4933
    %v4966 = vadd.f32 %v3392, %v4934
    %v4967 = vadd.f32 %v3393, %v4935
    %v4968 = vadd.f32 %v3394, %v4936
    %v4969 = vadd.f32 %v3395, %v4937
    %v4970 = vadd.f32 %v3396, %v4938
    %v4971 = vadd.f32 %v3397, %v4939
    %v4972 = vadd.f32 %v3398, %v4940
    %v4973 = vadd.f32 %v3399, %v4941
    %v4974 = vadd.f32 %v3400, %v4942
    %v4975 = vadd.f32 %v3401, %v4943
    %v4976 = vadd.f32 %v3402, %v4944
    %v4977 = vadd.f32 %v3403, %v4945
    %v4978 = vadd.f32 %v3404, %v4946
    %v4979 = vadd.f32 %v3405, %v4947
    %v4980 = vadd.f32 %v3406, %v4948
    %v4981 = vadd.f32 %v3407, %v4949
    %v4982 = vadd.f32 %v3408, %v4950
    %v4983 = vadd.f32 %v3409, %v4951
    %v4984 = vadd.f32 %v3410, %v4952
    %v4985 = vadd.f32 %v3411, %v4953
    %v4986 = vadd.f32 %v3412, %v4954
    %v4987 = vadd.f32 %v3413, %v4955
    %v4988 = vadd.f32 %v3414, %v4956
    %v4989 = vadd.f32 %v3415, %v4957
    %v4990 = vadd.f32 %v3416, %v4958
    %v5023 = vrot.slane %v4893, 7
    %v5024 = vrot.slane %v4894, 7
    %v5025 = vsel %vm136, %v5023, %v5024
    %v5026 = vrot.slane %v4895, 7
    %v5027 = vrot.slane %v4896, 7
    %v5028 = vsel %vm136, %v5026, %v5027
    %v5029 = vrot.slane %v4897, 7
    %v5030 = vrot.slane %v4898, 7
    %v5031 = vsel %vm136, %v5029, %v5030
    %v5032 = vrot.slane %v4899, 7
    %v5033 = vrot.slane %v4900, 7
    %v5034 = vsel %vm136, %v5032, %v5033
    %v5035 = vrot.slane %v4901, 7
    %v5036 = vrot.slane %v4902, 7
    %v5037 = vsel %vm136, %v5035, %v5036
    %v5038 = vrot.slane %v4903, 7
    %v5039 = vrot.slane %v4904, 7
    %v5040 = vsel %vm136, %v5038, %v5039
    %v5041 = vrot.slane %v4905, 7
    %v5042 = vrot.slane %v4906, 7
    %v5043 = vsel %vm136, %v5041, %v5042
    %v5044 = vrot.slane %v4907, 7
    %v5045 = vrot.slane %v4908, 7
    %v5046 = vsel %vm136, %v5044, %v5045
    %v5047 = vrot.slane %v4909, 7
    %v5048 = vrot.slane %v4910, 7
    %v5049 = vsel %vm136, %v5047, %v5048
    %v5050 = vrot.slane %v4911, 7
    %v5051 = vrot.slane %v4912, 7
    %v5052 = vsel %vm136, %v5050, %v5051
    %v5053 = vrot.slane %v4913, 7
    %v5054 = vrot.slane %v4914, 7
    %v5055 = vsel %vm136, %v5053, %v5054
    %v5056 = vrot.slane %v4915, 7
    %v5057 = vrot.slane %v4916, 7
    %v5058 = vsel %vm136, %v5056, %v5057
    %v5059 = vrot.slane %v4917, 7
    %v5060 = vrot.slane %v4918, 7
    %v5061 = vsel %vm136, %v5059, %v5060
    %v5062 = vrot.slane %v4919, 7
    %v5063 = vrot.slane %v4920, 7
    %v5064 = vsel %vm136, %v5062, %v5063
    %v5065 = vrot.slane %v4921, 7
    %v5066 = vrot.slane %v4922, 7
    %v5067 = vsel %vm136, %v5065, %v5066
    %v5068 = vrot.slane %v4923, 7
    %v5069 = vrot.slane %v4924, 7
    %v5070 = vsel %vm136, %v5068, %v5069
    %v5119 = vsel %vm136, 0.0, %v5023
    %v5120 = vsel %vm136, 0.0, %v5026
    %v5121 = vsel %vm136, 0.0, %v5029
    %v5122 = vsel %vm136, 0.0, %v5032
    %v5123 = vsel %vm136, 0.0, %v5035
    %v5124 = vsel %vm136, 0.0, %v5038
    %v5125 = vsel %vm136, 0.0, %v5041
    %v5126 = vsel %vm136, 0.0, %v5044
    %v5127 = vsel %vm136, 0.0, %v5047
    %v5128 = vsel %vm136, 0.0, %v5050
    %v5129 = vsel %vm136, 0.0, %v5053
    %v5130 = vsel %vm136, 0.0, %v5056
    %v5131 = vsel %vm136, 0.0, %v5059
    %v5132 = vsel %vm136, 0.0, %v5062
    %v5133 = vsel %vm136, 0.0, %v5065
    %v5134 = vsel %vm136, 0.0, %v5068
    %v5135 = vsel %vm136, %v5024, 0.0
    %v5136 = vsel %vm136, %v5027, 0.0
    %v5137 = vsel %vm136, %v5030, 0.0
    %v5138 = vsel %vm136, %v5033, 0.0
    %v5139 = vsel %vm136, %v5036, 0.0
    %v5140 = vsel %vm136, %v5039, 0.0
    %v5141 = vsel %vm136, %v5042, 0.0
    %v5142 = vsel %vm136, %v5045, 0.0
    %v5143 = vsel %vm136, %v5048, 0.0
    %v5144 = vsel %vm136, %v5051, 0.0
    %v5145 = vsel %vm136, %v5054, 0.0
    %v5146 = vsel %vm136, %v5057, 0.0
    %v5147 = vsel %vm136, %v5060, 0.0
    %v5148 = vsel %vm136, %v5063, 0.0
    %v5149 = vsel %vm136, %v5066, 0.0
    %v5150 = vsel %vm136, %v5069, 0.0
    %s5151 = sld [smem:[#allocation10 + $0x80]]
    %v5152 = vstv %s5151
    %v5153 = vmul.f32 %v5152, %v237
    %v5154 = vmul.f32 %v5152, %v138
    %v5155 = vmul.f32 %v5152, %v5119
    %v5156 = vmul.f32 %v5152, %v5025
    %v5157 = vmul.f32 %v5152, %v5120
    %v5158 = vmul.f32 %v5152, %v5028
    %v5159 = vmul.f32 %v5152, %v5121
    %v5160 = vmul.f32 %v5152, %v5031
    %v5161 = vmul.f32 %v5152, %v5122
    %v5162 = vmul.f32 %v5152, %v5034
    %v5163 = vmul.f32 %v5152, %v5123
    %v5164 = vmul.f32 %v5152, %v5037
    %v5165 = vmul.f32 %v5152, %v5124
    %v5166 = vmul.f32 %v5152, %v5040
    %v5167 = vmul.f32 %v5152, %v5125
    %v5168 = vmul.f32 %v5152, %v5043
    %v5169 = vmul.f32 %v5152, %v5126
    %v5170 = vmul.f32 %v5152, %v5046
    %v5171 = vmul.f32 %v5152, %v5127
    %v5172 = vmul.f32 %v5152, %v5049
    %v5173 = vmul.f32 %v5152, %v5128
    %v5174 = vmul.f32 %v5152, %v5052
    %v5175 = vmul.f32 %v5152, %v5129
    %v5176 = vmul.f32 %v5152, %v5055
    %v5177 = vmul.f32 %v5152, %v5130
    %v5178 = vmul.f32 %v5152, %v5058
    %v5179 = vmul.f32 %v5152, %v5131
    %v5180 = vmul.f32 %v5152, %v5061
    %v5181 = vmul.f32 %v5152, %v5132
    %v5182 = vmul.f32 %v5152, %v5064
    %v5183 = vmul.f32 %v5152, %v5133
    %v5184 = vmul.f32 %v5152, %v5067
    %v5185 = vadd.f32 %v4959, %v5153
    %v5186 = vadd.f32 %v4960, %v5154
    %v5187 = vadd.f32 %v4961, %v5155
    %v5188 = vadd.f32 %v4962, %v5156
    %v5189 = vadd.f32 %v4963, %v5157
    %v5190 = vadd.f32 %v4964, %v5158
    %v5191 = vadd.f32 %v4965, %v5159
    %v5192 = vadd.f32 %v4966, %v5160
    %v5193 = vadd.f32 %v4967, %v5161
    %v5194 = vadd.f32 %v4968, %v5162
    %v5195 = vadd.f32 %v4969, %v5163
    %v5196 = vadd.f32 %v4970, %v5164
    %v5197 = vadd.f32 %v4971, %v5165
    %v5198 = vadd.f32 %v4972, %v5166
    %v5199 = vadd.f32 %v4973, %v5167
    %v5200 = vadd.f32 %v4974, %v5168
    %v5201 = vadd.f32 %v4975, %v5169
    %v5202 = vadd.f32 %v4976, %v5170
    %v5203 = vadd.f32 %v4977, %v5171
    %v5204 = vadd.f32 %v4978, %v5172
    %v5205 = vadd.f32 %v4979, %v5173
    %v5206 = vadd.f32 %v4980, %v5174
    %v5207 = vadd.f32 %v4981, %v5175
    %v5208 = vadd.f32 %v4982, %v5176
    %v5209 = vadd.f32 %v4983, %v5177
    %v5210 = vadd.f32 %v4984, %v5178
    %v5211 = vadd.f32 %v4985, %v5179
    %v5212 = vadd.f32 %v4986, %v5180
    %v5213 = vadd.f32 %v4987, %v5181
    %v5214 = vadd.f32 %v4988, %v5182
    %v5215 = vadd.f32 %v4989, %v5183
    %v5216 = vadd.f32 %v4990, %v5184
    %s5217 = sld [smem:[#allocation10 + $0x81]]
    %v5218 = vstv %s5217
    %v5219 = vmul.f32 %v5218, %v237
    %v5220 = vmul.f32 %v5218, %v138
    %v5221 = vmul.f32 %v5218, %v254
    %v5222 = vmul.f32 %v5218, %v5119
    %v5223 = vmul.f32 %v5218, %v5025
    %v5224 = vmul.f32 %v5218, %v5135
    %v5225 = vmul.f32 %v5218, %v5120
    %v5226 = vmul.f32 %v5218, %v5028
    %v5227 = vmul.f32 %v5218, %v5136
    %v5228 = vmul.f32 %v5218, %v5121
    %v5229 = vmul.f32 %v5218, %v5031
    %v5230 = vmul.f32 %v5218, %v5137
    %v5231 = vmul.f32 %v5218, %v5122
    %v5232 = vmul.f32 %v5218, %v5034
    %v5233 = vmul.f32 %v5218, %v5138
    %v5234 = vmul.f32 %v5218, %v5123
    %v5235 = vmul.f32 %v5218, %v5037
    %v5236 = vmul.f32 %v5218, %v5139
    %v5237 = vmul.f32 %v5218, %v5124
    %v5238 = vmul.f32 %v5218, %v5040
    %v5239 = vmul.f32 %v5218, %v5140
    %v5240 = vmul.f32 %v5218, %v5125
    %v5241 = vmul.f32 %v5218, %v5043
    %v5242 = vmul.f32 %v5218, %v5141
    %v5243 = vmul.f32 %v5218, %v5126
    %v5244 = vmul.f32 %v5218, %v5046
    %v5245 = vmul.f32 %v5218, %v5142
    %v5246 = vmul.f32 %v5218, %v5127
    %v5247 = vmul.f32 %v5218, %v5049
    %v5248 = vmul.f32 %v5218, %v5143
    %v5249 = vmul.f32 %v5218, %v5128
    %v5250 = vmul.f32 %v5218, %v5052
    %v5251 = vmul.f32 %v5218, %v5144
    %v5252 = vmul.f32 %v5218, %v5129
    %v5253 = vmul.f32 %v5218, %v5055
    %v5254 = vmul.f32 %v5218, %v5145
    %v5255 = vmul.f32 %v5218, %v5130
    %v5256 = vmul.f32 %v5218, %v5058
    %v5257 = vmul.f32 %v5218, %v5146
    %v5258 = vmul.f32 %v5218, %v5131
    %v5259 = vmul.f32 %v5218, %v5061
    %v5260 = vmul.f32 %v5218, %v5147
    %v5261 = vmul.f32 %v5218, %v5132
    %v5262 = vmul.f32 %v5218, %v5064
    %v5263 = vmul.f32 %v5218, %v5148
    %v5264 = vmul.f32 %v5218, %v5133
    %v5265 = vmul.f32 %v5218, %v5067
    %v5266 = vmul.f32 %v5218, %v5149
    %v5315 = vrot.slane %v5219, 1
    %v5316 = vrot.slane %v5220, 1
    %v5317 = vsel %vm503, %v5315, %v5316
    %v5318 = vrot.slane %v5221, 1
    %v5319 = vsel %vm503, %v5316, %v5318
    %v5320 = vrot.slane %v5222, 1
    %v5321 = vrot.slane %v5223, 1
    %v5322 = vsel %vm503, %v5320, %v5321
    %v5323 = vrot.slane %v5224, 1
    %v5324 = vsel %vm503, %v5321, %v5323
    %v5325 = vrot.slane %v5225, 1
    %v5326 = vrot.slane %v5226, 1
    %v5327 = vsel %vm503, %v5325, %v5326
    %v5328 = vrot.slane %v5227, 1
    %v5329 = vsel %vm503, %v5326, %v5328
    %v5330 = vrot.slane %v5228, 1
    %v5331 = vrot.slane %v5229, 1
    %v5332 = vsel %vm503, %v5330, %v5331
    %v5333 = vrot.slane %v5230, 1
    %v5334 = vsel %vm503, %v5331, %v5333
    %v5335 = vrot.slane %v5231, 1
    %v5336 = vrot.slane %v5232, 1
    %v5337 = vsel %vm503, %v5335, %v5336
    %v5338 = vrot.slane %v5233, 1
    %v5339 = vsel %vm503, %v5336, %v5338
    %v5340 = vrot.slane %v5234, 1
    %v5341 = vrot.slane %v5235, 1
    %v5342 = vsel %vm503, %v5340, %v5341
    %v5343 = vrot.slane %v5236, 1
    %v5344 = vsel %vm503, %v5341, %v5343
    %v5345 = vrot.slane %v5237, 1
    %v5346 = vrot.slane %v5238, 1
    %v5347 = vsel %vm503, %v5345, %v5346
    %v5348 = vrot.slane %v5239, 1
    %v5349 = vsel %vm503, %v5346, %v5348
    %v5350 = vrot.slane %v5240, 1
    %v5351 = vrot.slane %v5241, 1
    %v5352 = vsel %vm503, %v5350, %v5351
    %v5353 = vrot.slane %v5242, 1
    %v5354 = vsel %vm503, %v5351, %v5353
    %v5355 = vrot.slane %v5243, 1
    %v5356 = vrot.slane %v5244, 1
    %v5357 = vsel %vm503, %v5355, %v5356
    %v5358 = vrot.slane %v5245, 1
    %v5359 = vsel %vm503, %v5356, %v5358
    %v5360 = vrot.slane %v5246, 1
    %v5361 = vrot.slane %v5247, 1
    %v5362 = vsel %vm503, %v5360, %v5361
    %v5363 = vrot.slane %v5248, 1
    %v5364 = vsel %vm503, %v5361, %v5363
    %v5365 = vrot.slane %v5249, 1
    %v5366 = vrot.slane %v5250, 1
    %v5367 = vsel %vm503, %v5365, %v5366
    %v5368 = vrot.slane %v5251, 1
    %v5369 = vsel %vm503, %v5366, %v5368
    %v5370 = vrot.slane %v5252, 1
    %v5371 = vrot.slane %v5253, 1
    %v5372 = vsel %vm503, %v5370, %v5371
    %v5373 = vrot.slane %v5254, 1
    %v5374 = vsel %vm503, %v5371, %v5373
    %v5375 = vrot.slane %v5255, 1
    %v5376 = vrot.slane %v5256, 1
    %v5377 = vsel %vm503, %v5375, %v5376
    %v5378 = vrot.slane %v5257, 1
    %v5379 = vsel %vm503, %v5376, %v5378
    %v5380 = vrot.slane %v5258, 1
    %v5381 = vrot.slane %v5259, 1
    %v5382 = vsel %vm503, %v5380, %v5381
    %v5383 = vrot.slane %v5260, 1
    %v5384 = vsel %vm503, %v5381, %v5383
    %v5385 = vrot.slane %v5261, 1
    %v5386 = vrot.slane %v5262, 1
    %v5387 = vsel %vm503, %v5385, %v5386
    %v5388 = vrot.slane %v5263, 1
    %v5389 = vsel %vm503, %v5386, %v5388
    %v5390 = vrot.slane %v5264, 1
    %v5391 = vrot.slane %v5265, 1
    %v5392 = vsel %vm503, %v5390, %v5391
    %v5393 = vrot.slane %v5266, 1
    %v5394 = vsel %vm503, %v5391, %v5393
    %v5427 = vadd.f32 %v5185, %v5317
    %v5428 = vadd.f32 %v5186, %v5319
    %v5429 = vadd.f32 %v5187, %v5322
    %v5430 = vadd.f32 %v5188, %v5324
    %v5431 = vadd.f32 %v5189, %v5327
    %v5432 = vadd.f32 %v5190, %v5329
    %v5433 = vadd.f32 %v5191, %v5332
    %v5434 = vadd.f32 %v5192, %v5334
    %v5435 = vadd.f32 %v5193, %v5337
    %v5436 = vadd.f32 %v5194, %v5339
    %v5437 = vadd.f32 %v5195, %v5342
    %v5438 = vadd.f32 %v5196, %v5344
    %v5439 = vadd.f32 %v5197, %v5347
    %v5440 = vadd.f32 %v5198, %v5349
    %v5441 = vadd.f32 %v5199, %v5352
    %v5442 = vadd.f32 %v5200, %v5354
    %v5443 = vadd.f32 %v5201, %v5357
    %v5444 = vadd.f32 %v5202, %v5359
    %v5445 = vadd.f32 %v5203, %v5362
    %v5446 = vadd.f32 %v5204, %v5364
    %v5447 = vadd.f32 %v5205, %v5367
    %v5448 = vadd.f32 %v5206, %v5369
    %v5449 = vadd.f32 %v5207, %v5372
    %v5450 = vadd.f32 %v5208, %v5374
    %v5451 = vadd.f32 %v5209, %v5377
    %v5452 = vadd.f32 %v5210, %v5379
    %v5453 = vadd.f32 %v5211, %v5382
    %v5454 = vadd.f32 %v5212, %v5384
    %v5455 = vadd.f32 %v5213, %v5387
    %v5456 = vadd.f32 %v5214, %v5389
    %v5457 = vadd.f32 %v5215, %v5392
    %v5458 = vadd.f32 %v5216, %v5394
    %s5459 = sld [smem:[#allocation10 + $0x82]]
    %v5460 = vstv %s5459
    %v5461 = vmul.f32 %v5460, %v237
    %v5462 = vmul.f32 %v5460, %v138
    %v5463 = vmul.f32 %v5460, %v254
    %v5464 = vmul.f32 %v5460, %v5119
    %v5465 = vmul.f32 %v5460, %v5025
    %v5466 = vmul.f32 %v5460, %v5135
    %v5467 = vmul.f32 %v5460, %v5120
    %v5468 = vmul.f32 %v5460, %v5028
    %v5469 = vmul.f32 %v5460, %v5136
    %v5470 = vmul.f32 %v5460, %v5121
    %v5471 = vmul.f32 %v5460, %v5031
    %v5472 = vmul.f32 %v5460, %v5137
    %v5473 = vmul.f32 %v5460, %v5122
    %v5474 = vmul.f32 %v5460, %v5034
    %v5475 = vmul.f32 %v5460, %v5138
    %v5476 = vmul.f32 %v5460, %v5123
    %v5477 = vmul.f32 %v5460, %v5037
    %v5478 = vmul.f32 %v5460, %v5139
    %v5479 = vmul.f32 %v5460, %v5124
    %v5480 = vmul.f32 %v5460, %v5040
    %v5481 = vmul.f32 %v5460, %v5140
    %v5482 = vmul.f32 %v5460, %v5125
    %v5483 = vmul.f32 %v5460, %v5043
    %v5484 = vmul.f32 %v5460, %v5141
    %v5485 = vmul.f32 %v5460, %v5126
    %v5486 = vmul.f32 %v5460, %v5046
    %v5487 = vmul.f32 %v5460, %v5142
    %v5488 = vmul.f32 %v5460, %v5127
    %v5489 = vmul.f32 %v5460, %v5049
    %v5490 = vmul.f32 %v5460, %v5143
    %v5491 = vmul.f32 %v5460, %v5128
    %v5492 = vmul.f32 %v5460, %v5052
    %v5493 = vmul.f32 %v5460, %v5144
    %v5494 = vmul.f32 %v5460, %v5129
    %v5495 = vmul.f32 %v5460, %v5055
    %v5496 = vmul.f32 %v5460, %v5145
    %v5497 = vmul.f32 %v5460, %v5130
    %v5498 = vmul.f32 %v5460, %v5058
    %v5499 = vmul.f32 %v5460, %v5146
    %v5500 = vmul.f32 %v5460, %v5131
    %v5501 = vmul.f32 %v5460, %v5061
    %v5502 = vmul.f32 %v5460, %v5147
    %v5503 = vmul.f32 %v5460, %v5132
    %v5504 = vmul.f32 %v5460, %v5064
    %v5505 = vmul.f32 %v5460, %v5148
    %v5506 = vmul.f32 %v5460, %v5133
    %v5507 = vmul.f32 %v5460, %v5067
    %v5508 = vmul.f32 %v5460, %v5149
    %v5557 = vrot.slane %v5461, 2
    %v5558 = vrot.slane %v5462, 2
    %v5559 = vsel %vm746, %v5557, %v5558
    %v5560 = vrot.slane %v5463, 2
    %v5561 = vsel %vm746, %v5558, %v5560
    %v5562 = vrot.slane %v5464, 2
    %v5563 = vrot.slane %v5465, 2
    %v5564 = vsel %vm746, %v5562, %v5563
    %v5565 = vrot.slane %v5466, 2
    %v5566 = vsel %vm746, %v5563, %v5565
    %v5567 = vrot.slane %v5467, 2
    %v5568 = vrot.slane %v5468, 2
    %v5569 = vsel %vm746, %v5567, %v5568
    %v5570 = vrot.slane %v5469, 2
    %v5571 = vsel %vm746, %v5568, %v5570
    %v5572 = vrot.slane %v5470, 2
    %v5573 = vrot.slane %v5471, 2
    %v5574 = vsel %vm746, %v5572, %v5573
    %v5575 = vrot.slane %v5472, 2
    %v5576 = vsel %vm746, %v5573, %v5575
    %v5577 = vrot.slane %v5473, 2
    %v5578 = vrot.slane %v5474, 2
    %v5579 = vsel %vm746, %v5577, %v5578
    %v5580 = vrot.slane %v5475, 2
    %v5581 = vsel %vm746, %v5578, %v5580
    %v5582 = vrot.slane %v5476, 2
    %v5583 = vrot.slane %v5477, 2
    %v5584 = vsel %vm746, %v5582, %v5583
    %v5585 = vrot.slane %v5478, 2
    %v5586 = vsel %vm746, %v5583, %v5585
    %v5587 = vrot.slane %v5479, 2
    %v5588 = vrot.slane %v5480, 2
    %v5589 = vsel %vm746, %v5587, %v5588
    %v5590 = vrot.slane %v5481, 2
    %v5591 = vsel %vm746, %v5588, %v5590
    %v5592 = vrot.slane %v5482, 2
    %v5593 = vrot.slane %v5483, 2
    %v5594 = vsel %vm746, %v5592, %v5593
    %v5595 = vrot.slane %v5484, 2
    %v5596 = vsel %vm746, %v5593, %v5595
    %v5597 = vrot.slane %v5485, 2
    %v5598 = vrot.slane %v5486, 2
    %v5599 = vsel %vm746, %v5597, %v5598
    %v5600 = vrot.slane %v5487, 2
    %v5601 = vsel %vm746, %v5598, %v5600
    %v5602 = vrot.slane %v5488, 2
    %v5603 = vrot.slane %v5489, 2
    %v5604 = vsel %vm746, %v5602, %v5603
    %v5605 = vrot.slane %v5490, 2
    %v5606 = vsel %vm746, %v5603, %v5605
    %v5607 = vrot.slane %v5491, 2
    %v5608 = vrot.slane %v5492, 2
    %v5609 = vsel %vm746, %v5607, %v5608
    %v5610 = vrot.slane %v5493, 2
    %v5611 = vsel %vm746, %v5608, %v5610
    %v5612 = vrot.slane %v5494, 2
    %v5613 = vrot.slane %v5495, 2
    %v5614 = vsel %vm746, %v5612, %v5613
    %v5615 = vrot.slane %v5496, 2
    %v5616 = vsel %vm746, %v5613, %v5615
    %v5617 = vrot.slane %v5497, 2
    %v5618 = vrot.slane %v5498, 2
    %v5619 = vsel %vm746, %v5617, %v5618
    %v5620 = vrot.slane %v5499, 2
    %v5621 = vsel %vm746, %v5618, %v5620
    %v5622 = vrot.slane %v5500, 2
    %v5623 = vrot.slane %v5501, 2
    %v5624 = vsel %vm746, %v5622, %v5623
    %v5625 = vrot.slane %v5502, 2
    %v5626 = vsel %vm746, %v5623, %v5625
    %v5627 = vrot.slane %v5503, 2
    %v5628 = vrot.slane %v5504, 2
    %v5629 = vsel %vm746, %v5627, %v5628
    %v5630 = vrot.slane %v5505, 2
    %v5631 = vsel %vm746, %v5628, %v5630
    %v5632 = vrot.slane %v5506, 2
    %v5633 = vrot.slane %v5507, 2
    %v5634 = vsel %vm746, %v5632, %v5633
    %v5635 = vrot.slane %v5508, 2
    %v5636 = vsel %vm746, %v5633, %v5635
    %v5669 = vadd.f32 %v5427, %v5559
    %v5670 = vadd.f32 %v5428, %v5561
    %v5671 = vadd.f32 %v5429, %v5564
    %v5672 = vadd.f32 %v5430, %v5566
    %v5673 = vadd.f32 %v5431, %v5569
    %v5674 = vadd.f32 %v5432, %v5571
    %v5675 = vadd.f32 %v5433, %v5574
    %v5676 = vadd.f32 %v5434, %v5576
    %v5677 = vadd.f32 %v5435, %v5579
    %v5678 = vadd.f32 %v5436, %v5581
    %v5679 = vadd.f32 %v5437, %v5584
    %v5680 = vadd.f32 %v5438, %v5586
    %v5681 = vadd.f32 %v5439, %v5589
    %v5682 = vadd.f32 %v5440, %v5591
    %v5683 = vadd.f32 %v5441, %v5594
    %v5684 = vadd.f32 %v5442, %v5596
    %v5685 = vadd.f32 %v5443, %v5599
    %v5686 = vadd.f32 %v5444, %v5601
    %v5687 = vadd.f32 %v5445, %v5604
    %v5688 = vadd.f32 %v5446, %v5606
    %v5689 = vadd.f32 %v5447, %v5609
    %v5690 = vadd.f32 %v5448, %v5611
    %v5691 = vadd.f32 %v5449, %v5614
    %v5692 = vadd.f32 %v5450, %v5616
    %v5693 = vadd.f32 %v5451, %v5619
    %v5694 = vadd.f32 %v5452, %v5621
    %v5695 = vadd.f32 %v5453, %v5624
    %v5696 = vadd.f32 %v5454, %v5626
    %v5697 = vadd.f32 %v5455, %v5629
    %v5698 = vadd.f32 %v5456, %v5631
    %v5699 = vadd.f32 %v5457, %v5634
    %v5700 = vadd.f32 %v5458, %v5636
    %s5701 = sld [smem:[#allocation10 + $0x83]]
    %v5702 = vstv %s5701
    %v5703 = vmul.f32 %v5702, %v5119
    %v5704 = vmul.f32 %v5702, %v5025
    %v5705 = vmul.f32 %v5702, %v5120
    %v5706 = vmul.f32 %v5702, %v5028
    %v5707 = vmul.f32 %v5702, %v5121
    %v5708 = vmul.f32 %v5702, %v5031
    %v5709 = vmul.f32 %v5702, %v5122
    %v5710 = vmul.f32 %v5702, %v5034
    %v5711 = vmul.f32 %v5702, %v5123
    %v5712 = vmul.f32 %v5702, %v5037
    %v5713 = vmul.f32 %v5702, %v5124
    %v5714 = vmul.f32 %v5702, %v5040
    %v5715 = vmul.f32 %v5702, %v5125
    %v5716 = vmul.f32 %v5702, %v5043
    %v5717 = vmul.f32 %v5702, %v5126
    %v5718 = vmul.f32 %v5702, %v5046
    %v5719 = vmul.f32 %v5702, %v5127
    %v5720 = vmul.f32 %v5702, %v5049
    %v5721 = vmul.f32 %v5702, %v5128
    %v5722 = vmul.f32 %v5702, %v5052
    %v5723 = vmul.f32 %v5702, %v5129
    %v5724 = vmul.f32 %v5702, %v5055
    %v5725 = vmul.f32 %v5702, %v5130
    %v5726 = vmul.f32 %v5702, %v5058
    %v5727 = vmul.f32 %v5702, %v5131
    %v5728 = vmul.f32 %v5702, %v5061
    %v5729 = vmul.f32 %v5702, %v5132
    %v5730 = vmul.f32 %v5702, %v5064
    %v5731 = vmul.f32 %v5702, %v5133
    %v5732 = vmul.f32 %v5702, %v5067
    %v5733 = vmul.f32 %v5702, %v5134
    %v5734 = vmul.f32 %v5702, %v5070
    %v5735 = vadd.f32 %v5669, %v5703
    %v5736 = vadd.f32 %v5670, %v5704
    %v5737 = vadd.f32 %v5671, %v5705
    %v5738 = vadd.f32 %v5672, %v5706
    %v5739 = vadd.f32 %v5673, %v5707
    %v5740 = vadd.f32 %v5674, %v5708
    %v5741 = vadd.f32 %v5675, %v5709
    %v5742 = vadd.f32 %v5676, %v5710
    %v5743 = vadd.f32 %v5677, %v5711
    %v5744 = vadd.f32 %v5678, %v5712
    %v5745 = vadd.f32 %v5679, %v5713
    %v5746 = vadd.f32 %v5680, %v5714
    %v5747 = vadd.f32 %v5681, %v5715
    %v5748 = vadd.f32 %v5682, %v5716
    %v5749 = vadd.f32 %v5683, %v5717
    %v5750 = vadd.f32 %v5684, %v5718
    %v5751 = vadd.f32 %v5685, %v5719
    %v5752 = vadd.f32 %v5686, %v5720
    %v5753 = vadd.f32 %v5687, %v5721
    %v5754 = vadd.f32 %v5688, %v5722
    %v5755 = vadd.f32 %v5689, %v5723
    %v5756 = vadd.f32 %v5690, %v5724
    %v5757 = vadd.f32 %v5691, %v5725
    %v5758 = vadd.f32 %v5692, %v5726
    %v5759 = vadd.f32 %v5693, %v5727
    %v5760 = vadd.f32 %v5694, %v5728
    %v5761 = vadd.f32 %v5695, %v5729
    %v5762 = vadd.f32 %v5696, %v5730
    %v5763 = vadd.f32 %v5697, %v5731
    %v5764 = vadd.f32 %v5698, %v5732
    %v5765 = vadd.f32 %v5699, %v5733
    %v5766 = vadd.f32 %v5700, %v5734
    %s5767 = sld [smem:[#allocation10 + $0x85]]
    %v5768 = vstv %s5767
    %v5769 = vmul.f32 %v5768, %v5119
    %v5770 = vmul.f32 %v5768, %v5025
    %v5771 = vmul.f32 %v5768, %v5135
    %v5772 = vmul.f32 %v5768, %v5120
    %v5773 = vmul.f32 %v5768, %v5028
    %v5774 = vmul.f32 %v5768, %v5136
    %v5775 = vmul.f32 %v5768, %v5121
    %v5776 = vmul.f32 %v5768, %v5031
    %v5777 = vmul.f32 %v5768, %v5137
    %v5778 = vmul.f32 %v5768, %v5122
    %v5779 = vmul.f32 %v5768, %v5034
    %v5780 = vmul.f32 %v5768, %v5138
    %v5781 = vmul.f32 %v5768, %v5123
    %v5782 = vmul.f32 %v5768, %v5037
    %v5783 = vmul.f32 %v5768, %v5139
    %v5784 = vmul.f32 %v5768, %v5124
    %v5785 = vmul.f32 %v5768, %v5040
    %v5786 = vmul.f32 %v5768, %v5140
    %v5787 = vmul.f32 %v5768, %v5125
    %v5788 = vmul.f32 %v5768, %v5043
    %v5789 = vmul.f32 %v5768, %v5141
    %v5790 = vmul.f32 %v5768, %v5126
    %v5791 = vmul.f32 %v5768, %v5046
    %v5792 = vmul.f32 %v5768, %v5142
    %v5793 = vmul.f32 %v5768, %v5127
    %v5794 = vmul.f32 %v5768, %v5049
    %v5795 = vmul.f32 %v5768, %v5143
    %v5796 = vmul.f32 %v5768, %v5128
    %v5797 = vmul.f32 %v5768, %v5052
    %v5798 = vmul.f32 %v5768, %v5144
    %v5799 = vmul.f32 %v5768, %v5129
    %v5800 = vmul.f32 %v5768, %v5055
    %v5801 = vmul.f32 %v5768, %v5145
    %v5802 = vmul.f32 %v5768, %v5130
    %v5803 = vmul.f32 %v5768, %v5058
    %v5804 = vmul.f32 %v5768, %v5146
    %v5805 = vmul.f32 %v5768, %v5131
    %v5806 = vmul.f32 %v5768, %v5061
    %v5807 = vmul.f32 %v5768, %v5147
    %v5808 = vmul.f32 %v5768, %v5132
    %v5809 = vmul.f32 %v5768, %v5064
    %v5810 = vmul.f32 %v5768, %v5148
    %v5811 = vmul.f32 %v5768, %v5133
    %v5812 = vmul.f32 %v5768, %v5067
    %v5813 = vmul.f32 %v5768, %v5149
    %v5814 = vmul.f32 %v5768, %v5134
    %v5815 = vmul.f32 %v5768, %v5070
    %v5816 = vmul.f32 %v5768, %v5150
    %v5865 = vrot.slane %v5769, 2
    %v5866 = vrot.slane %v5770, 2
    %v5867 = vsel %vm746, %v5865, %v5866
    %v5868 = vrot.slane %v5771, 2
    %v5869 = vsel %vm746, %v5866, %v5868
    %v5870 = vrot.slane %v5772, 2
    %v5871 = vrot.slane %v5773, 2
    %v5872 = vsel %vm746, %v5870, %v5871
    %v5873 = vrot.slane %v5774, 2
    %v5874 = vsel %vm746, %v5871, %v5873
    %v5875 = vrot.slane %v5775, 2
    %v5876 = vrot.slane %v5776, 2
    %v5877 = vsel %vm746, %v5875, %v5876
    %v5878 = vrot.slane %v5777, 2
    %v5879 = vsel %vm746, %v5876, %v5878
    %v5880 = vrot.slane %v5778, 2
    %v5881 = vrot.slane %v5779, 2
    %v5882 = vsel %vm746, %v5880, %v5881
    %v5883 = vrot.slane %v5780, 2
    %v5884 = vsel %vm746, %v5881, %v5883
    %v5885 = vrot.slane %v5781, 2
    %v5886 = vrot.slane %v5782, 2
    %v5887 = vsel %vm746, %v5885, %v5886
    %v5888 = vrot.slane %v5783, 2
    %v5889 = vsel %vm746, %v5886, %v5888
    %v5890 = vrot.slane %v5784, 2
    %v5891 = vrot.slane %v5785, 2
    %v5892 = vsel %vm746, %v5890, %v5891
    %v5893 = vrot.slane %v5786, 2
    %v5894 = vsel %vm746, %v5891, %v5893
    %v5895 = vrot.slane %v5787, 2
    %v5896 = vrot.slane %v5788, 2
    %v5897 = vsel %vm746, %v5895, %v5896
    %v5898 = vrot.slane %v5789, 2
    %v5899 = vsel %vm746, %v5896, %v5898
    %v5900 = vrot.slane %v5790, 2
    %v5901 = vrot.slane %v5791, 2
    %v5902 = vsel %vm746, %v5900, %v5901
    %v5903 = vrot.slane %v5792, 2
    %v5904 = vsel %vm746, %v5901, %v5903
    %v5905 = vrot.slane %v5793, 2
    %v5906 = vrot.slane %v5794, 2
    %v5907 = vsel %vm746, %v5905, %v5906
    %v5908 = vrot.slane %v5795, 2
    %v5909 = vsel %vm746, %v5906, %v5908
    %v5910 = vrot.slane %v5796, 2
    %v5911 = vrot.slane %v5797, 2
    %v5912 = vsel %vm746, %v5910, %v5911
    %v5913 = vrot.slane %v5798, 2
    %v5914 = vsel %vm746, %v5911, %v5913
    %v5915 = vrot.slane %v5799, 2
    %v5916 = vrot.slane %v5800, 2
    %v5917 = vsel %vm746, %v5915, %v5916
    %v5918 = vrot.slane %v5801, 2
    %v5919 = vsel %vm746, %v5916, %v5918
    %v5920 = vrot.slane %v5802, 2
    %v5921 = vrot.slane %v5803, 2
    %v5922 = vsel %vm746, %v5920, %v5921
    %v5923 = vrot.slane %v5804, 2
    %v5924 = vsel %vm746, %v5921, %v5923
    %v5925 = vrot.slane %v5805, 2
    %v5926 = vrot.slane %v5806, 2
    %v5927 = vsel %vm746, %v5925, %v5926
    %v5928 = vrot.slane %v5807, 2
    %v5929 = vsel %vm746, %v5926, %v5928
    %v5930 = vrot.slane %v5808, 2
    %v5931 = vrot.slane %v5809, 2
    %v5932 = vsel %vm746, %v5930, %v5931
    %v5933 = vrot.slane %v5810, 2
    %v5934 = vsel %vm746, %v5931, %v5933
    %v5935 = vrot.slane %v5811, 2
    %v5936 = vrot.slane %v5812, 2
    %v5937 = vsel %vm746, %v5935, %v5936
    %v5938 = vrot.slane %v5813, 2
    %v5939 = vsel %vm746, %v5936, %v5938
    %v5940 = vrot.slane %v5814, 2
    %v5941 = vrot.slane %v5815, 2
    %v5942 = vsel %vm746, %v5940, %v5941
    %v5943 = vrot.slane %v5816, 2
    %v5944 = vsel %vm746, %v5941, %v5943
    %v5977 = vadd.f32 %v5735, %v5867
    %v5978 = vadd.f32 %v5736, %v5869
    %v5979 = vadd.f32 %v5737, %v5872
    %v5980 = vadd.f32 %v5738, %v5874
    %v5981 = vadd.f32 %v5739, %v5877
    %v5982 = vadd.f32 %v5740, %v5879
    %v5983 = vadd.f32 %v5741, %v5882
    %v5984 = vadd.f32 %v5742, %v5884
    %v5985 = vadd.f32 %v5743, %v5887
    %v5986 = vadd.f32 %v5744, %v5889
    %v5987 = vadd.f32 %v5745, %v5892
    %v5988 = vadd.f32 %v5746, %v5894
    %v5989 = vadd.f32 %v5747, %v5897
    %v5990 = vadd.f32 %v5748, %v5899
    %v5991 = vadd.f32 %v5749, %v5902
    %v5992 = vadd.f32 %v5750, %v5904
    %v5993 = vadd.f32 %v5751, %v5907
    %v5994 = vadd.f32 %v5752, %v5909
    %v5995 = vadd.f32 %v5753, %v5912
    %v5996 = vadd.f32 %v5754, %v5914
    %v5997 = vadd.f32 %v5755, %v5917
    %v5998 = vadd.f32 %v5756, %v5919
    %v5999 = vadd.f32 %v5757, %v5922
    %v6000 = vadd.f32 %v5758, %v5924
    %v6001 = vadd.f32 %v5759, %v5927
    %v6002 = vadd.f32 %v5760, %v5929
    %v6003 = vadd.f32 %v5761, %v5932
    %v6004 = vadd.f32 %v5762, %v5934
    %v6005 = vadd.f32 %v5763, %v5937
    %v6006 = vadd.f32 %v5764, %v5939
    %v6007 = vadd.f32 %v5765, %v5942
    %v6008 = vadd.f32 %v5766, %v5944
    %s6009 = sld [smem:[#allocation10 + $0x86]]
    %v6010 = vstv %s6009
    %v6011 = vmul.f32 %v6010, %v5120
    %v6012 = vmul.f32 %v6010, %v5028
    %v6013 = vmul.f32 %v6010, %v5121
    %v6014 = vmul.f32 %v6010, %v5031
    %v6015 = vmul.f32 %v6010, %v5122
    %v6016 = vmul.f32 %v6010, %v5034
    %v6017 = vmul.f32 %v6010, %v5123
    %v6018 = vmul.f32 %v6010, %v5037
    %v6019 = vmul.f32 %v6010, %v5124
    %v6020 = vmul.f32 %v6010, %v5040
    %v6021 = vmul.f32 %v6010, %v5125
    %v6022 = vmul.f32 %v6010, %v5043
    %v6023 = vmul.f32 %v6010, %v5126
    %v6024 = vmul.f32 %v6010, %v5046
    %v6025 = vmul.f32 %v6010, %v5127
    %v6026 = vmul.f32 %v6010, %v5049
    %v6027 = vmul.f32 %v6010, %v5128
    %v6028 = vmul.f32 %v6010, %v5052
    %v6029 = vmul.f32 %v6010, %v5129
    %v6030 = vmul.f32 %v6010, %v5055
    %v6031 = vmul.f32 %v6010, %v5130
    %v6032 = vmul.f32 %v6010, %v5058
    %v6033 = vmul.f32 %v6010, %v5131
    %v6034 = vmul.f32 %v6010, %v5061
    %v6035 = vmul.f32 %v6010, %v5132
    %v6036 = vmul.f32 %v6010, %v5064
    %v6037 = vmul.f32 %v6010, %v5133
    %v6038 = vmul.f32 %v6010, %v5067
    %v6039 = vmul.f32 %v6010, %v5134
    %v6040 = vmul.f32 %v6010, %v5070
    %v6041 = vmul.f32 %v6010, %v237
    %v6042 = vmul.f32 %v6010, %v138
    %v6043 = vadd.f32 %v5977, %v6011
    %v6044 = vadd.f32 %v5978, %v6012
    %v6045 = vadd.f32 %v5979, %v6013
    %v6046 = vadd.f32 %v5980, %v6014
    %v6047 = vadd.f32 %v5981, %v6015
    %v6048 = vadd.f32 %v5982, %v6016
    %v6049 = vadd.f32 %v5983, %v6017
    %v6050 = vadd.f32 %v5984, %v6018
    %v6051 = vadd.f32 %v5985, %v6019
    %v6052 = vadd.f32 %v5986, %v6020
    %v6053 = vadd.f32 %v5987, %v6021
    %v6054 = vadd.f32 %v5988, %v6022
    %v6055 = vadd.f32 %v5989, %v6023
    %v6056 = vadd.f32 %v5990, %v6024
    %v6057 = vadd.f32 %v5991, %v6025
    %v6058 = vadd.f32 %v5992, %v6026
    %v6059 = vadd.f32 %v5993, %v6027
    %v6060 = vadd.f32 %v5994, %v6028
    %v6061 = vadd.f32 %v5995, %v6029
    %v6062 = vadd.f32 %v5996, %v6030
    %v6063 = vadd.f32 %v5997, %v6031
    %v6064 = vadd.f32 %v5998, %v6032
    %v6065 = vadd.f32 %v5999, %v6033
    %v6066 = vadd.f32 %v6000, %v6034
    %v6067 = vadd.f32 %v6001, %v6035
    %v6068 = vadd.f32 %v6002, %v6036
    %v6069 = vadd.f32 %v6003, %v6037
    %v6070 = vadd.f32 %v6004, %v6038
    %v6071 = vadd.f32 %v6005, %v6039
    %v6072 = vadd.f32 %v6006, %v6040
    %v6073 = vadd.f32 %v6007, %v6041
    %v6074 = vadd.f32 %v6008, %v6042
    %s6075 = sld [smem:[#allocation10 + $0x87]]
    %v6076 = vstv %s6075
    %v6077 = vmul.f32 %v6076, %v5120
    %v6078 = vmul.f32 %v6076, %v5028
    %v6079 = vmul.f32 %v6076, %v5136
    %v6080 = vmul.f32 %v6076, %v5121
    %v6081 = vmul.f32 %v6076, %v5031
    %v6082 = vmul.f32 %v6076, %v5137
    %v6083 = vmul.f32 %v6076, %v5122
    %v6084 = vmul.f32 %v6076, %v5034
    %v6085 = vmul.f32 %v6076, %v5138
    %v6086 = vmul.f32 %v6076, %v5123
    %v6087 = vmul.f32 %v6076, %v5037
    %v6088 = vmul.f32 %v6076, %v5139
    %v6089 = vmul.f32 %v6076, %v5124
    %v6090 = vmul.f32 %v6076, %v5040
    %v6091 = vmul.f32 %v6076, %v5140
    %v6092 = vmul.f32 %v6076, %v5125
    %v6093 = vmul.f32 %v6076, %v5043
    %v6094 = vmul.f32 %v6076, %v5141
    %v6095 = vmul.f32 %v6076, %v5126
    %v6096 = vmul.f32 %v6076, %v5046
    %v6097 = vmul.f32 %v6076, %v5142
    %v6098 = vmul.f32 %v6076, %v5127
    %v6099 = vmul.f32 %v6076, %v5049
    %v6100 = vmul.f32 %v6076, %v5143
    %v6101 = vmul.f32 %v6076, %v5128
    %v6102 = vmul.f32 %v6076, %v5052
    %v6103 = vmul.f32 %v6076, %v5144
    %v6104 = vmul.f32 %v6076, %v5129
    %v6105 = vmul.f32 %v6076, %v5055
    %v6106 = vmul.f32 %v6076, %v5145
    %v6107 = vmul.f32 %v6076, %v5130
    %v6108 = vmul.f32 %v6076, %v5058
    %v6109 = vmul.f32 %v6076, %v5146
    %v6110 = vmul.f32 %v6076, %v5131
    %v6111 = vmul.f32 %v6076, %v5061
    %v6112 = vmul.f32 %v6076, %v5147
    %v6113 = vmul.f32 %v6076, %v5132
    %v6114 = vmul.f32 %v6076, %v5064
    %v6115 = vmul.f32 %v6076, %v5148
    %v6116 = vmul.f32 %v6076, %v5133
    %v6117 = vmul.f32 %v6076, %v5067
    %v6118 = vmul.f32 %v6076, %v5149
    %v6119 = vmul.f32 %v6076, %v5134
    %v6120 = vmul.f32 %v6076, %v5070
    %v6121 = vmul.f32 %v6076, %v5150
    %v6122 = vmul.f32 %v6076, %v237
    %v6123 = vmul.f32 %v6076, %v138
    %v6124 = vmul.f32 %v6076, %v254
    %v6173 = vrot.slane %v6077, 1
    %v6174 = vrot.slane %v6078, 1
    %v6175 = vsel %vm503, %v6173, %v6174
    %v6176 = vrot.slane %v6079, 1
    %v6177 = vsel %vm503, %v6174, %v6176
    %v6178 = vrot.slane %v6080, 1
    %v6179 = vrot.slane %v6081, 1
    %v6180 = vsel %vm503, %v6178, %v6179
    %v6181 = vrot.slane %v6082, 1
    %v6182 = vsel %vm503, %v6179, %v6181
    %v6183 = vrot.slane %v6083, 1
    %v6184 = vrot.slane %v6084, 1
    %v6185 = vsel %vm503, %v6183, %v6184
    %v6186 = vrot.slane %v6085, 1
    %v6187 = vsel %vm503, %v6184, %v6186
    %v6188 = vrot.slane %v6086, 1
    %v6189 = vrot.slane %v6087, 1
    %v6190 = vsel %vm503, %v6188, %v6189
    %v6191 = vrot.slane %v6088, 1
    %v6192 = vsel %vm503, %v6189, %v6191
    %v6193 = vrot.slane %v6089, 1
    %v6194 = vrot.slane %v6090, 1
    %v6195 = vsel %vm503, %v6193, %v6194
    %v6196 = vrot.slane %v6091, 1
    %v6197 = vsel %vm503, %v6194, %v6196
    %v6198 = vrot.slane %v6092, 1
    %v6199 = vrot.slane %v6093, 1
    %v6200 = vsel %vm503, %v6198, %v6199
    %v6201 = vrot.slane %v6094, 1
    %v6202 = vsel %vm503, %v6199, %v6201
    %v6203 = vrot.slane %v6095, 1
    %v6204 = vrot.slane %v6096, 1
    %v6205 = vsel %vm503, %v6203, %v6204
    %v6206 = vrot.slane %v6097, 1
    %v6207 = vsel %vm503, %v6204, %v6206
    %v6208 = vrot.slane %v6098, 1
    %v6209 = vrot.slane %v6099, 1
    %v6210 = vsel %vm503, %v6208, %v6209
    %v6211 = vrot.slane %v6100, 1
    %v6212 = vsel %vm503, %v6209, %v6211
    %v6213 = vrot.slane %v6101, 1
    %v6214 = vrot.slane %v6102, 1
    %v6215 = vsel %vm503, %v6213, %v6214
    %v6216 = vrot.slane %v6103, 1
    %v6217 = vsel %vm503, %v6214, %v6216
    %v6218 = vrot.slane %v6104, 1
    %v6219 = vrot.slane %v6105, 1
    %v6220 = vsel %vm503, %v6218, %v6219
    %v6221 = vrot.slane %v6106, 1
    %v6222 = vsel %vm503, %v6219, %v6221
    %v6223 = vrot.slane %v6107, 1
    %v6224 = vrot.slane %v6108, 1
    %v6225 = vsel %vm503, %v6223, %v6224
    %v6226 = vrot.slane %v6109, 1
    %v6227 = vsel %vm503, %v6224, %v6226
    %v6228 = vrot.slane %v6110, 1
    %v6229 = vrot.slane %v6111, 1
    %v6230 = vsel %vm503, %v6228, %v6229
    %v6231 = vrot.slane %v6112, 1
    %v6232 = vsel %vm503, %v6229, %v6231
    %v6233 = vrot.slane %v6113, 1
    %v6234 = vrot.slane %v6114, 1
    %v6235 = vsel %vm503, %v6233, %v6234
    %v6236 = vrot.slane %v6115, 1
    %v6237 = vsel %vm503, %v6234, %v6236
    %v6238 = vrot.slane %v6116, 1
    %v6239 = vrot.slane %v6117, 1
    %v6240 = vsel %vm503, %v6238, %v6239
    %v6241 = vrot.slane %v6118, 1
    %v6242 = vsel %vm503, %v6239, %v6241
    %v6243 = vrot.slane %v6119, 1
    %v6244 = vrot.slane %v6120, 1
    %v6245 = vsel %vm503, %v6243, %v6244
    %v6246 = vrot.slane %v6121, 1
    %v6247 = vsel %vm503, %v6244, %v6246
    %v6248 = vrot.slane %v6122, 1
    %v6249 = vrot.slane %v6123, 1
    %v6250 = vsel %vm503, %v6248, %v6249
    %v6251 = vrot.slane %v6124, 1
    %v6252 = vsel %vm503, %v6249, %v6251
    %v6285 = vadd.f32 %v6043, %v6175
    %v6286 = vadd.f32 %v6044, %v6177
    %v6287 = vadd.f32 %v6045, %v6180
    %v6288 = vadd.f32 %v6046, %v6182
    %v6289 = vadd.f32 %v6047, %v6185
    %v6290 = vadd.f32 %v6048, %v6187
    %v6291 = vadd.f32 %v6049, %v6190
    %v6292 = vadd.f32 %v6050, %v6192
    %v6293 = vadd.f32 %v6051, %v6195
    %v6294 = vadd.f32 %v6052, %v6197
    %v6295 = vadd.f32 %v6053, %v6200
    %v6296 = vadd.f32 %v6054, %v6202
    %v6297 = vadd.f32 %v6055, %v6205
    %v6298 = vadd.f32 %v6056, %v6207
    %v6299 = vadd.f32 %v6057, %v6210
    %v6300 = vadd.f32 %v6058, %v6212
    %v6301 = vadd.f32 %v6059, %v6215
    %v6302 = vadd.f32 %v6060, %v6217
    %v6303 = vadd.f32 %v6061, %v6220
    %v6304 = vadd.f32 %v6062, %v6222
    %v6305 = vadd.f32 %v6063, %v6225
    %v6306 = vadd.f32 %v6064, %v6227
    %v6307 = vadd.f32 %v6065, %v6230
    %v6308 = vadd.f32 %v6066, %v6232
    %v6309 = vadd.f32 %v6067, %v6235
    %v6310 = vadd.f32 %v6068, %v6237
    %v6311 = vadd.f32 %v6069, %v6240
    %v6312 = vadd.f32 %v6070, %v6242
    %v6313 = vadd.f32 %v6071, %v6245
    %v6314 = vadd.f32 %v6072, %v6247
    %v6315 = vadd.f32 %v6073, %v6250
    %v6316 = vadd.f32 %v6074, %v6252
    %s6317 = sld [smem:[#allocation10 + $0x88]]
    %v6318 = vstv %s6317
    %v6319 = vmul.f32 %v6318, %v5120
    %v6320 = vmul.f32 %v6318, %v5028
    %v6321 = vmul.f32 %v6318, %v5136
    %v6322 = vmul.f32 %v6318, %v5121
    %v6323 = vmul.f32 %v6318, %v5031
    %v6324 = vmul.f32 %v6318, %v5137
    %v6325 = vmul.f32 %v6318, %v5122
    %v6326 = vmul.f32 %v6318, %v5034
    %v6327 = vmul.f32 %v6318, %v5138
    %v6328 = vmul.f32 %v6318, %v5123
    %v6329 = vmul.f32 %v6318, %v5037
    %v6330 = vmul.f32 %v6318, %v5139
    %v6331 = vmul.f32 %v6318, %v5124
    %v6332 = vmul.f32 %v6318, %v5040
    %v6333 = vmul.f32 %v6318, %v5140
    %v6334 = vmul.f32 %v6318, %v5125
    %v6335 = vmul.f32 %v6318, %v5043
    %v6336 = vmul.f32 %v6318, %v5141
    %v6337 = vmul.f32 %v6318, %v5126
    %v6338 = vmul.f32 %v6318, %v5046
    %v6339 = vmul.f32 %v6318, %v5142
    %v6340 = vmul.f32 %v6318, %v5127
    %v6341 = vmul.f32 %v6318, %v5049
    %v6342 = vmul.f32 %v6318, %v5143
    %v6343 = vmul.f32 %v6318, %v5128
    %v6344 = vmul.f32 %v6318, %v5052
    %v6345 = vmul.f32 %v6318, %v5144
    %v6346 = vmul.f32 %v6318, %v5129
    %v6347 = vmul.f32 %v6318, %v5055
    %v6348 = vmul.f32 %v6318, %v5145
    %v6349 = vmul.f32 %v6318, %v5130
    %v6350 = vmul.f32 %v6318, %v5058
    %v6351 = vmul.f32 %v6318, %v5146
    %v6352 = vmul.f32 %v6318, %v5131
    %v6353 = vmul.f32 %v6318, %v5061
    %v6354 = vmul.f32 %v6318, %v5147
    %v6355 = vmul.f32 %v6318, %v5132
    %v6356 = vmul.f32 %v6318, %v5064
    %v6357 = vmul.f32 %v6318, %v5148
    %v6358 = vmul.f32 %v6318, %v5133
    %v6359 = vmul.f32 %v6318, %v5067
    %v6360 = vmul.f32 %v6318, %v5149
    %v6361 = vmul.f32 %v6318, %v5134
    %v6362 = vmul.f32 %v6318, %v5070
    %v6363 = vmul.f32 %v6318, %v5150
    %v6364 = vmul.f32 %v6318, %v237
    %v6365 = vmul.f32 %v6318, %v138
    %v6366 = vmul.f32 %v6318, %v254
    %v6415 = vrot.slane %v6319, 2
    %v6416 = vrot.slane %v6320, 2
    %v6417 = vsel %vm746, %v6415, %v6416
    %v6418 = vrot.slane %v6321, 2
    %v6419 = vsel %vm746, %v6416, %v6418
    %v6420 = vrot.slane %v6322, 2
    %v6421 = vrot.slane %v6323, 2
    %v6422 = vsel %vm746, %v6420, %v6421
    %v6423 = vrot.slane %v6324, 2
    %v6424 = vsel %vm746, %v6421, %v6423
    %v6425 = vrot.slane %v6325, 2
    %v6426 = vrot.slane %v6326, 2
    %v6427 = vsel %vm746, %v6425, %v6426
    %v6428 = vrot.slane %v6327, 2
    %v6429 = vsel %vm746, %v6426, %v6428
    %v6430 = vrot.slane %v6328, 2
    %v6431 = vrot.slane %v6329, 2
    %v6432 = vsel %vm746, %v6430, %v6431
    %v6433 = vrot.slane %v6330, 2
    %v6434 = vsel %vm746, %v6431, %v6433
    %v6435 = vrot.slane %v6331, 2
    %v6436 = vrot.slane %v6332, 2
    %v6437 = vsel %vm746, %v6435, %v6436
    %v6438 = vrot.slane %v6333, 2
    %v6439 = vsel %vm746, %v6436, %v6438
    %v6440 = vrot.slane %v6334, 2
    %v6441 = vrot.slane %v6335, 2
    %v6442 = vsel %vm746, %v6440, %v6441
    %v6443 = vrot.slane %v6336, 2
    %v6444 = vsel %vm746, %v6441, %v6443
    %v6445 = vrot.slane %v6337, 2
    %v6446 = vrot.slane %v6338, 2
    %v6447 = vsel %vm746, %v6445, %v6446
    %v6448 = vrot.slane %v6339, 2
    %v6449 = vsel %vm746, %v6446, %v6448
    %v6450 = vrot.slane %v6340, 2
    %v6451 = vrot.slane %v6341, 2
    %v6452 = vsel %vm746, %v6450, %v6451
    %v6453 = vrot.slane %v6342, 2
    %v6454 = vsel %vm746, %v6451, %v6453
    %v6455 = vrot.slane %v6343, 2
    %v6456 = vrot.slane %v6344, 2
    %v6457 = vsel %vm746, %v6455, %v6456
    %v6458 = vrot.slane %v6345, 2
    %v6459 = vsel %vm746, %v6456, %v6458
    %v6460 = vrot.slane %v6346, 2
    %v6461 = vrot.slane %v6347, 2
    %v6462 = vsel %vm746, %v6460, %v6461
    %v6463 = vrot.slane %v6348, 2
    %v6464 = vsel %vm746, %v6461, %v6463
    %v6465 = vrot.slane %v6349, 2
    %v6466 = vrot.slane %v6350, 2
    %v6467 = vsel %vm746, %v6465, %v6466
    %v6468 = vrot.slane %v6351, 2
    %v6469 = vsel %vm746, %v6466, %v6468
    %v6470 = vrot.slane %v6352, 2
    %v6471 = vrot.slane %v6353, 2
    %v6472 = vsel %vm746, %v6470, %v6471
    %v6473 = vrot.slane %v6354, 2
    %v6474 = vsel %vm746, %v6471, %v6473
    %v6475 = vrot.slane %v6355, 2
    %v6476 = vrot.slane %v6356, 2
    %v6477 = vsel %vm746, %v6475, %v6476
    %v6478 = vrot.slane %v6357, 2
    %v6479 = vsel %vm746, %v6476, %v6478
    %v6480 = vrot.slane %v6358, 2
    %v6481 = vrot.slane %v6359, 2
    %v6482 = vsel %vm746, %v6480, %v6481
    %v6483 = vrot.slane %v6360, 2
    %v6484 = vsel %vm746, %v6481, %v6483
    %v6485 = vrot.slane %v6361, 2
    %v6486 = vrot.slane %v6362, 2
    %v6487 = vsel %vm746, %v6485, %v6486
    %v6488 = vrot.slane %v6363, 2
    %v6489 = vsel %vm746, %v6486, %v6488
    %v6490 = vrot.slane %v6364, 2
    %v6491 = vrot.slane %v6365, 2
    %v6492 = vsel %vm746, %v6490, %v6491
    %v6493 = vrot.slane %v6366, 2
    %v6494 = vsel %vm746, %v6491, %v6493
    %v6527 = vadd.f32 %v6285, %v6417
    %v6528 = vadd.f32 %v6286, %v6419
    %v6529 = vadd.f32 %v6287, %v6422
    %v6530 = vadd.f32 %v6288, %v6424
    %v6531 = vadd.f32 %v6289, %v6427
    %v6532 = vadd.f32 %v6290, %v6429
    %v6533 = vadd.f32 %v6291, %v6432
    %v6534 = vadd.f32 %v6292, %v6434
    %v6535 = vadd.f32 %v6293, %v6437
    %v6536 = vadd.f32 %v6294, %v6439
    %v6537 = vadd.f32 %v6295, %v6442
    %v6538 = vadd.f32 %v6296, %v6444
    %v6539 = vadd.f32 %v6297, %v6447
    %v6540 = vadd.f32 %v6298, %v6449
    %v6541 = vadd.f32 %v6299, %v6452
    %v6542 = vadd.f32 %v6300, %v6454
    %v6543 = vadd.f32 %v6301, %v6457
    %v6544 = vadd.f32 %v6302, %v6459
    %v6545 = vadd.f32 %v6303, %v6462
    %v6546 = vadd.f32 %v6304, %v6464
    %v6547 = vadd.f32 %v6305, %v6467
    %v6548 = vadd.f32 %v6306, %v6469
    %v6549 = vadd.f32 %v6307, %v6472
    %v6550 = vadd.f32 %v6308, %v6474
    %v6551 = vadd.f32 %v6309, %v6477
    %v6552 = vadd.f32 %v6310, %v6479
    %v6553 = vadd.f32 %v6311, %v6482
    %v6554 = vadd.f32 %v6312, %v6484
    %v6555 = vadd.f32 %v6313, %v6487
    %v6556 = vadd.f32 %v6314, %v6489
    %v6557 = vadd.f32 %v6315, %v6492
    %v6558 = vadd.f32 %v6316, %v6494
    %s6559 = sld [smem:[#allocation8 + $0x104]]
    %v6560 = vstv %s6559
    %v6561 = vmul.f32 %v6560, %v71
    %v6562 = vmul.f32 %v6560, %v72
    %v6563 = vmul.f32 %v6560, %v73
    %v6564 = vmul.f32 %v6560, %v74
    %v6565 = vmul.f32 %v6560, %v75
    %v6566 = vmul.f32 %v6560, %v76
    %v6567 = vmul.f32 %v6560, %v77
    %v6568 = vmul.f32 %v6560, %v78
    %v6569 = vmul.f32 %v6560, %v79
    %v6570 = vmul.f32 %v6560, %v80
    %v6571 = vmul.f32 %v6560, %v81
    %v6572 = vmul.f32 %v6560, %v82
    %v6573 = vmul.f32 %v6560, %v83
    %v6574 = vmul.f32 %v6560, %v84
    %v6575 = vmul.f32 %v6560, %v85
    %v6576 = vmul.f32 %v6560, %v86
    %v6577 = vmul.f32 %v6560, %v87
    %v6578 = vmul.f32 %v6560, %v88
    %v6579 = vmul.f32 %v6560, %v89
    %v6580 = vmul.f32 %v6560, %v90
    %v6581 = vmul.f32 %v6560, %v91
    %v6582 = vmul.f32 %v6560, %v92
    %v6583 = vmul.f32 %v6560, %v93
    %v6584 = vmul.f32 %v6560, %v94
    %v6585 = vmul.f32 %v6560, %v95
    %v6586 = vmul.f32 %v6560, %v96
    %v6587 = vmul.f32 %v6560, %v97
    %v6588 = vmul.f32 %v6560, %v98
    %v6589 = vmul.f32 %v6560, %v99
    %v6590 = vmul.f32 %v6560, %v100
    %v6591 = vmul.f32 %v6560, %v101
    %v6592 = vmul.f32 %v6560, %v102
    %s6593 = sld [smem:[#allocation9 + $0x2]]
    %v6594 = vstv %s6593
    %v6595 = vadd.f32 %v6561, %v6594
    %v6596 = vadd.f32 %v6562, %v6594
    %v6597 = vadd.f32 %v6563, %v6594
    %v6598 = vadd.f32 %v6564, %v6594
    %v6599 = vadd.f32 %v6565, %v6594
    %v6600 = vadd.f32 %v6566, %v6594
    %v6601 = vadd.f32 %v6567, %v6594
    %v6602 = vadd.f32 %v6568, %v6594
    %v6603 = vadd.f32 %v6569, %v6594
    %v6604 = vadd.f32 %v6570, %v6594
    %v6605 = vadd.f32 %v6571, %v6594
    %v6606 = vadd.f32 %v6572, %v6594
    %v6607 = vadd.f32 %v6573, %v6594
    %v6608 = vadd.f32 %v6574, %v6594
    %v6609 = vadd.f32 %v6575, %v6594
    %v6610 = vadd.f32 %v6576, %v6594
    %v6611 = vadd.f32 %v6577, %v6594
    %v6612 = vadd.f32 %v6578, %v6594
    %v6613 = vadd.f32 %v6579, %v6594
    %v6614 = vadd.f32 %v6580, %v6594
    %v6615 = vadd.f32 %v6581, %v6594
    %v6616 = vadd.f32 %v6582, %v6594
    %v6617 = vadd.f32 %v6583, %v6594
    %v6618 = vadd.f32 %v6584, %v6594
    %v6619 = vadd.f32 %v6585, %v6594
    %v6620 = vadd.f32 %v6586, %v6594
    %v6621 = vadd.f32 %v6587, %v6594
    %v6622 = vadd.f32 %v6588, %v6594
    %v6623 = vadd.f32 %v6589, %v6594
    %v6624 = vadd.f32 %v6590, %v6594
    %v6625 = vadd.f32 %v6591, %v6594
    %v6626 = vadd.f32 %v6592, %v6594
    %s6627 = sld [smem:[#allocation8 + $0x100]]
    %v6628 = vstv %s6627
    %v6629 = vmul.f32 %v6628, %v237
    %v6630 = vmul.f32 %v6628, %v138
    %v6631 = vmul.f32 %v6628, %v238
    %v6632 = vmul.f32 %v6628, %v141
    %v6633 = vmul.f32 %v6628, %v239
    %v6634 = vmul.f32 %v6628, %v144
    %v6635 = vmul.f32 %v6628, %v240
    %v6636 = vmul.f32 %v6628, %v147
    %v6637 = vmul.f32 %v6628, %v241
    %v6638 = vmul.f32 %v6628, %v150
    %v6639 = vmul.f32 %v6628, %v242
    %v6640 = vmul.f32 %v6628, %v153
    %v6641 = vmul.f32 %v6628, %v243
    %v6642 = vmul.f32 %v6628, %v156
    %v6643 = vmul.f32 %v6628, %v244
    %v6644 = vmul.f32 %v6628, %v159
    %v6645 = vmul.f32 %v6628, %v245
    %v6646 = vmul.f32 %v6628, %v162
    %v6647 = vmul.f32 %v6628, %v246
    %v6648 = vmul.f32 %v6628, %v165
    %v6649 = vmul.f32 %v6628, %v247
    %v6650 = vmul.f32 %v6628, %v168
    %v6651 = vmul.f32 %v6628, %v248
    %v6652 = vmul.f32 %v6628, %v171
    %v6653 = vmul.f32 %v6628, %v249
    %v6654 = vmul.f32 %v6628, %v174
    %v6655 = vmul.f32 %v6628, %v250
    %v6656 = vmul.f32 %v6628, %v177
    %v6657 = vmul.f32 %v6628, %v251
    %v6658 = vmul.f32 %v6628, %v180
    %v6659 = vmul.f32 %v6628, %v252
    %v6660 = vmul.f32 %v6628, %v183
    %v6661 = vadd.f32 %v6595, %v6629
    %v6662 = vadd.f32 %v6596, %v6630
    %v6663 = vadd.f32 %v6597, %v6631
    %v6664 = vadd.f32 %v6598, %v6632
    %v6665 = vadd.f32 %v6599, %v6633
    %v6666 = vadd.f32 %v6600, %v6634
    %v6667 = vadd.f32 %v6601, %v6635
    %v6668 = vadd.f32 %v6602, %v6636
    %v6669 = vadd.f32 %v6603, %v6637
    %v6670 = vadd.f32 %v6604, %v6638
    %v6671 = vadd.f32 %v6605, %v6639
    %v6672 = vadd.f32 %v6606, %v6640
    %v6673 = vadd.f32 %v6607, %v6641
    %v6674 = vadd.f32 %v6608, %v6642
    %v6675 = vadd.f32 %v6609, %v6643
    %v6676 = vadd.f32 %v6610, %v6644
    %v6677 = vadd.f32 %v6611, %v6645
    %v6678 = vadd.f32 %v6612, %v6646
    %v6679 = vadd.f32 %v6613, %v6647
    %v6680 = vadd.f32 %v6614, %v6648
    %v6681 = vadd.f32 %v6615, %v6649
    %v6682 = vadd.f32 %v6616, %v6650
    %v6683 = vadd.f32 %v6617, %v6651
    %v6684 = vadd.f32 %v6618, %v6652
    %v6685 = vadd.f32 %v6619, %v6653
    %v6686 = vadd.f32 %v6620, %v6654
    %v6687 = vadd.f32 %v6621, %v6655
    %v6688 = vadd.f32 %v6622, %v6656
    %v6689 = vadd.f32 %v6623, %v6657
    %v6690 = vadd.f32 %v6624, %v6658
    %v6691 = vadd.f32 %v6625, %v6659
    %v6692 = vadd.f32 %v6626, %v6660
    %s6693 = sld [smem:[#allocation8 + $0x101]]
    %v6694 = vstv %s6693
    %v6695 = vmul.f32 %v6694, %v237
    %v6696 = vmul.f32 %v6694, %v138
    %v6697 = vmul.f32 %v6694, %v254
    %v6698 = vmul.f32 %v6694, %v238
    %v6699 = vmul.f32 %v6694, %v141
    %v6700 = vmul.f32 %v6694, %v255
    %v6701 = vmul.f32 %v6694, %v239
    %v6702 = vmul.f32 %v6694, %v144
    %v6703 = vmul.f32 %v6694, %v256
    %v6704 = vmul.f32 %v6694, %v240
    %v6705 = vmul.f32 %v6694, %v147
    %v6706 = vmul.f32 %v6694, %v257
    %v6707 = vmul.f32 %v6694, %v241
    %v6708 = vmul.f32 %v6694, %v150
    %v6709 = vmul.f32 %v6694, %v258
    %v6710 = vmul.f32 %v6694, %v242
    %v6711 = vmul.f32 %v6694, %v153
    %v6712 = vmul.f32 %v6694, %v259
    %v6713 = vmul.f32 %v6694, %v243
    %v6714 = vmul.f32 %v6694, %v156
    %v6715 = vmul.f32 %v6694, %v260
    %v6716 = vmul.f32 %v6694, %v244
    %v6717 = vmul.f32 %v6694, %v159
    %v6718 = vmul.f32 %v6694, %v261
    %v6719 = vmul.f32 %v6694, %v245
    %v6720 = vmul.f32 %v6694, %v162
    %v6721 = vmul.f32 %v6694, %v262
    %v6722 = vmul.f32 %v6694, %v246
    %v6723 = vmul.f32 %v6694, %v165
    %v6724 = vmul.f32 %v6694, %v263
    %v6725 = vmul.f32 %v6694, %v247
    %v6726 = vmul.f32 %v6694, %v168
    %v6727 = vmul.f32 %v6694, %v264
    %v6728 = vmul.f32 %v6694, %v248
    %v6729 = vmul.f32 %v6694, %v171
    %v6730 = vmul.f32 %v6694, %v265
    %v6731 = vmul.f32 %v6694, %v249
    %v6732 = vmul.f32 %v6694, %v174
    %v6733 = vmul.f32 %v6694, %v266
    %v6734 = vmul.f32 %v6694, %v250
    %v6735 = vmul.f32 %v6694, %v177
    %v6736 = vmul.f32 %v6694, %v267
    %v6737 = vmul.f32 %v6694, %v251
    %v6738 = vmul.f32 %v6694, %v180
    %v6739 = vmul.f32 %v6694, %v268
    %v6740 = vmul.f32 %v6694, %v252
    %v6741 = vmul.f32 %v6694, %v183
    %v6742 = vmul.f32 %v6694, %v269
    %v6791 = vrot.slane %v6695, 1
    %v6792 = vrot.slane %v6696, 1
    %v6793 = vsel %vm503, %v6791, %v6792
    %v6794 = vrot.slane %v6697, 1
    %v6795 = vsel %vm503, %v6792, %v6794
    %v6796 = vrot.slane %v6698, 1
    %v6797 = vrot.slane %v6699, 1
    %v6798 = vsel %vm503, %v6796, %v6797
    %v6799 = vrot.slane %v6700, 1
    %v6800 = vsel %vm503, %v6797, %v6799
    %v6801 = vrot.slane %v6701, 1
    %v6802 = vrot.slane %v6702, 1
    %v6803 = vsel %vm503, %v6801, %v6802
    %v6804 = vrot.slane %v6703, 1
    %v6805 = vsel %vm503, %v6802, %v6804
    %v6806 = vrot.slane %v6704, 1
    %v6807 = vrot.slane %v6705, 1
    %v6808 = vsel %vm503, %v6806, %v6807
    %v6809 = vrot.slane %v6706, 1
    %v6810 = vsel %vm503, %v6807, %v6809
    %v6811 = vrot.slane %v6707, 1
    %v6812 = vrot.slane %v6708, 1
    %v6813 = vsel %vm503, %v6811, %v6812
    %v6814 = vrot.slane %v6709, 1
    %v6815 = vsel %vm503, %v6812, %v6814
    %v6816 = vrot.slane %v6710, 1
    %v6817 = vrot.slane %v6711, 1
    %v6818 = vsel %vm503, %v6816, %v6817
    %v6819 = vrot.slane %v6712, 1
    %v6820 = vsel %vm503, %v6817, %v6819
    %v6821 = vrot.slane %v6713, 1
    %v6822 = vrot.slane %v6714, 1
    %v6823 = vsel %vm503, %v6821, %v6822
    %v6824 = vrot.slane %v6715, 1
    %v6825 = vsel %vm503, %v6822, %v6824
    %v6826 = vrot.slane %v6716, 1
    %v6827 = vrot.slane %v6717, 1
    %v6828 = vsel %vm503, %v6826, %v6827
    %v6829 = vrot.slane %v6718, 1
    %v6830 = vsel %vm503, %v6827, %v6829
    %v6831 = vrot.slane %v6719, 1
    %v6832 = vrot.slane %v6720, 1
    %v6833 = vsel %vm503, %v6831, %v6832
    %v6834 = vrot.slane %v6721, 1
    %v6835 = vsel %vm503, %v6832, %v6834
    %v6836 = vrot.slane %v6722, 1
    %v6837 = vrot.slane %v6723, 1
    %v6838 = vsel %vm503, %v6836, %v6837
    %v6839 = vrot.slane %v6724, 1
    %v6840 = vsel %vm503, %v6837, %v6839
    %v6841 = vrot.slane %v6725, 1
    %v6842 = vrot.slane %v6726, 1
    %v6843 = vsel %vm503, %v6841, %v6842
    %v6844 = vrot.slane %v6727, 1
    %v6845 = vsel %vm503, %v6842, %v6844
    %v6846 = vrot.slane %v6728, 1
    %v6847 = vrot.slane %v6729, 1
    %v6848 = vsel %vm503, %v6846, %v6847
    %v6849 = vrot.slane %v6730, 1
    %v6850 = vsel %vm503, %v6847, %v6849
    %v6851 = vrot.slane %v6731, 1
    %v6852 = vrot.slane %v6732, 1
    %v6853 = vsel %vm503, %v6851, %v6852
    %v6854 = vrot.slane %v6733, 1
    %v6855 = vsel %vm503, %v6852, %v6854
    %v6856 = vrot.slane %v6734, 1
    %v6857 = vrot.slane %v6735, 1
    %v6858 = vsel %vm503, %v6856, %v6857
    %v6859 = vrot.slane %v6736, 1
    %v6860 = vsel %vm503, %v6857, %v6859
    %v6861 = vrot.slane %v6737, 1
    %v6862 = vrot.slane %v6738, 1
    %v6863 = vsel %vm503, %v6861, %v6862
    %v6864 = vrot.slane %v6739, 1
    %v6865 = vsel %vm503, %v6862, %v6864
    %v6866 = vrot.slane %v6740, 1
    %v6867 = vrot.slane %v6741, 1
    %v6868 = vsel %vm503, %v6866, %v6867
    %v6869 = vrot.slane %v6742, 1
    %v6870 = vsel %vm503, %v6867, %v6869
    %v6903 = vadd.f32 %v6661, %v6793
    %v6904 = vadd.f32 %v6662, %v6795
    %v6905 = vadd.f32 %v6663, %v6798
    %v6906 = vadd.f32 %v6664, %v6800
    %v6907 = vadd.f32 %v6665, %v6803
    %v6908 = vadd.f32 %v6666, %v6805
    %v6909 = vadd.f32 %v6667, %v6808
    %v6910 = vadd.f32 %v6668, %v6810
    %v6911 = vadd.f32 %v6669, %v6813
    %v6912 = vadd.f32 %v6670, %v6815
    %v6913 = vadd.f32 %v6671, %v6818
    %v6914 = vadd.f32 %v6672, %v6820
    %v6915 = vadd.f32 %v6673, %v6823
    %v6916 = vadd.f32 %v6674, %v6825
    %v6917 = vadd.f32 %v6675, %v6828
    %v6918 = vadd.f32 %v6676, %v6830
    %v6919 = vadd.f32 %v6677, %v6833
    %v6920 = vadd.f32 %v6678, %v6835
    %v6921 = vadd.f32 %v6679, %v6838
    %v6922 = vadd.f32 %v6680, %v6840
    %v6923 = vadd.f32 %v6681, %v6843
    %v6924 = vadd.f32 %v6682, %v6845
    %v6925 = vadd.f32 %v6683, %v6848
    %v6926 = vadd.f32 %v6684, %v6850
    %v6927 = vadd.f32 %v6685, %v6853
    %v6928 = vadd.f32 %v6686, %v6855
    %v6929 = vadd.f32 %v6687, %v6858
    %v6930 = vadd.f32 %v6688, %v6860
    %v6931 = vadd.f32 %v6689, %v6863
    %v6932 = vadd.f32 %v6690, %v6865
    %v6933 = vadd.f32 %v6691, %v6868
    %v6934 = vadd.f32 %v6692, %v6870
    %s6935 = sld [smem:[#allocation8 + $0x102]]
    %v6936 = vstv %s6935
    %v6937 = vmul.f32 %v6936, %v237
    %v6938 = vmul.f32 %v6936, %v138
    %v6939 = vmul.f32 %v6936, %v254
    %v6940 = vmul.f32 %v6936, %v238
    %v6941 = vmul.f32 %v6936, %v141
    %v6942 = vmul.f32 %v6936, %v255
    %v6943 = vmul.f32 %v6936, %v239
    %v6944 = vmul.f32 %v6936, %v144
    %v6945 = vmul.f32 %v6936, %v256
    %v6946 = vmul.f32 %v6936, %v240
    %v6947 = vmul.f32 %v6936, %v147
    %v6948 = vmul.f32 %v6936, %v257
    %v6949 = vmul.f32 %v6936, %v241
    %v6950 = vmul.f32 %v6936, %v150
    %v6951 = vmul.f32 %v6936, %v258
    %v6952 = vmul.f32 %v6936, %v242
    %v6953 = vmul.f32 %v6936, %v153
    %v6954 = vmul.f32 %v6936, %v259
    %v6955 = vmul.f32 %v6936, %v243
    %v6956 = vmul.f32 %v6936, %v156
    %v6957 = vmul.f32 %v6936, %v260
    %v6958 = vmul.f32 %v6936, %v244
    %v6959 = vmul.f32 %v6936, %v159
    %v6960 = vmul.f32 %v6936, %v261
    %v6961 = vmul.f32 %v6936, %v245
    %v6962 = vmul.f32 %v6936, %v162
    %v6963 = vmul.f32 %v6936, %v262
    %v6964 = vmul.f32 %v6936, %v246
    %v6965 = vmul.f32 %v6936, %v165
    %v6966 = vmul.f32 %v6936, %v263
    %v6967 = vmul.f32 %v6936, %v247
    %v6968 = vmul.f32 %v6936, %v168
    %v6969 = vmul.f32 %v6936, %v264
    %v6970 = vmul.f32 %v6936, %v248
    %v6971 = vmul.f32 %v6936, %v171
    %v6972 = vmul.f32 %v6936, %v265
    %v6973 = vmul.f32 %v6936, %v249
    %v6974 = vmul.f32 %v6936, %v174
    %v6975 = vmul.f32 %v6936, %v266
    %v6976 = vmul.f32 %v6936, %v250
    %v6977 = vmul.f32 %v6936, %v177
    %v6978 = vmul.f32 %v6936, %v267
    %v6979 = vmul.f32 %v6936, %v251
    %v6980 = vmul.f32 %v6936, %v180
    %v6981 = vmul.f32 %v6936, %v268
    %v6982 = vmul.f32 %v6936, %v252
    %v6983 = vmul.f32 %v6936, %v183
    %v6984 = vmul.f32 %v6936, %v269
    %v7033 = vrot.slane %v6937, 2
    %v7034 = vrot.slane %v6938, 2
    %v7035 = vsel %vm746, %v7033, %v7034
    %v7036 = vrot.slane %v6939, 2
    %v7037 = vsel %vm746, %v7034, %v7036
    %v7038 = vrot.slane %v6940, 2
    %v7039 = vrot.slane %v6941, 2
    %v7040 = vsel %vm746, %v7038, %v7039
    %v7041 = vrot.slane %v6942, 2
    %v7042 = vsel %vm746, %v7039, %v7041
    %v7043 = vrot.slane %v6943, 2
    %v7044 = vrot.slane %v6944, 2
    %v7045 = vsel %vm746, %v7043, %v7044
    %v7046 = vrot.slane %v6945, 2
    %v7047 = vsel %vm746, %v7044, %v7046
    %v7048 = vrot.slane %v6946, 2
    %v7049 = vrot.slane %v6947, 2
    %v7050 = vsel %vm746, %v7048, %v7049
    %v7051 = vrot.slane %v6948, 2
    %v7052 = vsel %vm746, %v7049, %v7051
    %v7053 = vrot.slane %v6949, 2
    %v7054 = vrot.slane %v6950, 2
    %v7055 = vsel %vm746, %v7053, %v7054
    %v7056 = vrot.slane %v6951, 2
    %v7057 = vsel %vm746, %v7054, %v7056
    %v7058 = vrot.slane %v6952, 2
    %v7059 = vrot.slane %v6953, 2
    %v7060 = vsel %vm746, %v7058, %v7059
    %v7061 = vrot.slane %v6954, 2
    %v7062 = vsel %vm746, %v7059, %v7061
    %v7063 = vrot.slane %v6955, 2
    %v7064 = vrot.slane %v6956, 2
    %v7065 = vsel %vm746, %v7063, %v7064
    %v7066 = vrot.slane %v6957, 2
    %v7067 = vsel %vm746, %v7064, %v7066
    %v7068 = vrot.slane %v6958, 2
    %v7069 = vrot.slane %v6959, 2
    %v7070 = vsel %vm746, %v7068, %v7069
    %v7071 = vrot.slane %v6960, 2
    %v7072 = vsel %vm746, %v7069, %v7071
    %v7073 = vrot.slane %v6961, 2
    %v7074 = vrot.slane %v6962, 2
    %v7075 = vsel %vm746, %v7073, %v7074
    %v7076 = vrot.slane %v6963, 2
    %v7077 = vsel %vm746, %v7074, %v7076
    %v7078 = vrot.slane %v6964, 2
    %v7079 = vrot.slane %v6965, 2
    %v7080 = vsel %vm746, %v7078, %v7079
    %v7081 = vrot.slane %v6966, 2
    %v7082 = vsel %vm746, %v7079, %v7081
    %v7083 = vrot.slane %v6967, 2
    %v7084 = vrot.slane %v6968, 2
    %v7085 = vsel %vm746, %v7083, %v7084
    %v7086 = vrot.slane %v6969, 2
    %v7087 = vsel %vm746, %v7084, %v7086
    %v7088 = vrot.slane %v6970, 2
    %v7089 = vrot.slane %v6971, 2
    %v7090 = vsel %vm746, %v7088, %v7089
    %v7091 = vrot.slane %v6972, 2
    %v7092 = vsel %vm746, %v7089, %v7091
    %v7093 = vrot.slane %v6973, 2
    %v7094 = vrot.slane %v6974, 2
    %v7095 = vsel %vm746, %v7093, %v7094
    %v7096 = vrot.slane %v6975, 2
    %v7097 = vsel %vm746, %v7094, %v7096
    %v7098 = vrot.slane %v6976, 2
    %v7099 = vrot.slane %v6977, 2
    %v7100 = vsel %vm746, %v7098, %v7099
    %v7101 = vrot.slane %v6978, 2
    %v7102 = vsel %vm746, %v7099, %v7101
    %v7103 = vrot.slane %v6979, 2
    %v7104 = vrot.slane %v6980, 2
    %v7105 = vsel %vm746, %v7103, %v7104
    %v7106 = vrot.slane %v6981, 2
    %v7107 = vsel %vm746, %v7104, %v7106
    %v7108 = vrot.slane %v6982, 2
    %v7109 = vrot.slane %v6983, 2
    %v7110 = vsel %vm746, %v7108, %v7109
    %v7111 = vrot.slane %v6984, 2
    %v7112 = vsel %vm746, %v7109, %v7111
    %v7145 = vadd.f32 %v6903, %v7035
    %v7146 = vadd.f32 %v6904, %v7037
    %v7147 = vadd.f32 %v6905, %v7040
    %v7148 = vadd.f32 %v6906, %v7042
    %v7149 = vadd.f32 %v6907, %v7045
    %v7150 = vadd.f32 %v6908, %v7047
    %v7151 = vadd.f32 %v6909, %v7050
    %v7152 = vadd.f32 %v6910, %v7052
    %v7153 = vadd.f32 %v6911, %v7055
    %v7154 = vadd.f32 %v6912, %v7057
    %v7155 = vadd.f32 %v6913, %v7060
    %v7156 = vadd.f32 %v6914, %v7062
    %v7157 = vadd.f32 %v6915, %v7065
    %v7158 = vadd.f32 %v6916, %v7067
    %v7159 = vadd.f32 %v6917, %v7070
    %v7160 = vadd.f32 %v6918, %v7072
    %v7161 = vadd.f32 %v6919, %v7075
    %v7162 = vadd.f32 %v6920, %v7077
    %v7163 = vadd.f32 %v6921, %v7080
    %v7164 = vadd.f32 %v6922, %v7082
    %v7165 = vadd.f32 %v6923, %v7085
    %v7166 = vadd.f32 %v6924, %v7087
    %v7167 = vadd.f32 %v6925, %v7090
    %v7168 = vadd.f32 %v6926, %v7092
    %v7169 = vadd.f32 %v6927, %v7095
    %v7170 = vadd.f32 %v6928, %v7097
    %v7171 = vadd.f32 %v6929, %v7100
    %v7172 = vadd.f32 %v6930, %v7102
    %v7173 = vadd.f32 %v6931, %v7105
    %v7174 = vadd.f32 %v6932, %v7107
    %v7175 = vadd.f32 %v6933, %v7110
    %v7176 = vadd.f32 %v6934, %v7112
    %s7177 = sld [smem:[#allocation8 + $0x103]]
    %v7178 = vstv %s7177
    %v7179 = vmul.f32 %v7178, %v238
    %v7180 = vmul.f32 %v7178, %v141
    %v7181 = vmul.f32 %v7178, %v239
    %v7182 = vmul.f32 %v7178, %v144
    %v7183 = vmul.f32 %v7178, %v240
    %v7184 = vmul.f32 %v7178, %v147
    %v7185 = vmul.f32 %v7178, %v241
    %v7186 = vmul.f32 %v7178, %v150
    %v7187 = vmul.f32 %v7178, %v242
    %v7188 = vmul.f32 %v7178, %v153
    %v7189 = vmul.f32 %v7178, %v243
    %v7190 = vmul.f32 %v7178, %v156
    %v7191 = vmul.f32 %v7178, %v244
    %v7192 = vmul.f32 %v7178, %v159
    %v7193 = vmul.f32 %v7178, %v245
    %v7194 = vmul.f32 %v7178, %v162
    %v7195 = vmul.f32 %v7178, %v246
    %v7196 = vmul.f32 %v7178, %v165
    %v7197 = vmul.f32 %v7178, %v247
    %v7198 = vmul.f32 %v7178, %v168
    %v7199 = vmul.f32 %v7178, %v248
    %v7200 = vmul.f32 %v7178, %v171
    %v7201 = vmul.f32 %v7178, %v249
    %v7202 = vmul.f32 %v7178, %v174
    %v7203 = vmul.f32 %v7178, %v250
    %v7204 = vmul.f32 %v7178, %v177
    %v7205 = vmul.f32 %v7178, %v251
    %v7206 = vmul.f32 %v7178, %v180
    %v7207 = vmul.f32 %v7178, %v252
    %v7208 = vmul.f32 %v7178, %v183
    %v7209 = vmul.f32 %v7178, %v253
    %v7210 = vmul.f32 %v7178, %v186
    %v7211 = vadd.f32 %v7145, %v7179
    %v7212 = vadd.f32 %v7146, %v7180
    %v7213 = vadd.f32 %v7147, %v7181
    %v7214 = vadd.f32 %v7148, %v7182
    %v7215 = vadd.f32 %v7149, %v7183
    %v7216 = vadd.f32 %v7150, %v7184
    %v7217 = vadd.f32 %v7151, %v7185
    %v7218 = vadd.f32 %v7152, %v7186
    %v7219 = vadd.f32 %v7153, %v7187
    %v7220 = vadd.f32 %v7154, %v7188
    %v7221 = vadd.f32 %v7155, %v7189
    %v7222 = vadd.f32 %v7156, %v7190
    %v7223 = vadd.f32 %v7157, %v7191
    %v7224 = vadd.f32 %v7158, %v7192
    %v7225 = vadd.f32 %v7159, %v7193
    %v7226 = vadd.f32 %v7160, %v7194
    %v7227 = vadd.f32 %v7161, %v7195
    %v7228 = vadd.f32 %v7162, %v7196
    %v7229 = vadd.f32 %v7163, %v7197
    %v7230 = vadd.f32 %v7164, %v7198
    %v7231 = vadd.f32 %v7165, %v7199
    %v7232 = vadd.f32 %v7166, %v7200
    %v7233 = vadd.f32 %v7167, %v7201
    %v7234 = vadd.f32 %v7168, %v7202
    %v7235 = vadd.f32 %v7169, %v7203
    %v7236 = vadd.f32 %v7170, %v7204
    %v7237 = vadd.f32 %v7171, %v7205
    %v7238 = vadd.f32 %v7172, %v7206
    %v7239 = vadd.f32 %v7173, %v7207
    %v7240 = vadd.f32 %v7174, %v7208
    %v7241 = vadd.f32 %v7175, %v7209
    %v7242 = vadd.f32 %v7176, %v7210
    %s7243 = sld [smem:[#allocation8 + $0x105]]
    %v7244 = vstv %s7243
    %v7245 = vmul.f32 %v7244, %v238
    %v7246 = vmul.f32 %v7244, %v141
    %v7247 = vmul.f32 %v7244, %v255
    %v7248 = vmul.f32 %v7244, %v239
    %v7249 = vmul.f32 %v7244, %v144
    %v7250 = vmul.f32 %v7244, %v256
    %v7251 = vmul.f32 %v7244, %v240
    %v7252 = vmul.f32 %v7244, %v147
    %v7253 = vmul.f32 %v7244, %v257
    %v7254 = vmul.f32 %v7244, %v241
    %v7255 = vmul.f32 %v7244, %v150
    %v7256 = vmul.f32 %v7244, %v258
    %v7257 = vmul.f32 %v7244, %v242
    %v7258 = vmul.f32 %v7244, %v153
    %v7259 = vmul.f32 %v7244, %v259
    %v7260 = vmul.f32 %v7244, %v243
    %v7261 = vmul.f32 %v7244, %v156
    %v7262 = vmul.f32 %v7244, %v260
    %v7263 = vmul.f32 %v7244, %v244
    %v7264 = vmul.f32 %v7244, %v159
    %v7265 = vmul.f32 %v7244, %v261
    %v7266 = vmul.f32 %v7244, %v245
    %v7267 = vmul.f32 %v7244, %v162
    %v7268 = vmul.f32 %v7244, %v262
    %v7269 = vmul.f32 %v7244, %v246
    %v7270 = vmul.f32 %v7244, %v165
    %v7271 = vmul.f32 %v7244, %v263
    %v7272 = vmul.f32 %v7244, %v247
    %v7273 = vmul.f32 %v7244, %v168
    %v7274 = vmul.f32 %v7244, %v264
    %v7275 = vmul.f32 %v7244, %v248
    %v7276 = vmul.f32 %v7244, %v171
    %v7277 = vmul.f32 %v7244, %v265
    %v7278 = vmul.f32 %v7244, %v249
    %v7279 = vmul.f32 %v7244, %v174
    %v7280 = vmul.f32 %v7244, %v266
    %v7281 = vmul.f32 %v7244, %v250
    %v7282 = vmul.f32 %v7244, %v177
    %v7283 = vmul.f32 %v7244, %v267
    %v7284 = vmul.f32 %v7244, %v251
    %v7285 = vmul.f32 %v7244, %v180
    %v7286 = vmul.f32 %v7244, %v268
    %v7287 = vmul.f32 %v7244, %v252
    %v7288 = vmul.f32 %v7244, %v183
    %v7289 = vmul.f32 %v7244, %v269
    %v7290 = vmul.f32 %v7244, %v253
    %v7291 = vmul.f32 %v7244, %v186
    %v7292 = vmul.f32 %v7244, %v270
    %v7341 = vrot.slane %v7245, 2
    %v7342 = vrot.slane %v7246, 2
    %v7343 = vsel %vm746, %v7341, %v7342
    %v7344 = vrot.slane %v7247, 2
    %v7345 = vsel %vm746, %v7342, %v7344
    %v7346 = vrot.slane %v7248, 2
    %v7347 = vrot.slane %v7249, 2
    %v7348 = vsel %vm746, %v7346, %v7347
    %v7349 = vrot.slane %v7250, 2
    %v7350 = vsel %vm746, %v7347, %v7349
    %v7351 = vrot.slane %v7251, 2
    %v7352 = vrot.slane %v7252, 2
    %v7353 = vsel %vm746, %v7351, %v7352
    %v7354 = vrot.slane %v7253, 2
    %v7355 = vsel %vm746, %v7352, %v7354
    %v7356 = vrot.slane %v7254, 2
    %v7357 = vrot.slane %v7255, 2
    %v7358 = vsel %vm746, %v7356, %v7357
    %v7359 = vrot.slane %v7256, 2
    %v7360 = vsel %vm746, %v7357, %v7359
    %v7361 = vrot.slane %v7257, 2
    %v7362 = vrot.slane %v7258, 2
    %v7363 = vsel %vm746, %v7361, %v7362
    %v7364 = vrot.slane %v7259, 2
    %v7365 = vsel %vm746, %v7362, %v7364
    %v7366 = vrot.slane %v7260, 2
    %v7367 = vrot.slane %v7261, 2
    %v7368 = vsel %vm746, %v7366, %v7367
    %v7369 = vrot.slane %v7262, 2
    %v7370 = vsel %vm746, %v7367, %v7369
    %v7371 = vrot.slane %v7263, 2
    %v7372 = vrot.slane %v7264, 2
    %v7373 = vsel %vm746, %v7371, %v7372
    %v7374 = vrot.slane %v7265, 2
    %v7375 = vsel %vm746, %v7372, %v7374
    %v7376 = vrot.slane %v7266, 2
    %v7377 = vrot.slane %v7267, 2
    %v7378 = vsel %vm746, %v7376, %v7377
    %v7379 = vrot.slane %v7268, 2
    %v7380 = vsel %vm746, %v7377, %v7379
    %v7381 = vrot.slane %v7269, 2
    %v7382 = vrot.slane %v7270, 2
    %v7383 = vsel %vm746, %v7381, %v7382
    %v7384 = vrot.slane %v7271, 2
    %v7385 = vsel %vm746, %v7382, %v7384
    %v7386 = vrot.slane %v7272, 2
    %v7387 = vrot.slane %v7273, 2
    %v7388 = vsel %vm746, %v7386, %v7387
    %v7389 = vrot.slane %v7274, 2
    %v7390 = vsel %vm746, %v7387, %v7389
    %v7391 = vrot.slane %v7275, 2
    %v7392 = vrot.slane %v7276, 2
    %v7393 = vsel %vm746, %v7391, %v7392
    %v7394 = vrot.slane %v7277, 2
    %v7395 = vsel %vm746, %v7392, %v7394
    %v7396 = vrot.slane %v7278, 2
    %v7397 = vrot.slane %v7279, 2
    %v7398 = vsel %vm746, %v7396, %v7397
    %v7399 = vrot.slane %v7280, 2
    %v7400 = vsel %vm746, %v7397, %v7399
    %v7401 = vrot.slane %v7281, 2
    %v7402 = vrot.slane %v7282, 2
    %v7403 = vsel %vm746, %v7401, %v7402
    %v7404 = vrot.slane %v7283, 2
    %v7405 = vsel %vm746, %v7402, %v7404
    %v7406 = vrot.slane %v7284, 2
    %v7407 = vrot.slane %v7285, 2
    %v7408 = vsel %vm746, %v7406, %v7407
    %v7409 = vrot.slane %v7286, 2
    %v7410 = vsel %vm746, %v7407, %v7409
    %v7411 = vrot.slane %v7287, 2
    %v7412 = vrot.slane %v7288, 2
    %v7413 = vsel %vm746, %v7411, %v7412
    %v7414 = vrot.slane %v7289, 2
    %v7415 = vsel %vm746, %v7412, %v7414
    %v7416 = vrot.slane %v7290, 2
    %v7417 = vrot.slane %v7291, 2
    %v7418 = vsel %vm746, %v7416, %v7417
    %v7419 = vrot.slane %v7292, 2
    %v7420 = vsel %vm746, %v7417, %v7419
    %v7453 = vadd.f32 %v7211, %v7343
    %v7454 = vadd.f32 %v7212, %v7345
    %v7455 = vadd.f32 %v7213, %v7348
    %v7456 = vadd.f32 %v7214, %v7350
    %v7457 = vadd.f32 %v7215, %v7353
    %v7458 = vadd.f32 %v7216, %v7355
    %v7459 = vadd.f32 %v7217, %v7358
    %v7460 = vadd.f32 %v7218, %v7360
    %v7461 = vadd.f32 %v7219, %v7363
    %v7462 = vadd.f32 %v7220, %v7365
    %v7463 = vadd.f32 %v7221, %v7368
    %v7464 = vadd.f32 %v7222, %v7370
    %v7465 = vadd.f32 %v7223, %v7373
    %v7466 = vadd.f32 %v7224, %v7375
    %v7467 = vadd.f32 %v7225, %v7378
    %v7468 = vadd.f32 %v7226, %v7380
    %v7469 = vadd.f32 %v7227, %v7383
    %v7470 = vadd.f32 %v7228, %v7385
    %v7471 = vadd.f32 %v7229, %v7388
    %v7472 = vadd.f32 %v7230, %v7390
    %v7473 = vadd.f32 %v7231, %v7393
    %v7474 = vadd.f32 %v7232, %v7395
    %v7475 = vadd.f32 %v7233, %v7398
    %v7476 = vadd.f32 %v7234, %v7400
    %v7477 = vadd.f32 %v7235, %v7403
    %v7478 = vadd.f32 %v7236, %v7405
    %v7479 = vadd.f32 %v7237, %v7408
    %v7480 = vadd.f32 %v7238, %v7410
    %v7481 = vadd.f32 %v7239, %v7413
    %v7482 = vadd.f32 %v7240, %v7415
    %v7483 = vadd.f32 %v7241, %v7418
    %v7484 = vadd.f32 %v7242, %v7420
    %s7485 = sld [smem:[#allocation8 + $0x106]]
    %v7486 = vstv %s7485
    %v7487 = vmul.f32 %v7486, %v239
    %v7488 = vmul.f32 %v7486, %v144
    %v7489 = vmul.f32 %v7486, %v240
    %v7490 = vmul.f32 %v7486, %v147
    %v7491 = vmul.f32 %v7486, %v241
    %v7492 = vmul.f32 %v7486, %v150
    %v7493 = vmul.f32 %v7486, %v242
    %v7494 = vmul.f32 %v7486, %v153
    %v7495 = vmul.f32 %v7486, %v243
    %v7496 = vmul.f32 %v7486, %v156
    %v7497 = vmul.f32 %v7486, %v244
    %v7498 = vmul.f32 %v7486, %v159
    %v7499 = vmul.f32 %v7486, %v245
    %v7500 = vmul.f32 %v7486, %v162
    %v7501 = vmul.f32 %v7486, %v246
    %v7502 = vmul.f32 %v7486, %v165
    %v7503 = vmul.f32 %v7486, %v247
    %v7504 = vmul.f32 %v7486, %v168
    %v7505 = vmul.f32 %v7486, %v248
    %v7506 = vmul.f32 %v7486, %v171
    %v7507 = vmul.f32 %v7486, %v249
    %v7508 = vmul.f32 %v7486, %v174
    %v7509 = vmul.f32 %v7486, %v250
    %v7510 = vmul.f32 %v7486, %v177
    %v7511 = vmul.f32 %v7486, %v251
    %v7512 = vmul.f32 %v7486, %v180
    %v7513 = vmul.f32 %v7486, %v252
    %v7514 = vmul.f32 %v7486, %v183
    %v7515 = vmul.f32 %v7486, %v253
    %v7516 = vmul.f32 %v7486, %v186
    %v7517 = vmul.f32 %v7486, %v237
    %v7518 = vmul.f32 %v7486, %v138
    %v7519 = vadd.f32 %v7453, %v7487
    %v7520 = vadd.f32 %v7454, %v7488
    %v7521 = vadd.f32 %v7455, %v7489
    %v7522 = vadd.f32 %v7456, %v7490
    %v7523 = vadd.f32 %v7457, %v7491
    %v7524 = vadd.f32 %v7458, %v7492
    %v7525 = vadd.f32 %v7459, %v7493
    %v7526 = vadd.f32 %v7460, %v7494
    %v7527 = vadd.f32 %v7461, %v7495
    %v7528 = vadd.f32 %v7462, %v7496
    %v7529 = vadd.f32 %v7463, %v7497
    %v7530 = vadd.f32 %v7464, %v7498
    %v7531 = vadd.f32 %v7465, %v7499
    %v7532 = vadd.f32 %v7466, %v7500
    %v7533 = vadd.f32 %v7467, %v7501
    %v7534 = vadd.f32 %v7468, %v7502
    %v7535 = vadd.f32 %v7469, %v7503
    %v7536 = vadd.f32 %v7470, %v7504
    %v7537 = vadd.f32 %v7471, %v7505
    %v7538 = vadd.f32 %v7472, %v7506
    %v7539 = vadd.f32 %v7473, %v7507
    %v7540 = vadd.f32 %v7474, %v7508
    %v7541 = vadd.f32 %v7475, %v7509
    %v7542 = vadd.f32 %v7476, %v7510
    %v7543 = vadd.f32 %v7477, %v7511
    %v7544 = vadd.f32 %v7478, %v7512
    %v7545 = vadd.f32 %v7479, %v7513
    %v7546 = vadd.f32 %v7480, %v7514
    %v7547 = vadd.f32 %v7481, %v7515
    %v7548 = vadd.f32 %v7482, %v7516
    %v7549 = vadd.f32 %v7483, %v7517
    %v7550 = vadd.f32 %v7484, %v7518
    %s7551 = sld [smem:[#allocation8 + $0x107]]
    %v7552 = vstv %s7551
    %v7553 = vmul.f32 %v7552, %v239
    %v7554 = vmul.f32 %v7552, %v144
    %v7555 = vmul.f32 %v7552, %v256
    %v7556 = vmul.f32 %v7552, %v240
    %v7557 = vmul.f32 %v7552, %v147
    %v7558 = vmul.f32 %v7552, %v257
    %v7559 = vmul.f32 %v7552, %v241
    %v7560 = vmul.f32 %v7552, %v150
    %v7561 = vmul.f32 %v7552, %v258
    %v7562 = vmul.f32 %v7552, %v242
    %v7563 = vmul.f32 %v7552, %v153
    %v7564 = vmul.f32 %v7552, %v259
    %v7565 = vmul.f32 %v7552, %v243
    %v7566 = vmul.f32 %v7552, %v156
    %v7567 = vmul.f32 %v7552, %v260
    %v7568 = vmul.f32 %v7552, %v244
    %v7569 = vmul.f32 %v7552, %v159
    %v7570 = vmul.f32 %v7552, %v261
    %v7571 = vmul.f32 %v7552, %v245
    %v7572 = vmul.f32 %v7552, %v162
    %v7573 = vmul.f32 %v7552, %v262
    %v7574 = vmul.f32 %v7552, %v246
    %v7575 = vmul.f32 %v7552, %v165
    %v7576 = vmul.f32 %v7552, %v263
    %v7577 = vmul.f32 %v7552, %v247
    %v7578 = vmul.f32 %v7552, %v168
    %v7579 = vmul.f32 %v7552, %v264
    %v7580 = vmul.f32 %v7552, %v248
    %v7581 = vmul.f32 %v7552, %v171
    %v7582 = vmul.f32 %v7552, %v265
    %v7583 = vmul.f32 %v7552, %v249
    %v7584 = vmul.f32 %v7552, %v174
    %v7585 = vmul.f32 %v7552, %v266
    %v7586 = vmul.f32 %v7552, %v250
    %v7587 = vmul.f32 %v7552, %v177
    %v7588 = vmul.f32 %v7552, %v267
    %v7589 = vmul.f32 %v7552, %v251
    %v7590 = vmul.f32 %v7552, %v180
    %v7591 = vmul.f32 %v7552, %v268
    %v7592 = vmul.f32 %v7552, %v252
    %v7593 = vmul.f32 %v7552, %v183
    %v7594 = vmul.f32 %v7552, %v269
    %v7595 = vmul.f32 %v7552, %v253
    %v7596 = vmul.f32 %v7552, %v186
    %v7597 = vmul.f32 %v7552, %v270
    %v7598 = vmul.f32 %v7552, %v237
    %v7599 = vmul.f32 %v7552, %v138
    %v7600 = vmul.f32 %v7552, %v254
    %v7649 = vrot.slane %v7553, 1
    %v7650 = vrot.slane %v7554, 1
    %v7651 = vsel %vm503, %v7649, %v7650
    %v7652 = vrot.slane %v7555, 1
    %v7653 = vsel %vm503, %v7650, %v7652
    %v7654 = vrot.slane %v7556, 1
    %v7655 = vrot.slane %v7557, 1
    %v7656 = vsel %vm503, %v7654, %v7655
    %v7657 = vrot.slane %v7558, 1
    %v7658 = vsel %vm503, %v7655, %v7657
    %v7659 = vrot.slane %v7559, 1
    %v7660 = vrot.slane %v7560, 1
    %v7661 = vsel %vm503, %v7659, %v7660
    %v7662 = vrot.slane %v7561, 1
    %v7663 = vsel %vm503, %v7660, %v7662
    %v7664 = vrot.slane %v7562, 1
    %v7665 = vrot.slane %v7563, 1
    %v7666 = vsel %vm503, %v7664, %v7665
    %v7667 = vrot.slane %v7564, 1
    %v7668 = vsel %vm503, %v7665, %v7667
    %v7669 = vrot.slane %v7565, 1
    %v7670 = vrot.slane %v7566, 1
    %v7671 = vsel %vm503, %v7669, %v7670
    %v7672 = vrot.slane %v7567, 1
    %v7673 = vsel %vm503, %v7670, %v7672
    %v7674 = vrot.slane %v7568, 1
    %v7675 = vrot.slane %v7569, 1
    %v7676 = vsel %vm503, %v7674, %v7675
    %v7677 = vrot.slane %v7570, 1
    %v7678 = vsel %vm503, %v7675, %v7677
    %v7679 = vrot.slane %v7571, 1
    %v7680 = vrot.slane %v7572, 1
    %v7681 = vsel %vm503, %v7679, %v7680
    %v7682 = vrot.slane %v7573, 1
    %v7683 = vsel %vm503, %v7680, %v7682
    %v7684 = vrot.slane %v7574, 1
    %v7685 = vrot.slane %v7575, 1
    %v7686 = vsel %vm503, %v7684, %v7685
    %v7687 = vrot.slane %v7576, 1
    %v7688 = vsel %vm503, %v7685, %v7687
    %v7689 = vrot.slane %v7577, 1
    %v7690 = vrot.slane %v7578, 1
    %v7691 = vsel %vm503, %v7689, %v7690
    %v7692 = vrot.slane %v7579, 1
    %v7693 = vsel %vm503, %v7690, %v7692
    %v7694 = vrot.slane %v7580, 1
    %v7695 = vrot.slane %v7581, 1
    %v7696 = vsel %vm503, %v7694, %v7695
    %v7697 = vrot.slane %v7582, 1
    %v7698 = vsel %vm503, %v7695, %v7697
    %v7699 = vrot.slane %v7583, 1
    %v7700 = vrot.slane %v7584, 1
    %v7701 = vsel %vm503, %v7699, %v7700
    %v7702 = vrot.slane %v7585, 1
    %v7703 = vsel %vm503, %v7700, %v7702
    %v7704 = vrot.slane %v7586, 1
    %v7705 = vrot.slane %v7587, 1
    %v7706 = vsel %vm503, %v7704, %v7705
    %v7707 = vrot.slane %v7588, 1
    %v7708 = vsel %vm503, %v7705, %v7707
    %v7709 = vrot.slane %v7589, 1
    %v7710 = vrot.slane %v7590, 1
    %v7711 = vsel %vm503, %v7709, %v7710
    %v7712 = vrot.slane %v7591, 1
    %v7713 = vsel %vm503, %v7710, %v7712
    %v7714 = vrot.slane %v7592, 1
    %v7715 = vrot.slane %v7593, 1
    %v7716 = vsel %vm503, %v7714, %v7715
    %v7717 = vrot.slane %v7594, 1
    %v7718 = vsel %vm503, %v7715, %v7717
    %v7719 = vrot.slane %v7595, 1
    %v7720 = vrot.slane %v7596, 1
    %v7721 = vsel %vm503, %v7719, %v7720
    %v7722 = vrot.slane %v7597, 1
    %v7723 = vsel %vm503, %v7720, %v7722
    %v7724 = vrot.slane %v7598, 1
    %v7725 = vrot.slane %v7599, 1
    %v7726 = vsel %vm503, %v7724, %v7725
    %v7727 = vrot.slane %v7600, 1
    %v7728 = vsel %vm503, %v7725, %v7727
    %v7761 = vadd.f32 %v7519, %v7651
    %v7762 = vadd.f32 %v7520, %v7653
    %v7763 = vadd.f32 %v7521, %v7656
    %v7764 = vadd.f32 %v7522, %v7658
    %v7765 = vadd.f32 %v7523, %v7661
    %v7766 = vadd.f32 %v7524, %v7663
    %v7767 = vadd.f32 %v7525, %v7666
    %v7768 = vadd.f32 %v7526, %v7668
    %v7769 = vadd.f32 %v7527, %v7671
    %v7770 = vadd.f32 %v7528, %v7673
    %v7771 = vadd.f32 %v7529, %v7676
    %v7772 = vadd.f32 %v7530, %v7678
    %v7773 = vadd.f32 %v7531, %v7681
    %v7774 = vadd.f32 %v7532, %v7683
    %v7775 = vadd.f32 %v7533, %v7686
    %v7776 = vadd.f32 %v7534, %v7688
    %v7777 = vadd.f32 %v7535, %v7691
    %v7778 = vadd.f32 %v7536, %v7693
    %v7779 = vadd.f32 %v7537, %v7696
    %v7780 = vadd.f32 %v7538, %v7698
    %v7781 = vadd.f32 %v7539, %v7701
    %v7782 = vadd.f32 %v7540, %v7703
    %v7783 = vadd.f32 %v7541, %v7706
    %v7784 = vadd.f32 %v7542, %v7708
    %v7785 = vadd.f32 %v7543, %v7711
    %v7786 = vadd.f32 %v7544, %v7713
    %v7787 = vadd.f32 %v7545, %v7716
    %v7788 = vadd.f32 %v7546, %v7718
    %v7789 = vadd.f32 %v7547, %v7721
    %v7790 = vadd.f32 %v7548, %v7723
    %v7791 = vadd.f32 %v7549, %v7726
    %v7792 = vadd.f32 %v7550, %v7728
    %s7793 = sld [smem:[#allocation8 + $0x108]]
    %v7794 = vstv %s7793
    %v7795 = vmul.f32 %v7794, %v239
    %v7796 = vmul.f32 %v7794, %v144
    %v7797 = vmul.f32 %v7794, %v256
    %v7798 = vmul.f32 %v7794, %v240
    %v7799 = vmul.f32 %v7794, %v147
    %v7800 = vmul.f32 %v7794, %v257
    %v7801 = vmul.f32 %v7794, %v241
    %v7802 = vmul.f32 %v7794, %v150
    %v7803 = vmul.f32 %v7794, %v258
    %v7804 = vmul.f32 %v7794, %v242
    %v7805 = vmul.f32 %v7794, %v153
    %v7806 = vmul.f32 %v7794, %v259
    %v7807 = vmul.f32 %v7794, %v243
    %v7808 = vmul.f32 %v7794, %v156
    %v7809 = vmul.f32 %v7794, %v260
    %v7810 = vmul.f32 %v7794, %v244
    %v7811 = vmul.f32 %v7794, %v159
    %v7812 = vmul.f32 %v7794, %v261
    %v7813 = vmul.f32 %v7794, %v245
    %v7814 = vmul.f32 %v7794, %v162
    %v7815 = vmul.f32 %v7794, %v262
    %v7816 = vmul.f32 %v7794, %v246
    %v7817 = vmul.f32 %v7794, %v165
    %v7818 = vmul.f32 %v7794, %v263
    %v7819 = vmul.f32 %v7794, %v247
    %v7820 = vmul.f32 %v7794, %v168
    %v7821 = vmul.f32 %v7794, %v264
    %v7822 = vmul.f32 %v7794, %v248
    %v7823 = vmul.f32 %v7794, %v171
    %v7824 = vmul.f32 %v7794, %v265
    %v7825 = vmul.f32 %v7794, %v249
    %v7826 = vmul.f32 %v7794, %v174
    %v7827 = vmul.f32 %v7794, %v266
    %v7828 = vmul.f32 %v7794, %v250
    %v7829 = vmul.f32 %v7794, %v177
    %v7830 = vmul.f32 %v7794, %v267
    %v7831 = vmul.f32 %v7794, %v251
    %v7832 = vmul.f32 %v7794, %v180
    %v7833 = vmul.f32 %v7794, %v268
    %v7834 = vmul.f32 %v7794, %v252
    %v7835 = vmul.f32 %v7794, %v183
    %v7836 = vmul.f32 %v7794, %v269
    %v7837 = vmul.f32 %v7794, %v253
    %v7838 = vmul.f32 %v7794, %v186
    %v7839 = vmul.f32 %v7794, %v270
    %v7840 = vmul.f32 %v7794, %v237
    %v7841 = vmul.f32 %v7794, %v138
    %v7842 = vmul.f32 %v7794, %v254
    %v7891 = vrot.slane %v7795, 2
    %v7892 = vrot.slane %v7796, 2
    %v7893 = vsel %vm746, %v7891, %v7892
    %v7894 = vrot.slane %v7797, 2
    %v7895 = vsel %vm746, %v7892, %v7894
    %v7896 = vrot.slane %v7798, 2
    %v7897 = vrot.slane %v7799, 2
    %v7898 = vsel %vm746, %v7896, %v7897
    %v7899 = vrot.slane %v7800, 2
    %v7900 = vsel %vm746, %v7897, %v7899
    %v7901 = vrot.slane %v7801, 2
    %v7902 = vrot.slane %v7802, 2
    %v7903 = vsel %vm746, %v7901, %v7902
    %v7904 = vrot.slane %v7803, 2
    %v7905 = vsel %vm746, %v7902, %v7904
    %v7906 = vrot.slane %v7804, 2
    %v7907 = vrot.slane %v7805, 2
    %v7908 = vsel %vm746, %v7906, %v7907
    %v7909 = vrot.slane %v7806, 2
    %v7910 = vsel %vm746, %v7907, %v7909
    %v7911 = vrot.slane %v7807, 2
    %v7912 = vrot.slane %v7808, 2
    %v7913 = vsel %vm746, %v7911, %v7912
    %v7914 = vrot.slane %v7809, 2
    %v7915 = vsel %vm746, %v7912, %v7914
    %v7916 = vrot.slane %v7810, 2
    %v7917 = vrot.slane %v7811, 2
    %v7918 = vsel %vm746, %v7916, %v7917
    %v7919 = vrot.slane %v7812, 2
    %v7920 = vsel %vm746, %v7917, %v7919
    %v7921 = vrot.slane %v7813, 2
    %v7922 = vrot.slane %v7814, 2
    %v7923 = vsel %vm746, %v7921, %v7922
    %v7924 = vrot.slane %v7815, 2
    %v7925 = vsel %vm746, %v7922, %v7924
    %v7926 = vrot.slane %v7816, 2
    %v7927 = vrot.slane %v7817, 2
    %v7928 = vsel %vm746, %v7926, %v7927
    %v7929 = vrot.slane %v7818, 2
    %v7930 = vsel %vm746, %v7927, %v7929
    %v7931 = vrot.slane %v7819, 2
    %v7932 = vrot.slane %v7820, 2
    %v7933 = vsel %vm746, %v7931, %v7932
    %v7934 = vrot.slane %v7821, 2
    %v7935 = vsel %vm746, %v7932, %v7934
    %v7936 = vrot.slane %v7822, 2
    %v7937 = vrot.slane %v7823, 2
    %v7938 = vsel %vm746, %v7936, %v7937
    %v7939 = vrot.slane %v7824, 2
    %v7940 = vsel %vm746, %v7937, %v7939
    %v7941 = vrot.slane %v7825, 2
    %v7942 = vrot.slane %v7826, 2
    %v7943 = vsel %vm746, %v7941, %v7942
    %v7944 = vrot.slane %v7827, 2
    %v7945 = vsel %vm746, %v7942, %v7944
    %v7946 = vrot.slane %v7828, 2
    %v7947 = vrot.slane %v7829, 2
    %v7948 = vsel %vm746, %v7946, %v7947
    %v7949 = vrot.slane %v7830, 2
    %v7950 = vsel %vm746, %v7947, %v7949
    %v7951 = vrot.slane %v7831, 2
    %v7952 = vrot.slane %v7832, 2
    %v7953 = vsel %vm746, %v7951, %v7952
    %v7954 = vrot.slane %v7833, 2
    %v7955 = vsel %vm746, %v7952, %v7954
    %v7956 = vrot.slane %v7834, 2
    %v7957 = vrot.slane %v7835, 2
    %v7958 = vsel %vm746, %v7956, %v7957
    %v7959 = vrot.slane %v7836, 2
    %v7960 = vsel %vm746, %v7957, %v7959
    %v7961 = vrot.slane %v7837, 2
    %v7962 = vrot.slane %v7838, 2
    %v7963 = vsel %vm746, %v7961, %v7962
    %v7964 = vrot.slane %v7839, 2
    %v7965 = vsel %vm746, %v7962, %v7964
    %v7966 = vrot.slane %v7840, 2
    %v7967 = vrot.slane %v7841, 2
    %v7968 = vsel %vm746, %v7966, %v7967
    %v7969 = vrot.slane %v7842, 2
    %v7970 = vsel %vm746, %v7967, %v7969
    %v8003 = vadd.f32 %v7761, %v7893
    %v8004 = vadd.f32 %v7762, %v7895
    %v8005 = vadd.f32 %v7763, %v7898
    %v8006 = vadd.f32 %v7764, %v7900
    %v8007 = vadd.f32 %v7765, %v7903
    %v8008 = vadd.f32 %v7766, %v7905
    %v8009 = vadd.f32 %v7767, %v7908
    %v8010 = vadd.f32 %v7768, %v7910
    %v8011 = vadd.f32 %v7769, %v7913
    %v8012 = vadd.f32 %v7770, %v7915
    %v8013 = vadd.f32 %v7771, %v7918
    %v8014 = vadd.f32 %v7772, %v7920
    %v8015 = vadd.f32 %v7773, %v7923
    %v8016 = vadd.f32 %v7774, %v7925
    %v8017 = vadd.f32 %v7775, %v7928
    %v8018 = vadd.f32 %v7776, %v7930
    %v8019 = vadd.f32 %v7777, %v7933
    %v8020 = vadd.f32 %v7778, %v7935
    %v8021 = vadd.f32 %v7779, %v7938
    %v8022 = vadd.f32 %v7780, %v7940
    %v8023 = vadd.f32 %v7781, %v7943
    %v8024 = vadd.f32 %v7782, %v7945
    %v8025 = vadd.f32 %v7783, %v7948
    %v8026 = vadd.f32 %v7784, %v7950
    %v8027 = vadd.f32 %v7785, %v7953
    %v8028 = vadd.f32 %v7786, %v7955
    %v8029 = vadd.f32 %v7787, %v7958
    %v8030 = vadd.f32 %v7788, %v7960
    %v8031 = vadd.f32 %v7789, %v7963
    %v8032 = vadd.f32 %v7790, %v7965
    %v8033 = vadd.f32 %v7791, %v7968
    %v8034 = vadd.f32 %v7792, %v7970
    %v8035 = vmax.f32 %v8003, 0.0
    %v8036 = vmax.f32 %v8004, 0.0
    %v8037 = vmax.f32 %v8005, 0.0
    %v8038 = vmax.f32 %v8006, 0.0
    %v8039 = vmax.f32 %v8007, 0.0
    %v8040 = vmax.f32 %v8008, 0.0
    %v8041 = vmax.f32 %v8009, 0.0
    %v8042 = vmax.f32 %v8010, 0.0
    %v8043 = vmax.f32 %v8011, 0.0
    %v8044 = vmax.f32 %v8012, 0.0
    %v8045 = vmax.f32 %v8013, 0.0
    %v8046 = vmax.f32 %v8014, 0.0
    %v8047 = vmax.f32 %v8015, 0.0
    %v8048 = vmax.f32 %v8016, 0.0
    %v8049 = vmax.f32 %v8017, 0.0
    %v8050 = vmax.f32 %v8018, 0.0
    %v8051 = vmax.f32 %v8019, 0.0
    %v8052 = vmax.f32 %v8020, 0.0
    %v8053 = vmax.f32 %v8021, 0.0
    %v8054 = vmax.f32 %v8022, 0.0
    %v8055 = vmax.f32 %v8023, 0.0
    %v8056 = vmax.f32 %v8024, 0.0
    %v8057 = vmax.f32 %v8025, 0.0
    %v8058 = vmax.f32 %v8026, 0.0
    %v8059 = vmax.f32 %v8027, 0.0
    %v8060 = vmax.f32 %v8028, 0.0
    %v8061 = vmax.f32 %v8029, 0.0
    %v8062 = vmax.f32 %v8030, 0.0
    %v8063 = vmax.f32 %v8031, 0.0
    %v8064 = vmax.f32 %v8032, 0.0
    %v8065 = vmax.f32 %v8033, 0.0
    %v8066 = vmax.f32 %v8034, 0.0
    %s8067 = sld [smem:[#allocation10 + $0x104]]
    %v8068 = vstv %s8067
    %v8069 = vmul.f32 %v8068, %v8035
    %v8070 = vmul.f32 %v8068, %v8036
    %v8071 = vmul.f32 %v8068, %v8037
    %v8072 = vmul.f32 %v8068, %v8038
    %v8073 = vmul.f32 %v8068, %v8039
    %v8074 = vmul.f32 %v8068, %v8040
    %v8075 = vmul.f32 %v8068, %v8041
    %v8076 = vmul.f32 %v8068, %v8042
    %v8077 = vmul.f32 %v8068, %v8043
    %v8078 = vmul.f32 %v8068, %v8044
    %v8079 = vmul.f32 %v8068, %v8045
    %v8080 = vmul.f32 %v8068, %v8046
    %v8081 = vmul.f32 %v8068, %v8047
    %v8082 = vmul.f32 %v8068, %v8048
    %v8083 = vmul.f32 %v8068, %v8049
    %v8084 = vmul.f32 %v8068, %v8050
    %v8085 = vmul.f32 %v8068, %v8051
    %v8086 = vmul.f32 %v8068, %v8052
    %v8087 = vmul.f32 %v8068, %v8053
    %v8088 = vmul.f32 %v8068, %v8054
    %v8089 = vmul.f32 %v8068, %v8055
    %v8090 = vmul.f32 %v8068, %v8056
    %v8091 = vmul.f32 %v8068, %v8057
    %v8092 = vmul.f32 %v8068, %v8058
    %v8093 = vmul.f32 %v8068, %v8059
    %v8094 = vmul.f32 %v8068, %v8060
    %v8095 = vmul.f32 %v8068, %v8061
    %v8096 = vmul.f32 %v8068, %v8062
    %v8097 = vmul.f32 %v8068, %v8063
    %v8098 = vmul.f32 %v8068, %v8064
    %v8099 = vmul.f32 %v8068, %v8065
    %v8100 = vmul.f32 %v8068, %v8066
    %v8101 = vadd.f32 %v6527, %v8069
    %v8102 = vadd.f32 %v6528, %v8070
    %v8103 = vadd.f32 %v6529, %v8071
    %v8104 = vadd.f32 %v6530, %v8072
    %v8105 = vadd.f32 %v6531, %v8073
    %v8106 = vadd.f32 %v6532, %v8074
    %v8107 = vadd.f32 %v6533, %v8075
    %v8108 = vadd.f32 %v6534, %v8076
    %v8109 = vadd.f32 %v6535, %v8077
    %v8110 = vadd.f32 %v6536, %v8078
    %v8111 = vadd.f32 %v6537, %v8079
    %v8112 = vadd.f32 %v6538, %v8080
    %v8113 = vadd.f32 %v6539, %v8081
    %v8114 = vadd.f32 %v6540, %v8082
    %v8115 = vadd.f32 %v6541, %v8083
    %v8116 = vadd.f32 %v6542, %v8084
    %v8117 = vadd.f32 %v6543, %v8085
    %v8118 = vadd.f32 %v6544, %v8086
    %v8119 = vadd.f32 %v6545, %v8087
    %v8120 = vadd.f32 %v6546, %v8088
    %v8121 = vadd.f32 %v6547, %v8089
    %v8122 = vadd.f32 %v6548, %v8090
    %v8123 = vadd.f32 %v6549, %v8091
    %v8124 = vadd.f32 %v6550, %v8092
    %v8125 = vadd.f32 %v6551, %v8093
    %v8126 = vadd.f32 %v6552, %v8094
    %v8127 = vadd.f32 %v6553, %v8095
    %v8128 = vadd.f32 %v6554, %v8096
    %v8129 = vadd.f32 %v6555, %v8097
    %v8130 = vadd.f32 %v6556, %v8098
    %v8131 = vadd.f32 %v6557, %v8099
    %v8132 = vadd.f32 %v6558, %v8100
    %v8165 = vrot.slane %v8035, 7
    %v8166 = vrot.slane %v8036, 7
    %v8167 = vsel %vm136, %v8165, %v8166
    %v8168 = vrot.slane %v8037, 7
    %v8169 = vrot.slane %v8038, 7
    %v8170 = vsel %vm136, %v8168, %v8169
    %v8171 = vrot.slane %v8039, 7
    %v8172 = vrot.slane %v8040, 7
    %v8173 = vsel %vm136, %v8171, %v8172
    %v8174 = vrot.slane %v8041, 7
    %v8175 = vrot.slane %v8042, 7
    %v8176 = vsel %vm136, %v8174, %v8175
    %v8177 = vrot.slane %v8043, 7
    %v8178 = vrot.slane %v8044, 7
    %v8179 = vsel %vm136, %v8177, %v8178
    %v8180 = vrot.slane %v8045, 7
    %v8181 = vrot.slane %v8046, 7
    %v8182 = vsel %vm136, %v8180, %v8181
    %v8183 = vrot.slane %v8047, 7
    %v8184 = vrot.slane %v8048, 7
    %v8185 = vsel %vm136, %v8183, %v8184
    %v8186 = vrot.slane %v8049, 7
    %v8187 = vrot.slane %v8050, 7
    %v8188 = vsel %vm136, %v8186, %v8187
    %v8189 = vrot.slane %v8051, 7
    %v8190 = vrot.slane %v8052, 7
    %v8191 = vsel %vm136, %v8189, %v8190
    %v8192 = vrot.slane %v8053, 7
    %v8193 = vrot.slane %v8054, 7
    %v8194 = vsel %vm136, %v8192, %v8193
    %v8195 = vrot.slane %v8055, 7
    %v8196 = vrot.slane %v8056, 7
    %v8197 = vsel %vm136, %v8195, %v8196
    %v8198 = vrot.slane %v8057, 7
    %v8199 = vrot.slane %v8058, 7
    %v8200 = vsel %vm136, %v8198, %v8199
    %v8201 = vrot.slane %v8059, 7
    %v8202 = vrot.slane %v8060, 7
    %v8203 = vsel %vm136, %v8201, %v8202
    %v8204 = vrot.slane %v8061, 7
    %v8205 = vrot.slane %v8062, 7
    %v8206 = vsel %vm136, %v8204, %v8205
    %v8207 = vrot.slane %v8063, 7
    %v8208 = vrot.slane %v8064, 7
    %v8209 = vsel %vm136, %v8207, %v8208
    %v8210 = vrot.slane %v8065, 7
    %v8211 = vrot.slane %v8066, 7
    %v8212 = vsel %vm136, %v8210, %v8211
    %v8261 = vsel %vm136, 0.0, %v8165
    %v8262 = vsel %vm136, 0.0, %v8168
    %v8263 = vsel %vm136, 0.0, %v8171
    %v8264 = vsel %vm136, 0.0, %v8174
    %v8265 = vsel %vm136, 0.0, %v8177
    %v8266 = vsel %vm136, 0.0, %v8180
    %v8267 = vsel %vm136, 0.0, %v8183
    %v8268 = vsel %vm136, 0.0, %v8186
    %v8269 = vsel %vm136, 0.0, %v8189
    %v8270 = vsel %vm136, 0.0, %v8192
    %v8271 = vsel %vm136, 0.0, %v8195
    %v8272 = vsel %vm136, 0.0, %v8198
    %v8273 = vsel %vm136, 0.0, %v8201
    %v8274 = vsel %vm136, 0.0, %v8204
    %v8275 = vsel %vm136, 0.0, %v8207
    %v8276 = vsel %vm136, 0.0, %v8210
    %v8277 = vsel %vm136, %v8166, 0.0
    %v8278 = vsel %vm136, %v8169, 0.0
    %v8279 = vsel %vm136, %v8172, 0.0
    %v8280 = vsel %vm136, %v8175, 0.0
    %v8281 = vsel %vm136, %v8178, 0.0
    %v8282 = vsel %vm136, %v8181, 0.0
    %v8283 = vsel %vm136, %v8184, 0.0
    %v8284 = vsel %vm136, %v8187, 0.0
    %v8285 = vsel %vm136, %v8190, 0.0
    %v8286 = vsel %vm136, %v8193, 0.0
    %v8287 = vsel %vm136, %v8196, 0.0
    %v8288 = vsel %vm136, %v8199, 0.0
    %v8289 = vsel %vm136, %v8202, 0.0
    %v8290 = vsel %vm136, %v8205, 0.0
    %v8291 = vsel %vm136, %v8208, 0.0
    %v8292 = vsel %vm136, %v8211, 0.0
    %s8293 = sld [smem:[#allocation10 + $0x100]]
    %v8294 = vstv %s8293
    %v8295 = vmul.f32 %v8294, %v237
    %v8296 = vmul.f32 %v8294, %v138
    %v8297 = vmul.f32 %v8294, %v8261
    %v8298 = vmul.f32 %v8294, %v8167
    %v8299 = vmul.f32 %v8294, %v8262
    %v8300 = vmul.f32 %v8294, %v8170
    %v8301 = vmul.f32 %v8294, %v8263
    %v8302 = vmul.f32 %v8294, %v8173
    %v8303 = vmul.f32 %v8294, %v8264
    %v8304 = vmul.f32 %v8294, %v8176
    %v8305 = vmul.f32 %v8294, %v8265
    %v8306 = vmul.f32 %v8294, %v8179
    %v8307 = vmul.f32 %v8294, %v8266
    %v8308 = vmul.f32 %v8294, %v8182
    %v8309 = vmul.f32 %v8294, %v8267
    %v8310 = vmul.f32 %v8294, %v8185
    %v8311 = vmul.f32 %v8294, %v8268
    %v8312 = vmul.f32 %v8294, %v8188
    %v8313 = vmul.f32 %v8294, %v8269
    %v8314 = vmul.f32 %v8294, %v8191
    %v8315 = vmul.f32 %v8294, %v8270
    %v8316 = vmul.f32 %v8294, %v8194
    %v8317 = vmul.f32 %v8294, %v8271
    %v8318 = vmul.f32 %v8294, %v8197
    %v8319 = vmul.f32 %v8294, %v8272
    %v8320 = vmul.f32 %v8294, %v8200
    %v8321 = vmul.f32 %v8294, %v8273
    %v8322 = vmul.f32 %v8294, %v8203
    %v8323 = vmul.f32 %v8294, %v8274
    %v8324 = vmul.f32 %v8294, %v8206
    %v8325 = vmul.f32 %v8294, %v8275
    %v8326 = vmul.f32 %v8294, %v8209
    %v8327 = vadd.f32 %v8101, %v8295
    %v8328 = vadd.f32 %v8102, %v8296
    %v8329 = vadd.f32 %v8103, %v8297
    %v8330 = vadd.f32 %v8104, %v8298
    %v8331 = vadd.f32 %v8105, %v8299
    %v8332 = vadd.f32 %v8106, %v8300
    %v8333 = vadd.f32 %v8107, %v8301
    %v8334 = vadd.f32 %v8108, %v8302
    %v8335 = vadd.f32 %v8109, %v8303
    %v8336 = vadd.f32 %v8110, %v8304
    %v8337 = vadd.f32 %v8111, %v8305
    %v8338 = vadd.f32 %v8112, %v8306
    %v8339 = vadd.f32 %v8113, %v8307
    %v8340 = vadd.f32 %v8114, %v8308
    %v8341 = vadd.f32 %v8115, %v8309
    %v8342 = vadd.f32 %v8116, %v8310
    %v8343 = vadd.f32 %v8117, %v8311
    %v8344 = vadd.f32 %v8118, %v8312
    %v8345 = vadd.f32 %v8119, %v8313
    %v8346 = vadd.f32 %v8120, %v8314
    %v8347 = vadd.f32 %v8121, %v8315
    %v8348 = vadd.f32 %v8122, %v8316
    %v8349 = vadd.f32 %v8123, %v8317
    %v8350 = vadd.f32 %v8124, %v8318
    %v8351 = vadd.f32 %v8125, %v8319
    %v8352 = vadd.f32 %v8126, %v8320
    %v8353 = vadd.f32 %v8127, %v8321
    %v8354 = vadd.f32 %v8128, %v8322
    %v8355 = vadd.f32 %v8129, %v8323
    %v8356 = vadd.f32 %v8130, %v8324
    %v8357 = vadd.f32 %v8131, %v8325
    %v8358 = vadd.f32 %v8132, %v8326
    %s8359 = sld [smem:[#allocation10 + $0x101]]
    %v8360 = vstv %s8359
    %v8361 = vmul.f32 %v8360, %v237
    %v8362 = vmul.f32 %v8360, %v138
    %v8363 = vmul.f32 %v8360, %v254
    %v8364 = vmul.f32 %v8360, %v8261
    %v8365 = vmul.f32 %v8360, %v8167
    %v8366 = vmul.f32 %v8360, %v8277
    %v8367 = vmul.f32 %v8360, %v8262
    %v8368 = vmul.f32 %v8360, %v8170
    %v8369 = vmul.f32 %v8360, %v8278
    %v8370 = vmul.f32 %v8360, %v8263
    %v8371 = vmul.f32 %v8360, %v8173
    %v8372 = vmul.f32 %v8360, %v8279
    %v8373 = vmul.f32 %v8360, %v8264
    %v8374 = vmul.f32 %v8360, %v8176
    %v8375 = vmul.f32 %v8360, %v8280
    %v8376 = vmul.f32 %v8360, %v8265
    %v8377 = vmul.f32 %v8360, %v8179
    %v8378 = vmul.f32 %v8360, %v8281
    %v8379 = vmul.f32 %v8360, %v8266
    %v8380 = vmul.f32 %v8360, %v8182
    %v8381 = vmul.f32 %v8360, %v8282
    %v8382 = vmul.f32 %v8360, %v8267
    %v8383 = vmul.f32 %v8360, %v8185
    %v8384 = vmul.f32 %v8360, %v8283
    %v8385 = vmul.f32 %v8360, %v8268
    %v8386 = vmul.f32 %v8360, %v8188
    %v8387 = vmul.f32 %v8360, %v8284
    %v8388 = vmul.f32 %v8360, %v8269
    %v8389 = vmul.f32 %v8360, %v8191
    %v8390 = vmul.f32 %v8360, %v8285
    %v8391 = vmul.f32 %v8360, %v8270
    %v8392 = vmul.f32 %v8360, %v8194
    %v8393 = vmul.f32 %v8360, %v8286
    %v8394 = vmul.f32 %v8360, %v8271
    %v8395 = vmul.f32 %v8360, %v8197
    %v8396 = vmul.f32 %v8360, %v8287
    %v8397 = vmul.f32 %v8360, %v8272
    %v8398 = vmul.f32 %v8360, %v8200
    %v8399 = vmul.f32 %v8360, %v8288
    %v8400 = vmul.f32 %v8360, %v8273
    %v8401 = vmul.f32 %v8360, %v8203
    %v8402 = vmul.f32 %v8360, %v8289
    %v8403 = vmul.f32 %v8360, %v8274
    %v8404 = vmul.f32 %v8360, %v8206
    %v8405 = vmul.f32 %v8360, %v8290
    %v8406 = vmul.f32 %v8360, %v8275
    %v8407 = vmul.f32 %v8360, %v8209
    %v8408 = vmul.f32 %v8360, %v8291
    %v8457 = vrot.slane %v8361, 1
    %v8458 = vrot.slane %v8362, 1
    %v8459 = vsel %vm503, %v8457, %v8458
    %v8460 = vrot.slane %v8363, 1
    %v8461 = vsel %vm503, %v8458, %v8460
    %v8462 = vrot.slane %v8364, 1
    %v8463 = vrot.slane %v8365, 1
    %v8464 = vsel %vm503, %v8462, %v8463
    %v8465 = vrot.slane %v8366, 1
    %v8466 = vsel %vm503, %v8463, %v8465
    %v8467 = vrot.slane %v8367, 1
    %v8468 = vrot.slane %v8368, 1
    %v8469 = vsel %vm503, %v8467, %v8468
    %v8470 = vrot.slane %v8369, 1
    %v8471 = vsel %vm503, %v8468, %v8470
    %v8472 = vrot.slane %v8370, 1
    %v8473 = vrot.slane %v8371, 1
    %v8474 = vsel %vm503, %v8472, %v8473
    %v8475 = vrot.slane %v8372, 1
    %v8476 = vsel %vm503, %v8473, %v8475
    %v8477 = vrot.slane %v8373, 1
    %v8478 = vrot.slane %v8374, 1
    %v8479 = vsel %vm503, %v8477, %v8478
    %v8480 = vrot.slane %v8375, 1
    %v8481 = vsel %vm503, %v8478, %v8480
    %v8482 = vrot.slane %v8376, 1
    %v8483 = vrot.slane %v8377, 1
    %v8484 = vsel %vm503, %v8482, %v8483
    %v8485 = vrot.slane %v8378, 1
    %v8486 = vsel %vm503, %v8483, %v8485
    %v8487 = vrot.slane %v8379, 1
    %v8488 = vrot.slane %v8380, 1
    %v8489 = vsel %vm503, %v8487, %v8488
    %v8490 = vrot.slane %v8381, 1
    %v8491 = vsel %vm503, %v8488, %v8490
    %v8492 = vrot.slane %v8382, 1
    %v8493 = vrot.slane %v8383, 1
    %v8494 = vsel %vm503, %v8492, %v8493
    %v8495 = vrot.slane %v8384, 1
    %v8496 = vsel %vm503, %v8493, %v8495
    %v8497 = vrot.slane %v8385, 1
    %v8498 = vrot.slane %v8386, 1
    %v8499 = vsel %vm503, %v8497, %v8498
    %v8500 = vrot.slane %v8387, 1
    %v8501 = vsel %vm503, %v8498, %v8500
    %v8502 = vrot.slane %v8388, 1
    %v8503 = vrot.slane %v8389, 1
    %v8504 = vsel %vm503, %v8502, %v8503
    %v8505 = vrot.slane %v8390, 1
    %v8506 = vsel %vm503, %v8503, %v8505
    %v8507 = vrot.slane %v8391, 1
    %v8508 = vrot.slane %v8392, 1
    %v8509 = vsel %vm503, %v8507, %v8508
    %v8510 = vrot.slane %v8393, 1
    %v8511 = vsel %vm503, %v8508, %v8510
    %v8512 = vrot.slane %v8394, 1
    %v8513 = vrot.slane %v8395, 1
    %v8514 = vsel %vm503, %v8512, %v8513
    %v8515 = vrot.slane %v8396, 1
    %v8516 = vsel %vm503, %v8513, %v8515
    %v8517 = vrot.slane %v8397, 1
    %v8518 = vrot.slane %v8398, 1
    %v8519 = vsel %vm503, %v8517, %v8518
    %v8520 = vrot.slane %v8399, 1
    %v8521 = vsel %vm503, %v8518, %v8520
    %v8522 = vrot.slane %v8400, 1
    %v8523 = vrot.slane %v8401, 1
    %v8524 = vsel %vm503, %v8522, %v8523
    %v8525 = vrot.slane %v8402, 1
    %v8526 = vsel %vm503, %v8523, %v8525
    %v8527 = vrot.slane %v8403, 1
    %v8528 = vrot.slane %v8404, 1
    %v8529 = vsel %vm503, %v8527, %v8528
    %v8530 = vrot.slane %v8405, 1
    %v8531 = vsel %vm503, %v8528, %v8530
    %v8532 = vrot.slane %v8406, 1
    %v8533 = vrot.slane %v8407, 1
    %v8534 = vsel %vm503, %v8532, %v8533
    %v8535 = vrot.slane %v8408, 1
    %v8536 = vsel %vm503, %v8533, %v8535
    %v8569 = vadd.f32 %v8327, %v8459
    %v8570 = vadd.f32 %v8328, %v8461
    %v8571 = vadd.f32 %v8329, %v8464
    %v8572 = vadd.f32 %v8330, %v8466
    %v8573 = vadd.f32 %v8331, %v8469
    %v8574 = vadd.f32 %v8332, %v8471
    %v8575 = vadd.f32 %v8333, %v8474
    %v8576 = vadd.f32 %v8334, %v8476
    %v8577 = vadd.f32 %v8335, %v8479
    %v8578 = vadd.f32 %v8336, %v8481
    %v8579 = vadd.f32 %v8337, %v8484
    %v8580 = vadd.f32 %v8338, %v8486
    %v8581 = vadd.f32 %v8339, %v8489
    %v8582 = vadd.f32 %v8340, %v8491
    %v8583 = vadd.f32 %v8341, %v8494
    %v8584 = vadd.f32 %v8342, %v8496
    %v8585 = vadd.f32 %v8343, %v8499
    %v8586 = vadd.f32 %v8344, %v8501
    %v8587 = vadd.f32 %v8345, %v8504
    %v8588 = vadd.f32 %v8346, %v8506
    %v8589 = vadd.f32 %v8347, %v8509
    %v8590 = vadd.f32 %v8348, %v8511
    %v8591 = vadd.f32 %v8349, %v8514
    %v8592 = vadd.f32 %v8350, %v8516
    %v8593 = vadd.f32 %v8351, %v8519
    %v8594 = vadd.f32 %v8352, %v8521
    %v8595 = vadd.f32 %v8353, %v8524
    %v8596 = vadd.f32 %v8354, %v8526
    %v8597 = vadd.f32 %v8355, %v8529
    %v8598 = vadd.f32 %v8356, %v8531
    %v8599 = vadd.f32 %v8357, %v8534
    %v8600 = vadd.f32 %v8358, %v8536
    %s8601 = sld [smem:[#allocation10 + $0x102]]
    %v8602 = vstv %s8601
    %v8603 = vmul.f32 %v8602, %v237
    %v8604 = vmul.f32 %v8602, %v138
    %v8605 = vmul.f32 %v8602, %v254
    %v8606 = vmul.f32 %v8602, %v8261
    %v8607 = vmul.f32 %v8602, %v8167
    %v8608 = vmul.f32 %v8602, %v8277
    %v8609 = vmul.f32 %v8602, %v8262
    %v8610 = vmul.f32 %v8602, %v8170
    %v8611 = vmul.f32 %v8602, %v8278
    %v8612 = vmul.f32 %v8602, %v8263
    %v8613 = vmul.f32 %v8602, %v8173
    %v8614 = vmul.f32 %v8602, %v8279
    %v8615 = vmul.f32 %v8602, %v8264
    %v8616 = vmul.f32 %v8602, %v8176
    %v8617 = vmul.f32 %v8602, %v8280
    %v8618 = vmul.f32 %v8602, %v8265
    %v8619 = vmul.f32 %v8602, %v8179
    %v8620 = vmul.f32 %v8602, %v8281
    %v8621 = vmul.f32 %v8602, %v8266
    %v8622 = vmul.f32 %v8602, %v8182
    %v8623 = vmul.f32 %v8602, %v8282
    %v8624 = vmul.f32 %v8602, %v8267
    %v8625 = vmul.f32 %v8602, %v8185
    %v8626 = vmul.f32 %v8602, %v8283
    %v8627 = vmul.f32 %v8602, %v8268
    %v8628 = vmul.f32 %v8602, %v8188
    %v8629 = vmul.f32 %v8602, %v8284
    %v8630 = vmul.f32 %v8602, %v8269
    %v8631 = vmul.f32 %v8602, %v8191
    %v8632 = vmul.f32 %v8602, %v8285
    %v8633 = vmul.f32 %v8602, %v8270
    %v8634 = vmul.f32 %v8602, %v8194
    %v8635 = vmul.f32 %v8602, %v8286
    %v8636 = vmul.f32 %v8602, %v8271
    %v8637 = vmul.f32 %v8602, %v8197
    %v8638 = vmul.f32 %v8602, %v8287
    %v8639 = vmul.f32 %v8602, %v8272
    %v8640 = vmul.f32 %v8602, %v8200
    %v8641 = vmul.f32 %v8602, %v8288
    %v8642 = vmul.f32 %v8602, %v8273
    %v8643 = vmul.f32 %v8602, %v8203
    %v8644 = vmul.f32 %v8602, %v8289
    %v8645 = vmul.f32 %v8602, %v8274
    %v8646 = vmul.f32 %v8602, %v8206
    %v8647 = vmul.f32 %v8602, %v8290
    %v8648 = vmul.f32 %v8602, %v8275
    %v8649 = vmul.f32 %v8602, %v8209
    %v8650 = vmul.f32 %v8602, %v8291
    %v8699 = vrot.slane %v8603, 2
    %v8700 = vrot.slane %v8604, 2
    %v8701 = vsel %vm746, %v8699, %v8700
    %v8702 = vrot.slane %v8605, 2
    %v8703 = vsel %vm746, %v8700, %v8702
    %v8704 = vrot.slane %v8606, 2
    %v8705 = vrot.slane %v8607, 2
    %v8706 = vsel %vm746, %v8704, %v8705
    %v8707 = vrot.slane %v8608, 2
    %v8708 = vsel %vm746, %v8705, %v8707
    %v8709 = vrot.slane %v8609, 2
    %v8710 = vrot.slane %v8610, 2
    %v8711 = vsel %vm746, %v8709, %v8710
    %v8712 = vrot.slane %v8611, 2
    %v8713 = vsel %vm746, %v8710, %v8712
    %v8714 = vrot.slane %v8612, 2
    %v8715 = vrot.slane %v8613, 2
    %v8716 = vsel %vm746, %v8714, %v8715
    %v8717 = vrot.slane %v8614, 2
    %v8718 = vsel %vm746, %v8715, %v8717
    %v8719 = vrot.slane %v8615, 2
    %v8720 = vrot.slane %v8616, 2
    %v8721 = vsel %vm746, %v8719, %v8720
    %v8722 = vrot.slane %v8617, 2
    %v8723 = vsel %vm746, %v8720, %v8722
    %v8724 = vrot.slane %v8618, 2
    %v8725 = vrot.slane %v8619, 2
    %v8726 = vsel %vm746, %v8724, %v8725
    %v8727 = vrot.slane %v8620, 2
    %v8728 = vsel %vm746, %v8725, %v8727
    %v8729 = vrot.slane %v8621, 2
    %v8730 = vrot.slane %v8622, 2
    %v8731 = vsel %vm746, %v8729, %v8730
    %v8732 = vrot.slane %v8623, 2
    %v8733 = vsel %vm746, %v8730, %v8732
    %v8734 = vrot.slane %v8624, 2
    %v8735 = vrot.slane %v8625, 2
    %v8736 = vsel %vm746, %v8734, %v8735
    %v8737 = vrot.slane %v8626, 2
    %v8738 = vsel %vm746, %v8735, %v8737
    %v8739 = vrot.slane %v8627, 2
    %v8740 = vrot.slane %v8628, 2
    %v8741 = vsel %vm746, %v8739, %v8740
    %v8742 = vrot.slane %v8629, 2
    %v8743 = vsel %vm746, %v8740, %v8742
    %v8744 = vrot.slane %v8630, 2
    %v8745 = vrot.slane %v8631, 2
    %v8746 = vsel %vm746, %v8744, %v8745
    %v8747 = vrot.slane %v8632, 2
    %v8748 = vsel %vm746, %v8745, %v8747
    %v8749 = vrot.slane %v8633, 2
    %v8750 = vrot.slane %v8634, 2
    %v8751 = vsel %vm746, %v8749, %v8750
    %v8752 = vrot.slane %v8635, 2
    %v8753 = vsel %vm746, %v8750, %v8752
    %v8754 = vrot.slane %v8636, 2
    %v8755 = vrot.slane %v8637, 2
    %v8756 = vsel %vm746, %v8754, %v8755
    %v8757 = vrot.slane %v8638, 2
    %v8758 = vsel %vm746, %v8755, %v8757
    %v8759 = vrot.slane %v8639, 2
    %v8760 = vrot.slane %v8640, 2
    %v8761 = vsel %vm746, %v8759, %v8760
    %v8762 = vrot.slane %v8641, 2
    %v8763 = vsel %vm746, %v8760, %v8762
    %v8764 = vrot.slane %v8642, 2
    %v8765 = vrot.slane %v8643, 2
    %v8766 = vsel %vm746, %v8764, %v8765
    %v8767 = vrot.slane %v8644, 2
    %v8768 = vsel %vm746, %v8765, %v8767
    %v8769 = vrot.slane %v8645, 2
    %v8770 = vrot.slane %v8646, 2
    %v8771 = vsel %vm746, %v8769, %v8770
    %v8772 = vrot.slane %v8647, 2
    %v8773 = vsel %vm746, %v8770, %v8772
    %v8774 = vrot.slane %v8648, 2
    %v8775 = vrot.slane %v8649, 2
    %v8776 = vsel %vm746, %v8774, %v8775
    %v8777 = vrot.slane %v8650, 2
    %v8778 = vsel %vm746, %v8775, %v8777
    %v8811 = vadd.f32 %v8569, %v8701
    %v8812 = vadd.f32 %v8570, %v8703
    %v8813 = vadd.f32 %v8571, %v8706
    %v8814 = vadd.f32 %v8572, %v8708
    %v8815 = vadd.f32 %v8573, %v8711
    %v8816 = vadd.f32 %v8574, %v8713
    %v8817 = vadd.f32 %v8575, %v8716
    %v8818 = vadd.f32 %v8576, %v8718
    %v8819 = vadd.f32 %v8577, %v8721
    %v8820 = vadd.f32 %v8578, %v8723
    %v8821 = vadd.f32 %v8579, %v8726
    %v8822 = vadd.f32 %v8580, %v8728
    %v8823 = vadd.f32 %v8581, %v8731
    %v8824 = vadd.f32 %v8582, %v8733
    %v8825 = vadd.f32 %v8583, %v8736
    %v8826 = vadd.f32 %v8584, %v8738
    %v8827 = vadd.f32 %v8585, %v8741
    %v8828 = vadd.f32 %v8586, %v8743
    %v8829 = vadd.f32 %v8587, %v8746
    %v8830 = vadd.f32 %v8588, %v8748
    %v8831 = vadd.f32 %v8589, %v8751
    %v8832 = vadd.f32 %v8590, %v8753
    %v8833 = vadd.f32 %v8591, %v8756
    %v8834 = vadd.f32 %v8592, %v8758
    %v8835 = vadd.f32 %v8593, %v8761
    %v8836 = vadd.f32 %v8594, %v8763
    %v8837 = vadd.f32 %v8595, %v8766
    %v8838 = vadd.f32 %v8596, %v8768
    %v8839 = vadd.f32 %v8597, %v8771
    %v8840 = vadd.f32 %v8598, %v8773
    %v8841 = vadd.f32 %v8599, %v8776
    %v8842 = vadd.f32 %v8600, %v8778
    %s8843 = sld [smem:[#allocation10 + $0x103]]
    %v8844 = vstv %s8843
    %v8845 = vmul.f32 %v8844, %v8261
    %v8846 = vmul.f32 %v8844, %v8167
    %v8847 = vmul.f32 %v8844, %v8262
    %v8848 = vmul.f32 %v8844, %v8170
    %v8849 = vmul.f32 %v8844, %v8263
    %v8850 = vmul.f32 %v8844, %v8173
    %v8851 = vmul.f32 %v8844, %v8264
    %v8852 = vmul.f32 %v8844, %v8176
    %v8853 = vmul.f32 %v8844, %v8265
    %v8854 = vmul.f32 %v8844, %v8179
    %v8855 = vmul.f32 %v8844, %v8266
    %v8856 = vmul.f32 %v8844, %v8182
    %v8857 = vmul.f32 %v8844, %v8267
    %v8858 = vmul.f32 %v8844, %v8185
    %v8859 = vmul.f32 %v8844, %v8268
    %v8860 = vmul.f32 %v8844, %v8188
    %v8861 = vmul.f32 %v8844, %v8269
    %v8862 = vmul.f32 %v8844, %v8191
    %v8863 = vmul.f32 %v8844, %v8270
    %v8864 = vmul.f32 %v8844, %v8194
    %v8865 = vmul.f32 %v8844, %v8271
    %v8866 = vmul.f32 %v8844, %v8197
    %v8867 = vmul.f32 %v8844, %v8272
    %v8868 = vmul.f32 %v8844, %v8200
    %v8869 = vmul.f32 %v8844, %v8273
    %v8870 = vmul.f32 %v8844, %v8203
    %v8871 = vmul.f32 %v8844, %v8274
    %v8872 = vmul.f32 %v8844, %v8206
    %v8873 = vmul.f32 %v8844, %v8275
    %v8874 = vmul.f32 %v8844, %v8209
    %v8875 = vmul.f32 %v8844, %v8276
    %v8876 = vmul.f32 %v8844, %v8212
    %v8877 = vadd.f32 %v8811, %v8845
    %v8878 = vadd.f32 %v8812, %v8846
    %v8879 = vadd.f32 %v8813, %v8847
    %v8880 = vadd.f32 %v8814, %v8848
    %v8881 = vadd.f32 %v8815, %v8849
    %v8882 = vadd.f32 %v8816, %v8850
    %v8883 = vadd.f32 %v8817, %v8851
    %v8884 = vadd.f32 %v8818, %v8852
    %v8885 = vadd.f32 %v8819, %v8853
    %v8886 = vadd.f32 %v8820, %v8854
    %v8887 = vadd.f32 %v8821, %v8855
    %v8888 = vadd.f32 %v8822, %v8856
    %v8889 = vadd.f32 %v8823, %v8857
    %v8890 = vadd.f32 %v8824, %v8858
    %v8891 = vadd.f32 %v8825, %v8859
    %v8892 = vadd.f32 %v8826, %v8860
    %v8893 = vadd.f32 %v8827, %v8861
    %v8894 = vadd.f32 %v8828, %v8862
    %v8895 = vadd.f32 %v8829, %v8863
    %v8896 = vadd.f32 %v8830, %v8864
    %v8897 = vadd.f32 %v8831, %v8865
    %v8898 = vadd.f32 %v8832, %v8866
    %v8899 = vadd.f32 %v8833, %v8867
    %v8900 = vadd.f32 %v8834, %v8868
    %v8901 = vadd.f32 %v8835, %v8869
    %v8902 = vadd.f32 %v8836, %v8870
    %v8903 = vadd.f32 %v8837, %v8871
    %v8904 = vadd.f32 %v8838, %v8872
    %v8905 = vadd.f32 %v8839, %v8873
    %v8906 = vadd.f32 %v8840, %v8874
    %v8907 = vadd.f32 %v8841, %v8875
    %v8908 = vadd.f32 %v8842, %v8876
    %s8909 = sld [smem:[#allocation10 + $0x105]]
    %v8910 = vstv %s8909
    %v8911 = vmul.f32 %v8910, %v8261
    %v8912 = vmul.f32 %v8910, %v8167
    %v8913 = vmul.f32 %v8910, %v8277
    %v8914 = vmul.f32 %v8910, %v8262
    %v8915 = vmul.f32 %v8910, %v8170
    %v8916 = vmul.f32 %v8910, %v8278
    %v8917 = vmul.f32 %v8910, %v8263
    %v8918 = vmul.f32 %v8910, %v8173
    %v8919 = vmul.f32 %v8910, %v8279
    %v8920 = vmul.f32 %v8910, %v8264
    %v8921 = vmul.f32 %v8910, %v8176
    %v8922 = vmul.f32 %v8910, %v8280
    %v8923 = vmul.f32 %v8910, %v8265
    %v8924 = vmul.f32 %v8910, %v8179
    %v8925 = vmul.f32 %v8910, %v8281
    %v8926 = vmul.f32 %v8910, %v8266
    %v8927 = vmul.f32 %v8910, %v8182
    %v8928 = vmul.f32 %v8910, %v8282
    %v8929 = vmul.f32 %v8910, %v8267
    %v8930 = vmul.f32 %v8910, %v8185
    %v8931 = vmul.f32 %v8910, %v8283
    %v8932 = vmul.f32 %v8910, %v8268
    %v8933 = vmul.f32 %v8910, %v8188
    %v8934 = vmul.f32 %v8910, %v8284
    %v8935 = vmul.f32 %v8910, %v8269
    %v8936 = vmul.f32 %v8910, %v8191
    %v8937 = vmul.f32 %v8910, %v8285
    %v8938 = vmul.f32 %v8910, %v8270
    %v8939 = vmul.f32 %v8910, %v8194
    %v8940 = vmul.f32 %v8910, %v8286
    %v8941 = vmul.f32 %v8910, %v8271
    %v8942 = vmul.f32 %v8910, %v8197
    %v8943 = vmul.f32 %v8910, %v8287
    %v8944 = vmul.f32 %v8910, %v8272
    %v8945 = vmul.f32 %v8910, %v8200
    %v8946 = vmul.f32 %v8910, %v8288
    %v8947 = vmul.f32 %v8910, %v8273
    %v8948 = vmul.f32 %v8910, %v8203
    %v8949 = vmul.f32 %v8910, %v8289
    %v8950 = vmul.f32 %v8910, %v8274
    %v8951 = vmul.f32 %v8910, %v8206
    %v8952 = vmul.f32 %v8910, %v8290
    %v8953 = vmul.f32 %v8910, %v8275
    %v8954 = vmul.f32 %v8910, %v8209
    %v8955 = vmul.f32 %v8910, %v8291
    %v8956 = vmul.f32 %v8910, %v8276
    %v8957 = vmul.f32 %v8910, %v8212
    %v8958 = vmul.f32 %v8910, %v8292
    %v9007 = vrot.slane %v8911, 2
    %v9008 = vrot.slane %v8912, 2
    %v9009 = vsel %vm746, %v9007, %v9008
    %v9010 = vrot.slane %v8913, 2
    %v9011 = vsel %vm746, %v9008, %v9010
    %v9012 = vrot.slane %v8914, 2
    %v9013 = vrot.slane %v8915, 2
    %v9014 = vsel %vm746, %v9012, %v9013
    %v9015 = vrot.slane %v8916, 2
    %v9016 = vsel %vm746, %v9013, %v9015
    %v9017 = vrot.slane %v8917, 2
    %v9018 = vrot.slane %v8918, 2
    %v9019 = vsel %vm746, %v9017, %v9018
    %v9020 = vrot.slane %v8919, 2
    %v9021 = vsel %vm746, %v9018, %v9020
    %v9022 = vrot.slane %v8920, 2
    %v9023 = vrot.slane %v8921, 2
    %v9024 = vsel %vm746, %v9022, %v9023
    %v9025 = vrot.slane %v8922, 2
    %v9026 = vsel %vm746, %v9023, %v9025
    %v9027 = vrot.slane %v8923, 2
    %v9028 = vrot.slane %v8924, 2
    %v9029 = vsel %vm746, %v9027, %v9028
    %v9030 = vrot.slane %v8925, 2
    %v9031 = vsel %vm746, %v9028, %v9030
    %v9032 = vrot.slane %v8926, 2
    %v9033 = vrot.slane %v8927, 2
    %v9034 = vsel %vm746, %v9032, %v9033
    %v9035 = vrot.slane %v8928, 2
    %v9036 = vsel %vm746, %v9033, %v9035
    %v9037 = vrot.slane %v8929, 2
    %v9038 = vrot.slane %v8930, 2
    %v9039 = vsel %vm746, %v9037, %v9038
    %v9040 = vrot.slane %v8931, 2
    %v9041 = vsel %vm746, %v9038, %v9040
    %v9042 = vrot.slane %v8932, 2
    %v9043 = vrot.slane %v8933, 2
    %v9044 = vsel %vm746, %v9042, %v9043
    %v9045 = vrot.slane %v8934, 2
    %v9046 = vsel %vm746, %v9043, %v9045
    %v9047 = vrot.slane %v8935, 2
    %v9048 = vrot.slane %v8936, 2
    %v9049 = vsel %vm746, %v9047, %v9048
    %v9050 = vrot.slane %v8937, 2
    %v9051 = vsel %vm746, %v9048, %v9050
    %v9052 = vrot.slane %v8938, 2
    %v9053 = vrot.slane %v8939, 2
    %v9054 = vsel %vm746, %v9052, %v9053
    %v9055 = vrot.slane %v8940, 2
    %v9056 = vsel %vm746, %v9053, %v9055
    %v9057 = vrot.slane %v8941, 2
    %v9058 = vrot.slane %v8942, 2
    %v9059 = vsel %vm746, %v9057, %v9058
    %v9060 = vrot.slane %v8943, 2
    %v9061 = vsel %vm746, %v9058, %v9060
    %v9062 = vrot.slane %v8944, 2
    %v9063 = vrot.slane %v8945, 2
    %v9064 = vsel %vm746, %v9062, %v9063
    %v9065 = vrot.slane %v8946, 2
    %v9066 = vsel %vm746, %v9063, %v9065
    %v9067 = vrot.slane %v8947, 2
    %v9068 = vrot.slane %v8948, 2
    %v9069 = vsel %vm746, %v9067, %v9068
    %v9070 = vrot.slane %v8949, 2
    %v9071 = vsel %vm746, %v9068, %v9070
    %v9072 = vrot.slane %v8950, 2
    %v9073 = vrot.slane %v8951, 2
    %v9074 = vsel %vm746, %v9072, %v9073
    %v9075 = vrot.slane %v8952, 2
    %v9076 = vsel %vm746, %v9073, %v9075
    %v9077 = vrot.slane %v8953, 2
    %v9078 = vrot.slane %v8954, 2
    %v9079 = vsel %vm746, %v9077, %v9078
    %v9080 = vrot.slane %v8955, 2
    %v9081 = vsel %vm746, %v9078, %v9080
    %v9082 = vrot.slane %v8956, 2
    %v9083 = vrot.slane %v8957, 2
    %v9084 = vsel %vm746, %v9082, %v9083
    %v9085 = vrot.slane %v8958, 2
    %v9086 = vsel %vm746, %v9083, %v9085
    %v9119 = vadd.f32 %v8877, %v9009
    %v9120 = vadd.f32 %v8878, %v9011
    %v9121 = vadd.f32 %v8879, %v9014
    %v9122 = vadd.f32 %v8880, %v9016
    %v9123 = vadd.f32 %v8881, %v9019
    %v9124 = vadd.f32 %v8882, %v9021
    %v9125 = vadd.f32 %v8883, %v9024
    %v9126 = vadd.f32 %v8884, %v9026
    %v9127 = vadd.f32 %v8885, %v9029
    %v9128 = vadd.f32 %v8886, %v9031
    %v9129 = vadd.f32 %v8887, %v9034
    %v9130 = vadd.f32 %v8888, %v9036
    %v9131 = vadd.f32 %v8889, %v9039
    %v9132 = vadd.f32 %v8890, %v9041
    %v9133 = vadd.f32 %v8891, %v9044
    %v9134 = vadd.f32 %v8892, %v9046
    %v9135 = vadd.f32 %v8893, %v9049
    %v9136 = vadd.f32 %v8894, %v9051
    %v9137 = vadd.f32 %v8895, %v9054
    %v9138 = vadd.f32 %v8896, %v9056
    %v9139 = vadd.f32 %v8897, %v9059
    %v9140 = vadd.f32 %v8898, %v9061
    %v9141 = vadd.f32 %v8899, %v9064
    %v9142 = vadd.f32 %v8900, %v9066
    %v9143 = vadd.f32 %v8901, %v9069
    %v9144 = vadd.f32 %v8902, %v9071
    %v9145 = vadd.f32 %v8903, %v9074
    %v9146 = vadd.f32 %v8904, %v9076
    %v9147 = vadd.f32 %v8905, %v9079
    %v9148 = vadd.f32 %v8906, %v9081
    %v9149 = vadd.f32 %v8907, %v9084
    %v9150 = vadd.f32 %v8908, %v9086
    %s9151 = sld [smem:[#allocation10 + $0x106]]
    %v9152 = vstv %s9151
    %v9153 = vmul.f32 %v9152, %v8262
    %v9154 = vmul.f32 %v9152, %v8170
    %v9155 = vmul.f32 %v9152, %v8263
    %v9156 = vmul.f32 %v9152, %v8173
    %v9157 = vmul.f32 %v9152, %v8264
    %v9158 = vmul.f32 %v9152, %v8176
    %v9159 = vmul.f32 %v9152, %v8265
    %v9160 = vmul.f32 %v9152, %v8179
    %v9161 = vmul.f32 %v9152, %v8266
    %v9162 = vmul.f32 %v9152, %v8182
    %v9163 = vmul.f32 %v9152, %v8267
    %v9164 = vmul.f32 %v9152, %v8185
    %v9165 = vmul.f32 %v9152, %v8268
    %v9166 = vmul.f32 %v9152, %v8188
    %v9167 = vmul.f32 %v9152, %v8269
    %v9168 = vmul.f32 %v9152, %v8191
    %v9169 = vmul.f32 %v9152, %v8270
    %v9170 = vmul.f32 %v9152, %v8194
    %v9171 = vmul.f32 %v9152, %v8271
    %v9172 = vmul.f32 %v9152, %v8197
    %v9173 = vmul.f32 %v9152, %v8272
    %v9174 = vmul.f32 %v9152, %v8200
    %v9175 = vmul.f32 %v9152, %v8273
    %v9176 = vmul.f32 %v9152, %v8203
    %v9177 = vmul.f32 %v9152, %v8274
    %v9178 = vmul.f32 %v9152, %v8206
    %v9179 = vmul.f32 %v9152, %v8275
    %v9180 = vmul.f32 %v9152, %v8209
    %v9181 = vmul.f32 %v9152, %v8276
    %v9182 = vmul.f32 %v9152, %v8212
    %v9183 = vmul.f32 %v9152, %v237
    %v9184 = vmul.f32 %v9152, %v138
    %v9185 = vadd.f32 %v9119, %v9153
    %v9186 = vadd.f32 %v9120, %v9154
    %v9187 = vadd.f32 %v9121, %v9155
    %v9188 = vadd.f32 %v9122, %v9156
    %v9189 = vadd.f32 %v9123, %v9157
    %v9190 = vadd.f32 %v9124, %v9158
    %v9191 = vadd.f32 %v9125, %v9159
    %v9192 = vadd.f32 %v9126, %v9160
    %v9193 = vadd.f32 %v9127, %v9161
    %v9194 = vadd.f32 %v9128, %v9162
    %v9195 = vadd.f32 %v9129, %v9163
    %v9196 = vadd.f32 %v9130, %v9164
    %v9197 = vadd.f32 %v9131, %v9165
    %v9198 = vadd.f32 %v9132, %v9166
    %v9199 = vadd.f32 %v9133, %v9167
    %v9200 = vadd.f32 %v9134, %v9168
    %v9201 = vadd.f32 %v9135, %v9169
    %v9202 = vadd.f32 %v9136, %v9170
    %v9203 = vadd.f32 %v9137, %v9171
    %v9204 = vadd.f32 %v9138, %v9172
    %v9205 = vadd.f32 %v9139, %v9173
    %v9206 = vadd.f32 %v9140, %v9174
    %v9207 = vadd.f32 %v9141, %v9175
    %v9208 = vadd.f32 %v9142, %v9176
    %v9209 = vadd.f32 %v9143, %v9177
    %v9210 = vadd.f32 %v9144, %v9178
    %v9211 = vadd.f32 %v9145, %v9179
    %v9212 = vadd.f32 %v9146, %v9180
    %v9213 = vadd.f32 %v9147, %v9181
    %v9214 = vadd.f32 %v9148, %v9182
    %v9215 = vadd.f32 %v9149, %v9183
    %v9216 = vadd.f32 %v9150, %v9184
    %s9217 = sld [smem:[#allocation10 + $0x107]]
    %v9218 = vstv %s9217
    %v9219 = vmul.f32 %v9218, %v8262
    %v9220 = vmul.f32 %v9218, %v8170
    %v9221 = vmul.f32 %v9218, %v8278
    %v9222 = vmul.f32 %v9218, %v8263
    %v9223 = vmul.f32 %v9218, %v8173
    %v9224 = vmul.f32 %v9218, %v8279
    %v9225 = vmul.f32 %v9218, %v8264
    %v9226 = vmul.f32 %v9218, %v8176
    %v9227 = vmul.f32 %v9218, %v8280
    %v9228 = vmul.f32 %v9218, %v8265
    %v9229 = vmul.f32 %v9218, %v8179
    %v9230 = vmul.f32 %v9218, %v8281
    %v9231 = vmul.f32 %v9218, %v8266
    %v9232 = vmul.f32 %v9218, %v8182
    %v9233 = vmul.f32 %v9218, %v8282
    %v9234 = vmul.f32 %v9218, %v8267
    %v9235 = vmul.f32 %v9218, %v8185
    %v9236 = vmul.f32 %v9218, %v8283
    %v9237 = vmul.f32 %v9218, %v8268
    %v9238 = vmul.f32 %v9218, %v8188
    %v9239 = vmul.f32 %v9218, %v8284
    %v9240 = vmul.f32 %v9218, %v8269
    %v9241 = vmul.f32 %v9218, %v8191
    %v9242 = vmul.f32 %v9218, %v8285
    %v9243 = vmul.f32 %v9218, %v8270
    %v9244 = vmul.f32 %v9218, %v8194
    %v9245 = vmul.f32 %v9218, %v8286
    %v9246 = vmul.f32 %v9218, %v8271
    %v9247 = vmul.f32 %v9218, %v8197
    %v9248 = vmul.f32 %v9218, %v8287
    %v9249 = vmul.f32 %v9218, %v8272
    %v9250 = vmul.f32 %v9218, %v8200
    %v9251 = vmul.f32 %v9218, %v8288
    %v9252 = vmul.f32 %v9218, %v8273
    %v9253 = vmul.f32 %v9218, %v8203
    %v9254 = vmul.f32 %v9218, %v8289
    %v9255 = vmul.f32 %v9218, %v8274
    %v9256 = vmul.f32 %v9218, %v8206
    %v9257 = vmul.f32 %v9218, %v8290
    %v9258 = vmul.f32 %v9218, %v8275
    %v9259 = vmul.f32 %v9218, %v8209
    %v9260 = vmul.f32 %v9218, %v8291
    %v9261 = vmul.f32 %v9218, %v8276
    %v9262 = vmul.f32 %v9218, %v8212
    %v9263 = vmul.f32 %v9218, %v8292
    %v9264 = vmul.f32 %v9218, %v237
    %v9265 = vmul.f32 %v9218, %v138
    %v9266 = vmul.f32 %v9218, %v254
    %v9315 = vrot.slane %v9219, 1
    %v9316 = vrot.slane %v9220, 1
    %v9317 = vsel %vm503, %v9315, %v9316
    %v9318 = vrot.slane %v9221, 1
    %v9319 = vsel %vm503, %v9316, %v9318
    %v9320 = vrot.slane %v9222, 1
    %v9321 = vrot.slane %v9223, 1
    %v9322 = vsel %vm503, %v9320, %v9321
    %v9323 = vrot.slane %v9224, 1
    %v9324 = vsel %vm503, %v9321, %v9323
    %v9325 = vrot.slane %v9225, 1
    %v9326 = vrot.slane %v9226, 1
    %v9327 = vsel %vm503, %v9325, %v9326
    %v9328 = vrot.slane %v9227, 1
    %v9329 = vsel %vm503, %v9326, %v9328
    %v9330 = vrot.slane %v9228, 1
    %v9331 = vrot.slane %v9229, 1
    %v9332 = vsel %vm503, %v9330, %v9331
    %v9333 = vrot.slane %v9230, 1
    %v9334 = vsel %vm503, %v9331, %v9333
    %v9335 = vrot.slane %v9231, 1
    %v9336 = vrot.slane %v9232, 1
    %v9337 = vsel %vm503, %v9335, %v9336
    %v9338 = vrot.slane %v9233, 1
    %v9339 = vsel %vm503, %v9336, %v9338
    %v9340 = vrot.slane %v9234, 1
    %v9341 = vrot.slane %v9235, 1
    %v9342 = vsel %vm503, %v9340, %v9341
    %v9343 = vrot.slane %v9236, 1
    %v9344 = vsel %vm503, %v9341, %v9343
    %v9345 = vrot.slane %v9237, 1
    %v9346 = vrot.slane %v9238, 1
    %v9347 = vsel %vm503, %v9345, %v9346
    %v9348 = vrot.slane %v9239, 1
    %v9349 = vsel %vm503, %v9346, %v9348
    %v9350 = vrot.slane %v9240, 1
    %v9351 = vrot.slane %v9241, 1
    %v9352 = vsel %vm503, %v9350, %v9351
    %v9353 = vrot.slane %v9242, 1
    %v9354 = vsel %vm503, %v9351, %v9353
    %v9355 = vrot.slane %v9243, 1
    %v9356 = vrot.slane %v9244, 1
    %v9357 = vsel %vm503, %v9355, %v9356
    %v9358 = vrot.slane %v9245, 1
    %v9359 = vsel %vm503, %v9356, %v9358
    %v9360 = vrot.slane %v9246, 1
    %v9361 = vrot.slane %v9247, 1
    %v9362 = vsel %vm503, %v9360, %v9361
    %v9363 = vrot.slane %v9248, 1
    %v9364 = vsel %vm503, %v9361, %v9363
    %v9365 = vrot.slane %v9249, 1
    %v9366 = vrot.slane %v9250, 1
    %v9367 = vsel %vm503, %v9365, %v9366
    %v9368 = vrot.slane %v9251, 1
    %v9369 = vsel %vm503, %v9366, %v9368
    %v9370 = vrot.slane %v9252, 1
    %v9371 = vrot.slane %v9253, 1
    %v9372 = vsel %vm503, %v9370, %v9371
    %v9373 = vrot.slane %v9254, 1
    %v9374 = vsel %vm503, %v9371, %v9373
    %v9375 = vrot.slane %v9255, 1
    %v9376 = vrot.slane %v9256, 1
    %v9377 = vsel %vm503, %v9375, %v9376
    %v9378 = vrot.slane %v9257, 1
    %v9379 = vsel %vm503, %v9376, %v9378
    %v9380 = vrot.slane %v9258, 1
    %v9381 = vrot.slane %v9259, 1
    %v9382 = vsel %vm503, %v9380, %v9381
    %v9383 = vrot.slane %v9260, 1
    %v9384 = vsel %vm503, %v9381, %v9383
    %v9385 = vrot.slane %v9261, 1
    %v9386 = vrot.slane %v9262, 1
    %v9387 = vsel %vm503, %v9385, %v9386
    %v9388 = vrot.slane %v9263, 1
    %v9389 = vsel %vm503, %v9386, %v9388
    %v9390 = vrot.slane %v9264, 1
    %v9391 = vrot.slane %v9265, 1
    %v9392 = vsel %vm503, %v9390, %v9391
    %v9393 = vrot.slane %v9266, 1
    %v9394 = vsel %vm503, %v9391, %v9393
    %v9427 = vadd.f32 %v9185, %v9317
    %v9428 = vadd.f32 %v9186, %v9319
    %v9429 = vadd.f32 %v9187, %v9322
    %v9430 = vadd.f32 %v9188, %v9324
    %v9431 = vadd.f32 %v9189, %v9327
    %v9432 = vadd.f32 %v9190, %v9329
    %v9433 = vadd.f32 %v9191, %v9332
    %v9434 = vadd.f32 %v9192, %v9334
    %v9435 = vadd.f32 %v9193, %v9337
    %v9436 = vadd.f32 %v9194, %v9339
    %v9437 = vadd.f32 %v9195, %v9342
    %v9438 = vadd.f32 %v9196, %v9344
    %v9439 = vadd.f32 %v9197, %v9347
    %v9440 = vadd.f32 %v9198, %v9349
    %v9441 = vadd.f32 %v9199, %v9352
    %v9442 = vadd.f32 %v9200, %v9354
    %v9443 = vadd.f32 %v9201, %v9357
    %v9444 = vadd.f32 %v9202, %v9359
    %v9445 = vadd.f32 %v9203, %v9362
    %v9446 = vadd.f32 %v9204, %v9364
    %v9447 = vadd.f32 %v9205, %v9367
    %v9448 = vadd.f32 %v9206, %v9369
    %v9449 = vadd.f32 %v9207, %v9372
    %v9450 = vadd.f32 %v9208, %v9374
    %v9451 = vadd.f32 %v9209, %v9377
    %v9452 = vadd.f32 %v9210, %v9379
    %v9453 = vadd.f32 %v9211, %v9382
    %v9454 = vadd.f32 %v9212, %v9384
    %v9455 = vadd.f32 %v9213, %v9387
    %v9456 = vadd.f32 %v9214, %v9389
    %v9457 = vadd.f32 %v9215, %v9392
    %v9458 = vadd.f32 %v9216, %v9394
    %s9459 = sld [smem:[#allocation10 + $0x108]]
    %v9460 = vstv %s9459
    %v9461 = vmul.f32 %v9460, %v8262
    %v9462 = vmul.f32 %v9460, %v8170
    %v9463 = vmul.f32 %v9460, %v8278
    %v9464 = vmul.f32 %v9460, %v8263
    %v9465 = vmul.f32 %v9460, %v8173
    %v9466 = vmul.f32 %v9460, %v8279
    %v9467 = vmul.f32 %v9460, %v8264
    %v9468 = vmul.f32 %v9460, %v8176
    %v9469 = vmul.f32 %v9460, %v8280
    %v9470 = vmul.f32 %v9460, %v8265
    %v9471 = vmul.f32 %v9460, %v8179
    %v9472 = vmul.f32 %v9460, %v8281
    %v9473 = vmul.f32 %v9460, %v8266
    %v9474 = vmul.f32 %v9460, %v8182
    %v9475 = vmul.f32 %v9460, %v8282
    %v9476 = vmul.f32 %v9460, %v8267
    %v9477 = vmul.f32 %v9460, %v8185
    %v9478 = vmul.f32 %v9460, %v8283
    %v9479 = vmul.f32 %v9460, %v8268
    %v9480 = vmul.f32 %v9460, %v8188
    %v9481 = vmul.f32 %v9460, %v8284
    %v9482 = vmul.f32 %v9460, %v8269
    %v9483 = vmul.f32 %v9460, %v8191
    %v9484 = vmul.f32 %v9460, %v8285
    %v9485 = vmul.f32 %v9460, %v8270
    %v9486 = vmul.f32 %v9460, %v8194
    %v9487 = vmul.f32 %v9460, %v8286
    %v9488 = vmul.f32 %v9460, %v8271
    %v9489 = vmul.f32 %v9460, %v8197
    %v9490 = vmul.f32 %v9460, %v8287
    %v9491 = vmul.f32 %v9460, %v8272
    %v9492 = vmul.f32 %v9460, %v8200
    %v9493 = vmul.f32 %v9460, %v8288
    %v9494 = vmul.f32 %v9460, %v8273
    %v9495 = vmul.f32 %v9460, %v8203
    %v9496 = vmul.f32 %v9460, %v8289
    %v9497 = vmul.f32 %v9460, %v8274
    %v9498 = vmul.f32 %v9460, %v8206
    %v9499 = vmul.f32 %v9460, %v8290
    %v9500 = vmul.f32 %v9460, %v8275
    %v9501 = vmul.f32 %v9460, %v8209
    %v9502 = vmul.f32 %v9460, %v8291
    %v9503 = vmul.f32 %v9460, %v8276
    %v9504 = vmul.f32 %v9460, %v8212
    %v9505 = vmul.f32 %v9460, %v8292
    %v9506 = vmul.f32 %v9460, %v237
    %v9507 = vmul.f32 %v9460, %v138
    %v9508 = vmul.f32 %v9460, %v254
    %v9557 = vrot.slane %v9461, 2
    %v9558 = vrot.slane %v9462, 2
    %v9559 = vsel %vm746, %v9557, %v9558
    %v9560 = vrot.slane %v9463, 2
    %v9561 = vsel %vm746, %v9558, %v9560
    %v9562 = vrot.slane %v9464, 2
    %v9563 = vrot.slane %v9465, 2
    %v9564 = vsel %vm746, %v9562, %v9563
    %v9565 = vrot.slane %v9466, 2
    %v9566 = vsel %vm746, %v9563, %v9565
    %v9567 = vrot.slane %v9467, 2
    %v9568 = vrot.slane %v9468, 2
    %v9569 = vsel %vm746, %v9567, %v9568
    %v9570 = vrot.slane %v9469, 2
    %v9571 = vsel %vm746, %v9568, %v9570
    %v9572 = vrot.slane %v9470, 2
    %v9573 = vrot.slane %v9471, 2
    %v9574 = vsel %vm746, %v9572, %v9573
    %v9575 = vrot.slane %v9472, 2
    %v9576 = vsel %vm746, %v9573, %v9575
    %v9577 = vrot.slane %v9473, 2
    %v9578 = vrot.slane %v9474, 2
    %v9579 = vsel %vm746, %v9577, %v9578
    %v9580 = vrot.slane %v9475, 2
    %v9581 = vsel %vm746, %v9578, %v9580
    %v9582 = vrot.slane %v9476, 2
    %v9583 = vrot.slane %v9477, 2
    %v9584 = vsel %vm746, %v9582, %v9583
    %v9585 = vrot.slane %v9478, 2
    %v9586 = vsel %vm746, %v9583, %v9585
    %v9587 = vrot.slane %v9479, 2
    %v9588 = vrot.slane %v9480, 2
    %v9589 = vsel %vm746, %v9587, %v9588
    %v9590 = vrot.slane %v9481, 2
    %v9591 = vsel %vm746, %v9588, %v9590
    %v9592 = vrot.slane %v9482, 2
    %v9593 = vrot.slane %v9483, 2
    %v9594 = vsel %vm746, %v9592, %v9593
    %v9595 = vrot.slane %v9484, 2
    %v9596 = vsel %vm746, %v9593, %v9595
    %v9597 = vrot.slane %v9485, 2
    %v9598 = vrot.slane %v9486, 2
    %v9599 = vsel %vm746, %v9597, %v9598
    %v9600 = vrot.slane %v9487, 2
    %v9601 = vsel %vm746, %v9598, %v9600
    %v9602 = vrot.slane %v9488, 2
    %v9603 = vrot.slane %v9489, 2
    %v9604 = vsel %vm746, %v9602, %v9603
    %v9605 = vrot.slane %v9490, 2
    %v9606 = vsel %vm746, %v9603, %v9605
    %v9607 = vrot.slane %v9491, 2
    %v9608 = vrot.slane %v9492, 2
    %v9609 = vsel %vm746, %v9607, %v9608
    %v9610 = vrot.slane %v9493, 2
    %v9611 = vsel %vm746, %v9608, %v9610
    %v9612 = vrot.slane %v9494, 2
    %v9613 = vrot.slane %v9495, 2
    %v9614 = vsel %vm746, %v9612, %v9613
    %v9615 = vrot.slane %v9496, 2
    %v9616 = vsel %vm746, %v9613, %v9615
    %v9617 = vrot.slane %v9497, 2
    %v9618 = vrot.slane %v9498, 2
    %v9619 = vsel %vm746, %v9617, %v9618
    %v9620 = vrot.slane %v9499, 2
    %v9621 = vsel %vm746, %v9618, %v9620
    %v9622 = vrot.slane %v9500, 2
    %v9623 = vrot.slane %v9501, 2
    %v9624 = vsel %vm746, %v9622, %v9623
    %v9625 = vrot.slane %v9502, 2
    %v9626 = vsel %vm746, %v9623, %v9625
    %v9627 = vrot.slane %v9503, 2
    %v9628 = vrot.slane %v9504, 2
    %v9629 = vsel %vm746, %v9627, %v9628
    %v9630 = vrot.slane %v9505, 2
    %v9631 = vsel %vm746, %v9628, %v9630
    %v9632 = vrot.slane %v9506, 2
    %v9633 = vrot.slane %v9507, 2
    %v9634 = vsel %vm746, %v9632, %v9633
    %v9635 = vrot.slane %v9508, 2
    %v9636 = vsel %vm746, %v9633, %v9635
    %v9669 = vadd.f32 %v9427, %v9559
    %v9670 = vadd.f32 %v9428, %v9561
    %v9671 = vadd.f32 %v9429, %v9564
    %v9672 = vadd.f32 %v9430, %v9566
    %v9673 = vadd.f32 %v9431, %v9569
    %v9674 = vadd.f32 %v9432, %v9571
    %v9675 = vadd.f32 %v9433, %v9574
    %v9676 = vadd.f32 %v9434, %v9576
    %v9677 = vadd.f32 %v9435, %v9579
    %v9678 = vadd.f32 %v9436, %v9581
    %v9679 = vadd.f32 %v9437, %v9584
    %v9680 = vadd.f32 %v9438, %v9586
    %v9681 = vadd.f32 %v9439, %v9589
    %v9682 = vadd.f32 %v9440, %v9591
    %v9683 = vadd.f32 %v9441, %v9594
    %v9684 = vadd.f32 %v9442, %v9596
    %v9685 = vadd.f32 %v9443, %v9599
    %v9686 = vadd.f32 %v9444, %v9601
    %v9687 = vadd.f32 %v9445, %v9604
    %v9688 = vadd.f32 %v9446, %v9606
    %v9689 = vadd.f32 %v9447, %v9609
    %v9690 = vadd.f32 %v9448, %v9611
    %v9691 = vadd.f32 %v9449, %v9614
    %v9692 = vadd.f32 %v9450, %v9616
    %v9693 = vadd.f32 %v9451, %v9619
    %v9694 = vadd.f32 %v9452, %v9621
    %v9695 = vadd.f32 %v9453, %v9624
    %v9696 = vadd.f32 %v9454, %v9626
    %v9697 = vadd.f32 %v9455, %v9629
    %v9698 = vadd.f32 %v9456, %v9631
    %v9699 = vadd.f32 %v9457, %v9634
    %v9700 = vadd.f32 %v9458, %v9636
    %s9701 = sld [smem:[#allocation8 + $0x184]]
    %v9702 = vstv %s9701
    %v9703 = vmul.f32 %v9702, %v71
    %v9704 = vmul.f32 %v9702, %v72
    %v9705 = vmul.f32 %v9702, %v73
    %v9706 = vmul.f32 %v9702, %v74
    %v9707 = vmul.f32 %v9702, %v75
    %v9708 = vmul.f32 %v9702, %v76
    %v9709 = vmul.f32 %v9702, %v77
    %v9710 = vmul.f32 %v9702, %v78
    %v9711 = vmul.f32 %v9702, %v79
    %v9712 = vmul.f32 %v9702, %v80
    %v9713 = vmul.f32 %v9702, %v81
    %v9714 = vmul.f32 %v9702, %v82
    %v9715 = vmul.f32 %v9702, %v83
    %v9716 = vmul.f32 %v9702, %v84
    %v9717 = vmul.f32 %v9702, %v85
    %v9718 = vmul.f32 %v9702, %v86
    %v9719 = vmul.f32 %v9702, %v87
    %v9720 = vmul.f32 %v9702, %v88
    %v9721 = vmul.f32 %v9702, %v89
    %v9722 = vmul.f32 %v9702, %v90
    %v9723 = vmul.f32 %v9702, %v91
    %v9724 = vmul.f32 %v9702, %v92
    %v9725 = vmul.f32 %v9702, %v93
    %v9726 = vmul.f32 %v9702, %v94
    %v9727 = vmul.f32 %v9702, %v95
    %v9728 = vmul.f32 %v9702, %v96
    %v9729 = vmul.f32 %v9702, %v97
    %v9730 = vmul.f32 %v9702, %v98
    %v9731 = vmul.f32 %v9702, %v99
    %v9732 = vmul.f32 %v9702, %v100
    %v9733 = vmul.f32 %v9702, %v101
    %v9734 = vmul.f32 %v9702, %v102
    %s9735 = sld [smem:[#allocation9 + $0x3]]
    %v9736 = vstv %s9735
    %v9737 = vadd.f32 %v9703, %v9736
    %v9738 = vadd.f32 %v9704, %v9736
    %v9739 = vadd.f32 %v9705, %v9736
    %v9740 = vadd.f32 %v9706, %v9736
    %v9741 = vadd.f32 %v9707, %v9736
    %v9742 = vadd.f32 %v9708, %v9736
    %v9743 = vadd.f32 %v9709, %v9736
    %v9744 = vadd.f32 %v9710, %v9736
    %v9745 = vadd.f32 %v9711, %v9736
    %v9746 = vadd.f32 %v9712, %v9736
    %v9747 = vadd.f32 %v9713, %v9736
    %v9748 = vadd.f32 %v9714, %v9736
    %v9749 = vadd.f32 %v9715, %v9736
    %v9750 = vadd.f32 %v9716, %v9736
    %v9751 = vadd.f32 %v9717, %v9736
    %v9752 = vadd.f32 %v9718, %v9736
    %v9753 = vadd.f32 %v9719, %v9736
    %v9754 = vadd.f32 %v9720, %v9736
    %v9755 = vadd.f32 %v9721, %v9736
    %v9756 = vadd.f32 %v9722, %v9736
    %v9757 = vadd.f32 %v9723, %v9736
    %v9758 = vadd.f32 %v9724, %v9736
    %v9759 = vadd.f32 %v9725, %v9736
    %v9760 = vadd.f32 %v9726, %v9736
    %v9761 = vadd.f32 %v9727, %v9736
    %v9762 = vadd.f32 %v9728, %v9736
    %v9763 = vadd.f32 %v9729, %v9736
    %v9764 = vadd.f32 %v9730, %v9736
    %v9765 = vadd.f32 %v9731, %v9736
    %v9766 = vadd.f32 %v9732, %v9736
    %v9767 = vadd.f32 %v9733, %v9736
    %v9768 = vadd.f32 %v9734, %v9736
    %s9769 = sld [smem:[#allocation8 + $0x180]]
    %v9770 = vstv %s9769
    %v9771 = vmul.f32 %v9770, %v237
    %v9772 = vmul.f32 %v9770, %v138
    %v9773 = vmul.f32 %v9770, %v238
    %v9774 = vmul.f32 %v9770, %v141
    %v9775 = vmul.f32 %v9770, %v239
    %v9776 = vmul.f32 %v9770, %v144
    %v9777 = vmul.f32 %v9770, %v240
    %v9778 = vmul.f32 %v9770, %v147
    %v9779 = vmul.f32 %v9770, %v241
    %v9780 = vmul.f32 %v9770, %v150
    %v9781 = vmul.f32 %v9770, %v242
    %v9782 = vmul.f32 %v9770, %v153
    %v9783 = vmul.f32 %v9770, %v243
    %v9784 = vmul.f32 %v9770, %v156
    %v9785 = vmul.f32 %v9770, %v244
    %v9786 = vmul.f32 %v9770, %v159
    %v9787 = vmul.f32 %v9770, %v245
    %v9788 = vmul.f32 %v9770, %v162
    %v9789 = vmul.f32 %v9770, %v246
    %v9790 = vmul.f32 %v9770, %v165
    %v9791 = vmul.f32 %v9770, %v247
    %v9792 = vmul.f32 %v9770, %v168
    %v9793 = vmul.f32 %v9770, %v248
    %v9794 = vmul.f32 %v9770, %v171
    %v9795 = vmul.f32 %v9770, %v249
    %v9796 = vmul.f32 %v9770, %v174
    %v9797 = vmul.f32 %v9770, %v250
    %v9798 = vmul.f32 %v9770, %v177
    %v9799 = vmul.f32 %v9770, %v251
    %v9800 = vmul.f32 %v9770, %v180
    %v9801 = vmul.f32 %v9770, %v252
    %v9802 = vmul.f32 %v9770, %v183
    %v9803 = vadd.f32 %v9737, %v9771
    %v9804 = vadd.f32 %v9738, %v9772
    %v9805 = vadd.f32 %v9739, %v9773
    %v9806 = vadd.f32 %v9740, %v9774
    %v9807 = vadd.f32 %v9741, %v9775
    %v9808 = vadd.f32 %v9742, %v9776
    %v9809 = vadd.f32 %v9743, %v9777
    %v9810 = vadd.f32 %v9744, %v9778
    %v9811 = vadd.f32 %v9745, %v9779
    %v9812 = vadd.f32 %v9746, %v9780
    %v9813 = vadd.f32 %v9747, %v9781
    %v9814 = vadd.f32 %v9748, %v9782
    %v9815 = vadd.f32 %v9749, %v9783
    %v9816 = vadd.f32 %v9750, %v9784
    %v9817 = vadd.f32 %v9751, %v9785
    %v9818 = vadd.f32 %v9752, %v9786
    %v9819 = vadd.f32 %v9753, %v9787
    %v9820 = vadd.f32 %v9754, %v9788
    %v9821 = vadd.f32 %v9755, %v9789
    %v9822 = vadd.f32 %v9756, %v9790
    %v9823 = vadd.f32 %v9757, %v9791
    %v9824 = vadd.f32 %v9758, %v9792
    %v9825 = vadd.f32 %v9759, %v9793
    %v9826 = vadd.f32 %v9760, %v9794
    %v9827 = vadd.f32 %v9761, %v9795
    %v9828 = vadd.f32 %v9762, %v9796
    %v9829 = vadd.f32 %v9763, %v9797
    %v9830 = vadd.f32 %v9764, %v9798
    %v9831 = vadd.f32 %v9765, %v9799
    %v9832 = vadd.f32 %v9766, %v9800
    %v9833 = vadd.f32 %v9767, %v9801
    %v9834 = vadd.f32 %v9768, %v9802
    %s9835 = sld [smem:[#allocation8 + $0x181]]
    %v9836 = vstv %s9835
    %v9837 = vmul.f32 %v9836, %v237
    %v9838 = vmul.f32 %v9836, %v138
    %v9839 = vmul.f32 %v9836, %v254
    %v9840 = vmul.f32 %v9836, %v238
    %v9841 = vmul.f32 %v9836, %v141
    %v9842 = vmul.f32 %v9836, %v255
    %v9843 = vmul.f32 %v9836, %v239
    %v9844 = vmul.f32 %v9836, %v144
    %v9845 = vmul.f32 %v9836, %v256
    %v9846 = vmul.f32 %v9836, %v240
    %v9847 = vmul.f32 %v9836, %v147
    %v9848 = vmul.f32 %v9836, %v257
    %v9849 = vmul.f32 %v9836, %v241
    %v9850 = vmul.f32 %v9836, %v150
    %v9851 = vmul.f32 %v9836, %v258
    %v9852 = vmul.f32 %v9836, %v242
    %v9853 = vmul.f32 %v9836, %v153
    %v9854 = vmul.f32 %v9836, %v259
    %v9855 = vmul.f32 %v9836, %v243
    %v9856 = vmul.f32 %v9836, %v156
    %v9857 = vmul.f32 %v9836, %v260
    %v9858 = vmul.f32 %v9836, %v244
    %v9859 = vmul.f32 %v9836, %v159
    %v9860 = vmul.f32 %v9836, %v261
    %v9861 = vmul.f32 %v9836, %v245
    %v9862 = vmul.f32 %v9836, %v162
    %v9863 = vmul.f32 %v9836, %v262
    %v9864 = vmul.f32 %v9836, %v246
    %v9865 = vmul.f32 %v9836, %v165
    %v9866 = vmul.f32 %v9836, %v263
    %v9867 = vmul.f32 %v9836, %v247
    %v9868 = vmul.f32 %v9836, %v168
    %v9869 = vmul.f32 %v9836, %v264
    %v9870 = vmul.f32 %v9836, %v248
    %v9871 = vmul.f32 %v9836, %v171
    %v9872 = vmul.f32 %v9836, %v265
    %v9873 = vmul.f32 %v9836, %v249
    %v9874 = vmul.f32 %v9836, %v174
    %v9875 = vmul.f32 %v9836, %v266
    %v9876 = vmul.f32 %v9836, %v250
    %v9877 = vmul.f32 %v9836, %v177
    %v9878 = vmul.f32 %v9836, %v267
    %v9879 = vmul.f32 %v9836, %v251
    %v9880 = vmul.f32 %v9836, %v180
    %v9881 = vmul.f32 %v9836, %v268
    %v9882 = vmul.f32 %v9836, %v252
    %v9883 = vmul.f32 %v9836, %v183
    %v9884 = vmul.f32 %v9836, %v269
    %v9933 = vrot.slane %v9837, 1
    %v9934 = vrot.slane %v9838, 1
    %v9935 = vsel %vm503, %v9933, %v9934
    %v9936 = vrot.slane %v9839, 1
    %v9937 = vsel %vm503, %v9934, %v9936
    %v9938 = vrot.slane %v9840, 1
    %v9939 = vrot.slane %v9841, 1
    %v9940 = vsel %vm503, %v9938, %v9939
    %v9941 = vrot.slane %v9842, 1
    %v9942 = vsel %vm503, %v9939, %v9941
    %v9943 = vrot.slane %v9843, 1
    %v9944 = vrot.slane %v9844, 1
    %v9945 = vsel %vm503, %v9943, %v9944
    %v9946 = vrot.slane %v9845, 1
    %v9947 = vsel %vm503, %v9944, %v9946
    %v9948 = vrot.slane %v9846, 1
    %v9949 = vrot.slane %v9847, 1
    %v9950 = vsel %vm503, %v9948, %v9949
    %v9951 = vrot.slane %v9848, 1
    %v9952 = vsel %vm503, %v9949, %v9951
    %v9953 = vrot.slane %v9849, 1
    %v9954 = vrot.slane %v9850, 1
    %v9955 = vsel %vm503, %v9953, %v9954
    %v9956 = vrot.slane %v9851, 1
    %v9957 = vsel %vm503, %v9954, %v9956
    %v9958 = vrot.slane %v9852, 1
    %v9959 = vrot.slane %v9853, 1
    %v9960 = vsel %vm503, %v9958, %v9959
    %v9961 = vrot.slane %v9854, 1
    %v9962 = vsel %vm503, %v9959, %v9961
    %v9963 = vrot.slane %v9855, 1
    %v9964 = vrot.slane %v9856, 1
    %v9965 = vsel %vm503, %v9963, %v9964
    %v9966 = vrot.slane %v9857, 1
    %v9967 = vsel %vm503, %v9964, %v9966
    %v9968 = vrot.slane %v9858, 1
    %v9969 = vrot.slane %v9859, 1
    %v9970 = vsel %vm503, %v9968, %v9969
    %v9971 = vrot.slane %v9860, 1
    %v9972 = vsel %vm503, %v9969, %v9971
    %v9973 = vrot.slane %v9861, 1
    %v9974 = vrot.slane %v9862, 1
    %v9975 = vsel %vm503, %v9973, %v9974
    %v9976 = vrot.slane %v9863, 1
    %v9977 = vsel %vm503, %v9974, %v9976
    %v9978 = vrot.slane %v9864, 1
    %v9979 = vrot.slane %v9865, 1
    %v9980 = vsel %vm503, %v9978, %v9979
    %v9981 = vrot.slane %v9866, 1
    %v9982 = vsel %vm503, %v9979, %v9981
    %v9983 = vrot.slane %v9867, 1
    %v9984 = vrot.slane %v9868, 1
    %v9985 = vsel %vm503, %v9983, %v9984
    %v9986 = vrot.slane %v9869, 1
    %v9987 = vsel %vm503, %v9984, %v9986
    %v9988 = vrot.slane %v9870, 1
    %v9989 = vrot.slane %v9871, 1
    %v9990 = vsel %vm503, %v9988, %v9989
    %v9991 = vrot.slane %v9872, 1
    %v9992 = vsel %vm503, %v9989, %v9991
    %v9993 = vrot.slane %v9873, 1
    %v9994 = vrot.slane %v9874, 1
    %v9995 = vsel %vm503, %v9993, %v9994
    %v9996 = vrot.slane %v9875, 1
    %v9997 = vsel %vm503, %v9994, %v9996
    %v9998 = vrot.slane %v9876, 1
    %v9999 = vrot.slane %v9877, 1
    %v10000 = vsel %vm503, %v9998, %v9999
    %v10001 = vrot.slane %v9878, 1
    %v10002 = vsel %vm503, %v9999, %v10001
    %v10003 = vrot.slane %v9879, 1
    %v10004 = vrot.slane %v9880, 1
    %v10005 = vsel %vm503, %v10003, %v10004
    %v10006 = vrot.slane %v9881, 1
    %v10007 = vsel %vm503, %v10004, %v10006
    %v10008 = vrot.slane %v9882, 1
    %v10009 = vrot.slane %v9883, 1
    %v10010 = vsel %vm503, %v10008, %v10009
    %v10011 = vrot.slane %v9884, 1
    %v10012 = vsel %vm503, %v10009, %v10011
    %v10045 = vadd.f32 %v9803, %v9935
    %v10046 = vadd.f32 %v9804, %v9937
    %v10047 = vadd.f32 %v9805, %v9940
    %v10048 = vadd.f32 %v9806, %v9942
    %v10049 = vadd.f32 %v9807, %v9945
    %v10050 = vadd.f32 %v9808, %v9947
    %v10051 = vadd.f32 %v9809, %v9950
    %v10052 = vadd.f32 %v9810, %v9952
    %v10053 = vadd.f32 %v9811, %v9955
    %v10054 = vadd.f32 %v9812, %v9957
    %v10055 = vadd.f32 %v9813, %v9960
    %v10056 = vadd.f32 %v9814, %v9962
    %v10057 = vadd.f32 %v9815, %v9965
    %v10058 = vadd.f32 %v9816, %v9967
    %v10059 = vadd.f32 %v9817, %v9970
    %v10060 = vadd.f32 %v9818, %v9972
    %v10061 = vadd.f32 %v9819, %v9975
    %v10062 = vadd.f32 %v9820, %v9977
    %v10063 = vadd.f32 %v9821, %v9980
    %v10064 = vadd.f32 %v9822, %v9982
    %v10065 = vadd.f32 %v9823, %v9985
    %v10066 = vadd.f32 %v9824, %v9987
    %v10067 = vadd.f32 %v9825, %v9990
    %v10068 = vadd.f32 %v9826, %v9992
    %v10069 = vadd.f32 %v9827, %v9995
    %v10070 = vadd.f32 %v9828, %v9997
    %v10071 = vadd.f32 %v9829, %v10000
    %v10072 = vadd.f32 %v9830, %v10002
    %v10073 = vadd.f32 %v9831, %v10005
    %v10074 = vadd.f32 %v9832, %v10007
    %v10075 = vadd.f32 %v9833, %v10010
    %v10076 = vadd.f32 %v9834, %v10012
    %s10077 = sld [smem:[#allocation8 + $0x182]]
    %v10078 = vstv %s10077
    %v10079 = vmul.f32 %v10078, %v237
    %v10080 = vmul.f32 %v10078, %v138
    %v10081 = vmul.f32 %v10078, %v254
    %v10082 = vmul.f32 %v10078, %v238
    %v10083 = vmul.f32 %v10078, %v141
    %v10084 = vmul.f32 %v10078, %v255
    %v10085 = vmul.f32 %v10078, %v239
    %v10086 = vmul.f32 %v10078, %v144
    %v10087 = vmul.f32 %v10078, %v256
    %v10088 = vmul.f32 %v10078, %v240
    %v10089 = vmul.f32 %v10078, %v147
    %v10090 = vmul.f32 %v10078, %v257
    %v10091 = vmul.f32 %v10078, %v241
    %v10092 = vmul.f32 %v10078, %v150
    %v10093 = vmul.f32 %v10078, %v258
    %v10094 = vmul.f32 %v10078, %v242
    %v10095 = vmul.f32 %v10078, %v153
    %v10096 = vmul.f32 %v10078, %v259
    %v10097 = vmul.f32 %v10078, %v243
    %v10098 = vmul.f32 %v10078, %v156
    %v10099 = vmul.f32 %v10078, %v260
    %v10100 = vmul.f32 %v10078, %v244
    %v10101 = vmul.f32 %v10078, %v159
    %v10102 = vmul.f32 %v10078, %v261
    %v10103 = vmul.f32 %v10078, %v245
    %v10104 = vmul.f32 %v10078, %v162
    %v10105 = vmul.f32 %v10078, %v262
    %v10106 = vmul.f32 %v10078, %v246
    %v10107 = vmul.f32 %v10078, %v165
    %v10108 = vmul.f32 %v10078, %v263
    %v10109 = vmul.f32 %v10078, %v247
    %v10110 = vmul.f32 %v10078, %v168
    %v10111 = vmul.f32 %v10078, %v264
    %v10112 = vmul.f32 %v10078, %v248
    %v10113 = vmul.f32 %v10078, %v171
    %v10114 = vmul.f32 %v10078, %v265
    %v10115 = vmul.f32 %v10078, %v249
    %v10116 = vmul.f32 %v10078, %v174
    %v10117 = vmul.f32 %v10078, %v266
    %v10118 = vmul.f32 %v10078, %v250
    %v10119 = vmul.f32 %v10078, %v177
    %v10120 = vmul.f32 %v10078, %v267
    %v10121 = vmul.f32 %v10078, %v251
    %v10122 = vmul.f32 %v10078, %v180
    %v10123 = vmul.f32 %v10078, %v268
    %v10124 = vmul.f32 %v10078, %v252
    %v10125 = vmul.f32 %v10078, %v183
    %v10126 = vmul.f32 %v10078, %v269
    %v10175 = vrot.slane %v10079, 2
    %v10176 = vrot.slane %v10080, 2
    %v10177 = vsel %vm746, %v10175, %v10176
    %v10178 = vrot.slane %v10081, 2
    %v10179 = vsel %vm746, %v10176, %v10178
    %v10180 = vrot.slane %v10082, 2
    %v10181 = vrot.slane %v10083, 2
    %v10182 = vsel %vm746, %v10180, %v10181
    %v10183 = vrot.slane %v10084, 2
    %v10184 = vsel %vm746, %v10181, %v10183
    %v10185 = vrot.slane %v10085, 2
    %v10186 = vrot.slane %v10086, 2
    %v10187 = vsel %vm746, %v10185, %v10186
    %v10188 = vrot.slane %v10087, 2
    %v10189 = vsel %vm746, %v10186, %v10188
    %v10190 = vrot.slane %v10088, 2
    %v10191 = vrot.slane %v10089, 2
    %v10192 = vsel %vm746, %v10190, %v10191
    %v10193 = vrot.slane %v10090, 2
    %v10194 = vsel %vm746, %v10191, %v10193
    %v10195 = vrot.slane %v10091, 2
    %v10196 = vrot.slane %v10092, 2
    %v10197 = vsel %vm746, %v10195, %v10196
    %v10198 = vrot.slane %v10093, 2
    %v10199 = vsel %vm746, %v10196, %v10198
    %v10200 = vrot.slane %v10094, 2
    %v10201 = vrot.slane %v10095, 2
    %v10202 = vsel %vm746, %v10200, %v10201
    %v10203 = vrot.slane %v10096, 2
    %v10204 = vsel %vm746, %v10201, %v10203
    %v10205 = vrot.slane %v10097, 2
    %v10206 = vrot.slane %v10098, 2
    %v10207 = vsel %vm746, %v10205, %v10206
    %v10208 = vrot.slane %v10099, 2
    %v10209 = vsel %vm746, %v10206, %v10208
    %v10210 = vrot.slane %v10100, 2
    %v10211 = vrot.slane %v10101, 2
    %v10212 = vsel %vm746, %v10210, %v10211
    %v10213 = vrot.slane %v10102, 2
    %v10214 = vsel %vm746, %v10211, %v10213
    %v10215 = vrot.slane %v10103, 2
    %v10216 = vrot.slane %v10104, 2
    %v10217 = vsel %vm746, %v10215, %v10216
    %v10218 = vrot.slane %v10105, 2
    %v10219 = vsel %vm746, %v10216, %v10218
    %v10220 = vrot.slane %v10106, 2
    %v10221 = vrot.slane %v10107, 2
    %v10222 = vsel %vm746, %v10220, %v10221
    %v10223 = vrot.slane %v10108, 2
    %v10224 = vsel %vm746, %v10221, %v10223
    %v10225 = vrot.slane %v10109, 2
    %v10226 = vrot.slane %v10110, 2
    %v10227 = vsel %vm746, %v10225, %v10226
    %v10228 = vrot.slane %v10111, 2
    %v10229 = vsel %vm746, %v10226, %v10228
    %v10230 = vrot.slane %v10112, 2
    %v10231 = vrot.slane %v10113, 2
    %v10232 = vsel %vm746, %v10230, %v10231
    %v10233 = vrot.slane %v10114, 2
    %v10234 = vsel %vm746, %v10231, %v10233
    %v10235 = vrot.slane %v10115, 2
    %v10236 = vrot.slane %v10116, 2
    %v10237 = vsel %vm746, %v10235, %v10236
    %v10238 = vrot.slane %v10117, 2
    %v10239 = vsel %vm746, %v10236, %v10238
    %v10240 = vrot.slane %v10118, 2
    %v10241 = vrot.slane %v10119, 2
    %v10242 = vsel %vm746, %v10240, %v10241
    %v10243 = vrot.slane %v10120, 2
    %v10244 = vsel %vm746, %v10241, %v10243
    %v10245 = vrot.slane %v10121, 2
    %v10246 = vrot.slane %v10122, 2
    %v10247 = vsel %vm746, %v10245, %v10246
    %v10248 = vrot.slane %v10123, 2
    %v10249 = vsel %vm746, %v10246, %v10248
    %v10250 = vrot.slane %v10124, 2
    %v10251 = vrot.slane %v10125, 2
    %v10252 = vsel %vm746, %v10250, %v10251
    %v10253 = vrot.slane %v10126, 2
    %v10254 = vsel %vm746, %v10251, %v10253
    %v10287 = vadd.f32 %v10045, %v10177
    %v10288 = vadd.f32 %v10046, %v10179
    %v10289 = vadd.f32 %v10047, %v10182
    %v10290 = vadd.f32 %v10048, %v10184
    %v10291 = vadd.f32 %v10049, %v10187
    %v10292 = vadd.f32 %v10050, %v10189
    %v10293 = vadd.f32 %v10051, %v10192
    %v10294 = vadd.f32 %v10052, %v10194
    %v10295 = vadd.f32 %v10053, %v10197
    %v10296 = vadd.f32 %v10054, %v10199
    %v10297 = vadd.f32 %v10055, %v10202
    %v10298 = vadd.f32 %v10056, %v10204
    %v10299 = vadd.f32 %v10057, %v10207
    %v10300 = vadd.f32 %v10058, %v10209
    %v10301 = vadd.f32 %v10059, %v10212
    %v10302 = vadd.f32 %v10060, %v10214
    %v10303 = vadd.f32 %v10061, %v10217
    %v10304 = vadd.f32 %v10062, %v10219
    %v10305 = vadd.f32 %v10063, %v10222
    %v10306 = vadd.f32 %v10064, %v10224
    %v10307 = vadd.f32 %v10065, %v10227
    %v10308 = vadd.f32 %v10066, %v10229
    %v10309 = vadd.f32 %v10067, %v10232
    %v10310 = vadd.f32 %v10068, %v10234
    %v10311 = vadd.f32 %v10069, %v10237
    %v10312 = vadd.f32 %v10070, %v10239
    %v10313 = vadd.f32 %v10071, %v10242
    %v10314 = vadd.f32 %v10072, %v10244
    %v10315 = vadd.f32 %v10073, %v10247
    %v10316 = vadd.f32 %v10074, %v10249
    %v10317 = vadd.f32 %v10075, %v10252
    %v10318 = vadd.f32 %v10076, %v10254
    %s10319 = sld [smem:[#allocation8 + $0x183]]
    %v10320 = vstv %s10319
    %v10321 = vmul.f32 %v10320, %v238
    %v10322 = vmul.f32 %v10320, %v141
    %v10323 = vmul.f32 %v10320, %v239
    %v10324 = vmul.f32 %v10320, %v144
    %v10325 = vmul.f32 %v10320, %v240
    %v10326 = vmul.f32 %v10320, %v147
    %v10327 = vmul.f32 %v10320, %v241
    %v10328 = vmul.f32 %v10320, %v150
    %v10329 = vmul.f32 %v10320, %v242
    %v10330 = vmul.f32 %v10320, %v153
    %v10331 = vmul.f32 %v10320, %v243
    %v10332 = vmul.f32 %v10320, %v156
    %v10333 = vmul.f32 %v10320, %v244
    %v10334 = vmul.f32 %v10320, %v159
    %v10335 = vmul.f32 %v10320, %v245
    %v10336 = vmul.f32 %v10320, %v162
    %v10337 = vmul.f32 %v10320, %v246
    %v10338 = vmul.f32 %v10320, %v165
    %v10339 = vmul.f32 %v10320, %v247
    %v10340 = vmul.f32 %v10320, %v168
    %v10341 = vmul.f32 %v10320, %v248
    %v10342 = vmul.f32 %v10320, %v171
    %v10343 = vmul.f32 %v10320, %v249
    %v10344 = vmul.f32 %v10320, %v174
    %v10345 = vmul.f32 %v10320, %v250
    %v10346 = vmul.f32 %v10320, %v177
    %v10347 = vmul.f32 %v10320, %v251
    %v10348 = vmul.f32 %v10320, %v180
    %v10349 = vmul.f32 %v10320, %v252
    %v10350 = vmul.f32 %v10320, %v183
    %v10351 = vmul.f32 %v10320, %v253
    %v10352 = vmul.f32 %v10320, %v186
    %v10353 = vadd.f32 %v10287, %v10321
    %v10354 = vadd.f32 %v10288, %v10322
    %v10355 = vadd.f32 %v10289, %v10323
    %v10356 = vadd.f32 %v10290, %v10324
    %v10357 = vadd.f32 %v10291, %v10325
    %v10358 = vadd.f32 %v10292, %v10326
    %v10359 = vadd.f32 %v10293, %v10327
    %v10360 = vadd.f32 %v10294, %v10328
    %v10361 = vadd.f32 %v10295, %v10329
    %v10362 = vadd.f32 %v10296, %v10330
    %v10363 = vadd.f32 %v10297, %v10331
    %v10364 = vadd.f32 %v10298, %v10332
    %v10365 = vadd.f32 %v10299, %v10333
    %v10366 = vadd.f32 %v10300, %v10334
    %v10367 = vadd.f32 %v10301, %v10335
    %v10368 = vadd.f32 %v10302, %v10336
    %v10369 = vadd.f32 %v10303, %v10337
    %v10370 = vadd.f32 %v10304, %v10338
    %v10371 = vadd.f32 %v10305, %v10339
    %v10372 = vadd.f32 %v10306, %v10340
    %v10373 = vadd.f32 %v10307, %v10341
    %v10374 = vadd.f32 %v10308, %v10342
    %v10375 = vadd.f32 %v10309, %v10343
    %v10376 = vadd.f32 %v10310, %v10344
    %v10377 = vadd.f32 %v10311, %v10345
    %v10378 = vadd.f32 %v10312, %v10346
    %v10379 = vadd.f32 %v10313, %v10347
    %v10380 = vadd.f32 %v10314, %v10348
    %v10381 = vadd.f32 %v10315, %v10349
    %v10382 = vadd.f32 %v10316, %v10350
    %v10383 = vadd.f32 %v10317, %v10351
    %v10384 = vadd.f32 %v10318, %v10352
    %s10385 = sld [smem:[#allocation8 + $0x185]]
    %v10386 = vstv %s10385
    %v10387 = vmul.f32 %v10386, %v238
    %v10388 = vmul.f32 %v10386, %v141
    %v10389 = vmul.f32 %v10386, %v255
    %v10390 = vmul.f32 %v10386, %v239
    %v10391 = vmul.f32 %v10386, %v144
    %v10392 = vmul.f32 %v10386, %v256
    %v10393 = vmul.f32 %v10386, %v240
    %v10394 = vmul.f32 %v10386, %v147
    %v10395 = vmul.f32 %v10386, %v257
    %v10396 = vmul.f32 %v10386, %v241
    %v10397 = vmul.f32 %v10386, %v150
    %v10398 = vmul.f32 %v10386, %v258
    %v10399 = vmul.f32 %v10386, %v242
    %v10400 = vmul.f32 %v10386, %v153
    %v10401 = vmul.f32 %v10386, %v259
    %v10402 = vmul.f32 %v10386, %v243
    %v10403 = vmul.f32 %v10386, %v156
    %v10404 = vmul.f32 %v10386, %v260
    %v10405 = vmul.f32 %v10386, %v244
    %v10406 = vmul.f32 %v10386, %v159
    %v10407 = vmul.f32 %v10386, %v261
    %v10408 = vmul.f32 %v10386, %v245
    %v10409 = vmul.f32 %v10386, %v162
    %v10410 = vmul.f32 %v10386, %v262
    %v10411 = vmul.f32 %v10386, %v246
    %v10412 = vmul.f32 %v10386, %v165
    %v10413 = vmul.f32 %v10386, %v263
    %v10414 = vmul.f32 %v10386, %v247
    %v10415 = vmul.f32 %v10386, %v168
    %v10416 = vmul.f32 %v10386, %v264
    %v10417 = vmul.f32 %v10386, %v248
    %v10418 = vmul.f32 %v10386, %v171
    %v10419 = vmul.f32 %v10386, %v265
    %v10420 = vmul.f32 %v10386, %v249
    %v10421 = vmul.f32 %v10386, %v174
    %v10422 = vmul.f32 %v10386, %v266
    %v10423 = vmul.f32 %v10386, %v250
    %v10424 = vmul.f32 %v10386, %v177
    %v10425 = vmul.f32 %v10386, %v267
    %v10426 = vmul.f32 %v10386, %v251
    %v10427 = vmul.f32 %v10386, %v180
    %v10428 = vmul.f32 %v10386, %v268
    %v10429 = vmul.f32 %v10386, %v252
    %v10430 = vmul.f32 %v10386, %v183
    %v10431 = vmul.f32 %v10386, %v269
    %v10432 = vmul.f32 %v10386, %v253
    %v10433 = vmul.f32 %v10386, %v186
    %v10434 = vmul.f32 %v10386, %v270
    %v10483 = vrot.slane %v10387, 2
    %v10484 = vrot.slane %v10388, 2
    %v10485 = vsel %vm746, %v10483, %v10484
    %v10486 = vrot.slane %v10389, 2
    %v10487 = vsel %vm746, %v10484, %v10486
    %v10488 = vrot.slane %v10390, 2
    %v10489 = vrot.slane %v10391, 2
    %v10490 = vsel %vm746, %v10488, %v10489
    %v10491 = vrot.slane %v10392, 2
    %v10492 = vsel %vm746, %v10489, %v10491
    %v10493 = vrot.slane %v10393, 2
    %v10494 = vrot.slane %v10394, 2
    %v10495 = vsel %vm746, %v10493, %v10494
    %v10496 = vrot.slane %v10395, 2
    %v10497 = vsel %vm746, %v10494, %v10496
    %v10498 = vrot.slane %v10396, 2
    %v10499 = vrot.slane %v10397, 2
    %v10500 = vsel %vm746, %v10498, %v10499
    %v10501 = vrot.slane %v10398, 2
    %v10502 = vsel %vm746, %v10499, %v10501
    %v10503 = vrot.slane %v10399, 2
    %v10504 = vrot.slane %v10400, 2
    %v10505 = vsel %vm746, %v10503, %v10504
    %v10506 = vrot.slane %v10401, 2
    %v10507 = vsel %vm746, %v10504, %v10506
    %v10508 = vrot.slane %v10402, 2
    %v10509 = vrot.slane %v10403, 2
    %v10510 = vsel %vm746, %v10508, %v10509
    %v10511 = vrot.slane %v10404, 2
    %v10512 = vsel %vm746, %v10509, %v10511
    %v10513 = vrot.slane %v10405, 2
    %v10514 = vrot.slane %v10406, 2
    %v10515 = vsel %vm746, %v10513, %v10514
    %v10516 = vrot.slane %v10407, 2
    %v10517 = vsel %vm746, %v10514, %v10516
    %v10518 = vrot.slane %v10408, 2
    %v10519 = vrot.slane %v10409, 2
    %v10520 = vsel %vm746, %v10518, %v10519
    %v10521 = vrot.slane %v10410, 2
    %v10522 = vsel %vm746, %v10519, %v10521
    %v10523 = vrot.slane %v10411, 2
    %v10524 = vrot.slane %v10412, 2
    %v10525 = vsel %vm746, %v10523, %v10524
    %v10526 = vrot.slane %v10413, 2
    %v10527 = vsel %vm746, %v10524, %v10526
    %v10528 = vrot.slane %v10414, 2
    %v10529 = vrot.slane %v10415, 2
    %v10530 = vsel %vm746, %v10528, %v10529
    %v10531 = vrot.slane %v10416, 2
    %v10532 = vsel %vm746, %v10529, %v10531
    %v10533 = vrot.slane %v10417, 2
    %v10534 = vrot.slane %v10418, 2
    %v10535 = vsel %vm746, %v10533, %v10534
    %v10536 = vrot.slane %v10419, 2
    %v10537 = vsel %vm746, %v10534, %v10536
    %v10538 = vrot.slane %v10420, 2
    %v10539 = vrot.slane %v10421, 2
    %v10540 = vsel %vm746, %v10538, %v10539
    %v10541 = vrot.slane %v10422, 2
    %v10542 = vsel %vm746, %v10539, %v10541
    %v10543 = vrot.slane %v10423, 2
    %v10544 = vrot.slane %v10424, 2
    %v10545 = vsel %vm746, %v10543, %v10544
    %v10546 = vrot.slane %v10425, 2
    %v10547 = vsel %vm746, %v10544, %v10546
    %v10548 = vrot.slane %v10426, 2
    %v10549 = vrot.slane %v10427, 2
    %v10550 = vsel %vm746, %v10548, %v10549
    %v10551 = vrot.slane %v10428, 2
    %v10552 = vsel %vm746, %v10549, %v10551
    %v10553 = vrot.slane %v10429, 2
    %v10554 = vrot.slane %v10430, 2
    %v10555 = vsel %vm746, %v10553, %v10554
    %v10556 = vrot.slane %v10431, 2
    %v10557 = vsel %vm746, %v10554, %v10556
    %v10558 = vrot.slane %v10432, 2
    %v10559 = vrot.slane %v10433, 2
    %v10560 = vsel %vm746, %v10558, %v10559
    %v10561 = vrot.slane %v10434, 2
    %v10562 = vsel %vm746, %v10559, %v10561
    %v10595 = vadd.f32 %v10353, %v10485
    %v10596 = vadd.f32 %v10354, %v10487
    %v10597 = vadd.f32 %v10355, %v10490
    %v10598 = vadd.f32 %v10356, %v10492
    %v10599 = vadd.f32 %v10357, %v10495
    %v10600 = vadd.f32 %v10358, %v10497
    %v10601 = vadd.f32 %v10359, %v10500
    %v10602 = vadd.f32 %v10360, %v10502
    %v10603 = vadd.f32 %v10361, %v10505
    %v10604 = vadd.f32 %v10362, %v10507
    %v10605 = vadd.f32 %v10363, %v10510
    %v10606 = vadd.f32 %v10364, %v10512
    %v10607 = vadd.f32 %v10365, %v10515
    %v10608 = vadd.f32 %v10366, %v10517
    %v10609 = vadd.f32 %v10367, %v10520
    %v10610 = vadd.f32 %v10368, %v10522
    %v10611 = vadd.f32 %v10369, %v10525
    %v10612 = vadd.f32 %v10370, %v10527
    %v10613 = vadd.f32 %v10371, %v10530
    %v10614 = vadd.f32 %v10372, %v10532
    %v10615 = vadd.f32 %v10373, %v10535
    %v10616 = vadd.f32 %v10374, %v10537
    %v10617 = vadd.f32 %v10375, %v10540
    %v10618 = vadd.f32 %v10376, %v10542
    %v10619 = vadd.f32 %v10377, %v10545
    %v10620 = vadd.f32 %v10378, %v10547
    %v10621 = vadd.f32 %v10379, %v10550
    %v10622 = vadd.f32 %v10380, %v10552
    %v10623 = vadd.f32 %v10381, %v10555
    %v10624 = vadd.f32 %v10382, %v10557
    %v10625 = vadd.f32 %v10383, %v10560
    %v10626 = vadd.f32 %v10384, %v10562
    %s10627 = sld [smem:[#allocation8 + $0x186]]
    %v10628 = vstv %s10627
    %v10629 = vmul.f32 %v10628, %v239
    %v10630 = vmul.f32 %v10628, %v144
    %v10631 = vmul.f32 %v10628, %v240
    %v10632 = vmul.f32 %v10628, %v147
    %v10633 = vmul.f32 %v10628, %v241
    %v10634 = vmul.f32 %v10628, %v150
    %v10635 = vmul.f32 %v10628, %v242
    %v10636 = vmul.f32 %v10628, %v153
    %v10637 = vmul.f32 %v10628, %v243
    %v10638 = vmul.f32 %v10628, %v156
    %v10639 = vmul.f32 %v10628, %v244
    %v10640 = vmul.f32 %v10628, %v159
    %v10641 = vmul.f32 %v10628, %v245
    %v10642 = vmul.f32 %v10628, %v162
    %v10643 = vmul.f32 %v10628, %v246
    %v10644 = vmul.f32 %v10628, %v165
    %v10645 = vmul.f32 %v10628, %v247
    %v10646 = vmul.f32 %v10628, %v168
    %v10647 = vmul.f32 %v10628, %v248
    %v10648 = vmul.f32 %v10628, %v171
    %v10649 = vmul.f32 %v10628, %v249
    %v10650 = vmul.f32 %v10628, %v174
    %v10651 = vmul.f32 %v10628, %v250
    %v10652 = vmul.f32 %v10628, %v177
    %v10653 = vmul.f32 %v10628, %v251
    %v10654 = vmul.f32 %v10628, %v180
    %v10655 = vmul.f32 %v10628, %v252
    %v10656 = vmul.f32 %v10628, %v183
    %v10657 = vmul.f32 %v10628, %v253
    %v10658 = vmul.f32 %v10628, %v186
    %v10659 = vmul.f32 %v10628, %v237
    %v10660 = vmul.f32 %v10628, %v138
    %v10661 = vadd.f32 %v10595, %v10629
    %v10662 = vadd.f32 %v10596, %v10630
    %v10663 = vadd.f32 %v10597, %v10631
    %v10664 = vadd.f32 %v10598, %v10632
    %v10665 = vadd.f32 %v10599, %v10633
    %v10666 = vadd.f32 %v10600, %v10634
    %v10667 = vadd.f32 %v10601, %v10635
    %v10668 = vadd.f32 %v10602, %v10636
    %v10669 = vadd.f32 %v10603, %v10637
    %v10670 = vadd.f32 %v10604, %v10638
    %v10671 = vadd.f32 %v10605, %v10639
    %v10672 = vadd.f32 %v10606, %v10640
    %v10673 = vadd.f32 %v10607, %v10641
    %v10674 = vadd.f32 %v10608, %v10642
    %v10675 = vadd.f32 %v10609, %v10643
    %v10676 = vadd.f32 %v10610, %v10644
    %v10677 = vadd.f32 %v10611, %v10645
    %v10678 = vadd.f32 %v10612, %v10646
    %v10679 = vadd.f32 %v10613, %v10647
    %v10680 = vadd.f32 %v10614, %v10648
    %v10681 = vadd.f32 %v10615, %v10649
    %v10682 = vadd.f32 %v10616, %v10650
    %v10683 = vadd.f32 %v10617, %v10651
    %v10684 = vadd.f32 %v10618, %v10652
    %v10685 = vadd.f32 %v10619, %v10653
    %v10686 = vadd.f32 %v10620, %v10654
    %v10687 = vadd.f32 %v10621, %v10655
    %v10688 = vadd.f32 %v10622, %v10656
    %v10689 = vadd.f32 %v10623, %v10657
    %v10690 = vadd.f32 %v10624, %v10658
    %v10691 = vadd.f32 %v10625, %v10659
    %v10692 = vadd.f32 %v10626, %v10660
    %s10693 = sld [smem:[#allocation8 + $0x187]]
    %v10694 = vstv %s10693
    %v10695 = vmul.f32 %v10694, %v239
    %v10696 = vmul.f32 %v10694, %v144
    %v10697 = vmul.f32 %v10694, %v256
    %v10698 = vmul.f32 %v10694, %v240
    %v10699 = vmul.f32 %v10694, %v147
    %v10700 = vmul.f32 %v10694, %v257
    %v10701 = vmul.f32 %v10694, %v241
    %v10702 = vmul.f32 %v10694, %v150
    %v10703 = vmul.f32 %v10694, %v258
    %v10704 = vmul.f32 %v10694, %v242
    %v10705 = vmul.f32 %v10694, %v153
    %v10706 = vmul.f32 %v10694, %v259
    %v10707 = vmul.f32 %v10694, %v243
    %v10708 = vmul.f32 %v10694, %v156
    %v10709 = vmul.f32 %v10694, %v260
    %v10710 = vmul.f32 %v10694, %v244
    %v10711 = vmul.f32 %v10694, %v159
    %v10712 = vmul.f32 %v10694, %v261
    %v10713 = vmul.f32 %v10694, %v245
    %v10714 = vmul.f32 %v10694, %v162
    %v10715 = vmul.f32 %v10694, %v262
    %v10716 = vmul.f32 %v10694, %v246
    %v10717 = vmul.f32 %v10694, %v165
    %v10718 = vmul.f32 %v10694, %v263
    %v10719 = vmul.f32 %v10694, %v247
    %v10720 = vmul.f32 %v10694, %v168
    %v10721 = vmul.f32 %v10694, %v264
    %v10722 = vmul.f32 %v10694, %v248
    %v10723 = vmul.f32 %v10694, %v171
    %v10724 = vmul.f32 %v10694, %v265
    %v10725 = vmul.f32 %v10694, %v249
    %v10726 = vmul.f32 %v10694, %v174
    %v10727 = vmul.f32 %v10694, %v266
    %v10728 = vmul.f32 %v10694, %v250
    %v10729 = vmul.f32 %v10694, %v177
    %v10730 = vmul.f32 %v10694, %v267
    %v10731 = vmul.f32 %v10694, %v251
    %v10732 = vmul.f32 %v10694, %v180
    %v10733 = vmul.f32 %v10694, %v268
    %v10734 = vmul.f32 %v10694, %v252
    %v10735 = vmul.f32 %v10694, %v183
    %v10736 = vmul.f32 %v10694, %v269
    %v10737 = vmul.f32 %v10694, %v253
    %v10738 = vmul.f32 %v10694, %v186
    %v10739 = vmul.f32 %v10694, %v270
    %v10740 = vmul.f32 %v10694, %v237
    %v10741 = vmul.f32 %v10694, %v138
    %v10742 = vmul.f32 %v10694, %v254
    %v10791 = vrot.slane %v10695, 1
    %v10792 = vrot.slane %v10696, 1
    %v10793 = vsel %vm503, %v10791, %v10792
    %v10794 = vrot.slane %v10697, 1
    %v10795 = vsel %vm503, %v10792, %v10794
    %v10796 = vrot.slane %v10698, 1
    %v10797 = vrot.slane %v10699, 1
    %v10798 = vsel %vm503, %v10796, %v10797
    %v10799 = vrot.slane %v10700, 1
    %v10800 = vsel %vm503, %v10797, %v10799
    %v10801 = vrot.slane %v10701, 1
    %v10802 = vrot.slane %v10702, 1
    %v10803 = vsel %vm503, %v10801, %v10802
    %v10804 = vrot.slane %v10703, 1
    %v10805 = vsel %vm503, %v10802, %v10804
    %v10806 = vrot.slane %v10704, 1
    %v10807 = vrot.slane %v10705, 1
    %v10808 = vsel %vm503, %v10806, %v10807
    %v10809 = vrot.slane %v10706, 1
    %v10810 = vsel %vm503, %v10807, %v10809
    %v10811 = vrot.slane %v10707, 1
    %v10812 = vrot.slane %v10708, 1
    %v10813 = vsel %vm503, %v10811, %v10812
    %v10814 = vrot.slane %v10709, 1
    %v10815 = vsel %vm503, %v10812, %v10814
    %v10816 = vrot.slane %v10710, 1
    %v10817 = vrot.slane %v10711, 1
    %v10818 = vsel %vm503, %v10816, %v10817
    %v10819 = vrot.slane %v10712, 1
    %v10820 = vsel %vm503, %v10817, %v10819
    %v10821 = vrot.slane %v10713, 1
    %v10822 = vrot.slane %v10714, 1
    %v10823 = vsel %vm503, %v10821, %v10822
    %v10824 = vrot.slane %v10715, 1
    %v10825 = vsel %vm503, %v10822, %v10824
    %v10826 = vrot.slane %v10716, 1
    %v10827 = vrot.slane %v10717, 1
    %v10828 = vsel %vm503, %v10826, %v10827
    %v10829 = vrot.slane %v10718, 1
    %v10830 = vsel %vm503, %v10827, %v10829
    %v10831 = vrot.slane %v10719, 1
    %v10832 = vrot.slane %v10720, 1
    %v10833 = vsel %vm503, %v10831, %v10832
    %v10834 = vrot.slane %v10721, 1
    %v10835 = vsel %vm503, %v10832, %v10834
    %v10836 = vrot.slane %v10722, 1
    %v10837 = vrot.slane %v10723, 1
    %v10838 = vsel %vm503, %v10836, %v10837
    %v10839 = vrot.slane %v10724, 1
    %v10840 = vsel %vm503, %v10837, %v10839
    %v10841 = vrot.slane %v10725, 1
    %v10842 = vrot.slane %v10726, 1
    %v10843 = vsel %vm503, %v10841, %v10842
    %v10844 = vrot.slane %v10727, 1
    %v10845 = vsel %vm503, %v10842, %v10844
    %v10846 = vrot.slane %v10728, 1
    %v10847 = vrot.slane %v10729, 1
    %v10848 = vsel %vm503, %v10846, %v10847
    %v10849 = vrot.slane %v10730, 1
    %v10850 = vsel %vm503, %v10847, %v10849
    %v10851 = vrot.slane %v10731, 1
    %v10852 = vrot.slane %v10732, 1
    %v10853 = vsel %vm503, %v10851, %v10852
    %v10854 = vrot.slane %v10733, 1
    %v10855 = vsel %vm503, %v10852, %v10854
    %v10856 = vrot.slane %v10734, 1
    %v10857 = vrot.slane %v10735, 1
    %v10858 = vsel %vm503, %v10856, %v10857
    %v10859 = vrot.slane %v10736, 1
    %v10860 = vsel %vm503, %v10857, %v10859
    %v10861 = vrot.slane %v10737, 1
    %v10862 = vrot.slane %v10738, 1
    %v10863 = vsel %vm503, %v10861, %v10862
    %v10864 = vrot.slane %v10739, 1
    %v10865 = vsel %vm503, %v10862, %v10864
    %v10866 = vrot.slane %v10740, 1
    %v10867 = vrot.slane %v10741, 1
    %v10868 = vsel %vm503, %v10866, %v10867
    %v10869 = vrot.slane %v10742, 1
    %v10870 = vsel %vm503, %v10867, %v10869
    %v10903 = vadd.f32 %v10661, %v10793
    %v10904 = vadd.f32 %v10662, %v10795
    %v10905 = vadd.f32 %v10663, %v10798
    %v10906 = vadd.f32 %v10664, %v10800
    %v10907 = vadd.f32 %v10665, %v10803
    %v10908 = vadd.f32 %v10666, %v10805
    %v10909 = vadd.f32 %v10667, %v10808
    %v10910 = vadd.f32 %v10668, %v10810
    %v10911 = vadd.f32 %v10669, %v10813
    %v10912 = vadd.f32 %v10670, %v10815
    %v10913 = vadd.f32 %v10671, %v10818
    %v10914 = vadd.f32 %v10672, %v10820
    %v10915 = vadd.f32 %v10673, %v10823
    %v10916 = vadd.f32 %v10674, %v10825
    %v10917 = vadd.f32 %v10675, %v10828
    %v10918 = vadd.f32 %v10676, %v10830
    %v10919 = vadd.f32 %v10677, %v10833
    %v10920 = vadd.f32 %v10678, %v10835
    %v10921 = vadd.f32 %v10679, %v10838
    %v10922 = vadd.f32 %v10680, %v10840
    %v10923 = vadd.f32 %v10681, %v10843
    %v10924 = vadd.f32 %v10682, %v10845
    %v10925 = vadd.f32 %v10683, %v10848
    %v10926 = vadd.f32 %v10684, %v10850
    %v10927 = vadd.f32 %v10685, %v10853
    %v10928 = vadd.f32 %v10686, %v10855
    %v10929 = vadd.f32 %v10687, %v10858
    %v10930 = vadd.f32 %v10688, %v10860
    %v10931 = vadd.f32 %v10689, %v10863
    %v10932 = vadd.f32 %v10690, %v10865
    %v10933 = vadd.f32 %v10691, %v10868
    %v10934 = vadd.f32 %v10692, %v10870
    %s10935 = sld [smem:[#allocation8 + $0x188]]
    %v10936 = vstv %s10935
    %v10937 = vmul.f32 %v10936, %v239
    %v10938 = vmul.f32 %v10936, %v144
    %v10939 = vmul.f32 %v10936, %v256
    %v10940 = vmul.f32 %v10936, %v240
    %v10941 = vmul.f32 %v10936, %v147
    %v10942 = vmul.f32 %v10936, %v257
    %v10943 = vmul.f32 %v10936, %v241
    %v10944 = vmul.f32 %v10936, %v150
    %v10945 = vmul.f32 %v10936, %v258
    %v10946 = vmul.f32 %v10936, %v242
    %v10947 = vmul.f32 %v10936, %v153
    %v10948 = vmul.f32 %v10936, %v259
    %v10949 = vmul.f32 %v10936, %v243
    %v10950 = vmul.f32 %v10936, %v156
    %v10951 = vmul.f32 %v10936, %v260
    %v10952 = vmul.f32 %v10936, %v244
    %v10953 = vmul.f32 %v10936, %v159
    %v10954 = vmul.f32 %v10936, %v261
    %v10955 = vmul.f32 %v10936, %v245
    %v10956 = vmul.f32 %v10936, %v162
    %v10957 = vmul.f32 %v10936, %v262
    %v10958 = vmul.f32 %v10936, %v246
    %v10959 = vmul.f32 %v10936, %v165
    %v10960 = vmul.f32 %v10936, %v263
    %v10961 = vmul.f32 %v10936, %v247
    %v10962 = vmul.f32 %v10936, %v168
    %v10963 = vmul.f32 %v10936, %v264
    %v10964 = vmul.f32 %v10936, %v248
    %v10965 = vmul.f32 %v10936, %v171
    %v10966 = vmul.f32 %v10936, %v265
    %v10967 = vmul.f32 %v10936, %v249
    %v10968 = vmul.f32 %v10936, %v174
    %v10969 = vmul.f32 %v10936, %v266
    %v10970 = vmul.f32 %v10936, %v250
    %v10971 = vmul.f32 %v10936, %v177
    %v10972 = vmul.f32 %v10936, %v267
    %v10973 = vmul.f32 %v10936, %v251
    %v10974 = vmul.f32 %v10936, %v180
    %v10975 = vmul.f32 %v10936, %v268
    %v10976 = vmul.f32 %v10936, %v252
    %v10977 = vmul.f32 %v10936, %v183
    %v10978 = vmul.f32 %v10936, %v269
    %v10979 = vmul.f32 %v10936, %v253
    %v10980 = vmul.f32 %v10936, %v186
    %v10981 = vmul.f32 %v10936, %v270
    %v10982 = vmul.f32 %v10936, %v237
    %v10983 = vmul.f32 %v10936, %v138
    %v10984 = vmul.f32 %v10936, %v254
    %v11033 = vrot.slane %v10937, 2
    %v11034 = vrot.slane %v10938, 2
    %v11035 = vsel %vm746, %v11033, %v11034
    %v11036 = vrot.slane %v10939, 2
    %v11037 = vsel %vm746, %v11034, %v11036
    %v11038 = vrot.slane %v10940, 2
    %v11039 = vrot.slane %v10941, 2
    %v11040 = vsel %vm746, %v11038, %v11039
    %v11041 = vrot.slane %v10942, 2
    %v11042 = vsel %vm746, %v11039, %v11041
    %v11043 = vrot.slane %v10943, 2
    %v11044 = vrot.slane %v10944, 2
    %v11045 = vsel %vm746, %v11043, %v11044
    %v11046 = vrot.slane %v10945, 2
    %v11047 = vsel %vm746, %v11044, %v11046
    %v11048 = vrot.slane %v10946, 2
    %v11049 = vrot.slane %v10947, 2
    %v11050 = vsel %vm746, %v11048, %v11049
    %v11051 = vrot.slane %v10948, 2
    %v11052 = vsel %vm746, %v11049, %v11051
    %v11053 = vrot.slane %v10949, 2
    %v11054 = vrot.slane %v10950, 2
    %v11055 = vsel %vm746, %v11053, %v11054
    %v11056 = vrot.slane %v10951, 2
    %v11057 = vsel %vm746, %v11054, %v11056
    %v11058 = vrot.slane %v10952, 2
    %v11059 = vrot.slane %v10953, 2
    %v11060 = vsel %vm746, %v11058, %v11059
    %v11061 = vrot.slane %v10954, 2
    %v11062 = vsel %vm746, %v11059, %v11061
    %v11063 = vrot.slane %v10955, 2
    %v11064 = vrot.slane %v10956, 2
    %v11065 = vsel %vm746, %v11063, %v11064
    %v11066 = vrot.slane %v10957, 2
    %v11067 = vsel %vm746, %v11064, %v11066
    %v11068 = vrot.slane %v10958, 2
    %v11069 = vrot.slane %v10959, 2
    %v11070 = vsel %vm746, %v11068, %v11069
    %v11071 = vrot.slane %v10960, 2
    %v11072 = vsel %vm746, %v11069, %v11071
    %v11073 = vrot.slane %v10961, 2
    %v11074 = vrot.slane %v10962, 2
    %v11075 = vsel %vm746, %v11073, %v11074
    %v11076 = vrot.slane %v10963, 2
    %v11077 = vsel %vm746, %v11074, %v11076
    %v11078 = vrot.slane %v10964, 2
    %v11079 = vrot.slane %v10965, 2
    %v11080 = vsel %vm746, %v11078, %v11079
    %v11081 = vrot.slane %v10966, 2
    %v11082 = vsel %vm746, %v11079, %v11081
    %v11083 = vrot.slane %v10967, 2
    %v11084 = vrot.slane %v10968, 2
    %v11085 = vsel %vm746, %v11083, %v11084
    %v11086 = vrot.slane %v10969, 2
    %v11087 = vsel %vm746, %v11084, %v11086
    %v11088 = vrot.slane %v10970, 2
    %v11089 = vrot.slane %v10971, 2
    %v11090 = vsel %vm746, %v11088, %v11089
    %v11091 = vrot.slane %v10972, 2
    %v11092 = vsel %vm746, %v11089, %v11091
    %v11093 = vrot.slane %v10973, 2
    %v11094 = vrot.slane %v10974, 2
    %v11095 = vsel %vm746, %v11093, %v11094
    %v11096 = vrot.slane %v10975, 2
    %v11097 = vsel %vm746, %v11094, %v11096
    %v11098 = vrot.slane %v10976, 2
    %v11099 = vrot.slane %v10977, 2
    %v11100 = vsel %vm746, %v11098, %v11099
    %v11101 = vrot.slane %v10978, 2
    %v11102 = vsel %vm746, %v11099, %v11101
    %v11103 = vrot.slane %v10979, 2
    %v11104 = vrot.slane %v10980, 2
    %v11105 = vsel %vm746, %v11103, %v11104
    %v11106 = vrot.slane %v10981, 2
    %v11107 = vsel %vm746, %v11104, %v11106
    %v11108 = vrot.slane %v10982, 2
    %v11109 = vrot.slane %v10983, 2
    %v11110 = vsel %vm746, %v11108, %v11109
    %v11111 = vrot.slane %v10984, 2
    %v11112 = vsel %vm746, %v11109, %v11111
    %v11145 = vadd.f32 %v10903, %v11035
    %v11146 = vadd.f32 %v10904, %v11037
    %v11147 = vadd.f32 %v10905, %v11040
    %v11148 = vadd.f32 %v10906, %v11042
    %v11149 = vadd.f32 %v10907, %v11045
    %v11150 = vadd.f32 %v10908, %v11047
    %v11151 = vadd.f32 %v10909, %v11050
    %v11152 = vadd.f32 %v10910, %v11052
    %v11153 = vadd.f32 %v10911, %v11055
    %v11154 = vadd.f32 %v10912, %v11057
    %v11155 = vadd.f32 %v10913, %v11060
    %v11156 = vadd.f32 %v10914, %v11062
    %v11157 = vadd.f32 %v10915, %v11065
    %v11158 = vadd.f32 %v10916, %v11067
    %v11159 = vadd.f32 %v10917, %v11070
    %v11160 = vadd.f32 %v10918, %v11072
    %v11161 = vadd.f32 %v10919, %v11075
    %v11162 = vadd.f32 %v10920, %v11077
    %v11163 = vadd.f32 %v10921, %v11080
    %v11164 = vadd.f32 %v10922, %v11082
    %v11165 = vadd.f32 %v10923, %v11085
    %v11166 = vadd.f32 %v10924, %v11087
    %v11167 = vadd.f32 %v10925, %v11090
    %v11168 = vadd.f32 %v10926, %v11092
    %v11169 = vadd.f32 %v10927, %v11095
    %v11170 = vadd.f32 %v10928, %v11097
    %v11171 = vadd.f32 %v10929, %v11100
    %v11172 = vadd.f32 %v10930, %v11102
    %v11173 = vadd.f32 %v10931, %v11105
    %v11174 = vadd.f32 %v10932, %v11107
    %v11175 = vadd.f32 %v10933, %v11110
    %v11176 = vadd.f32 %v10934, %v11112
    %v11177 = vmax.f32 %v11145, 0.0
    %v11178 = vmax.f32 %v11146, 0.0
    %v11179 = vmax.f32 %v11147, 0.0
    %v11180 = vmax.f32 %v11148, 0.0
    %v11181 = vmax.f32 %v11149, 0.0
    %v11182 = vmax.f32 %v11150, 0.0
    %v11183 = vmax.f32 %v11151, 0.0
    %v11184 = vmax.f32 %v11152, 0.0
    %v11185 = vmax.f32 %v11153, 0.0
    %v11186 = vmax.f32 %v11154, 0.0
    %v11187 = vmax.f32 %v11155, 0.0
    %v11188 = vmax.f32 %v11156, 0.0
    %v11189 = vmax.f32 %v11157, 0.0
    %v11190 = vmax.f32 %v11158, 0.0
    %v11191 = vmax.f32 %v11159, 0.0
    %v11192 = vmax.f32 %v11160, 0.0
    %v11193 = vmax.f32 %v11161, 0.0
    %v11194 = vmax.f32 %v11162, 0.0
    %v11195 = vmax.f32 %v11163, 0.0
    %v11196 = vmax.f32 %v11164, 0.0
    %v11197 = vmax.f32 %v11165, 0.0
    %v11198 = vmax.f32 %v11166, 0.0
    %v11199 = vmax.f32 %v11167, 0.0
    %v11200 = vmax.f32 %v11168, 0.0
    %v11201 = vmax.f32 %v11169, 0.0
    %v11202 = vmax.f32 %v11170, 0.0
    %v11203 = vmax.f32 %v11171, 0.0
    %v11204 = vmax.f32 %v11172, 0.0
    %v11205 = vmax.f32 %v11173, 0.0
    %v11206 = vmax.f32 %v11174, 0.0
    %v11207 = vmax.f32 %v11175, 0.0
    %v11208 = vmax.f32 %v11176, 0.0
    %s11209 = sld [smem:[#allocation10 + $0x184]]
    %v11210 = vstv %s11209
    %v11211 = vmul.f32 %v11210, %v11177
    %v11212 = vmul.f32 %v11210, %v11178
    %v11213 = vmul.f32 %v11210, %v11179
    %v11214 = vmul.f32 %v11210, %v11180
    %v11215 = vmul.f32 %v11210, %v11181
    %v11216 = vmul.f32 %v11210, %v11182
    %v11217 = vmul.f32 %v11210, %v11183
    %v11218 = vmul.f32 %v11210, %v11184
    %v11219 = vmul.f32 %v11210, %v11185
    %v11220 = vmul.f32 %v11210, %v11186
    %v11221 = vmul.f32 %v11210, %v11187
    %v11222 = vmul.f32 %v11210, %v11188
    %v11223 = vmul.f32 %v11210, %v11189
    %v11224 = vmul.f32 %v11210, %v11190
    %v11225 = vmul.f32 %v11210, %v11191
    %v11226 = vmul.f32 %v11210, %v11192
    %v11227 = vmul.f32 %v11210, %v11193
    %v11228 = vmul.f32 %v11210, %v11194
    %v11229 = vmul.f32 %v11210, %v11195
    %v11230 = vmul.f32 %v11210, %v11196
    %v11231 = vmul.f32 %v11210, %v11197
    %v11232 = vmul.f32 %v11210, %v11198
    %v11233 = vmul.f32 %v11210, %v11199
    %v11234 = vmul.f32 %v11210, %v11200
    %v11235 = vmul.f32 %v11210, %v11201
    %v11236 = vmul.f32 %v11210, %v11202
    %v11237 = vmul.f32 %v11210, %v11203
    %v11238 = vmul.f32 %v11210, %v11204
    %v11239 = vmul.f32 %v11210, %v11205
    %v11240 = vmul.f32 %v11210, %v11206
    %v11241 = vmul.f32 %v11210, %v11207
    %v11242 = vmul.f32 %v11210, %v11208
    %v11243 = vadd.f32 %v9669, %v11211
    %v11244 = vadd.f32 %v9670, %v11212
    %v11245 = vadd.f32 %v9671, %v11213
    %v11246 = vadd.f32 %v9672, %v11214
    %v11247 = vadd.f32 %v9673, %v11215
    %v11248 = vadd.f32 %v9674, %v11216
    %v11249 = vadd.f32 %v9675, %v11217
    %v11250 = vadd.f32 %v9676, %v11218
    %v11251 = vadd.f32 %v9677, %v11219
    %v11252 = vadd.f32 %v9678, %v11220
    %v11253 = vadd.f32 %v9679, %v11221
    %v11254 = vadd.f32 %v9680, %v11222
    %v11255 = vadd.f32 %v9681, %v11223
    %v11256 = vadd.f32 %v9682, %v11224
    %v11257 = vadd.f32 %v9683, %v11225
    %v11258 = vadd.f32 %v9684, %v11226
    %v11259 = vadd.f32 %v9685, %v11227
    %v11260 = vadd.f32 %v9686, %v11228
    %v11261 = vadd.f32 %v9687, %v11229
    %v11262 = vadd.f32 %v9688, %v11230
    %v11263 = vadd.f32 %v9689, %v11231
    %v11264 = vadd.f32 %v9690, %v11232
    %v11265 = vadd.f32 %v9691, %v11233
    %v11266 = vadd.f32 %v9692, %v11234
    %v11267 = vadd.f32 %v9693, %v11235
    %v11268 = vadd.f32 %v9694, %v11236
    %v11269 = vadd.f32 %v9695, %v11237
    %v11270 = vadd.f32 %v9696, %v11238
    %v11271 = vadd.f32 %v9697, %v11239
    %v11272 = vadd.f32 %v9698, %v11240
    %v11273 = vadd.f32 %v9699, %v11241
    %v11274 = vadd.f32 %v9700, %v11242
    %v11307 = vrot.slane %v11177, 7
    %v11308 = vrot.slane %v11178, 7
    %v11309 = vsel %vm136, %v11307, %v11308
    %v11310 = vrot.slane %v11179, 7
    %v11311 = vrot.slane %v11180, 7
    %v11312 = vsel %vm136, %v11310, %v11311
    %v11313 = vrot.slane %v11181, 7
    %v11314 = vrot.slane %v11182, 7
    %v11315 = vsel %vm136, %v11313, %v11314
    %v11316 = vrot.slane %v11183, 7
    %v11317 = vrot.slane %v11184, 7
    %v11318 = vsel %vm136, %v11316, %v11317
    %v11319 = vrot.slane %v11185, 7
    %v11320 = vrot.slane %v11186, 7
    %v11321 = vsel %vm136, %v11319, %v11320
    %v11322 = vrot.slane %v11187, 7
    %v11323 = vrot.slane %v11188, 7
    %v11324 = vsel %vm136, %v11322, %v11323
    %v11325 = vrot.slane %v11189, 7
    %v11326 = vrot.slane %v11190, 7
    %v11327 = vsel %vm136, %v11325, %v11326
    %v11328 = vrot.slane %v11191, 7
    %v11329 = vrot.slane %v11192, 7
    %v11330 = vsel %vm136, %v11328, %v11329
    %v11331 = vrot.slane %v11193, 7
    %v11332 = vrot.slane %v11194, 7
    %v11333 = vsel %vm136, %v11331, %v11332
    %v11334 = vrot.slane %v11195, 7
    %v11335 = vrot.slane %v11196, 7
    %v11336 = vsel %vm136, %v11334, %v11335
    %v11337 = vrot.slane %v11197, 7
    %v11338 = vrot.slane %v11198, 7
    %v11339 = vsel %vm136, %v11337, %v11338
    %v11340 = vrot.slane %v11199, 7
    %v11341 = vrot.slane %v11200, 7
    %v11342 = vsel %vm136, %v11340, %v11341
    %v11343 = vrot.slane %v11201, 7
    %v11344 = vrot.slane %v11202, 7
    %v11345 = vsel %vm136, %v11343, %v11344
    %v11346 = vrot.slane %v11203, 7
    %v11347 = vrot.slane %v11204, 7
    %v11348 = vsel %vm136, %v11346, %v11347
    %v11349 = vrot.slane %v11205, 7
    %v11350 = vrot.slane %v11206, 7
    %v11351 = vsel %vm136, %v11349, %v11350
    %v11352 = vrot.slane %v11207, 7
    %v11353 = vrot.slane %v11208, 7
    %v11354 = vsel %vm136, %v11352, %v11353
    %v11403 = vsel %vm136, 0.0, %v11307
    %v11404 = vsel %vm136, 0.0, %v11310
    %v11405 = vsel %vm136, 0.0, %v11313
    %v11406 = vsel %vm136, 0.0, %v11316
    %v11407 = vsel %vm136, 0.0, %v11319
    %v11408 = vsel %vm136, 0.0, %v11322
    %v11409 = vsel %vm136, 0.0, %v11325
    %v11410 = vsel %vm136, 0.0, %v11328
    %v11411 = vsel %vm136, 0.0, %v11331
    %v11412 = vsel %vm136, 0.0, %v11334
    %v11413 = vsel %vm136, 0.0, %v11337
    %v11414 = vsel %vm136, 0.0, %v11340
    %v11415 = vsel %vm136, 0.0, %v11343
    %v11416 = vsel %vm136, 0.0, %v11346
    %v11417 = vsel %vm136, 0.0, %v11349
    %v11418 = vsel %vm136, 0.0, %v11352
    %v11419 = vsel %vm136, %v11308, 0.0
    %v11420 = vsel %vm136, %v11311, 0.0
    %v11421 = vsel %vm136, %v11314, 0.0
    %v11422 = vsel %vm136, %v11317, 0.0
    %v11423 = vsel %vm136, %v11320, 0.0
    %v11424 = vsel %vm136, %v11323, 0.0
    %v11425 = vsel %vm136, %v11326, 0.0
    %v11426 = vsel %vm136, %v11329, 0.0
    %v11427 = vsel %vm136, %v11332, 0.0
    %v11428 = vsel %vm136, %v11335, 0.0
    %v11429 = vsel %vm136, %v11338, 0.0
    %v11430 = vsel %vm136, %v11341, 0.0
    %v11431 = vsel %vm136, %v11344, 0.0
    %v11432 = vsel %vm136, %v11347, 0.0
    %v11433 = vsel %vm136, %v11350, 0.0
    %v11434 = vsel %vm136, %v11353, 0.0
    %s11435 = sld [smem:[#allocation10 + $0x180]]
    %v11436 = vstv %s11435
    %v11437 = vmul.f32 %v11436, %v237
    %v11438 = vmul.f32 %v11436, %v138
    %v11439 = vmul.f32 %v11436, %v11403
    %v11440 = vmul.f32 %v11436, %v11309
    %v11441 = vmul.f32 %v11436, %v11404
    %v11442 = vmul.f32 %v11436, %v11312
    %v11443 = vmul.f32 %v11436, %v11405
    %v11444 = vmul.f32 %v11436, %v11315
    %v11445 = vmul.f32 %v11436, %v11406
    %v11446 = vmul.f32 %v11436, %v11318
    %v11447 = vmul.f32 %v11436, %v11407
    %v11448 = vmul.f32 %v11436, %v11321
    %v11449 = vmul.f32 %v11436, %v11408
    %v11450 = vmul.f32 %v11436, %v11324
    %v11451 = vmul.f32 %v11436, %v11409
    %v11452 = vmul.f32 %v11436, %v11327
    %v11453 = vmul.f32 %v11436, %v11410
    %v11454 = vmul.f32 %v11436, %v11330
    %v11455 = vmul.f32 %v11436, %v11411
    %v11456 = vmul.f32 %v11436, %v11333
    %v11457 = vmul.f32 %v11436, %v11412
    %v11458 = vmul.f32 %v11436, %v11336
    %v11459 = vmul.f32 %v11436, %v11413
    %v11460 = vmul.f32 %v11436, %v11339
    %v11461 = vmul.f32 %v11436, %v11414
    %v11462 = vmul.f32 %v11436, %v11342
    %v11463 = vmul.f32 %v11436, %v11415
    %v11464 = vmul.f32 %v11436, %v11345
    %v11465 = vmul.f32 %v11436, %v11416
    %v11466 = vmul.f32 %v11436, %v11348
    %v11467 = vmul.f32 %v11436, %v11417
    %v11468 = vmul.f32 %v11436, %v11351
    %v11469 = vadd.f32 %v11243, %v11437
    %v11470 = vadd.f32 %v11244, %v11438
    %v11471 = vadd.f32 %v11245, %v11439
    %v11472 = vadd.f32 %v11246, %v11440
    %v11473 = vadd.f32 %v11247, %v11441
    %v11474 = vadd.f32 %v11248, %v11442
    %v11475 = vadd.f32 %v11249, %v11443
    %v11476 = vadd.f32 %v11250, %v11444
    %v11477 = vadd.f32 %v11251, %v11445
    %v11478 = vadd.f32 %v11252, %v11446
    %v11479 = vadd.f32 %v11253, %v11447
    %v11480 = vadd.f32 %v11254, %v11448
    %v11481 = vadd.f32 %v11255, %v11449
    %v11482 = vadd.f32 %v11256, %v11450
    %v11483 = vadd.f32 %v11257, %v11451
    %v11484 = vadd.f32 %v11258, %v11452
    %v11485 = vadd.f32 %v11259, %v11453
    %v11486 = vadd.f32 %v11260, %v11454
    %v11487 = vadd.f32 %v11261, %v11455
    %v11488 = vadd.f32 %v11262, %v11456
    %v11489 = vadd.f32 %v11263, %v11457
    %v11490 = vadd.f32 %v11264, %v11458
    %v11491 = vadd.f32 %v11265, %v11459
    %v11492 = vadd.f32 %v11266, %v11460
    %v11493 = vadd.f32 %v11267, %v11461
    %v11494 = vadd.f32 %v11268, %v11462
    %v11495 = vadd.f32 %v11269, %v11463
    %v11496 = vadd.f32 %v11270, %v11464
    %v11497 = vadd.f32 %v11271, %v11465
    %v11498 = vadd.f32 %v11272, %v11466
    %v11499 = vadd.f32 %v11273, %v11467
    %v11500 = vadd.f32 %v11274, %v11468
    %s11501 = sld [smem:[#allocation10 + $0x181]]
    %v11502 = vstv %s11501
    %v11503 = vmul.f32 %v11502, %v237
    %v11504 = vmul.f32 %v11502, %v138
    %v11505 = vmul.f32 %v11502, %v254
    %v11506 = vmul.f32 %v11502, %v11403
    %v11507 = vmul.f32 %v11502, %v11309
    %v11508 = vmul.f32 %v11502, %v11419
    %v11509 = vmul.f32 %v11502, %v11404
    %v11510 = vmul.f32 %v11502, %v11312
    %v11511 = vmul.f32 %v11502, %v11420
    %v11512 = vmul.f32 %v11502, %v11405
    %v11513 = vmul.f32 %v11502, %v11315
    %v11514 = vmul.f32 %v11502, %v11421
    %v11515 = vmul.f32 %v11502, %v11406
    %v11516 = vmul.f32 %v11502, %v11318
    %v11517 = vmul.f32 %v11502, %v11422
    %v11518 = vmul.f32 %v11502, %v11407
    %v11519 = vmul.f32 %v11502, %v11321
    %v11520 = vmul.f32 %v11502, %v11423
    %v11521 = vmul.f32 %v11502, %v11408
    %v11522 = vmul.f32 %v11502, %v11324
    %v11523 = vmul.f32 %v11502, %v11424
    %v11524 = vmul.f32 %v11502, %v11409
    %v11525 = vmul.f32 %v11502, %v11327
    %v11526 = vmul.f32 %v11502, %v11425
    %v11527 = vmul.f32 %v11502, %v11410
    %v11528 = vmul.f32 %v11502, %v11330
    %v11529 = vmul.f32 %v11502, %v11426
    %v11530 = vmul.f32 %v11502, %v11411
    %v11531 = vmul.f32 %v11502, %v11333
    %v11532 = vmul.f32 %v11502, %v11427
    %v11533 = vmul.f32 %v11502, %v11412
    %v11534 = vmul.f32 %v11502, %v11336
    %v11535 = vmul.f32 %v11502, %v11428
    %v11536 = vmul.f32 %v11502, %v11413
    %v11537 = vmul.f32 %v11502, %v11339
    %v11538 = vmul.f32 %v11502, %v11429
    %v11539 = vmul.f32 %v11502, %v11414
    %v11540 = vmul.f32 %v11502, %v11342
    %v11541 = vmul.f32 %v11502, %v11430
    %v11542 = vmul.f32 %v11502, %v11415
    %v11543 = vmul.f32 %v11502, %v11345
    %v11544 = vmul.f32 %v11502, %v11431
    %v11545 = vmul.f32 %v11502, %v11416
    %v11546 = vmul.f32 %v11502, %v11348
    %v11547 = vmul.f32 %v11502, %v11432
    %v11548 = vmul.f32 %v11502, %v11417
    %v11549 = vmul.f32 %v11502, %v11351
    %v11550 = vmul.f32 %v11502, %v11433
    %v11599 = vrot.slane %v11503, 1
    %v11600 = vrot.slane %v11504, 1
    %v11601 = vsel %vm503, %v11599, %v11600
    %v11602 = vrot.slane %v11505, 1
    %v11603 = vsel %vm503, %v11600, %v11602
    %v11604 = vrot.slane %v11506, 1
    %v11605 = vrot.slane %v11507, 1
    %v11606 = vsel %vm503, %v11604, %v11605
    %v11607 = vrot.slane %v11508, 1
    %v11608 = vsel %vm503, %v11605, %v11607
    %v11609 = vrot.slane %v11509, 1
    %v11610 = vrot.slane %v11510, 1
    %v11611 = vsel %vm503, %v11609, %v11610
    %v11612 = vrot.slane %v11511, 1
    %v11613 = vsel %vm503, %v11610, %v11612
    %v11614 = vrot.slane %v11512, 1
    %v11615 = vrot.slane %v11513, 1
    %v11616 = vsel %vm503, %v11614, %v11615
    %v11617 = vrot.slane %v11514, 1
    %v11618 = vsel %vm503, %v11615, %v11617
    %v11619 = vrot.slane %v11515, 1
    %v11620 = vrot.slane %v11516, 1
    %v11621 = vsel %vm503, %v11619, %v11620
    %v11622 = vrot.slane %v11517, 1
    %v11623 = vsel %vm503, %v11620, %v11622
    %v11624 = vrot.slane %v11518, 1
    %v11625 = vrot.slane %v11519, 1
    %v11626 = vsel %vm503, %v11624, %v11625
    %v11627 = vrot.slane %v11520, 1
    %v11628 = vsel %vm503, %v11625, %v11627
    %v11629 = vrot.slane %v11521, 1
    %v11630 = vrot.slane %v11522, 1
    %v11631 = vsel %vm503, %v11629, %v11630
    %v11632 = vrot.slane %v11523, 1
    %v11633 = vsel %vm503, %v11630, %v11632
    %v11634 = vrot.slane %v11524, 1
    %v11635 = vrot.slane %v11525, 1
    %v11636 = vsel %vm503, %v11634, %v11635
    %v11637 = vrot.slane %v11526, 1
    %v11638 = vsel %vm503, %v11635, %v11637
    %v11639 = vrot.slane %v11527, 1
    %v11640 = vrot.slane %v11528, 1
    %v11641 = vsel %vm503, %v11639, %v11640
    %v11642 = vrot.slane %v11529, 1
    %v11643 = vsel %vm503, %v11640, %v11642
    %v11644 = vrot.slane %v11530, 1
    %v11645 = vrot.slane %v11531, 1
    %v11646 = vsel %vm503, %v11644, %v11645
    %v11647 = vrot.slane %v11532, 1
    %v11648 = vsel %vm503, %v11645, %v11647
    %v11649 = vrot.slane %v11533, 1
    %v11650 = vrot.slane %v11534, 1
    %v11651 = vsel %vm503, %v11649, %v11650
    %v11652 = vrot.slane %v11535, 1
    %v11653 = vsel %vm503, %v11650, %v11652
    %v11654 = vrot.slane %v11536, 1
    %v11655 = vrot.slane %v11537, 1
    %v11656 = vsel %vm503, %v11654, %v11655
    %v11657 = vrot.slane %v11538, 1
    %v11658 = vsel %vm503, %v11655, %v11657
    %v11659 = vrot.slane %v11539, 1
    %v11660 = vrot.slane %v11540, 1
    %v11661 = vsel %vm503, %v11659, %v11660
    %v11662 = vrot.slane %v11541, 1
    %v11663 = vsel %vm503, %v11660, %v11662
    %v11664 = vrot.slane %v11542, 1
    %v11665 = vrot.slane %v11543, 1
    %v11666 = vsel %vm503, %v11664, %v11665
    %v11667 = vrot.slane %v11544, 1
    %v11668 = vsel %vm503, %v11665, %v11667
    %v11669 = vrot.slane %v11545, 1
    %v11670 = vrot.slane %v11546, 1
    %v11671 = vsel %vm503, %v11669, %v11670
    %v11672 = vrot.slane %v11547, 1
    %v11673 = vsel %vm503, %v11670, %v11672
    %v11674 = vrot.slane %v11548, 1
    %v11675 = vrot.slane %v11549, 1
    %v11676 = vsel %vm503, %v11674, %v11675
    %v11677 = vrot.slane %v11550, 1
    %v11678 = vsel %vm503, %v11675, %v11677
    %v11711 = vadd.f32 %v11469, %v11601
    %v11712 = vadd.f32 %v11470, %v11603
    %v11713 = vadd.f32 %v11471, %v11606
    %v11714 = vadd.f32 %v11472, %v11608
    %v11715 = vadd.f32 %v11473, %v11611
    %v11716 = vadd.f32 %v11474, %v11613
    %v11717 = vadd.f32 %v11475, %v11616
    %v11718 = vadd.f32 %v11476, %v11618
    %v11719 = vadd.f32 %v11477, %v11621
    %v11720 = vadd.f32 %v11478, %v11623
    %v11721 = vadd.f32 %v11479, %v11626
    %v11722 = vadd.f32 %v11480, %v11628
    %v11723 = vadd.f32 %v11481, %v11631
    %v11724 = vadd.f32 %v11482, %v11633
    %v11725 = vadd.f32 %v11483, %v11636
    %v11726 = vadd.f32 %v11484, %v11638
    %v11727 = vadd.f32 %v11485, %v11641
    %v11728 = vadd.f32 %v11486, %v11643
    %v11729 = vadd.f32 %v11487, %v11646
    %v11730 = vadd.f32 %v11488, %v11648
    %v11731 = vadd.f32 %v11489, %v11651
    %v11732 = vadd.f32 %v11490, %v11653
    %v11733 = vadd.f32 %v11491, %v11656
    %v11734 = vadd.f32 %v11492, %v11658
    %v11735 = vadd.f32 %v11493, %v11661
    %v11736 = vadd.f32 %v11494, %v11663
    %v11737 = vadd.f32 %v11495, %v11666
    %v11738 = vadd.f32 %v11496, %v11668
    %v11739 = vadd.f32 %v11497, %v11671
    %v11740 = vadd.f32 %v11498, %v11673
    %v11741 = vadd.f32 %v11499, %v11676
    %v11742 = vadd.f32 %v11500, %v11678
    %s11743 = sld [smem:[#allocation10 + $0x182]]
    %v11744 = vstv %s11743
    %v11745 = vmul.f32 %v11744, %v237
    %v11746 = vmul.f32 %v11744, %v138
    %v11747 = vmul.f32 %v11744, %v254
    %v11748 = vmul.f32 %v11744, %v11403
    %v11749 = vmul.f32 %v11744, %v11309
    %v11750 = vmul.f32 %v11744, %v11419
    %v11751 = vmul.f32 %v11744, %v11404
    %v11752 = vmul.f32 %v11744, %v11312
    %v11753 = vmul.f32 %v11744, %v11420
    %v11754 = vmul.f32 %v11744, %v11405
    %v11755 = vmul.f32 %v11744, %v11315
    %v11756 = vmul.f32 %v11744, %v11421
    %v11757 = vmul.f32 %v11744, %v11406
    %v11758 = vmul.f32 %v11744, %v11318
    %v11759 = vmul.f32 %v11744, %v11422
    %v11760 = vmul.f32 %v11744, %v11407
    %v11761 = vmul.f32 %v11744, %v11321
    %v11762 = vmul.f32 %v11744, %v11423
    %v11763 = vmul.f32 %v11744, %v11408
    %v11764 = vmul.f32 %v11744, %v11324
    %v11765 = vmul.f32 %v11744, %v11424
    %v11766 = vmul.f32 %v11744, %v11409
    %v11767 = vmul.f32 %v11744, %v11327
    %v11768 = vmul.f32 %v11744, %v11425
    %v11769 = vmul.f32 %v11744, %v11410
    %v11770 = vmul.f32 %v11744, %v11330
    %v11771 = vmul.f32 %v11744, %v11426
    %v11772 = vmul.f32 %v11744, %v11411
    %v11773 = vmul.f32 %v11744, %v11333
    %v11774 = vmul.f32 %v11744, %v11427
    %v11775 = vmul.f32 %v11744, %v11412
    %v11776 = vmul.f32 %v11744, %v11336
    %v11777 = vmul.f32 %v11744, %v11428
    %v11778 = vmul.f32 %v11744, %v11413
    %v11779 = vmul.f32 %v11744, %v11339
    %v11780 = vmul.f32 %v11744, %v11429
    %v11781 = vmul.f32 %v11744, %v11414
    %v11782 = vmul.f32 %v11744, %v11342
    %v11783 = vmul.f32 %v11744, %v11430
    %v11784 = vmul.f32 %v11744, %v11415
    %v11785 = vmul.f32 %v11744, %v11345
    %v11786 = vmul.f32 %v11744, %v11431
    %v11787 = vmul.f32 %v11744, %v11416
    %v11788 = vmul.f32 %v11744, %v11348
    %v11789 = vmul.f32 %v11744, %v11432
    %v11790 = vmul.f32 %v11744, %v11417
    %v11791 = vmul.f32 %v11744, %v11351
    %v11792 = vmul.f32 %v11744, %v11433
    %v11841 = vrot.slane %v11745, 2
    %v11842 = vrot.slane %v11746, 2
    %v11843 = vsel %vm746, %v11841, %v11842
    %v11844 = vrot.slane %v11747, 2
    %v11845 = vsel %vm746, %v11842, %v11844
    %v11846 = vrot.slane %v11748, 2
    %v11847 = vrot.slane %v11749, 2
    %v11848 = vsel %vm746, %v11846, %v11847
    %v11849 = vrot.slane %v11750, 2
    %v11850 = vsel %vm746, %v11847, %v11849
    %v11851 = vrot.slane %v11751, 2
    %v11852 = vrot.slane %v11752, 2
    %v11853 = vsel %vm746, %v11851, %v11852
    %v11854 = vrot.slane %v11753, 2
    %v11855 = vsel %vm746, %v11852, %v11854
    %v11856 = vrot.slane %v11754, 2
    %v11857 = vrot.slane %v11755, 2
    %v11858 = vsel %vm746, %v11856, %v11857
    %v11859 = vrot.slane %v11756, 2
    %v11860 = vsel %vm746, %v11857, %v11859
    %v11861 = vrot.slane %v11757, 2
    %v11862 = vrot.slane %v11758, 2
    %v11863 = vsel %vm746, %v11861, %v11862
    %v11864 = vrot.slane %v11759, 2
    %v11865 = vsel %vm746, %v11862, %v11864
    %v11866 = vrot.slane %v11760, 2
    %v11867 = vrot.slane %v11761, 2
    %v11868 = vsel %vm746, %v11866, %v11867
    %v11869 = vrot.slane %v11762, 2
    %v11870 = vsel %vm746, %v11867, %v11869
    %v11871 = vrot.slane %v11763, 2
    %v11872 = vrot.slane %v11764, 2
    %v11873 = vsel %vm746, %v11871, %v11872
    %v11874 = vrot.slane %v11765, 2
    %v11875 = vsel %vm746, %v11872, %v11874
    %v11876 = vrot.slane %v11766, 2
    %v11877 = vrot.slane %v11767, 2
    %v11878 = vsel %vm746, %v11876, %v11877
    %v11879 = vrot.slane %v11768, 2
    %v11880 = vsel %vm746, %v11877, %v11879
    %v11881 = vrot.slane %v11769, 2
    %v11882 = vrot.slane %v11770, 2
    %v11883 = vsel %vm746, %v11881, %v11882
    %v11884 = vrot.slane %v11771, 2
    %v11885 = vsel %vm746, %v11882, %v11884
    %v11886 = vrot.slane %v11772, 2
    %v11887 = vrot.slane %v11773, 2
    %v11888 = vsel %vm746, %v11886, %v11887
    %v11889 = vrot.slane %v11774, 2
    %v11890 = vsel %vm746, %v11887, %v11889
    %v11891 = vrot.slane %v11775, 2
    %v11892 = vrot.slane %v11776, 2
    %v11893 = vsel %vm746, %v11891, %v11892
    %v11894 = vrot.slane %v11777, 2
    %v11895 = vsel %vm746, %v11892, %v11894
    %v11896 = vrot.slane %v11778, 2
    %v11897 = vrot.slane %v11779, 2
    %v11898 = vsel %vm746, %v11896, %v11897
    %v11899 = vrot.slane %v11780, 2
    %v11900 = vsel %vm746, %v11897, %v11899
    %v11901 = vrot.slane %v11781, 2
    %v11902 = vrot.slane %v11782, 2
    %v11903 = vsel %vm746, %v11901, %v11902
    %v11904 = vrot.slane %v11783, 2
    %v11905 = vsel %vm746, %v11902, %v11904
    %v11906 = vrot.slane %v11784, 2
    %v11907 = vrot.slane %v11785, 2
    %v11908 = vsel %vm746, %v11906, %v11907
    %v11909 = vrot.slane %v11786, 2
    %v11910 = vsel %vm746, %v11907, %v11909
    %v11911 = vrot.slane %v11787, 2
    %v11912 = vrot.slane %v11788, 2
    %v11913 = vsel %vm746, %v11911, %v11912
    %v11914 = vrot.slane %v11789, 2
    %v11915 = vsel %vm746, %v11912, %v11914
    %v11916 = vrot.slane %v11790, 2
    %v11917 = vrot.slane %v11791, 2
    %v11918 = vsel %vm746, %v11916, %v11917
    %v11919 = vrot.slane %v11792, 2
    %v11920 = vsel %vm746, %v11917, %v11919
    %v11953 = vadd.f32 %v11711, %v11843
    %v11954 = vadd.f32 %v11712, %v11845
    %v11955 = vadd.f32 %v11713, %v11848
    %v11956 = vadd.f32 %v11714, %v11850
    %v11957 = vadd.f32 %v11715, %v11853
    %v11958 = vadd.f32 %v11716, %v11855
    %v11959 = vadd.f32 %v11717, %v11858
    %v11960 = vadd.f32 %v11718, %v11860
    %v11961 = vadd.f32 %v11719, %v11863
    %v11962 = vadd.f32 %v11720, %v11865
    %v11963 = vadd.f32 %v11721, %v11868
    %v11964 = vadd.f32 %v11722, %v11870
    %v11965 = vadd.f32 %v11723, %v11873
    %v11966 = vadd.f32 %v11724, %v11875
    %v11967 = vadd.f32 %v11725, %v11878
    %v11968 = vadd.f32 %v11726, %v11880
    %v11969 = vadd.f32 %v11727, %v11883
    %v11970 = vadd.f32 %v11728, %v11885
    %v11971 = vadd.f32 %v11729, %v11888
    %v11972 = vadd.f32 %v11730, %v11890
    %v11973 = vadd.f32 %v11731, %v11893
    %v11974 = vadd.f32 %v11732, %v11895
    %v11975 = vadd.f32 %v11733, %v11898
    %v11976 = vadd.f32 %v11734, %v11900
    %v11977 = vadd.f32 %v11735, %v11903
    %v11978 = vadd.f32 %v11736, %v11905
    %v11979 = vadd.f32 %v11737, %v11908
    %v11980 = vadd.f32 %v11738, %v11910
    %v11981 = vadd.f32 %v11739, %v11913
    %v11982 = vadd.f32 %v11740, %v11915
    %v11983 = vadd.f32 %v11741, %v11918
    %v11984 = vadd.f32 %v11742, %v11920
    %s11985 = sld [smem:[#allocation10 + $0x183]]
    %v11986 = vstv %s11985
    %v11987 = vmul.f32 %v11986, %v11403
    %v11988 = vmul.f32 %v11986, %v11309
    %v11989 = vmul.f32 %v11986, %v11404
    %v11990 = vmul.f32 %v11986, %v11312
    %v11991 = vmul.f32 %v11986, %v11405
    %v11992 = vmul.f32 %v11986, %v11315
    %v11993 = vmul.f32 %v11986, %v11406
    %v11994 = vmul.f32 %v11986, %v11318
    %v11995 = vmul.f32 %v11986, %v11407
    %v11996 = vmul.f32 %v11986, %v11321
    %v11997 = vmul.f32 %v11986, %v11408
    %v11998 = vmul.f32 %v11986, %v11324
    %v11999 = vmul.f32 %v11986, %v11409
    %v12000 = vmul.f32 %v11986, %v11327
    %v12001 = vmul.f32 %v11986, %v11410
    %v12002 = vmul.f32 %v11986, %v11330
    %v12003 = vmul.f32 %v11986, %v11411
    %v12004 = vmul.f32 %v11986, %v11333
    %v12005 = vmul.f32 %v11986, %v11412
    %v12006 = vmul.f32 %v11986, %v11336
    %v12007 = vmul.f32 %v11986, %v11413
    %v12008 = vmul.f32 %v11986, %v11339
    %v12009 = vmul.f32 %v11986, %v11414
    %v12010 = vmul.f32 %v11986, %v11342
    %v12011 = vmul.f32 %v11986, %v11415
    %v12012 = vmul.f32 %v11986, %v11345
    %v12013 = vmul.f32 %v11986, %v11416
    %v12014 = vmul.f32 %v11986, %v11348
    %v12015 = vmul.f32 %v11986, %v11417
    %v12016 = vmul.f32 %v11986, %v11351
    %v12017 = vmul.f32 %v11986, %v11418
    %v12018 = vmul.f32 %v11986, %v11354
    %v12019 = vadd.f32 %v11953, %v11987
    %v12020 = vadd.f32 %v11954, %v11988
    %v12021 = vadd.f32 %v11955, %v11989
    %v12022 = vadd.f32 %v11956, %v11990
    %v12023 = vadd.f32 %v11957, %v11991
    %v12024 = vadd.f32 %v11958, %v11992
    %v12025 = vadd.f32 %v11959, %v11993
    %v12026 = vadd.f32 %v11960, %v11994
    %v12027 = vadd.f32 %v11961, %v11995
    %v12028 = vadd.f32 %v11962, %v11996
    %v12029 = vadd.f32 %v11963, %v11997
    %v12030 = vadd.f32 %v11964, %v11998
    %v12031 = vadd.f32 %v11965, %v11999
    %v12032 = vadd.f32 %v11966, %v12000
    %v12033 = vadd.f32 %v11967, %v12001
    %v12034 = vadd.f32 %v11968, %v12002
    %v12035 = vadd.f32 %v11969, %v12003
    %v12036 = vadd.f32 %v11970, %v12004
    %v12037 = vadd.f32 %v11971, %v12005
    %v12038 = vadd.f32 %v11972, %v12006
    %v12039 = vadd.f32 %v11973, %v12007
    %v12040 = vadd.f32 %v11974, %v12008
    %v12041 = vadd.f32 %v11975, %v12009
    %v12042 = vadd.f32 %v11976, %v12010
    %v12043 = vadd.f32 %v11977, %v12011
    %v12044 = vadd.f32 %v11978, %v12012
    %v12045 = vadd.f32 %v11979, %v12013
    %v12046 = vadd.f32 %v11980, %v12014
    %v12047 = vadd.f32 %v11981, %v12015
    %v12048 = vadd.f32 %v11982, %v12016
    %v12049 = vadd.f32 %v11983, %v12017
    %v12050 = vadd.f32 %v11984, %v12018
    %s12051 = sld [smem:[#allocation10 + $0x185]]
    %v12052 = vstv %s12051
    %v12053 = vmul.f32 %v12052, %v11403
    %v12054 = vmul.f32 %v12052, %v11309
    %v12055 = vmul.f32 %v12052, %v11419
    %v12056 = vmul.f32 %v12052, %v11404
    %v12057 = vmul.f32 %v12052, %v11312
    %v12058 = vmul.f32 %v12052, %v11420
    %v12059 = vmul.f32 %v12052, %v11405
    %v12060 = vmul.f32 %v12052, %v11315
    %v12061 = vmul.f32 %v12052, %v11421
    %v12062 = vmul.f32 %v12052, %v11406
    %v12063 = vmul.f32 %v12052, %v11318
    %v12064 = vmul.f32 %v12052, %v11422
    %v12065 = vmul.f32 %v12052, %v11407
    %v12066 = vmul.f32 %v12052, %v11321
    %v12067 = vmul.f32 %v12052, %v11423
    %v12068 = vmul.f32 %v12052, %v11408
    %v12069 = vmul.f32 %v12052, %v11324
    %v12070 = vmul.f32 %v12052, %v11424
    %v12071 = vmul.f32 %v12052, %v11409
    %v12072 = vmul.f32 %v12052, %v11327
    %v12073 = vmul.f32 %v12052, %v11425
    %v12074 = vmul.f32 %v12052, %v11410
    %v12075 = vmul.f32 %v12052, %v11330
    %v12076 = vmul.f32 %v12052, %v11426
    %v12077 = vmul.f32 %v12052, %v11411
    %v12078 = vmul.f32 %v12052, %v11333
    %v12079 = vmul.f32 %v12052, %v11427
    %v12080 = vmul.f32 %v12052, %v11412
    %v12081 = vmul.f32 %v12052, %v11336
    %v12082 = vmul.f32 %v12052, %v11428
    %v12083 = vmul.f32 %v12052, %v11413
    %v12084 = vmul.f32 %v12052, %v11339
    %v12085 = vmul.f32 %v12052, %v11429
    %v12086 = vmul.f32 %v12052, %v11414
    %v12087 = vmul.f32 %v12052, %v11342
    %v12088 = vmul.f32 %v12052, %v11430
    %v12089 = vmul.f32 %v12052, %v11415
    %v12090 = vmul.f32 %v12052, %v11345
    %v12091 = vmul.f32 %v12052, %v11431
    %v12092 = vmul.f32 %v12052, %v11416
    %v12093 = vmul.f32 %v12052, %v11348
    %v12094 = vmul.f32 %v12052, %v11432
    %v12095 = vmul.f32 %v12052, %v11417
    %v12096 = vmul.f32 %v12052, %v11351
    %v12097 = vmul.f32 %v12052, %v11433
    %v12098 = vmul.f32 %v12052, %v11418
    %v12099 = vmul.f32 %v12052, %v11354
    %v12100 = vmul.f32 %v12052, %v11434
    %v12149 = vrot.slane %v12053, 2
    %v12150 = vrot.slane %v12054, 2
    %v12151 = vsel %vm746, %v12149, %v12150
    %v12152 = vrot.slane %v12055, 2
    %v12153 = vsel %vm746, %v12150, %v12152
    %v12154 = vrot.slane %v12056, 2
    %v12155 = vrot.slane %v12057, 2
    %v12156 = vsel %vm746, %v12154, %v12155
    %v12157 = vrot.slane %v12058, 2
    %v12158 = vsel %vm746, %v12155, %v12157
    %v12159 = vrot.slane %v12059, 2
    %v12160 = vrot.slane %v12060, 2
    %v12161 = vsel %vm746, %v12159, %v12160
    %v12162 = vrot.slane %v12061, 2
    %v12163 = vsel %vm746, %v12160, %v12162
    %v12164 = vrot.slane %v12062, 2
    %v12165 = vrot.slane %v12063, 2
    %v12166 = vsel %vm746, %v12164, %v12165
    %v12167 = vrot.slane %v12064, 2
    %v12168 = vsel %vm746, %v12165, %v12167
    %v12169 = vrot.slane %v12065, 2
    %v12170 = vrot.slane %v12066, 2
    %v12171 = vsel %vm746, %v12169, %v12170
    %v12172 = vrot.slane %v12067, 2
    %v12173 = vsel %vm746, %v12170, %v12172
    %v12174 = vrot.slane %v12068, 2
    %v12175 = vrot.slane %v12069, 2
    %v12176 = vsel %vm746, %v12174, %v12175
    %v12177 = vrot.slane %v12070, 2
    %v12178 = vsel %vm746, %v12175, %v12177
    %v12179 = vrot.slane %v12071, 2
    %v12180 = vrot.slane %v12072, 2
    %v12181 = vsel %vm746, %v12179, %v12180
    %v12182 = vrot.slane %v12073, 2
    %v12183 = vsel %vm746, %v12180, %v12182
    %v12184 = vrot.slane %v12074, 2
    %v12185 = vrot.slane %v12075, 2
    %v12186 = vsel %vm746, %v12184, %v12185
    %v12187 = vrot.slane %v12076, 2
    %v12188 = vsel %vm746, %v12185, %v12187
    %v12189 = vrot.slane %v12077, 2
    %v12190 = vrot.slane %v12078, 2
    %v12191 = vsel %vm746, %v12189, %v12190
    %v12192 = vrot.slane %v12079, 2
    %v12193 = vsel %vm746, %v12190, %v12192
    %v12194 = vrot.slane %v12080, 2
    %v12195 = vrot.slane %v12081, 2
    %v12196 = vsel %vm746, %v12194, %v12195
    %v12197 = vrot.slane %v12082, 2
    %v12198 = vsel %vm746, %v12195, %v12197
    %v12199 = vrot.slane %v12083, 2
    %v12200 = vrot.slane %v12084, 2
    %v12201 = vsel %vm746, %v12199, %v12200
    %v12202 = vrot.slane %v12085, 2
    %v12203 = vsel %vm746, %v12200, %v12202
    %v12204 = vrot.slane %v12086, 2
    %v12205 = vrot.slane %v12087, 2
    %v12206 = vsel %vm746, %v12204, %v12205
    %v12207 = vrot.slane %v12088, 2
    %v12208 = vsel %vm746, %v12205, %v12207
    %v12209 = vrot.slane %v12089, 2
    %v12210 = vrot.slane %v12090, 2
    %v12211 = vsel %vm746, %v12209, %v12210
    %v12212 = vrot.slane %v12091, 2
    %v12213 = vsel %vm746, %v12210, %v12212
    %v12214 = vrot.slane %v12092, 2
    %v12215 = vrot.slane %v12093, 2
    %v12216 = vsel %vm746, %v12214, %v12215
    %v12217 = vrot.slane %v12094, 2
    %v12218 = vsel %vm746, %v12215, %v12217
    %v12219 = vrot.slane %v12095, 2
    %v12220 = vrot.slane %v12096, 2
    %v12221 = vsel %vm746, %v12219, %v12220
    %v12222 = vrot.slane %v12097, 2
    %v12223 = vsel %vm746, %v12220, %v12222
    %v12224 = vrot.slane %v12098, 2
    %v12225 = vrot.slane %v12099, 2
    %v12226 = vsel %vm746, %v12224, %v12225
    %v12227 = vrot.slane %v12100, 2
    %v12228 = vsel %vm746, %v12225, %v12227
    %v12261 = vadd.f32 %v12019, %v12151
    %v12262 = vadd.f32 %v12020, %v12153
    %v12263 = vadd.f32 %v12021, %v12156
    %v12264 = vadd.f32 %v12022, %v12158
    %v12265 = vadd.f32 %v12023, %v12161
    %v12266 = vadd.f32 %v12024, %v12163
    %v12267 = vadd.f32 %v12025, %v12166
    %v12268 = vadd.f32 %v12026, %v12168
    %v12269 = vadd.f32 %v12027, %v12171
    %v12270 = vadd.f32 %v12028, %v12173
    %v12271 = vadd.f32 %v12029, %v12176
    %v12272 = vadd.f32 %v12030, %v12178
    %v12273 = vadd.f32 %v12031, %v12181
    %v12274 = vadd.f32 %v12032, %v12183
    %v12275 = vadd.f32 %v12033, %v12186
    %v12276 = vadd.f32 %v12034, %v12188
    %v12277 = vadd.f32 %v12035, %v12191
    %v12278 = vadd.f32 %v12036, %v12193
    %v12279 = vadd.f32 %v12037, %v12196
    %v12280 = vadd.f32 %v12038, %v12198
    %v12281 = vadd.f32 %v12039, %v12201
    %v12282 = vadd.f32 %v12040, %v12203
    %v12283 = vadd.f32 %v12041, %v12206
    %v12284 = vadd.f32 %v12042, %v12208
    %v12285 = vadd.f32 %v12043, %v12211
    %v12286 = vadd.f32 %v12044, %v12213
    %v12287 = vadd.f32 %v12045, %v12216
    %v12288 = vadd.f32 %v12046, %v12218
    %v12289 = vadd.f32 %v12047, %v12221
    %v12290 = vadd.f32 %v12048, %v12223
    %v12291 = vadd.f32 %v12049, %v12226
    %v12292 = vadd.f32 %v12050, %v12228
    %s12293 = sld [smem:[#allocation10 + $0x186]]
    %v12294 = vstv %s12293
    %v12295 = vmul.f32 %v12294, %v11404
    %v12296 = vmul.f32 %v12294, %v11312
    %v12297 = vmul.f32 %v12294, %v11405
    %v12298 = vmul.f32 %v12294, %v11315
    %v12299 = vmul.f32 %v12294, %v11406
    %v12300 = vmul.f32 %v12294, %v11318
    %v12301 = vmul.f32 %v12294, %v11407
    %v12302 = vmul.f32 %v12294, %v11321
    %v12303 = vmul.f32 %v12294, %v11408
    %v12304 = vmul.f32 %v12294, %v11324
    %v12305 = vmul.f32 %v12294, %v11409
    %v12306 = vmul.f32 %v12294, %v11327
    %v12307 = vmul.f32 %v12294, %v11410
    %v12308 = vmul.f32 %v12294, %v11330
    %v12309 = vmul.f32 %v12294, %v11411
    %v12310 = vmul.f32 %v12294, %v11333
    %v12311 = vmul.f32 %v12294, %v11412
    %v12312 = vmul.f32 %v12294, %v11336
    %v12313 = vmul.f32 %v12294, %v11413
    %v12314 = vmul.f32 %v12294, %v11339
    %v12315 = vmul.f32 %v12294, %v11414
    %v12316 = vmul.f32 %v12294, %v11342
    %v12317 = vmul.f32 %v12294, %v11415
    %v12318 = vmul.f32 %v12294, %v11345
    %v12319 = vmul.f32 %v12294, %v11416
    %v12320 = vmul.f32 %v12294, %v11348
    %v12321 = vmul.f32 %v12294, %v11417
    %v12322 = vmul.f32 %v12294, %v11351
    %v12323 = vmul.f32 %v12294, %v11418
    %v12324 = vmul.f32 %v12294, %v11354
    %v12325 = vmul.f32 %v12294, %v237
    %v12326 = vmul.f32 %v12294, %v138
    %v12327 = vadd.f32 %v12261, %v12295
    %v12328 = vadd.f32 %v12262, %v12296
    %v12329 = vadd.f32 %v12263, %v12297
    %v12330 = vadd.f32 %v12264, %v12298
    %v12331 = vadd.f32 %v12265, %v12299
    %v12332 = vadd.f32 %v12266, %v12300
    %v12333 = vadd.f32 %v12267, %v12301
    %v12334 = vadd.f32 %v12268, %v12302
    %v12335 = vadd.f32 %v12269, %v12303
    %v12336 = vadd.f32 %v12270, %v12304
    %v12337 = vadd.f32 %v12271, %v12305
    %v12338 = vadd.f32 %v12272, %v12306
    %v12339 = vadd.f32 %v12273, %v12307
    %v12340 = vadd.f32 %v12274, %v12308
    %v12341 = vadd.f32 %v12275, %v12309
    %v12342 = vadd.f32 %v12276, %v12310
    %v12343 = vadd.f32 %v12277, %v12311
    %v12344 = vadd.f32 %v12278, %v12312
    %v12345 = vadd.f32 %v12279, %v12313
    %v12346 = vadd.f32 %v12280, %v12314
    %v12347 = vadd.f32 %v12281, %v12315
    %v12348 = vadd.f32 %v12282, %v12316
    %v12349 = vadd.f32 %v12283, %v12317
    %v12350 = vadd.f32 %v12284, %v12318
    %v12351 = vadd.f32 %v12285, %v12319
    %v12352 = vadd.f32 %v12286, %v12320
    %v12353 = vadd.f32 %v12287, %v12321
    %v12354 = vadd.f32 %v12288, %v12322
    %v12355 = vadd.f32 %v12289, %v12323
    %v12356 = vadd.f32 %v12290, %v12324
    %v12357 = vadd.f32 %v12291, %v12325
    %v12358 = vadd.f32 %v12292, %v12326
    %s12359 = sld [smem:[#allocation10 + $0x187]]
    %v12360 = vstv %s12359
    %v12361 = vmul.f32 %v12360, %v11404
    %v12362 = vmul.f32 %v12360, %v11312
    %v12363 = vmul.f32 %v12360, %v11420
    %v12364 = vmul.f32 %v12360, %v11405
    %v12365 = vmul.f32 %v12360, %v11315
    %v12366 = vmul.f32 %v12360, %v11421
    %v12367 = vmul.f32 %v12360, %v11406
    %v12368 = vmul.f32 %v12360, %v11318
    %v12369 = vmul.f32 %v12360, %v11422
    %v12370 = vmul.f32 %v12360, %v11407
    %v12371 = vmul.f32 %v12360, %v11321
    %v12372 = vmul.f32 %v12360, %v11423
    %v12373 = vmul.f32 %v12360, %v11408
    %v12374 = vmul.f32 %v12360, %v11324
    %v12375 = vmul.f32 %v12360, %v11424
    %v12376 = vmul.f32 %v12360, %v11409
    %v12377 = vmul.f32 %v12360, %v11327
    %v12378 = vmul.f32 %v12360, %v11425
    %v12379 = vmul.f32 %v12360, %v11410
    %v12380 = vmul.f32 %v12360, %v11330
    %v12381 = vmul.f32 %v12360, %v11426
    %v12382 = vmul.f32 %v12360, %v11411
    %v12383 = vmul.f32 %v12360, %v11333
    %v12384 = vmul.f32 %v12360, %v11427
    %v12385 = vmul.f32 %v12360, %v11412
    %v12386 = vmul.f32 %v12360, %v11336
    %v12387 = vmul.f32 %v12360, %v11428
    %v12388 = vmul.f32 %v12360, %v11413
    %v12389 = vmul.f32 %v12360, %v11339
    %v12390 = vmul.f32 %v12360, %v11429
    %v12391 = vmul.f32 %v12360, %v11414
    %v12392 = vmul.f32 %v12360, %v11342
    %v12393 = vmul.f32 %v12360, %v11430
    %v12394 = vmul.f32 %v12360, %v11415
    %v12395 = vmul.f32 %v12360, %v11345
    %v12396 = vmul.f32 %v12360, %v11431
    %v12397 = vmul.f32 %v12360, %v11416
    %v12398 = vmul.f32 %v12360, %v11348
    %v12399 = vmul.f32 %v12360, %v11432
    %v12400 = vmul.f32 %v12360, %v11417
    %v12401 = vmul.f32 %v12360, %v11351
    %v12402 = vmul.f32 %v12360, %v11433
    %v12403 = vmul.f32 %v12360, %v11418
    %v12404 = vmul.f32 %v12360, %v11354
    %v12405 = vmul.f32 %v12360, %v11434
    %v12406 = vmul.f32 %v12360, %v237
    %v12407 = vmul.f32 %v12360, %v138
    %v12408 = vmul.f32 %v12360, %v254
    %v12457 = vrot.slane %v12361, 1
    %v12458 = vrot.slane %v12362, 1
    %v12459 = vsel %vm503, %v12457, %v12458
    %v12460 = vrot.slane %v12363, 1
    %v12461 = vsel %vm503, %v12458, %v12460
    %v12462 = vrot.slane %v12364, 1
    %v12463 = vrot.slane %v12365, 1
    %v12464 = vsel %vm503, %v12462, %v12463
    %v12465 = vrot.slane %v12366, 1
    %v12466 = vsel %vm503, %v12463, %v12465
    %v12467 = vrot.slane %v12367, 1
    %v12468 = vrot.slane %v12368, 1
    %v12469 = vsel %vm503, %v12467, %v12468
    %v12470 = vrot.slane %v12369, 1
    %v12471 = vsel %vm503, %v12468, %v12470
    %v12472 = vrot.slane %v12370, 1
    %v12473 = vrot.slane %v12371, 1
    %v12474 = vsel %vm503, %v12472, %v12473
    %v12475 = vrot.slane %v12372, 1
    %v12476 = vsel %vm503, %v12473, %v12475
    %v12477 = vrot.slane %v12373, 1
    %v12478 = vrot.slane %v12374, 1
    %v12479 = vsel %vm503, %v12477, %v12478
    %v12480 = vrot.slane %v12375, 1
    %v12481 = vsel %vm503, %v12478, %v12480
    %v12482 = vrot.slane %v12376, 1
    %v12483 = vrot.slane %v12377, 1
    %v12484 = vsel %vm503, %v12482, %v12483
    %v12485 = vrot.slane %v12378, 1
    %v12486 = vsel %vm503, %v12483, %v12485
    %v12487 = vrot.slane %v12379, 1
    %v12488 = vrot.slane %v12380, 1
    %v12489 = vsel %vm503, %v12487, %v12488
    %v12490 = vrot.slane %v12381, 1
    %v12491 = vsel %vm503, %v12488, %v12490
    %v12492 = vrot.slane %v12382, 1
    %v12493 = vrot.slane %v12383, 1
    %v12494 = vsel %vm503, %v12492, %v12493
    %v12495 = vrot.slane %v12384, 1
    %v12496 = vsel %vm503, %v12493, %v12495
    %v12497 = vrot.slane %v12385, 1
    %v12498 = vrot.slane %v12386, 1
    %v12499 = vsel %vm503, %v12497, %v12498
    %v12500 = vrot.slane %v12387, 1
    %v12501 = vsel %vm503, %v12498, %v12500
    %v12502 = vrot.slane %v12388, 1
    %v12503 = vrot.slane %v12389, 1
    %v12504 = vsel %vm503, %v12502, %v12503
    %v12505 = vrot.slane %v12390, 1
    %v12506 = vsel %vm503, %v12503, %v12505
    %v12507 = vrot.slane %v12391, 1
    %v12508 = vrot.slane %v12392, 1
    %v12509 = vsel %vm503, %v12507, %v12508
    %v12510 = vrot.slane %v12393, 1
    %v12511 = vsel %vm503, %v12508, %v12510
    %v12512 = vrot.slane %v12394, 1
    %v12513 = vrot.slane %v12395, 1
    %v12514 = vsel %vm503, %v12512, %v12513
    %v12515 = vrot.slane %v12396, 1
    %v12516 = vsel %vm503, %v12513, %v12515
    %v12517 = vrot.slane %v12397, 1
    %v12518 = vrot.slane %v12398, 1
    %v12519 = vsel %vm503, %v12517, %v12518
    %v12520 = vrot.slane %v12399, 1
    %v12521 = vsel %vm503, %v12518, %v12520
    %v12522 = vrot.slane %v12400, 1
    %v12523 = vrot.slane %v12401, 1
    %v12524 = vsel %vm503, %v12522, %v12523
    %v12525 = vrot.slane %v12402, 1
    %v12526 = vsel %vm503, %v12523, %v12525
    %v12527 = vrot.slane %v12403, 1
    %v12528 = vrot.slane %v12404, 1
    %v12529 = vsel %vm503, %v12527, %v12528
    %v12530 = vrot.slane %v12405, 1
    %v12531 = vsel %vm503, %v12528, %v12530
    %v12532 = vrot.slane %v12406, 1
    %v12533 = vrot.slane %v12407, 1
    %v12534 = vsel %vm503, %v12532, %v12533
    %v12535 = vrot.slane %v12408, 1
    %v12536 = vsel %vm503, %v12533, %v12535
    %v12569 = vadd.f32 %v12327, %v12459
    %v12570 = vadd.f32 %v12328, %v12461
    %v12571 = vadd.f32 %v12329, %v12464
    %v12572 = vadd.f32 %v12330, %v12466
    %v12573 = vadd.f32 %v12331, %v12469
    %v12574 = vadd.f32 %v12332, %v12471
    %v12575 = vadd.f32 %v12333, %v12474
    %v12576 = vadd.f32 %v12334, %v12476
    %v12577 = vadd.f32 %v12335, %v12479
    %v12578 = vadd.f32 %v12336, %v12481
    %v12579 = vadd.f32 %v12337, %v12484
    %v12580 = vadd.f32 %v12338, %v12486
    %v12581 = vadd.f32 %v12339, %v12489
    %v12582 = vadd.f32 %v12340, %v12491
    %v12583 = vadd.f32 %v12341, %v12494
    %v12584 = vadd.f32 %v12342, %v12496
    %v12585 = vadd.f32 %v12343, %v12499
    %v12586 = vadd.f32 %v12344, %v12501
    %v12587 = vadd.f32 %v12345, %v12504
    %v12588 = vadd.f32 %v12346, %v12506
    %v12589 = vadd.f32 %v12347, %v12509
    %v12590 = vadd.f32 %v12348, %v12511
    %v12591 = vadd.f32 %v12349, %v12514
    %v12592 = vadd.f32 %v12350, %v12516
    %v12593 = vadd.f32 %v12351, %v12519
    %v12594 = vadd.f32 %v12352, %v12521
    %v12595 = vadd.f32 %v12353, %v12524
    %v12596 = vadd.f32 %v12354, %v12526
    %v12597 = vadd.f32 %v12355, %v12529
    %v12598 = vadd.f32 %v12356, %v12531
    %v12599 = vadd.f32 %v12357, %v12534
    %v12600 = vadd.f32 %v12358, %v12536
    %s12601 = sld [smem:[#allocation10 + $0x188]]
    %v12602 = vstv %s12601
    %v12603 = vmul.f32 %v12602, %v11404
    %v12604 = vmul.f32 %v12602, %v11312
    %v12605 = vmul.f32 %v12602, %v11420
    %v12606 = vmul.f32 %v12602, %v11405
    %v12607 = vmul.f32 %v12602, %v11315
    %v12608 = vmul.f32 %v12602, %v11421
    %v12609 = vmul.f32 %v12602, %v11406
    %v12610 = vmul.f32 %v12602, %v11318
    %v12611 = vmul.f32 %v12602, %v11422
    %v12612 = vmul.f32 %v12602, %v11407
    %v12613 = vmul.f32 %v12602, %v11321
    %v12614 = vmul.f32 %v12602, %v11423
    %v12615 = vmul.f32 %v12602, %v11408
    %v12616 = vmul.f32 %v12602, %v11324
    %v12617 = vmul.f32 %v12602, %v11424
    %v12618 = vmul.f32 %v12602, %v11409
    %v12619 = vmul.f32 %v12602, %v11327
    %v12620 = vmul.f32 %v12602, %v11425
    %v12621 = vmul.f32 %v12602, %v11410
    %v12622 = vmul.f32 %v12602, %v11330
    %v12623 = vmul.f32 %v12602, %v11426
    %v12624 = vmul.f32 %v12602, %v11411
    %v12625 = vmul.f32 %v12602, %v11333
    %v12626 = vmul.f32 %v12602, %v11427
    %v12627 = vmul.f32 %v12602, %v11412
    %v12628 = vmul.f32 %v12602, %v11336
    %v12629 = vmul.f32 %v12602, %v11428
    %v12630 = vmul.f32 %v12602, %v11413
    %v12631 = vmul.f32 %v12602, %v11339
    %v12632 = vmul.f32 %v12602, %v11429
    %v12633 = vmul.f32 %v12602, %v11414
    %v12634 = vmul.f32 %v12602, %v11342
    %v12635 = vmul.f32 %v12602, %v11430
    %v12636 = vmul.f32 %v12602, %v11415
    %v12637 = vmul.f32 %v12602, %v11345
    %v12638 = vmul.f32 %v12602, %v11431
    %v12639 = vmul.f32 %v12602, %v11416
    %v12640 = vmul.f32 %v12602, %v11348
    %v12641 = vmul.f32 %v12602, %v11432
    %v12642 = vmul.f32 %v12602, %v11417
    %v12643 = vmul.f32 %v12602, %v11351
    %v12644 = vmul.f32 %v12602, %v11433
    %v12645 = vmul.f32 %v12602, %v11418
    %v12646 = vmul.f32 %v12602, %v11354
    %v12647 = vmul.f32 %v12602, %v11434
    %v12648 = vmul.f32 %v12602, %v237
    %v12649 = vmul.f32 %v12602, %v138
    %v12650 = vmul.f32 %v12602, %v254
    %v12699 = vrot.slane %v12603, 2
    %v12700 = vrot.slane %v12604, 2
    %v12701 = vsel %vm746, %v12699, %v12700
    %v12702 = vrot.slane %v12605, 2
    %v12703 = vsel %vm746, %v12700, %v12702
    %v12704 = vrot.slane %v12606, 2
    %v12705 = vrot.slane %v12607, 2
    %v12706 = vsel %vm746, %v12704, %v12705
    %v12707 = vrot.slane %v12608, 2
    %v12708 = vsel %vm746, %v12705, %v12707
    %v12709 = vrot.slane %v12609, 2
    %v12710 = vrot.slane %v12610, 2
    %v12711 = vsel %vm746, %v12709, %v12710
    %v12712 = vrot.slane %v12611, 2
    %v12713 = vsel %vm746, %v12710, %v12712
    %v12714 = vrot.slane %v12612, 2
    %v12715 = vrot.slane %v12613, 2
    %v12716 = vsel %vm746, %v12714, %v12715
    %v12717 = vrot.slane %v12614, 2
    %v12718 = vsel %vm746, %v12715, %v12717
    %v12719 = vrot.slane %v12615, 2
    %v12720 = vrot.slane %v12616, 2
    %v12721 = vsel %vm746, %v12719, %v12720
    %v12722 = vrot.slane %v12617, 2
    %v12723 = vsel %vm746, %v12720, %v12722
    %v12724 = vrot.slane %v12618, 2
    %v12725 = vrot.slane %v12619, 2
    %v12726 = vsel %vm746, %v12724, %v12725
    %v12727 = vrot.slane %v12620, 2
    %v12728 = vsel %vm746, %v12725, %v12727
    %v12729 = vrot.slane %v12621, 2
    %v12730 = vrot.slane %v12622, 2
    %v12731 = vsel %vm746, %v12729, %v12730
    %v12732 = vrot.slane %v12623, 2
    %v12733 = vsel %vm746, %v12730, %v12732
    %v12734 = vrot.slane %v12624, 2
    %v12735 = vrot.slane %v12625, 2
    %v12736 = vsel %vm746, %v12734, %v12735
    %v12737 = vrot.slane %v12626, 2
    %v12738 = vsel %vm746, %v12735, %v12737
    %v12739 = vrot.slane %v12627, 2
    %v12740 = vrot.slane %v12628, 2
    %v12741 = vsel %vm746, %v12739, %v12740
    %v12742 = vrot.slane %v12629, 2
    %v12743 = vsel %vm746, %v12740, %v12742
    %v12744 = vrot.slane %v12630, 2
    %v12745 = vrot.slane %v12631, 2
    %v12746 = vsel %vm746, %v12744, %v12745
    %v12747 = vrot.slane %v12632, 2
    %v12748 = vsel %vm746, %v12745, %v12747
    %v12749 = vrot.slane %v12633, 2
    %v12750 = vrot.slane %v12634, 2
    %v12751 = vsel %vm746, %v12749, %v12750
    %v12752 = vrot.slane %v12635, 2
    %v12753 = vsel %vm746, %v12750, %v12752
    %v12754 = vrot.slane %v12636, 2
    %v12755 = vrot.slane %v12637, 2
    %v12756 = vsel %vm746, %v12754, %v12755
    %v12757 = vrot.slane %v12638, 2
    %v12758 = vsel %vm746, %v12755, %v12757
    %v12759 = vrot.slane %v12639, 2
    %v12760 = vrot.slane %v12640, 2
    %v12761 = vsel %vm746, %v12759, %v12760
    %v12762 = vrot.slane %v12641, 2
    %v12763 = vsel %vm746, %v12760, %v12762
    %v12764 = vrot.slane %v12642, 2
    %v12765 = vrot.slane %v12643, 2
    %v12766 = vsel %vm746, %v12764, %v12765
    %v12767 = vrot.slane %v12644, 2
    %v12768 = vsel %vm746, %v12765, %v12767
    %v12769 = vrot.slane %v12645, 2
    %v12770 = vrot.slane %v12646, 2
    %v12771 = vsel %vm746, %v12769, %v12770
    %v12772 = vrot.slane %v12647, 2
    %v12773 = vsel %vm746, %v12770, %v12772
    %v12774 = vrot.slane %v12648, 2
    %v12775 = vrot.slane %v12649, 2
    %v12776 = vsel %vm746, %v12774, %v12775
    %v12777 = vrot.slane %v12650, 2
    %v12778 = vsel %vm746, %v12775, %v12777
    %v12811 = vadd.f32 %v12569, %v12701
    %v12812 = vadd.f32 %v12570, %v12703
    %v12813 = vadd.f32 %v12571, %v12706
    %v12814 = vadd.f32 %v12572, %v12708
    %v12815 = vadd.f32 %v12573, %v12711
    %v12816 = vadd.f32 %v12574, %v12713
    %v12817 = vadd.f32 %v12575, %v12716
    %v12818 = vadd.f32 %v12576, %v12718
    %v12819 = vadd.f32 %v12577, %v12721
    %v12820 = vadd.f32 %v12578, %v12723
    %v12821 = vadd.f32 %v12579, %v12726
    %v12822 = vadd.f32 %v12580, %v12728
    %v12823 = vadd.f32 %v12581, %v12731
    %v12824 = vadd.f32 %v12582, %v12733
    %v12825 = vadd.f32 %v12583, %v12736
    %v12826 = vadd.f32 %v12584, %v12738
    %v12827 = vadd.f32 %v12585, %v12741
    %v12828 = vadd.f32 %v12586, %v12743
    %v12829 = vadd.f32 %v12587, %v12746
    %v12830 = vadd.f32 %v12588, %v12748
    %v12831 = vadd.f32 %v12589, %v12751
    %v12832 = vadd.f32 %v12590, %v12753
    %v12833 = vadd.f32 %v12591, %v12756
    %v12834 = vadd.f32 %v12592, %v12758
    %v12835 = vadd.f32 %v12593, %v12761
    %v12836 = vadd.f32 %v12594, %v12763
    %v12837 = vadd.f32 %v12595, %v12766
    %v12838 = vadd.f32 %v12596, %v12768
    %v12839 = vadd.f32 %v12597, %v12771
    %v12840 = vadd.f32 %v12598, %v12773
    %v12841 = vadd.f32 %v12599, %v12776
    %v12842 = vadd.f32 %v12600, %v12778
    %v12843 = vmax.f32 %v12811, 0.0
    %v12844 = vmax.f32 %v12812, 0.0
    %v12845 = vmax.f32 %v12813, 0.0
    %v12846 = vmax.f32 %v12814, 0.0
    %v12847 = vmax.f32 %v12815, 0.0
    %v12848 = vmax.f32 %v12816, 0.0
    %v12849 = vmax.f32 %v12817, 0.0
    %v12850 = vmax.f32 %v12818, 0.0
    %v12851 = vmax.f32 %v12819, 0.0
    %v12852 = vmax.f32 %v12820, 0.0
    %v12853 = vmax.f32 %v12821, 0.0
    %v12854 = vmax.f32 %v12822, 0.0
    %v12855 = vmax.f32 %v12823, 0.0
    %v12856 = vmax.f32 %v12824, 0.0
    %v12857 = vmax.f32 %v12825, 0.0
    %v12858 = vmax.f32 %v12826, 0.0
    %v12859 = vmax.f32 %v12827, 0.0
    %v12860 = vmax.f32 %v12828, 0.0
    %v12861 = vmax.f32 %v12829, 0.0
    %v12862 = vmax.f32 %v12830, 0.0
    %v12863 = vmax.f32 %v12831, 0.0
    %v12864 = vmax.f32 %v12832, 0.0
    %v12865 = vmax.f32 %v12833, 0.0
    %v12866 = vmax.f32 %v12834, 0.0
    %v12867 = vmax.f32 %v12835, 0.0
    %v12868 = vmax.f32 %v12836, 0.0
    %v12869 = vmax.f32 %v12837, 0.0
    %v12870 = vmax.f32 %v12838, 0.0
    %v12871 = vmax.f32 %v12839, 0.0
    %v12872 = vmax.f32 %v12840, 0.0
    %v12873 = vmax.f32 %v12841, 0.0
    %v12874 = vmax.f32 %v12842, 0.0
    %12875 = vst [vmem:[#allocation12] sm:$0xff] %v12843
    %12876 = vst [vmem:[#allocation12 + $0x8] sm:$0xff] %v12844
    %12877 = vst [vmem:[#allocation12 + $0x10] sm:$0xff] %v12845
    %12878 = vst [vmem:[#allocation12 + $0x18] sm:$0xff] %v12846
    %12879 = vst [vmem:[#allocation12 + $0x20] sm:$0xff] %v12847
    %12880 = vst [vmem:[#allocation12 + $0x28] sm:$0xff] %v12848
    %12881 = vst [vmem:[#allocation12 + $0x30] sm:$0xff] %v12849
    %12882 = vst [vmem:[#allocation12 + $0x38] sm:$0xff] %v12850
    %12883 = vst [vmem:[#allocation12 + $0x40] sm:$0xff] %v12851
    %12884 = vst [vmem:[#allocation12 + $0x48] sm:$0xff] %v12852
    %12885 = vst [vmem:[#allocation12 + $0x50] sm:$0xff] %v12853
    %12886 = vst [vmem:[#allocation12 + $0x58] sm:$0xff] %v12854
    %12887 = vst [vmem:[#allocation12 + $0x60] sm:$0xff] %v12855
    %12888 = vst [vmem:[#allocation12 + $0x68] sm:$0xff] %v12856
    %12889 = vst [vmem:[#allocation12 + $0x70] sm:$0xff] %v12857
    %12890 = vst [vmem:[#allocation12 + $0x78] sm:$0xff] %v12858
    %12891 = vst [vmem:[#allocation12 + $0x80] sm:$0xff] %v12859
    %12892 = vst [vmem:[#allocation12 + $0x88] sm:$0xff] %v12860
    %12893 = vst [vmem:[#allocation12 + $0x90] sm:$0xff] %v12861
    %12894 = vst [vmem:[#allocation12 + $0x98] sm:$0xff] %v12862
    %12895 = vst [vmem:[#allocation12 + $0xa0] sm:$0xff] %v12863
    %12896 = vst [vmem:[#allocation12 + $0xa8] sm:$0xff] %v12864
    %12897 = vst [vmem:[#allocation12 + $0xb0] sm:$0xff] %v12865
    %12898 = vst [vmem:[#allocation12 + $0xb8] sm:$0xff] %v12866
    %12899 = vst [vmem:[#allocation12 + $0xc0] sm:$0xff] %v12867
    %12900 = vst [vmem:[#allocation12 + $0xc8] sm:$0xff] %v12868
    %12901 = vst [vmem:[#allocation12 + $0xd0] sm:$0xff] %v12869
    %12902 = vst [vmem:[#allocation12 + $0xd8] sm:$0xff] %v12870
    %12903 = vst [vmem:[#allocation12 + $0xe0] sm:$0xff] %v12871
    %12904 = vst [vmem:[#allocation12 + $0xe8] sm:$0xff] %v12872
    %12905 = vst [vmem:[#allocation12 + $0xf0] sm:$0xff] %v12873
    %12906 = vst [vmem:[#allocation12 + $0xf8] sm:$0xff] %v12874
    // Predicated region
    $region38: #{tpu_custom_call.1} parent=1 // pred_check
      _
    $region39: #{tpu_custom_call.1} parent=1 // pred_check_branch
      %12908 = sbr.rel (0) target = $region41
    $region40: #{tpu_custom_call.1} parent=1 // pred_region
      %s12910 = ssub.s32 4096, 4096
      %12911 = vsyncadd [#allocation5], %s12910
      %s12912 = sshll.u32 [#allocation12], 4
      %s12913 = int_to_ptr.vmem [resolvable:$true] %s12912
      %12918 = dma.vmem_to_hbm [thread:$0]  %s12913, 4096, %s5, [#allocation5], 128, 128, 8
    $region41: #{tpu_custom_call.1} parent=1 // pred_fallthru
      _
    // Predicated region
    $region42: #{tpu_custom_call.1} parent=1 // pred_check
      _
    $region43: #{tpu_custom_call.1} parent=1 // pred_check_branch
      %12920 = sbr.rel (0) target = $region45
    $region44: #{tpu_custom_call.1} parent=1 // pred_region
      %12921 = dma.done [#allocation5], 4096
    $region45: #{tpu_custom_call.1} parent=1 // pred_fallthru
      _
    %12922 = vsyncpa [#allocation4], 1
    %12923 = vsyncpa [#allocation5], 1
    %12924 = vsyncpa [#allocation6], 1
    %12925 = vsyncpa [#allocation7], 1
    %12926 = vsyncpa [#allocation11], 1

</llo_original>
